<compile_context>
chip_gen: v7x
topology: tpu7x:2x2x1
jax: 0.10.0
libtpu: 0.0.40
codegen_flags: <defaults>
</compile_context>

<pallas_src>
import jax
import jax.numpy as jnp
from jax.experimental import pallas as pl
from jax.experimental.pallas import tpu as pltpu

# VGG19_bn config 'E' ([64,64,M,128,...,512,M]) with channel widths scaled by 1/16.
CFG = [4, 4, 'M', 8, 8, 'M', 16, 16, 16, 16, 'M', 32, 32, 32, 32, 'M', 32, 32, 32, 32, 'M']
FC_HIDDEN = 64          # scaled stand-in for the 4096-wide classifier layers
IN_CH = 3
SPATIAL = 32            # 5 maxpools: 32 -> 1
BATCH = 2
BN_EPS = 1e-5

LANES = 128             # every output block is padded to 128 lanes (lane-dense stores)
MT_MAX = 1024           # max output rows (M) per grid step; multiple of 8 sublanes

_COMPILER_PARAMS = pltpu.CompilerParams(dimension_semantics=("parallel",))


# ----------------------------- Pallas kernels ------------------------------

def conv_bn_relu_kernel(p_ref, w_ref, s_ref, b_ref, o_ref):
    """3x3 conv as one wide-K matmul + folded BN + ReLU (lane-dense output).

    p_ref: (MT, 9*Cin)  bf16  im2col patch rows (batch folded into M)
    w_ref: (9*Cin, 128) bf16  weight slab, Cout zero-padded to 128 lanes
    s_ref, b_ref: (1, 128) f32 folded BN scale / bias (zero on pad lanes)
    o_ref: (MT, 128)    bf16
    """
    acc = jnp.dot(p_ref[...], w_ref[...], preferred_element_type=jnp.float32)
    y = jnp.maximum(acc * s_ref[...] + b_ref[...], 0.0)     # f32 epilogue (v5e VPU)
    o_ref[...] = y.astype(o_ref.dtype)


def conv_bn_relu_pool_kernel(p_ref, w_ref, s_ref, b_ref, o_ref):
    """3x3 conv + folded BN + ReLU + fused 2x2/stride-2 maxpool.

    p_ref: (4, MT, 9*Cin) bf16  patches; leading dim = pool phase (ph*2+pw)
    o_ref: (MT, 128)      bf16  pooled, lane-dense
    """
    w = w_ref[...]
    s = s_ref[...]
    b = b_ref[...]
    y = None
    for ph in range(4):                                   # unrolled at trace time
        acc = jnp.dot(p_ref[ph], w, preferred_element_type=jnp.float32)
        yp = jnp.maximum(acc * s + b, 0.0)
        y = yp if y is None else jnp.maximum(y, yp)
    o_ref[...] = y.astype(o_ref.dtype)


def final_conv_classifier_kernel(p_ref, w_ref, s_ref, b_ref,
                                 w1_ref, b1_ref, w2_ref, b2_ref, o_ref):
    """Last conv (+BN+ReLU+pool) fused with fc1 + ReLU + Dropout(id) + fc2 + ReLU.

    The final pool reduces spatial to 1x1, so the NCHW .view(B, -1) flatten is
    just the channel vector; the feature rows stay in VMEM as f32 and feed the
    classifier matmuls directly (classifier math is f32 end-to-end).
    Padded lanes stay exactly zero: conv pads have zero scale/bias (ReLU(0)=0)
    and fc weight slabs have zero pad rows/cols.
    """
    w = w_ref[...]
    s = s_ref[...]
    b = b_ref[...]
    y = None
    for ph in range(4):
        acc = jnp.dot(p_ref[ph], w, preferred_element_type=jnp.float32)
        yp = jnp.maximum(acc * s + b, 0.0)
        y = yp if y is None else jnp.maximum(y, yp)
    h = jnp.dot(y, w1_ref[...], preferred_element_type=jnp.float32)
    h = jnp.maximum(h + b1_ref[...], 0.0)
    # TODO(synk): Dropout between fc1 and fc2 is inference-mode identity.
    h = jnp.dot(h, w2_ref[...], preferred_element_type=jnp.float32)
    o_ref[...] = jnp.maximum(h + b2_ref[...], 0.0)


# ----------------------------- Pallas wrappers ------------------------------

def _im2col(x, pool):
    """x: (B, H, W, Cin) bf16 -> im2col patch rows with batch folded into M.

    Non-pooled: (B*H*W, 9*Cin), rows ordered (b, h, w).
    Pooled:     (4, B*Ho*Wo, 9*Cin), leading dim = pool phase (ph*2+pw) so the
                in-kernel 2x2 pool is a max over the four phase matmul results.
    """
    B, H, W, Cin = x.shape
    xp = jnp.pad(x, ((0, 0), (1, 1), (1, 1), (0, 0)))
    taps = jnp.stack(
        [xp[:, dy:dy + H, dx:dx + W, :] for dy in range(3) for dx in range(3)],
        axis=3).reshape(B, H, W, 9 * Cin)
    if pool:
        Ho, Wo = H // 2, W // 2
        t = taps.reshape(B, Ho, 2, Wo, 2, 9 * Cin)
        t = jnp.transpose(t, (2, 4, 0, 1, 3, 5))        # (ph, pw, B, Ho, Wo, 9Cin)
        return t.reshape(4, B * Ho * Wo, 9 * Cin), Ho, Wo
    return taps.reshape(B * H * W, 9 * Cin), H, W


def conv_bn_relu(x, w, scale, bias, pool):
    """x: (B,H,W,Cin) bf16 -> ((B*Ho*Wo, 128) bf16 lane-dense, Ho, Wo)."""
    B, H, W, Cin = x.shape
    K = 9 * Cin
    patch, Ho, Wo = _im2col(x, pool)
    Mo = B * Ho * Wo
    mt = min(MT_MAX, Mo)                    # parallel M-tile (multiple of 8 or full)
    grid = (pl.cdiv(Mo, mt),)
    if pool:
        kernel = conv_bn_relu_pool_kernel
        p_spec = pl.BlockSpec((4, mt, K), lambda m: (0, m, 0))
    else:
        kernel = conv_bn_relu_kernel
        p_spec = pl.BlockSpec((mt, K), lambda m: (m, 0))
    out = pl.pallas_call(
        kernel,
        out_shape=jax.ShapeDtypeStruct((Mo, LANES), jnp.bfloat16),
        grid=grid,
        in_specs=[
            p_spec,
            pl.BlockSpec((K, LANES), lambda m: (0, 0)),
            pl.BlockSpec((1, LANES), lambda m: (0, 0)),
            pl.BlockSpec((1, LANES), lambda m: (0, 0)),
        ],
        out_specs=pl.BlockSpec((mt, LANES), lambda m: (m, 0)),
        compiler_params=_COMPILER_PARAMS,
    )(patch, w, scale, bias)
    return out, Ho, Wo


def final_conv_classifier(x, w, scale, bias, params):
    """Last conv+pool fused with the classifier; returns (B, FC_HIDDEN) f32."""
    B, H, W, Cin = x.shape
    K = 9 * Cin
    patch, Ho, Wo = _im2col(x, pool=True)
    assert Ho == 1 and Wo == 1              # NCHW flatten == channel vector
    Mo = B
    out = pl.pallas_call(
        final_conv_classifier_kernel,
        out_shape=jax.ShapeDtypeStruct((Mo, LANES), jnp.float32),
        grid=(1,),
        in_specs=[
            pl.BlockSpec((4, Mo, K), lambda m: (0, 0, 0)),
            pl.BlockSpec((K, LANES), lambda m: (0, 0)),
            pl.BlockSpec((1, LANES), lambda m: (0, 0)),
            pl.BlockSpec((1, LANES), lambda m: (0, 0)),
            pl.BlockSpec((LANES, LANES), lambda m: (0, 0)),
            pl.BlockSpec((1, LANES), lambda m: (0, 0)),
            pl.BlockSpec((LANES, LANES), lambda m: (0, 0)),
            pl.BlockSpec((1, LANES), lambda m: (0, 0)),
        ],
        out_specs=pl.BlockSpec((Mo, LANES), lambda m: (m, 0)),
        compiler_params=_COMPILER_PARAMS,
    )(patch, w, scale, bias,
      params['fc1_w'], params['fc1_b'], params['fc2_w'], params['fc2_b'])
    return out[:, :FC_HIDDEN]


# ------------------------------- parameters --------------------------------

def init_params(key):
    convs = []
    cin = IN_CH
    spatial = SPATIAL
    for v in CFG:
        if v == 'M':
            spatial //= 2
            continue
        key, kw, kg, kb, km, kv = jax.random.split(key, 6)
        w = jax.random.normal(kw, (3, 3, cin, v), jnp.float32) * (2.0 / (9 * cin)) ** 0.5
        gamma = jax.random.uniform(kg, (v,), jnp.float32, 0.5, 1.5)
        beta = 0.1 * jax.random.normal(kb, (v,), jnp.float32)
        mean = 0.1 * jax.random.normal(km, (v,), jnp.float32)
        var = jax.random.uniform(kv, (v,), jnp.float32, 0.5, 1.5)
        # fold inference BatchNorm into per-channel scale/bias (kept in f32)
        scale = gamma / jnp.sqrt(var + BN_EPS)
        bias = beta - mean * scale
        # pad Cout to 128 lanes: zero weights + zero scale/bias on pad lanes
        wslab = jnp.zeros((9 * cin, LANES), jnp.bfloat16)
        wslab = wslab.at[:, :v].set(w.reshape(9 * cin, v).astype(jnp.bfloat16))
        spad = jnp.zeros((1, LANES), jnp.float32).at[:, :v].set(scale[None, :])
        bpad = jnp.zeros((1, LANES), jnp.float32).at[:, :v].set(bias[None, :])
        convs.append((wslab, spad, bpad))
        cin = v
    flat = cin * spatial * spatial
    assert spatial == 1 and flat <= LANES, "classifier fusion assumes 1x1 final spatial"
    key, k1, k2, k3, k4 = jax.random.split(key, 5)
    fc1 = jax.random.normal(k1, (flat, FC_HIDDEN), jnp.float32) * (1.0 / flat) ** 0.5
    fc1_b = 0.01 * jax.random.normal(k2, (FC_HIDDEN,), jnp.float32)
    fc2 = jax.random.normal(k3, (FC_HIDDEN, FC_HIDDEN), jnp.float32) * (1.0 / FC_HIDDEN) ** 0.5
    fc2_b = 0.01 * jax.random.normal(k4, (FC_HIDDEN,), jnp.float32)
    # classifier weights stay f32 (PyTorch-faithful); zero-padded to 128x128 slabs
    fc1_w = jnp.zeros((LANES, LANES), jnp.float32).at[:flat, :FC_HIDDEN].set(fc1)
    fc1_bp = jnp.zeros((1, LANES), jnp.float32).at[:, :FC_HIDDEN].set(fc1_b[None, :])
    fc2_w = jnp.zeros((LANES, LANES), jnp.float32).at[:FC_HIDDEN, :FC_HIDDEN].set(fc2)
    fc2_bp = jnp.zeros((1, LANES), jnp.float32).at[:, :FC_HIDDEN].set(fc2_b[None, :])
    return {'convs': convs, 'fc1_w': fc1_w, 'fc1_b': fc1_bp,
            'fc2_w': fc2_w, 'fc2_b': fc2_bp}


# -------------------------------- forward ----------------------------------

def vggnet_forward(x_nchw, params):
    """Mirrors VGGNet.forward: features(x).view(B, -1) -> classifier[:-2]."""
    B = x_nchw.shape[0]
    # layout: convert PyTorch NCHW input to NHWC bf16 for the conv kernels.
    x = jnp.transpose(x_nchw, (0, 2, 3, 1)).astype(jnp.bfloat16)
    convs = params['convs']
    n_conv = len(convs)
    ci = 0
    idx = 0
    while idx < len(CFG):
        cout = CFG[idx]                                     # static Python int
        # every 'M' in VGG follows a conv -> fuse the pool into that conv kernel
        pool = (idx + 1 < len(CFG)) and (CFG[idx + 1] == 'M')
        w, s, b = convs[ci]
        if ci == n_conv - 1:
            # last conv + pool + classifier fused in one pallas_call
            return final_conv_classifier(x, w, s, b, params)
        out, Ho, Wo = conv_bn_relu(x, w, s, b, pool=pool)
        # lane-dense (Mo, 128) -> drop the channel pad before the next im2col
        # so patch HBM bytes do not inflate with the padding.
        x = out.reshape(B, Ho, Wo, LANES)[..., :cout]
        ci += 1
        idx += 2 if pool else 1
    raise AssertionError("CFG must end with a pooled conv layer")


if __name__ == "__main__":
    key = jax.random.PRNGKey(0)
    kx, kp = jax.random.split(key)
    # NCHW, matching the PyTorch module's input convention.
    x = jax.random.normal(kx, (BATCH, IN_CH, SPATIAL, SPATIAL), jnp.float32)
    params = init_params(kp)
    out = jax.jit(vggnet_forward)(x, params)
    out = jax.block_until_ready(out)
    assert out.shape == (BATCH, FC_HIDDEN), out.shape
    assert bool(jnp.all(jnp.isfinite(out)))
    print("KERNEL_OK")
</pallas_src>

<mosaic_0001>
module attributes {stable_mosaic.version = 11 : i64} {
  func.func @conv_bn_relu_kernel(%arg0: i32, %arg1: memref<1024x27xbf16, #tpu.memory_space<vmem>>, %arg2: memref<27x128xbf16, #tpu.memory_space<vmem>>, %arg3: memref<1x128xf32, #tpu.memory_space<vmem>>, %arg4: memref<1x128xf32, #tpu.memory_space<vmem>>, %arg5: memref<1024x128xbf16, #tpu.memory_space<vmem>>) attributes {dimension_semantics = [#tpu.dimension_semantics<parallel>], iteration_bounds = array<i64: 2>, scalar_prefetch = 0 : i64, scratch_operands = 0 : i64, tpu.core_type = #tpu.core_type<tc>, window_params = [{transform_indices = @transform_0, window_bounds = array<i64: 1024, 27>}, {pipeline_mode = #tpu.pipeline_mode<synchronous>, transform_indices = @transform_1, window_bounds = array<i64: 27, 128>}, {pipeline_mode = #tpu.pipeline_mode<synchronous>, transform_indices = @transform_2, window_bounds = array<i64: 1, 128>}, {pipeline_mode = #tpu.pipeline_mode<synchronous>, transform_indices = @transform_3, window_bounds = array<i64: 1, 128>}, {transform_indices = @transform_4, window_bounds = array<i64: 1024, 128>}]} {
    %c0 = arith.constant 0 : index
    %c0_0 = arith.constant 0 : index
    %0 = vector.load %arg1[%c0, %c0_0] : memref<1024x27xbf16, #tpu.memory_space<vmem>>, vector<1024x27xbf16>
    %c0_1 = arith.constant 0 : index
    %c0_2 = arith.constant 0 : index
    %1 = vector.load %arg2[%c0_1, %c0_2] : memref<27x128xbf16, #tpu.memory_space<vmem>>, vector<27x128xbf16>
    %cst = arith.constant dense<0.000000e+00> : vector<1024x128xf32>
    %2 = tpu.matmul %0, %1, %cst {dimension_numbers = #tpu.dot_dimension_numbers<[1], [0], [0], [1], [0, 0, 1, 1], [], []>} : vector<1024x27xbf16>, vector<27x128xbf16>, vector<1024x128xf32> -> vector<1024x128xf32>
    %c0_3 = arith.constant 0 : index
    %c0_4 = arith.constant 0 : index
    %3 = vector.load %arg3[%c0_3, %c0_4] : memref<1x128xf32, #tpu.memory_space<vmem>>, vector<1x128xf32>
    %4 = vector.broadcast %3 : vector<1x128xf32> to vector<1024x128xf32>
    %5 = arith.mulf %2, %4 : vector<1024x128xf32>
    %c0_5 = arith.constant 0 : index
    %c0_6 = arith.constant 0 : index
    %6 = vector.load %arg4[%c0_5, %c0_6] : memref<1x128xf32, #tpu.memory_space<vmem>>, vector<1x128xf32>
    %7 = vector.broadcast %6 : vector<1x128xf32> to vector<1024x128xf32>
    %8 = arith.addf %5, %7 : vector<1024x128xf32>
    %cst_7 = arith.constant 0.000000e+00 : f32
    %9 = vector.broadcast %cst_7 : f32 to vector<1024x128xf32>
    %10 = arith.maximumf %8, %9 : vector<1024x128xf32>
    %11 = arith.truncf %10 : vector<1024x128xf32> to vector<1024x128xbf16>
    %c0_8 = arith.constant 0 : index
    %c0_9 = arith.constant 0 : index
    %12 = vector.load %arg5[%c0_8, %c0_9] : memref<1024x128xbf16, #tpu.memory_space<vmem>>, vector<1024x128xbf16>
    tpu.vector_store %arg5[%c0_8, %c0_9], %11 {strides = array<i32>} : memref<1024x128xbf16, #tpu.memory_space<vmem>>, vector<1024x128xbf16>,
    return
  }
  func.func @transform_0(%arg0: i32) -> (i32, i32) {
    %c0_i32 = arith.constant 0 : i32
    %c0_i32_0 = arith.constant 0 : i32
    return %arg0, %c0_i32 : i32, i32
  }
  func.func @transform_1(%arg0: i32) -> (i32, i32) {
    %c0_i32 = arith.constant 0 : i32
    %c0_i32_0 = arith.constant 0 : i32
    %c0_i32_1 = arith.constant 0 : i32
    return %c0_i32, %c0_i32_0 : i32, i32
  }
  func.func @transform_2(%arg0: i32) -> (i32, i32) {
    %c0_i32 = arith.constant 0 : i32
    %c0_i32_0 = arith.constant 0 : i32
    %c0_i32_1 = arith.constant 0 : i32
    return %c0_i32, %c0_i32_0 : i32, i32
  }
  func.func @transform_3(%arg0: i32) -> (i32, i32) {
    %c0_i32 = arith.constant 0 : i32
    %c0_i32_0 = arith.constant 0 : i32
    %c0_i32_1 = arith.constant 0 : i32
    return %c0_i32, %c0_i32_0 : i32, i32
  }
  func.func @transform_4(%arg0: i32) -> (i32, i32) {
    %c0_i32 = arith.constant 0 : i32
    %c0_i32_0 = arith.constant 0 : i32
    return %arg0, %c0_i32 : i32, i32
  }
}

module attributes {stable_mosaic.version = 11 : i64} {
  func.func @conv_bn_relu_pool_kernel(%arg0: i32, %arg1: memref<4x512x36xbf16, #tpu.memory_space<vmem>>, %arg2: memref<36x128xbf16, #tpu.memory_space<vmem>>, %arg3: memref<1x128xf32, #tpu.memory_space<vmem>>, %arg4: memref<1x128xf32, #tpu.memory_space<vmem>>, %arg5: memref<512x128xbf16, #tpu.memory_space<vmem>>) attributes {dimension_semantics = [#tpu.dimension_semantics<parallel>], iteration_bounds = array<i64: 1>, scalar_prefetch = 0 : i64, scratch_operands = 0 : i64, tpu.core_type = #tpu.core_type<tc>, window_params = [{transform_indices = @transform_0, window_bounds = array<i64: 4, 512, 36>}, {pipeline_mode = #tpu.pipeline_mode<synchronous>, transform_indices = @transform_1, window_bounds = array<i64: 36, 128>}, {pipeline_mode = #tpu.pipeline_mode<synchronous>, transform_indices = @transform_2, window_bounds = array<i64: 1, 128>}, {pipeline_mode = #tpu.pipeline_mode<synchronous>, transform_indices = @transform_3, window_bounds = array<i64: 1, 128>}, {transform_indices = @transform_4, window_bounds = array<i64: 512, 128>}]} {
    %c0 = arith.constant 0 : index
    %c0_0 = arith.constant 0 : index
    %0 = vector.load %arg2[%c0, %c0_0] : memref<36x128xbf16, #tpu.memory_space<vmem>>, vector<36x128xbf16>
    %c0_1 = arith.constant 0 : index
    %c0_2 = arith.constant 0 : index
    %1 = vector.load %arg3[%c0_1, %c0_2] : memref<1x128xf32, #tpu.memory_space<vmem>>, vector<1x128xf32>
    %c0_3 = arith.constant 0 : index
    %c0_4 = arith.constant 0 : index
    %2 = vector.load %arg4[%c0_3, %c0_4] : memref<1x128xf32, #tpu.memory_space<vmem>>, vector<1x128xf32>
    %c0_5 = arith.constant 0 : index
    %c0_6 = arith.constant 0 : index
    %c0_7 = arith.constant 0 : index
    %3 = vector.load %arg1[%c0_5, %c0_6, %c0_7] : memref<4x512x36xbf16, #tpu.memory_space<vmem>>, vector<1x512x36xbf16>
    %4 = vector.shape_cast %3 : vector<1x512x36xbf16> to vector<512x36xbf16>
    %cst = arith.constant dense<0.000000e+00> : vector<512x128xf32>
    %5 = tpu.matmul %4, %0, %cst {dimension_numbers = #tpu.dot_dimension_numbers<[1], [0], [0], [1], [0, 0, 1, 1], [], []>} : vector<512x36xbf16>, vector<36x128xbf16>, vector<512x128xf32> -> vector<512x128xf32>
    %6 = vector.broadcast %1 : vector<1x128xf32> to vector<512x128xf32>
    %7 = arith.mulf %5, %6 : vector<512x128xf32>
    %8 = vector.broadcast %2 : vector<1x128xf32> to vector<512x128xf32>
    %9 = arith.addf %7, %8 : vector<512x128xf32>
    %cst_8 = arith.constant 0.000000e+00 : f32
    %10 = vector.broadcast %cst_8 : f32 to vector<512x128xf32>
    %11 = arith.maximumf %9, %10 : vector<512x128xf32>
    %c1 = arith.constant 1 : index
    %c0_9 = arith.constant 0 : index
    %c0_10 = arith.constant 0 : index
    %12 = vector.load %arg1[%c1, %c0_9, %c0_10] : memref<4x512x36xbf16, #tpu.memory_space<vmem>>, vector<1x512x36xbf16>
    %13 = vector.shape_cast %12 : vector<1x512x36xbf16> to vector<512x36xbf16>
    %cst_11 = arith.constant dense<0.000000e+00> : vector<512x128xf32>
    %14 = tpu.matmul %13, %0, %cst_11 {dimension_numbers = #tpu.dot_dimension_numbers<[1], [0], [0], [1], [0, 0, 1, 1], [], []>} : vector<512x36xbf16>, vector<36x128xbf16>, vector<512x128xf32> -> vector<512x128xf32>
    %15 = vector.broadcast %1 : vector<1x128xf32> to vector<512x128xf32>
    %16 = arith.mulf %14, %15 : vector<512x128xf32>
    %17 = vector.broadcast %2 : vector<1x128xf32> to vector<512x128xf32>
    %18 = arith.addf %16, %17 : vector<512x128xf32>
    %cst_12 = arith.constant 0.000000e+00 : f32
    %19 = vector.broadcast %cst_12 : f32 to vector<512x128xf32>
    %20 = arith.maximumf %18, %19 : vector<512x128xf32>
    %21 = arith.maximumf %11, %20 : vector<512x128xf32>
    %c2 = arith.constant 2 : index
    %c0_13 = arith.constant 0 : index
    %c0_14 = arith.constant 0 : index
    %22 = vector.load %arg1[%c2, %c0_13, %c0_14] : memref<4x512x36xbf16, #tpu.memory_space<vmem>>, vector<1x512x36xbf16>
    %23 = vector.shape_cast %22 : vector<1x512x36xbf16> to vector<512x36xbf16>
    %cst_15 = arith.constant dense<0.000000e+00> : vector<512x128xf32>
    %24 = tpu.matmul %23, %0, %cst_15 {dimension_numbers = #tpu.dot_dimension_numbers<[1], [0], [0], [1], [0, 0, 1, 1], [], []>} : vector<512x36xbf16>, vector<36x128xbf16>, vector<512x128xf32> -> vector<512x128xf32>
    %25 = vector.broadcast %1 : vector<1x128xf32> to vector<512x128xf32>
    %26 = arith.mulf %24, %25 : vector<512x128xf32>
    %27 = vector.broadcast %2 : vector<1x128xf32> to vector<512x128xf32>
    %28 = arith.addf %26, %27 : vector<512x128xf32>
    %cst_16 = arith.constant 0.000000e+00 : f32
    %29 = vector.broadcast %cst_16 : f32 to vector<512x128xf32>
    %30 = arith.maximumf %28, %29 : vector<512x128xf32>
    %31 = arith.maximumf %21, %30 : vector<512x128xf32>
    %c3 = arith.constant 3 : index
    %c0_17 = arith.constant 0 : index
    %c0_18 = arith.constant 0 : index
    %32 = vector.load %arg1[%c3, %c0_17, %c0_18] : memref<4x512x36xbf16, #tpu.memory_space<vmem>>, vector<1x512x36xbf16>
    %33 = vector.shape_cast %32 : vector<1x512x36xbf16> to vector<512x36xbf16>
    %cst_19 = arith.constant dense<0.000000e+00> : vector<512x128xf32>
    %34 = tpu.matmul %33, %0, %cst_19 {dimension_numbers = #tpu.dot_dimension_numbers<[1], [0], [0], [1], [0, 0, 1, 1], [], []>} : vector<512x36xbf16>, vector<36x128xbf16>, vector<512x128xf32> -> vector<512x128xf32>
    %35 = vector.broadcast %1 : vector<1x128xf32> to vector<512x128xf32>
    %36 = arith.mulf %34, %35 : vector<512x128xf32>
    %37 = vector.broadcast %2 : vector<1x128xf32> to vector<512x128xf32>
    %38 = arith.addf %36, %37 : vector<512x128xf32>
    %cst_20 = arith.constant 0.000000e+00 : f32
    %39 = vector.broadcast %cst_20 : f32 to vector<512x128xf32>
    %40 = arith.maximumf %38, %39 : vector<512x128xf32>
    %41 = arith.maximumf %31, %40 : vector<512x128xf32>
    %42 = arith.truncf %41 : vector<512x128xf32> to vector<512x128xbf16>
    %c0_21 = arith.constant 0 : index
    %c0_22 = arith.constant 0 : index
    %43 = vector.load %arg5[%c0_21, %c0_22] : memref<512x128xbf16, #tpu.memory_space<vmem>>, vector<512x128xbf16>
    tpu.vector_store %arg5[%c0_21, %c0_22], %42 {strides = array<i32>} : memref<512x128xbf16, #tpu.memory_space<vmem>>, vector<512x128xbf16>,
    return
  }
  func.func @transform_0(%arg0: i32) -> (i32, i32, i32) {
    %c0_i32 = arith.constant 0 : i32
    %c0_i32_0 = arith.constant 0 : i32
    %c0_i32_1 = arith.constant 0 : i32
    return %c0_i32, %arg0, %c0_i32_0 : i32, i32, i32
  }
  func.func @transform_1(%arg0: i32) -> (i32, i32) {
    %c0_i32 = arith.constant 0 : i32
    %c0_i32_0 = arith.constant 0 : i32
    %c0_i32_1 = arith.constant 0 : i32
    return %c0_i32, %c0_i32_0 : i32, i32
  }
  func.func @transform_2(%arg0: i32) -> (i32, i32) {
    %c0_i32 = arith.constant 0 : i32
    %c0_i32_0 = arith.constant 0 : i32
    %c0_i32_1 = arith.constant 0 : i32
    return %c0_i32, %c0_i32_0 : i32, i32
  }
  func.func @transform_3(%arg0: i32) -> (i32, i32) {
    %c0_i32 = arith.constant 0 : i32
    %c0_i32_0 = arith.constant 0 : i32
    %c0_i32_1 = arith.constant 0 : i32
    return %c0_i32, %c0_i32_0 : i32, i32
  }
  func.func @transform_4(%arg0: i32) -> (i32, i32) {
    %c0_i32 = arith.constant 0 : i32
    %c0_i32_0 = arith.constant 0 : i32
    return %arg0, %c0_i32 : i32, i32
  }
}

module attributes {stable_mosaic.version = 11 : i64} {
  func.func @conv_bn_relu_kernel(%arg0: i32, %arg1: memref<512x36xbf16, #tpu.memory_space<vmem>>, %arg2: memref<36x128xbf16, #tpu.memory_space<vmem>>, %arg3: memref<1x128xf32, #tpu.memory_space<vmem>>, %arg4: memref<1x128xf32, #tpu.memory_space<vmem>>, %arg5: memref<512x128xbf16, #tpu.memory_space<vmem>>) attributes {dimension_semantics = [#tpu.dimension_semantics<parallel>], iteration_bounds = array<i64: 1>, scalar_prefetch = 0 : i64, scratch_operands = 0 : i64, tpu.core_type = #tpu.core_type<tc>, window_params = [{transform_indices = @transform_0, window_bounds = array<i64: 512, 36>}, {pipeline_mode = #tpu.pipeline_mode<synchronous>, transform_indices = @transform_1, window_bounds = array<i64: 36, 128>}, {pipeline_mode = #tpu.pipeline_mode<synchronous>, transform_indices = @transform_2, window_bounds = array<i64: 1, 128>}, {pipeline_mode = #tpu.pipeline_mode<synchronous>, transform_indices = @transform_3, window_bounds = array<i64: 1, 128>}, {transform_indices = @transform_4, window_bounds = array<i64: 512, 128>}]} {
    %c0 = arith.constant 0 : index
    %c0_0 = arith.constant 0 : index
    %0 = vector.load %arg1[%c0, %c0_0] : memref<512x36xbf16, #tpu.memory_space<vmem>>, vector<512x36xbf16>
    %c0_1 = arith.constant 0 : index
    %c0_2 = arith.constant 0 : index
    %1 = vector.load %arg2[%c0_1, %c0_2] : memref<36x128xbf16, #tpu.memory_space<vmem>>, vector<36x128xbf16>
    %cst = arith.constant dense<0.000000e+00> : vector<512x128xf32>
    %2 = tpu.matmul %0, %1, %cst {dimension_numbers = #tpu.dot_dimension_numbers<[1], [0], [0], [1], [0, 0, 1, 1], [], []>} : vector<512x36xbf16>, vector<36x128xbf16>, vector<512x128xf32> -> vector<512x128xf32>
    %c0_3 = arith.constant 0 : index
    %c0_4 = arith.constant 0 : index
    %3 = vector.load %arg3[%c0_3, %c0_4] : memref<1x128xf32, #tpu.memory_space<vmem>>, vector<1x128xf32>
    %4 = vector.broadcast %3 : vector<1x128xf32> to vector<512x128xf32>
    %5 = arith.mulf %2, %4 : vector<512x128xf32>
    %c0_5 = arith.constant 0 : index
    %c0_6 = arith.constant 0 : index
    %6 = vector.load %arg4[%c0_5, %c0_6] : memref<1x128xf32, #tpu.memory_space<vmem>>, vector<1x128xf32>
    %7 = vector.broadcast %6 : vector<1x128xf32> to vector<512x128xf32>
    %8 = arith.addf %5, %7 : vector<512x128xf32>
    %cst_7 = arith.constant 0.000000e+00 : f32
    %9 = vector.broadcast %cst_7 : f32 to vector<512x128xf32>
    %10 = arith.maximumf %8, %9 : vector<512x128xf32>
    %11 = arith.truncf %10 : vector<512x128xf32> to vector<512x128xbf16>
    %c0_8 = arith.constant 0 : index
    %c0_9 = arith.constant 0 : index
    %12 = vector.load %arg5[%c0_8, %c0_9] : memref<512x128xbf16, #tpu.memory_space<vmem>>, vector<512x128xbf16>
    tpu.vector_store %arg5[%c0_8, %c0_9], %11 {strides = array<i32>} : memref<512x128xbf16, #tpu.memory_space<vmem>>, vector<512x128xbf16>,
    return
  }
  func.func @transform_0(%arg0: i32) -> (i32, i32) {
    %c0_i32 = arith.constant 0 : i32
    %c0_i32_0 = arith.constant 0 : i32
    return %arg0, %c0_i32 : i32, i32
  }
  func.func @transform_1(%arg0: i32) -> (i32, i32) {
    %c0_i32 = arith.constant 0 : i32
    %c0_i32_0 = arith.constant 0 : i32
    %c0_i32_1 = arith.constant 0 : i32
    return %c0_i32, %c0_i32_0 : i32, i32
  }
  func.func @transform_2(%arg0: i32) -> (i32, i32) {
    %c0_i32 = arith.constant 0 : i32
    %c0_i32_0 = arith.constant 0 : i32
    %c0_i32_1 = arith.constant 0 : i32
    return %c0_i32, %c0_i32_0 : i32, i32
  }
  func.func @transform_3(%arg0: i32) -> (i32, i32) {
    %c0_i32 = arith.constant 0 : i32
    %c0_i32_0 = arith.constant 0 : i32
    %c0_i32_1 = arith.constant 0 : i32
    return %c0_i32, %c0_i32_0 : i32, i32
  }
  func.func @transform_4(%arg0: i32) -> (i32, i32) {
    %c0_i32 = arith.constant 0 : i32
    %c0_i32_0 = arith.constant 0 : i32
    return %arg0, %c0_i32 : i32, i32
  }
}

module attributes {stable_mosaic.version = 11 : i64} {
  func.func @conv_bn_relu_pool_kernel(%arg0: i32, %arg1: memref<4x128x72xbf16, #tpu.memory_space<vmem>>, %arg2: memref<72x128xbf16, #tpu.memory_space<vmem>>, %arg3: memref<1x128xf32, #tpu.memory_space<vmem>>, %arg4: memref<1x128xf32, #tpu.memory_space<vmem>>, %arg5: memref<128x128xbf16, #tpu.memory_space<vmem>>) attributes {dimension_semantics = [#tpu.dimension_semantics<parallel>], iteration_bounds = array<i64: 1>, scalar_prefetch = 0 : i64, scratch_operands = 0 : i64, tpu.core_type = #tpu.core_type<tc>, window_params = [{transform_indices = @transform_0, window_bounds = array<i64: 4, 128, 72>}, {pipeline_mode = #tpu.pipeline_mode<synchronous>, transform_indices = @transform_1, window_bounds = array<i64: 72, 128>}, {pipeline_mode = #tpu.pipeline_mode<synchronous>, transform_indices = @transform_2, window_bounds = array<i64: 1, 128>}, {pipeline_mode = #tpu.pipeline_mode<synchronous>, transform_indices = @transform_3, window_bounds = array<i64: 1, 128>}, {transform_indices = @transform_4, window_bounds = array<i64: 128, 128>}]} {
    %c0 = arith.constant 0 : index
    %c0_0 = arith.constant 0 : index
    %0 = vector.load %arg2[%c0, %c0_0] : memref<72x128xbf16, #tpu.memory_space<vmem>>, vector<72x128xbf16>
    %c0_1 = arith.constant 0 : index
    %c0_2 = arith.constant 0 : index
    %1 = vector.load %arg3[%c0_1, %c0_2] : memref<1x128xf32, #tpu.memory_space<vmem>>, vector<1x128xf32>
    %c0_3 = arith.constant 0 : index
    %c0_4 = arith.constant 0 : index
    %2 = vector.load %arg4[%c0_3, %c0_4] : memref<1x128xf32, #tpu.memory_space<vmem>>, vector<1x128xf32>
    %c0_5 = arith.constant 0 : index
    %c0_6 = arith.constant 0 : index
    %c0_7 = arith.constant 0 : index
    %3 = vector.load %arg1[%c0_5, %c0_6, %c0_7] : memref<4x128x72xbf16, #tpu.memory_space<vmem>>, vector<1x128x72xbf16>
    %4 = vector.shape_cast %3 : vector<1x128x72xbf16> to vector<128x72xbf16>
    %cst = arith.constant dense<0.000000e+00> : vector<128x128xf32>
    %5 = tpu.matmul %4, %0, %cst {dimension_numbers = #tpu.dot_dimension_numbers<[1], [0], [0], [1], [0, 0, 1, 1], [], []>} : vector<128x72xbf16>, vector<72x128xbf16>, vector<128x128xf32> -> vector<128x128xf32>
    %6 = vector.broadcast %1 : vector<1x128xf32> to vector<128x128xf32>
    %7 = arith.mulf %5, %6 : vector<128x128xf32>
    %8 = vector.broadcast %2 : vector<1x128xf32> to vector<128x128xf32>
    %9 = arith.addf %7, %8 : vector<128x128xf32>
    %cst_8 = arith.constant 0.000000e+00 : f32
    %10 = vector.broadcast %cst_8 : f32 to vector<128x128xf32>
    %11 = arith.maximumf %9, %10 : vector<128x128xf32>
    %c1 = arith.constant 1 : index
    %c0_9 = arith.constant 0 : index
    %c0_10 = arith.constant 0 : index
    %12 = vector.load %arg1[%c1, %c0_9, %c0_10] : memref<4x128x72xbf16, #tpu.memory_space<vmem>>, vector<1x128x72xbf16>
    %13 = vector.shape_cast %12 : vector<1x128x72xbf16> to vector<128x72xbf16>
    %cst_11 = arith.constant dense<0.000000e+00> : vector<128x128xf32>
    %14 = tpu.matmul %13, %0, %cst_11 {dimension_numbers = #tpu.dot_dimension_numbers<[1], [0], [0], [1], [0, 0, 1, 1], [], []>} : vector<128x72xbf16>, vector<72x128xbf16>, vector<128x128xf32> -> vector<128x128xf32>
    %15 = vector.broadcast %1 : vector<1x128xf32> to vector<128x128xf32>
    %16 = arith.mulf %14, %15 : vector<128x128xf32>
    %17 = vector.broadcast %2 : vector<1x128xf32> to vector<128x128xf32>
    %18 = arith.addf %16, %17 : vector<128x128xf32>
    %cst_12 = arith.constant 0.000000e+00 : f32
    %19 = vector.broadcast %cst_12 : f32 to vector<128x128xf32>
    %20 = arith.maximumf %18, %19 : vector<128x128xf32>
    %21 = arith.maximumf %11, %20 : vector<128x128xf32>
    %c2 = arith.constant 2 : index
    %c0_13 = arith.constant 0 : index
    %c0_14 = arith.constant 0 : index
    %22 = vector.load %arg1[%c2, %c0_13, %c0_14] : memref<4x128x72xbf16, #tpu.memory_space<vmem>>, vector<1x128x72xbf16>
    %23 = vector.shape_cast %22 : vector<1x128x72xbf16> to vector<128x72xbf16>
    %cst_15 = arith.constant dense<0.000000e+00> : vector<128x128xf32>
    %24 = tpu.matmul %23, %0, %cst_15 {dimension_numbers = #tpu.dot_dimension_numbers<[1], [0], [0], [1], [0, 0, 1, 1], [], []>} : vector<128x72xbf16>, vector<72x128xbf16>, vector<128x128xf32> -> vector<128x128xf32>
    %25 = vector.broadcast %1 : vector<1x128xf32> to vector<128x128xf32>
    %26 = arith.mulf %24, %25 : vector<128x128xf32>
    %27 = vector.broadcast %2 : vector<1x128xf32> to vector<128x128xf32>
    %28 = arith.addf %26, %27 : vector<128x128xf32>
    %cst_16 = arith.constant 0.000000e+00 : f32
    %29 = vector.broadcast %cst_16 : f32 to vector<128x128xf32>
    %30 = arith.maximumf %28, %29 : vector<128x128xf32>
    %31 = arith.maximumf %21, %30 : vector<128x128xf32>
    %c3 = arith.constant 3 : index
    %c0_17 = arith.constant 0 : index
    %c0_18 = arith.constant 0 : index
    %32 = vector.load %arg1[%c3, %c0_17, %c0_18] : memref<4x128x72xbf16, #tpu.memory_space<vmem>>, vector<1x128x72xbf16>
    %33 = vector.shape_cast %32 : vector<1x128x72xbf16> to vector<128x72xbf16>
    %cst_19 = arith.constant dense<0.000000e+00> : vector<128x128xf32>
    %34 = tpu.matmul %33, %0, %cst_19 {dimension_numbers = #tpu.dot_dimension_numbers<[1], [0], [0], [1], [0, 0, 1, 1], [], []>} : vector<128x72xbf16>, vector<72x128xbf16>, vector<128x128xf32> -> vector<128x128xf32>
    %35 = vector.broadcast %1 : vector<1x128xf32> to vector<128x128xf32>
    %36 = arith.mulf %34, %35 : vector<128x128xf32>
    %37 = vector.broadcast %2 : vector<1x128xf32> to vector<128x128xf32>
    %38 = arith.addf %36, %37 : vector<128x128xf32>
    %cst_20 = arith.constant 0.000000e+00 : f32
    %39 = vector.broadcast %cst_20 : f32 to vector<128x128xf32>
    %40 = arith.maximumf %38, %39 : vector<128x128xf32>
    %41 = arith.maximumf %31, %40 : vector<128x128xf32>
    %42 = arith.truncf %41 : vector<128x128xf32> to vector<128x128xbf16>
    %c0_21 = arith.constant 0 : index
    %c0_22 = arith.constant 0 : index
    %43 = vector.load %arg5[%c0_21, %c0_22] : memref<128x128xbf16, #tpu.memory_space<vmem>>, vector<128x128xbf16>
    tpu.vector_store %arg5[%c0_21, %c0_22], %42 {strides = array<i32>} : memref<128x128xbf16, #tpu.memory_space<vmem>>, vector<128x128xbf16>,
    return
  }
  func.func @transform_0(%arg0: i32) -> (i32, i32, i32) {
    %c0_i32 = arith.constant 0 : i32
    %c0_i32_0 = arith.constant 0 : i32
    %c0_i32_1 = arith.constant 0 : i32
    return %c0_i32, %arg0, %c0_i32_0 : i32, i32, i32
  }
  func.func @transform_1(%arg0: i32) -> (i32, i32) {
    %c0_i32 = arith.constant 0 : i32
    %c0_i32_0 = arith.constant 0 : i32
    %c0_i32_1 = arith.constant 0 : i32
    return %c0_i32, %c0_i32_0 : i32, i32
  }
  func.func @transform_2(%arg0: i32) -> (i32, i32) {
    %c0_i32 = arith.constant 0 : i32
    %c0_i32_0 = arith.constant 0 : i32
    %c0_i32_1 = arith.constant 0 : i32
    return %c0_i32, %c0_i32_0 : i32, i32
  }
  func.func @transform_3(%arg0: i32) -> (i32, i32) {
    %c0_i32 = arith.constant 0 : i32
    %c0_i32_0 = arith.constant 0 : i32
    %c0_i32_1 = arith.constant 0 : i32
    return %c0_i32, %c0_i32_0 : i32, i32
  }
  func.func @transform_4(%arg0: i32) -> (i32, i32) {
    %c0_i32 = arith.constant 0 : i32
    %c0_i32_0 = arith.constant 0 : i32
    return %arg0, %c0_i32 : i32, i32
  }
}

module attributes {stable_mosaic.version = 11 : i64} {
  func.func @conv_bn_relu_kernel(%arg0: i32, %arg1: memref<128x72xbf16, #tpu.memory_space<vmem>>, %arg2: memref<72x128xbf16, #tpu.memory_space<vmem>>, %arg3: memref<1x128xf32, #tpu.memory_space<vmem>>, %arg4: memref<1x128xf32, #tpu.memory_space<vmem>>, %arg5: memref<128x128xbf16, #tpu.memory_space<vmem>>) attributes {dimension_semantics = [#tpu.dimension_semantics<parallel>], iteration_bounds = array<i64: 1>, scalar_prefetch = 0 : i64, scratch_operands = 0 : i64, tpu.core_type = #tpu.core_type<tc>, window_params = [{transform_indices = @transform_0, window_bounds = array<i64: 128, 72>}, {pipeline_mode = #tpu.pipeline_mode<synchronous>, transform_indices = @transform_1, window_bounds = array<i64: 72, 128>}, {pipeline_mode = #tpu.pipeline_mode<synchronous>, transform_indices = @transform_2, window_bounds = array<i64: 1, 128>}, {pipeline_mode = #tpu.pipeline_mode<synchronous>, transform_indices = @transform_3, window_bounds = array<i64: 1, 128>}, {transform_indices = @transform_4, window_bounds = array<i64: 128, 128>}]} {
    %c0 = arith.constant 0 : index
    %c0_0 = arith.constant 0 : index
    %0 = vector.load %arg1[%c0, %c0_0] : memref<128x72xbf16, #tpu.memory_space<vmem>>, vector<128x72xbf16>
    %c0_1 = arith.constant 0 : index
    %c0_2 = arith.constant 0 : index
    %1 = vector.load %arg2[%c0_1, %c0_2] : memref<72x128xbf16, #tpu.memory_space<vmem>>, vector<72x128xbf16>
    %cst = arith.constant dense<0.000000e+00> : vector<128x128xf32>
    %2 = tpu.matmul %0, %1, %cst {dimension_numbers = #tpu.dot_dimension_numbers<[1], [0], [0], [1], [0, 0, 1, 1], [], []>} : vector<128x72xbf16>, vector<72x128xbf16>, vector<128x128xf32> -> vector<128x128xf32>
    %c0_3 = arith.constant 0 : index
    %c0_4 = arith.constant 0 : index
    %3 = vector.load %arg3[%c0_3, %c0_4] : memref<1x128xf32, #tpu.memory_space<vmem>>, vector<1x128xf32>
    %4 = vector.broadcast %3 : vector<1x128xf32> to vector<128x128xf32>
    %5 = arith.mulf %2, %4 : vector<128x128xf32>
    %c0_5 = arith.constant 0 : index
    %c0_6 = arith.constant 0 : index
    %6 = vector.load %arg4[%c0_5, %c0_6] : memref<1x128xf32, #tpu.memory_space<vmem>>, vector<1x128xf32>
    %7 = vector.broadcast %6 : vector<1x128xf32> to vector<128x128xf32>
    %8 = arith.addf %5, %7 : vector<128x128xf32>
    %cst_7 = arith.constant 0.000000e+00 : f32
    %9 = vector.broadcast %cst_7 : f32 to vector<128x128xf32>
    %10 = arith.maximumf %8, %9 : vector<128x128xf32>
    %11 = arith.truncf %10 : vector<128x128xf32> to vector<128x128xbf16>
    %c0_8 = arith.constant 0 : index
    %c0_9 = arith.constant 0 : index
    %12 = vector.load %arg5[%c0_8, %c0_9] : memref<128x128xbf16, #tpu.memory_space<vmem>>, vector<128x128xbf16>
    tpu.vector_store %arg5[%c0_8, %c0_9], %11 {strides = array<i32>} : memref<128x128xbf16, #tpu.memory_space<vmem>>, vector<128x128xbf16>,
    return
  }
  func.func @transform_0(%arg0: i32) -> (i32, i32) {
    %c0_i32 = arith.constant 0 : i32
    %c0_i32_0 = arith.constant 0 : i32
    return %arg0, %c0_i32 : i32, i32
  }
  func.func @transform_1(%arg0: i32) -> (i32, i32) {
    %c0_i32 = arith.constant 0 : i32
    %c0_i32_0 = arith.constant 0 : i32
    %c0_i32_1 = arith.constant 0 : i32
    return %c0_i32, %c0_i32_0 : i32, i32
  }
  func.func @transform_2(%arg0: i32) -> (i32, i32) {
    %c0_i32 = arith.constant 0 : i32
    %c0_i32_0 = arith.constant 0 : i32
    %c0_i32_1 = arith.constant 0 : i32
    return %c0_i32, %c0_i32_0 : i32, i32
  }
  func.func @transform_3(%arg0: i32) -> (i32, i32) {
    %c0_i32 = arith.constant 0 : i32
    %c0_i32_0 = arith.constant 0 : i32
    %c0_i32_1 = arith.constant 0 : i32
    return %c0_i32, %c0_i32_0 : i32, i32
  }
  func.func @transform_4(%arg0: i32) -> (i32, i32) {
    %c0_i32 = arith.constant 0 : i32
    %c0_i32_0 = arith.constant 0 : i32
    return %arg0, %c0_i32 : i32, i32
  }
}

module attributes {stable_mosaic.version = 11 : i64} {
  func.func @conv_bn_relu_kernel(%arg0: i32, %arg1: memref<128x144xbf16, #tpu.memory_space<vmem>>, %arg2: memref<144x128xbf16, #tpu.memory_space<vmem>>, %arg3: memref<1x128xf32, #tpu.memory_space<vmem>>, %arg4: memref<1x128xf32, #tpu.memory_space<vmem>>, %arg5: memref<128x128xbf16, #tpu.memory_space<vmem>>) attributes {dimension_semantics = [#tpu.dimension_semantics<parallel>], iteration_bounds = array<i64: 1>, scalar_prefetch = 0 : i64, scratch_operands = 0 : i64, tpu.core_type = #tpu.core_type<tc>, window_params = [{transform_indices = @transform_0, window_bounds = array<i64: 128, 144>}, {pipeline_mode = #tpu.pipeline_mode<synchronous>, transform_indices = @transform_1, window_bounds = array<i64: 144, 128>}, {pipeline_mode = #tpu.pipeline_mode<synchronous>, transform_indices = @transform_2, window_bounds = array<i64: 1, 128>}, {pipeline_mode = #tpu.pipeline_mode<synchronous>, transform_indices = @transform_3, window_bounds = array<i64: 1, 128>}, {transform_indices = @transform_4, window_bounds = array<i64: 128, 128>}]} {
    %c0 = arith.constant 0 : index
    %c0_0 = arith.constant 0 : index
    %0 = vector.load %arg1[%c0, %c0_0] : memref<128x144xbf16, #tpu.memory_space<vmem>>, vector<128x144xbf16>
    %c0_1 = arith.constant 0 : index
    %c0_2 = arith.constant 0 : index
    %1 = vector.load %arg2[%c0_1, %c0_2] : memref<144x128xbf16, #tpu.memory_space<vmem>>, vector<144x128xbf16>
    %cst = arith.constant dense<0.000000e+00> : vector<128x128xf32>
    %2 = tpu.matmul %0, %1, %cst {dimension_numbers = #tpu.dot_dimension_numbers<[1], [0], [0], [1], [0, 0, 1, 1], [], []>} : vector<128x144xbf16>, vector<144x128xbf16>, vector<128x128xf32> -> vector<128x128xf32>
    %c0_3 = arith.constant 0 : index
    %c0_4 = arith.constant 0 : index
    %3 = vector.load %arg3[%c0_3, %c0_4] : memref<1x128xf32, #tpu.memory_space<vmem>>, vector<1x128xf32>
    %4 = vector.broadcast %3 : vector<1x128xf32> to vector<128x128xf32>
    %5 = arith.mulf %2, %4 : vector<128x128xf32>
    %c0_5 = arith.constant 0 : index
    %c0_6 = arith.constant 0 : index
    %6 = vector.load %arg4[%c0_5, %c0_6] : memref<1x128xf32, #tpu.memory_space<vmem>>, vector<1x128xf32>
    %7 = vector.broadcast %6 : vector<1x128xf32> to vector<128x128xf32>
    %8 = arith.addf %5, %7 : vector<128x128xf32>
    %cst_7 = arith.constant 0.000000e+00 : f32
    %9 = vector.broadcast %cst_7 : f32 to vector<128x128xf32>
    %10 = arith.maximumf %8, %9 : vector<128x128xf32>
    %11 = arith.truncf %10 : vector<128x128xf32> to vector<128x128xbf16>
    %c0_8 = arith.constant 0 : index
    %c0_9 = arith.constant 0 : index
    %12 = vector.load %arg5[%c0_8, %c0_9] : memref<128x128xbf16, #tpu.memory_space<vmem>>, vector<128x128xbf16>
    tpu.vector_store %arg5[%c0_8, %c0_9], %11 {strides = array<i32>} : memref<128x128xbf16, #tpu.memory_space<vmem>>, vector<128x128xbf16>,
    return
  }
  func.func @transform_0(%arg0: i32) -> (i32, i32) {
    %c0_i32 = arith.constant 0 : i32
    %c0_i32_0 = arith.constant 0 : i32
    return %arg0, %c0_i32 : i32, i32
  }
  func.func @transform_1(%arg0: i32) -> (i32, i32) {
    %c0_i32 = arith.constant 0 : i32
    %c0_i32_0 = arith.constant 0 : i32
    %c0_i32_1 = arith.constant 0 : i32
    return %c0_i32, %c0_i32_0 : i32, i32
  }
  func.func @transform_2(%arg0: i32) -> (i32, i32) {
    %c0_i32 = arith.constant 0 : i32
    %c0_i32_0 = arith.constant 0 : i32
    %c0_i32_1 = arith.constant 0 : i32
    return %c0_i32, %c0_i32_0 : i32, i32
  }
  func.func @transform_3(%arg0: i32) -> (i32, i32) {
    %c0_i32 = arith.constant 0 : i32
    %c0_i32_0 = arith.constant 0 : i32
    %c0_i32_1 = arith.constant 0 : i32
    return %c0_i32, %c0_i32_0 : i32, i32
  }
  func.func @transform_4(%arg0: i32) -> (i32, i32) {
    %c0_i32 = arith.constant 0 : i32
    %c0_i32_0 = arith.constant 0 : i32
    return %arg0, %c0_i32 : i32, i32
  }
}

module attributes {stable_mosaic.version = 11 : i64} {
  func.func @conv_bn_relu_pool_kernel(%arg0: i32, %arg1: memref<4x32x144xbf16, #tpu.memory_space<vmem>>, %arg2: memref<144x128xbf16, #tpu.memory_space<vmem>>, %arg3: memref<1x128xf32, #tpu.memory_space<vmem>>, %arg4: memref<1x128xf32, #tpu.memory_space<vmem>>, %arg5: memref<32x128xbf16, #tpu.memory_space<vmem>>) attributes {dimension_semantics = [#tpu.dimension_semantics<parallel>], iteration_bounds = array<i64: 1>, scalar_prefetch = 0 : i64, scratch_operands = 0 : i64, tpu.core_type = #tpu.core_type<tc>, window_params = [{transform_indices = @transform_0, window_bounds = array<i64: 4, 32, 144>}, {pipeline_mode = #tpu.pipeline_mode<synchronous>, transform_indices = @transform_1, window_bounds = array<i64: 144, 128>}, {pipeline_mode = #tpu.pipeline_mode<synchronous>, transform_indices = @transform_2, window_bounds = array<i64: 1, 128>}, {pipeline_mode = #tpu.pipeline_mode<synchronous>, transform_indices = @transform_3, window_bounds = array<i64: 1, 128>}, {transform_indices = @transform_4, window_bounds = array<i64: 32, 128>}]} {
    %c0 = arith.constant 0 : index
    %c0_0 = arith.constant 0 : index
    %0 = vector.load %arg2[%c0, %c0_0] : memref<144x128xbf16, #tpu.memory_space<vmem>>, vector<144x128xbf16>
    %c0_1 = arith.constant 0 : index
    %c0_2 = arith.constant 0 : index
    %1 = vector.load %arg3[%c0_1, %c0_2] : memref<1x128xf32, #tpu.memory_space<vmem>>, vector<1x128xf32>
    %c0_3 = arith.constant 0 : index
    %c0_4 = arith.constant 0 : index
    %2 = vector.load %arg4[%c0_3, %c0_4] : memref<1x128xf32, #tpu.memory_space<vmem>>, vector<1x128xf32>
    %c0_5 = arith.constant 0 : index
    %c0_6 = arith.constant 0 : index
    %c0_7 = arith.constant 0 : index
    %3 = vector.load %arg1[%c0_5, %c0_6, %c0_7] : memref<4x32x144xbf16, #tpu.memory_space<vmem>>, vector<1x32x144xbf16>
    %4 = vector.shape_cast %3 : vector<1x32x144xbf16> to vector<32x144xbf16>
    %cst = arith.constant dense<0.000000e+00> : vector<32x128xf32>
    %5 = tpu.matmul %4, %0, %cst {dimension_numbers = #tpu.dot_dimension_numbers<[1], [0], [0], [1], [0, 0, 1, 1], [], []>} : vector<32x144xbf16>, vector<144x128xbf16>, vector<32x128xf32> -> vector<32x128xf32>
    %6 = vector.broadcast %1 : vector<1x128xf32> to vector<32x128xf32>
    %7 = arith.mulf %5, %6 : vector<32x128xf32>
    %8 = vector.broadcast %2 : vector<1x128xf32> to vector<32x128xf32>
    %9 = arith.addf %7, %8 : vector<32x128xf32>
    %cst_8 = arith.constant 0.000000e+00 : f32
    %10 = vector.broadcast %cst_8 : f32 to vector<32x128xf32>
    %11 = arith.maximumf %9, %10 : vector<32x128xf32>
    %c1 = arith.constant 1 : index
    %c0_9 = arith.constant 0 : index
    %c0_10 = arith.constant 0 : index
    %12 = vector.load %arg1[%c1, %c0_9, %c0_10] : memref<4x32x144xbf16, #tpu.memory_space<vmem>>, vector<1x32x144xbf16>
    %13 = vector.shape_cast %12 : vector<1x32x144xbf16> to vector<32x144xbf16>
    %cst_11 = arith.constant dense<0.000000e+00> : vector<32x128xf32>
    %14 = tpu.matmul %13, %0, %cst_11 {dimension_numbers = #tpu.dot_dimension_numbers<[1], [0], [0], [1], [0, 0, 1, 1], [], []>} : vector<32x144xbf16>, vector<144x128xbf16>, vector<32x128xf32> -> vector<32x128xf32>
    %15 = vector.broadcast %1 : vector<1x128xf32> to vector<32x128xf32>
    %16 = arith.mulf %14, %15 : vector<32x128xf32>
    %17 = vector.broadcast %2 : vector<1x128xf32> to vector<32x128xf32>
    %18 = arith.addf %16, %17 : vector<32x128xf32>
    %cst_12 = arith.constant 0.000000e+00 : f32
    %19 = vector.broadcast %cst_12 : f32 to vector<32x128xf32>
    %20 = arith.maximumf %18, %19 : vector<32x128xf32>
    %21 = arith.maximumf %11, %20 : vector<32x128xf32>
    %c2 = arith.constant 2 : index
    %c0_13 = arith.constant 0 : index
    %c0_14 = arith.constant 0 : index
    %22 = vector.load %arg1[%c2, %c0_13, %c0_14] : memref<4x32x144xbf16, #tpu.memory_space<vmem>>, vector<1x32x144xbf16>
    %23 = vector.shape_cast %22 : vector<1x32x144xbf16> to vector<32x144xbf16>
    %cst_15 = arith.constant dense<0.000000e+00> : vector<32x128xf32>
    %24 = tpu.matmul %23, %0, %cst_15 {dimension_numbers = #tpu.dot_dimension_numbers<[1], [0], [0], [1], [0, 0, 1, 1], [], []>} : vector<32x144xbf16>, vector<144x128xbf16>, vector<32x128xf32> -> vector<32x128xf32>
    %25 = vector.broadcast %1 : vector<1x128xf32> to vector<32x128xf32>
    %26 = arith.mulf %24, %25 : vector<32x128xf32>
    %27 = vector.broadcast %2 : vector<1x128xf32> to vector<32x128xf32>
    %28 = arith.addf %26, %27 : vector<32x128xf32>
    %cst_16 = arith.constant 0.000000e+00 : f32
    %29 = vector.broadcast %cst_16 : f32 to vector<32x128xf32>
    %30 = arith.maximumf %28, %29 : vector<32x128xf32>
    %31 = arith.maximumf %21, %30 : vector<32x128xf32>
    %c3 = arith.constant 3 : index
    %c0_17 = arith.constant 0 : index
    %c0_18 = arith.constant 0 : index
    %32 = vector.load %arg1[%c3, %c0_17, %c0_18] : memref<4x32x144xbf16, #tpu.memory_space<vmem>>, vector<1x32x144xbf16>
    %33 = vector.shape_cast %32 : vector<1x32x144xbf16> to vector<32x144xbf16>
    %cst_19 = arith.constant dense<0.000000e+00> : vector<32x128xf32>
    %34 = tpu.matmul %33, %0, %cst_19 {dimension_numbers = #tpu.dot_dimension_numbers<[1], [0], [0], [1], [0, 0, 1, 1], [], []>} : vector<32x144xbf16>, vector<144x128xbf16>, vector<32x128xf32> -> vector<32x128xf32>
    %35 = vector.broadcast %1 : vector<1x128xf32> to vector<32x128xf32>
    %36 = arith.mulf %34, %35 : vector<32x128xf32>
    %37 = vector.broadcast %2 : vector<1x128xf32> to vector<32x128xf32>
    %38 = arith.addf %36, %37 : vector<32x128xf32>
    %cst_20 = arith.constant 0.000000e+00 : f32
    %39 = vector.broadcast %cst_20 : f32 to vector<32x128xf32>
    %40 = arith.maximumf %38, %39 : vector<32x128xf32>
    %41 = arith.maximumf %31, %40 : vector<32x128xf32>
    %42 = arith.truncf %41 : vector<32x128xf32> to vector<32x128xbf16>
    %c0_21 = arith.constant 0 : index
    %c0_22 = arith.constant 0 : index
    %43 = vector.load %arg5[%c0_21, %c0_22] : memref<32x128xbf16, #tpu.memory_space<vmem>>, vector<32x128xbf16>
    tpu.vector_store %arg5[%c0_21, %c0_22], %42 {strides = array<i32>} : memref<32x128xbf16, #tpu.memory_space<vmem>>, vector<32x128xbf16>,
    return
  }
  func.func @transform_0(%arg0: i32) -> (i32, i32, i32) {
    %c0_i32 = arith.constant 0 : i32
    %c0_i32_0 = arith.constant 0 : i32
    %c0_i32_1 = arith.constant 0 : i32
    return %c0_i32, %arg0, %c0_i32_0 : i32, i32, i32
  }
  func.func @transform_1(%arg0: i32) -> (i32, i32) {
    %c0_i32 = arith.constant 0 : i32
    %c0_i32_0 = arith.constant 0 : i32
    %c0_i32_1 = arith.constant 0 : i32
    return %c0_i32, %c0_i32_0 : i32, i32
  }
  func.func @transform_2(%arg0: i32) -> (i32, i32) {
    %c0_i32 = arith.constant 0 : i32
    %c0_i32_0 = arith.constant 0 : i32
    %c0_i32_1 = arith.constant 0 : i32
    return %c0_i32, %c0_i32_0 : i32, i32
  }
  func.func @transform_3(%arg0: i32) -> (i32, i32) {
    %c0_i32 = arith.constant 0 : i32
    %c0_i32_0 = arith.constant 0 : i32
    %c0_i32_1 = arith.constant 0 : i32
    return %c0_i32, %c0_i32_0 : i32, i32
  }
  func.func @transform_4(%arg0: i32) -> (i32, i32) {
    %c0_i32 = arith.constant 0 : i32
    %c0_i32_0 = arith.constant 0 : i32
    return %arg0, %c0_i32 : i32, i32
  }
}

module attributes {stable_mosaic.version = 11 : i64} {
  func.func @conv_bn_relu_kernel(%arg0: i32, %arg1: memref<32x144xbf16, #tpu.memory_space<vmem>>, %arg2: memref<144x128xbf16, #tpu.memory_space<vmem>>, %arg3: memref<1x128xf32, #tpu.memory_space<vmem>>, %arg4: memref<1x128xf32, #tpu.memory_space<vmem>>, %arg5: memref<32x128xbf16, #tpu.memory_space<vmem>>) attributes {dimension_semantics = [#tpu.dimension_semantics<parallel>], iteration_bounds = array<i64: 1>, scalar_prefetch = 0 : i64, scratch_operands = 0 : i64, tpu.core_type = #tpu.core_type<tc>, window_params = [{transform_indices = @transform_0, window_bounds = array<i64: 32, 144>}, {pipeline_mode = #tpu.pipeline_mode<synchronous>, transform_indices = @transform_1, window_bounds = array<i64: 144, 128>}, {pipeline_mode = #tpu.pipeline_mode<synchronous>, transform_indices = @transform_2, window_bounds = array<i64: 1, 128>}, {pipeline_mode = #tpu.pipeline_mode<synchronous>, transform_indices = @transform_3, window_bounds = array<i64: 1, 128>}, {transform_indices = @transform_4, window_bounds = array<i64: 32, 128>}]} {
    %c0 = arith.constant 0 : index
    %c0_0 = arith.constant 0 : index
    %0 = vector.load %arg1[%c0, %c0_0] : memref<32x144xbf16, #tpu.memory_space<vmem>>, vector<32x144xbf16>
    %c0_1 = arith.constant 0 : index
    %c0_2 = arith.constant 0 : index
    %1 = vector.load %arg2[%c0_1, %c0_2] : memref<144x128xbf16, #tpu.memory_space<vmem>>, vector<144x128xbf16>
    %cst = arith.constant dense<0.000000e+00> : vector<32x128xf32>
    %2 = tpu.matmul %0, %1, %cst {dimension_numbers = #tpu.dot_dimension_numbers<[1], [0], [0], [1], [0, 0, 1, 1], [], []>} : vector<32x144xbf16>, vector<144x128xbf16>, vector<32x128xf32> -> vector<32x128xf32>
    %c0_3 = arith.constant 0 : index
    %c0_4 = arith.constant 0 : index
    %3 = vector.load %arg3[%c0_3, %c0_4] : memref<1x128xf32, #tpu.memory_space<vmem>>, vector<1x128xf32>
    %4 = vector.broadcast %3 : vector<1x128xf32> to vector<32x128xf32>
    %5 = arith.mulf %2, %4 : vector<32x128xf32>
    %c0_5 = arith.constant 0 : index
    %c0_6 = arith.constant 0 : index
    %6 = vector.load %arg4[%c0_5, %c0_6] : memref<1x128xf32, #tpu.memory_space<vmem>>, vector<1x128xf32>
    %7 = vector.broadcast %6 : vector<1x128xf32> to vector<32x128xf32>
    %8 = arith.addf %5, %7 : vector<32x128xf32>
    %cst_7 = arith.constant 0.000000e+00 : f32
    %9 = vector.broadcast %cst_7 : f32 to vector<32x128xf32>
    %10 = arith.maximumf %8, %9 : vector<32x128xf32>
    %11 = arith.truncf %10 : vector<32x128xf32> to vector<32x128xbf16>
    %c0_8 = arith.constant 0 : index
    %c0_9 = arith.constant 0 : index
    %12 = vector.load %arg5[%c0_8, %c0_9] : memref<32x128xbf16, #tpu.memory_space<vmem>>, vector<32x128xbf16>
    tpu.vector_store %arg5[%c0_8, %c0_9], %11 {strides = array<i32>} : memref<32x128xbf16, #tpu.memory_space<vmem>>, vector<32x128xbf16>,
    return
  }
  func.func @transform_0(%arg0: i32) -> (i32, i32) {
    %c0_i32 = arith.constant 0 : i32
    %c0_i32_0 = arith.constant 0 : i32
    return %arg0, %c0_i32 : i32, i32
  }
  func.func @transform_1(%arg0: i32) -> (i32, i32) {
    %c0_i32 = arith.constant 0 : i32
    %c0_i32_0 = arith.constant 0 : i32
    %c0_i32_1 = arith.constant 0 : i32
    return %c0_i32, %c0_i32_0 : i32, i32
  }
  func.func @transform_2(%arg0: i32) -> (i32, i32) {
    %c0_i32 = arith.constant 0 : i32
    %c0_i32_0 = arith.constant 0 : i32
    %c0_i32_1 = arith.constant 0 : i32
    return %c0_i32, %c0_i32_0 : i32, i32
  }
  func.func @transform_3(%arg0: i32) -> (i32, i32) {
    %c0_i32 = arith.constant 0 : i32
    %c0_i32_0 = arith.constant 0 : i32
    %c0_i32_1 = arith.constant 0 : i32
    return %c0_i32, %c0_i32_0 : i32, i32
  }
  func.func @transform_4(%arg0: i32) -> (i32, i32) {
    %c0_i32 = arith.constant 0 : i32
    %c0_i32_0 = arith.constant 0 : i32
    return %arg0, %c0_i32 : i32, i32
  }
}

module attributes {stable_mosaic.version = 11 : i64} {
  func.func @conv_bn_relu_kernel(%arg0: i32, %arg1: memref<32x288xbf16, #tpu.memory_space<vmem>>, %arg2: memref<288x128xbf16, #tpu.memory_space<vmem>>, %arg3: memref<1x128xf32, #tpu.memory_space<vmem>>, %arg4: memref<1x128xf32, #tpu.memory_space<vmem>>, %arg5: memref<32x128xbf16, #tpu.memory_space<vmem>>) attributes {dimension_semantics = [#tpu.dimension_semantics<parallel>], iteration_bounds = array<i64: 1>, scalar_prefetch = 0 : i64, scratch_operands = 0 : i64, tpu.core_type = #tpu.core_type<tc>, window_params = [{transform_indices = @transform_0, window_bounds = array<i64: 32, 288>}, {pipeline_mode = #tpu.pipeline_mode<synchronous>, transform_indices = @transform_1, window_bounds = array<i64: 288, 128>}, {pipeline_mode = #tpu.pipeline_mode<synchronous>, transform_indices = @transform_2, window_bounds = array<i64: 1, 128>}, {pipeline_mode = #tpu.pipeline_mode<synchronous>, transform_indices = @transform_3, window_bounds = array<i64: 1, 128>}, {transform_indices = @transform_4, window_bounds = array<i64: 32, 128>}]} {
    %c0 = arith.constant 0 : index
    %c0_0 = arith.constant 0 : index
    %0 = vector.load %arg1[%c0, %c0_0] : memref<32x288xbf16, #tpu.memory_space<vmem>>, vector<32x288xbf16>
    %c0_1 = arith.constant 0 : index
    %c0_2 = arith.constant 0 : index
    %1 = vector.load %arg2[%c0_1, %c0_2] : memref<288x128xbf16, #tpu.memory_space<vmem>>, vector<288x128xbf16>
    %cst = arith.constant dense<0.000000e+00> : vector<32x128xf32>
    %2 = tpu.matmul %0, %1, %cst {dimension_numbers = #tpu.dot_dimension_numbers<[1], [0], [0], [1], [0, 0, 1, 1], [], []>} : vector<32x288xbf16>, vector<288x128xbf16>, vector<32x128xf32> -> vector<32x128xf32>
    %c0_3 = arith.constant 0 : index
    %c0_4 = arith.constant 0 : index
    %3 = vector.load %arg3[%c0_3, %c0_4] : memref<1x128xf32, #tpu.memory_space<vmem>>, vector<1x128xf32>
    %4 = vector.broadcast %3 : vector<1x128xf32> to vector<32x128xf32>
    %5 = arith.mulf %2, %4 : vector<32x128xf32>
    %c0_5 = arith.constant 0 : index
    %c0_6 = arith.constant 0 : index
    %6 = vector.load %arg4[%c0_5, %c0_6] : memref<1x128xf32, #tpu.memory_space<vmem>>, vector<1x128xf32>
    %7 = vector.broadcast %6 : vector<1x128xf32> to vector<32x128xf32>
    %8 = arith.addf %5, %7 : vector<32x128xf32>
    %cst_7 = arith.constant 0.000000e+00 : f32
    %9 = vector.broadcast %cst_7 : f32 to vector<32x128xf32>
    %10 = arith.maximumf %8, %9 : vector<32x128xf32>
    %11 = arith.truncf %10 : vector<32x128xf32> to vector<32x128xbf16>
    %c0_8 = arith.constant 0 : index
    %c0_9 = arith.constant 0 : index
    %12 = vector.load %arg5[%c0_8, %c0_9] : memref<32x128xbf16, #tpu.memory_space<vmem>>, vector<32x128xbf16>
    tpu.vector_store %arg5[%c0_8, %c0_9], %11 {strides = array<i32>} : memref<32x128xbf16, #tpu.memory_space<vmem>>, vector<32x128xbf16>,
    return
  }
  func.func @transform_0(%arg0: i32) -> (i32, i32) {
    %c0_i32 = arith.constant 0 : i32
    %c0_i32_0 = arith.constant 0 : i32
    return %arg0, %c0_i32 : i32, i32
  }
  func.func @transform_1(%arg0: i32) -> (i32, i32) {
    %c0_i32 = arith.constant 0 : i32
    %c0_i32_0 = arith.constant 0 : i32
    %c0_i32_1 = arith.constant 0 : i32
    return %c0_i32, %c0_i32_0 : i32, i32
  }
  func.func @transform_2(%arg0: i32) -> (i32, i32) {
    %c0_i32 = arith.constant 0 : i32
    %c0_i32_0 = arith.constant 0 : i32
    %c0_i32_1 = arith.constant 0 : i32
    return %c0_i32, %c0_i32_0 : i32, i32
  }
  func.func @transform_3(%arg0: i32) -> (i32, i32) {
    %c0_i32 = arith.constant 0 : i32
    %c0_i32_0 = arith.constant 0 : i32
    %c0_i32_1 = arith.constant 0 : i32
    return %c0_i32, %c0_i32_0 : i32, i32
  }
  func.func @transform_4(%arg0: i32) -> (i32, i32) {
    %c0_i32 = arith.constant 0 : i32
    %c0_i32_0 = arith.constant 0 : i32
    return %arg0, %c0_i32 : i32, i32
  }
}

module attributes {stable_mosaic.version = 11 : i64} {
  func.func @conv_bn_relu_pool_kernel(%arg0: i32, %arg1: memref<4x8x288xbf16, #tpu.memory_space<vmem>>, %arg2: memref<288x128xbf16, #tpu.memory_space<vmem>>, %arg3: memref<1x128xf32, #tpu.memory_space<vmem>>, %arg4: memref<1x128xf32, #tpu.memory_space<vmem>>, %arg5: memref<8x128xbf16, #tpu.memory_space<vmem>>) attributes {dimension_semantics = [#tpu.dimension_semantics<parallel>], iteration_bounds = array<i64: 1>, scalar_prefetch = 0 : i64, scratch_operands = 0 : i64, tpu.core_type = #tpu.core_type<tc>, window_params = [{transform_indices = @transform_0, window_bounds = array<i64: 4, 8, 288>}, {pipeline_mode = #tpu.pipeline_mode<synchronous>, transform_indices = @transform_1, window_bounds = array<i64: 288, 128>}, {pipeline_mode = #tpu.pipeline_mode<synchronous>, transform_indices = @transform_2, window_bounds = array<i64: 1, 128>}, {pipeline_mode = #tpu.pipeline_mode<synchronous>, transform_indices = @transform_3, window_bounds = array<i64: 1, 128>}, {transform_indices = @transform_4, window_bounds = array<i64: 8, 128>}]} {
    %c0 = arith.constant 0 : index
    %c0_0 = arith.constant 0 : index
    %0 = vector.load %arg2[%c0, %c0_0] : memref<288x128xbf16, #tpu.memory_space<vmem>>, vector<288x128xbf16>
    %c0_1 = arith.constant 0 : index
    %c0_2 = arith.constant 0 : index
    %1 = vector.load %arg3[%c0_1, %c0_2] : memref<1x128xf32, #tpu.memory_space<vmem>>, vector<1x128xf32>
    %c0_3 = arith.constant 0 : index
    %c0_4 = arith.constant 0 : index
    %2 = vector.load %arg4[%c0_3, %c0_4] : memref<1x128xf32, #tpu.memory_space<vmem>>, vector<1x128xf32>
    %c0_5 = arith.constant 0 : index
    %c0_6 = arith.constant 0 : index
    %c0_7 = arith.constant 0 : index
    %3 = vector.load %arg1[%c0_5, %c0_6, %c0_7] : memref<4x8x288xbf16, #tpu.memory_space<vmem>>, vector<1x8x288xbf16>
    %4 = vector.shape_cast %3 : vector<1x8x288xbf16> to vector<8x288xbf16>
    %cst = arith.constant dense<0.000000e+00> : vector<8x128xf32>
    %5 = tpu.matmul %4, %0, %cst {dimension_numbers = #tpu.dot_dimension_numbers<[1], [0], [0], [1], [0, 0, 1, 1], [], []>} : vector<8x288xbf16>, vector<288x128xbf16>, vector<8x128xf32> -> vector<8x128xf32>
    %6 = vector.broadcast %1 : vector<1x128xf32> to vector<8x128xf32>
    %7 = arith.mulf %5, %6 : vector<8x128xf32>
    %8 = vector.broadcast %2 : vector<1x128xf32> to vector<8x128xf32>
    %9 = arith.addf %7, %8 : vector<8x128xf32>
    %cst_8 = arith.constant 0.000000e+00 : f32
    %10 = vector.broadcast %cst_8 : f32 to vector<8x128xf32>
    %11 = arith.maximumf %9, %10 : vector<8x128xf32>
    %c1 = arith.constant 1 : index
    %c0_9 = arith.constant 0 : index
    %c0_10 = arith.constant 0 : index
    %12 = vector.load %arg1[%c1, %c0_9, %c0_10] : memref<4x8x288xbf16, #tpu.memory_space<vmem>>, vector<1x8x288xbf16>
    %13 = vector.shape_cast %12 : vector<1x8x288xbf16> to vector<8x288xbf16>
    %cst_11 = arith.constant dense<0.000000e+00> : vector<8x128xf32>
    %14 = tpu.matmul %13, %0, %cst_11 {dimension_numbers = #tpu.dot_dimension_numbers<[1], [0], [0], [1], [0, 0, 1, 1], [], []>} : vector<8x288xbf16>, vector<288x128xbf16>, vector<8x128xf32> -> vector<8x128xf32>
    %15 = vector.broadcast %1 : vector<1x128xf32> to vector<8x128xf32>
    %16 = arith.mulf %14, %15 : vector<8x128xf32>
    %17 = vector.broadcast %2 : vector<1x128xf32> to vector<8x128xf32>
    %18 = arith.addf %16, %17 : vector<8x128xf32>
    %cst_12 = arith.constant 0.000000e+00 : f32
    %19 = vector.broadcast %cst_12 : f32 to vector<8x128xf32>
    %20 = arith.maximumf %18, %19 : vector<8x128xf32>
    %21 = arith.maximumf %11, %20 : vector<8x128xf32>
    %c2 = arith.constant 2 : index
    %c0_13 = arith.constant 0 : index
    %c0_14 = arith.constant 0 : index
    %22 = vector.load %arg1[%c2, %c0_13, %c0_14] : memref<4x8x288xbf16, #tpu.memory_space<vmem>>, vector<1x8x288xbf16>
    %23 = vector.shape_cast %22 : vector<1x8x288xbf16> to vector<8x288xbf16>
    %cst_15 = arith.constant dense<0.000000e+00> : vector<8x128xf32>
    %24 = tpu.matmul %23, %0, %cst_15 {dimension_numbers = #tpu.dot_dimension_numbers<[1], [0], [0], [1], [0, 0, 1, 1], [], []>} : vector<8x288xbf16>, vector<288x128xbf16>, vector<8x128xf32> -> vector<8x128xf32>
    %25 = vector.broadcast %1 : vector<1x128xf32> to vector<8x128xf32>
    %26 = arith.mulf %24, %25 : vector<8x128xf32>
    %27 = vector.broadcast %2 : vector<1x128xf32> to vector<8x128xf32>
    %28 = arith.addf %26, %27 : vector<8x128xf32>
    %cst_16 = arith.constant 0.000000e+00 : f32
    %29 = vector.broadcast %cst_16 : f32 to vector<8x128xf32>
    %30 = arith.maximumf %28, %29 : vector<8x128xf32>
    %31 = arith.maximumf %21, %30 : vector<8x128xf32>
    %c3 = arith.constant 3 : index
    %c0_17 = arith.constant 0 : index
    %c0_18 = arith.constant 0 : index
    %32 = vector.load %arg1[%c3, %c0_17, %c0_18] : memref<4x8x288xbf16, #tpu.memory_space<vmem>>, vector<1x8x288xbf16>
    %33 = vector.shape_cast %32 : vector<1x8x288xbf16> to vector<8x288xbf16>
    %cst_19 = arith.constant dense<0.000000e+00> : vector<8x128xf32>
    %34 = tpu.matmul %33, %0, %cst_19 {dimension_numbers = #tpu.dot_dimension_numbers<[1], [0], [0], [1], [0, 0, 1, 1], [], []>} : vector<8x288xbf16>, vector<288x128xbf16>, vector<8x128xf32> -> vector<8x128xf32>
    %35 = vector.broadcast %1 : vector<1x128xf32> to vector<8x128xf32>
    %36 = arith.mulf %34, %35 : vector<8x128xf32>
    %37 = vector.broadcast %2 : vector<1x128xf32> to vector<8x128xf32>
    %38 = arith.addf %36, %37 : vector<8x128xf32>
    %cst_20 = arith.constant 0.000000e+00 : f32
    %39 = vector.broadcast %cst_20 : f32 to vector<8x128xf32>
    %40 = arith.maximumf %38, %39 : vector<8x128xf32>
    %41 = arith.maximumf %31, %40 : vector<8x128xf32>
    %42 = arith.truncf %41 : vector<8x128xf32> to vector<8x128xbf16>
    %c0_21 = arith.constant 0 : index
    %c0_22 = arith.constant 0 : index
    %43 = vector.load %arg5[%c0_21, %c0_22] : memref<8x128xbf16, #tpu.memory_space<vmem>>, vector<8x128xbf16>
    tpu.vector_store %arg5[%c0_21, %c0_22], %42 {strides = array<i32>} : memref<8x128xbf16, #tpu.memory_space<vmem>>, vector<8x128xbf16>,
    return
  }
  func.func @transform_0(%arg0: i32) -> (i32, i32, i32) {
    %c0_i32 = arith.constant 0 : i32
    %c0_i32_0 = arith.constant 0 : i32
    %c0_i32_1 = arith.constant 0 : i32
    return %c0_i32, %arg0, %c0_i32_0 : i32, i32, i32
  }
  func.func @transform_1(%arg0: i32) -> (i32, i32) {
    %c0_i32 = arith.constant 0 : i32
    %c0_i32_0 = arith.constant 0 : i32
    %c0_i32_1 = arith.constant 0 : i32
    return %c0_i32, %c0_i32_0 : i32, i32
  }
  func.func @transform_2(%arg0: i32) -> (i32, i32) {
    %c0_i32 = arith.constant 0 : i32
    %c0_i32_0 = arith.constant 0 : i32
    %c0_i32_1 = arith.constant 0 : i32
    return %c0_i32, %c0_i32_0 : i32, i32
  }
  func.func @transform_3(%arg0: i32) -> (i32, i32) {
    %c0_i32 = arith.constant 0 : i32
    %c0_i32_0 = arith.constant 0 : i32
    %c0_i32_1 = arith.constant 0 : i32
    return %c0_i32, %c0_i32_0 : i32, i32
  }
  func.func @transform_4(%arg0: i32) -> (i32, i32) {
    %c0_i32 = arith.constant 0 : i32
    %c0_i32_0 = arith.constant 0 : i32
    return %arg0, %c0_i32 : i32, i32
  }
}

module attributes {stable_mosaic.version = 11 : i64} {
  func.func @conv_bn_relu_kernel(%arg0: i32, %arg1: memref<8x288xbf16, #tpu.memory_space<vmem>>, %arg2: memref<288x128xbf16, #tpu.memory_space<vmem>>, %arg3: memref<1x128xf32, #tpu.memory_space<vmem>>, %arg4: memref<1x128xf32, #tpu.memory_space<vmem>>, %arg5: memref<8x128xbf16, #tpu.memory_space<vmem>>) attributes {dimension_semantics = [#tpu.dimension_semantics<parallel>], iteration_bounds = array<i64: 1>, scalar_prefetch = 0 : i64, scratch_operands = 0 : i64, tpu.core_type = #tpu.core_type<tc>, window_params = [{transform_indices = @transform_0, window_bounds = array<i64: 8, 288>}, {pipeline_mode = #tpu.pipeline_mode<synchronous>, transform_indices = @transform_1, window_bounds = array<i64: 288, 128>}, {pipeline_mode = #tpu.pipeline_mode<synchronous>, transform_indices = @transform_2, window_bounds = array<i64: 1, 128>}, {pipeline_mode = #tpu.pipeline_mode<synchronous>, transform_indices = @transform_3, window_bounds = array<i64: 1, 128>}, {transform_indices = @transform_4, window_bounds = array<i64: 8, 128>}]} {
    %c0 = arith.constant 0 : index
    %c0_0 = arith.constant 0 : index
    %0 = vector.load %arg1[%c0, %c0_0] : memref<8x288xbf16, #tpu.memory_space<vmem>>, vector<8x288xbf16>
    %c0_1 = arith.constant 0 : index
    %c0_2 = arith.constant 0 : index
    %1 = vector.load %arg2[%c0_1, %c0_2] : memref<288x128xbf16, #tpu.memory_space<vmem>>, vector<288x128xbf16>
    %cst = arith.constant dense<0.000000e+00> : vector<8x128xf32>
    %2 = tpu.matmul %0, %1, %cst {dimension_numbers = #tpu.dot_dimension_numbers<[1], [0], [0], [1], [0, 0, 1, 1], [], []>} : vector<8x288xbf16>, vector<288x128xbf16>, vector<8x128xf32> -> vector<8x128xf32>
    %c0_3 = arith.constant 0 : index
    %c0_4 = arith.constant 0 : index
    %3 = vector.load %arg3[%c0_3, %c0_4] : memref<1x128xf32, #tpu.memory_space<vmem>>, vector<1x128xf32>
    %4 = vector.broadcast %3 : vector<1x128xf32> to vector<8x128xf32>
    %5 = arith.mulf %2, %4 : vector<8x128xf32>
    %c0_5 = arith.constant 0 : index
    %c0_6 = arith.constant 0 : index
    %6 = vector.load %arg4[%c0_5, %c0_6] : memref<1x128xf32, #tpu.memory_space<vmem>>, vector<1x128xf32>
    %7 = vector.broadcast %6 : vector<1x128xf32> to vector<8x128xf32>
    %8 = arith.addf %5, %7 : vector<8x128xf32>
    %cst_7 = arith.constant 0.000000e+00 : f32
    %9 = vector.broadcast %cst_7 : f32 to vector<8x128xf32>
    %10 = arith.maximumf %8, %9 : vector<8x128xf32>
    %11 = arith.truncf %10 : vector<8x128xf32> to vector<8x128xbf16>
    %c0_8 = arith.constant 0 : index
    %c0_9 = arith.constant 0 : index
    %12 = vector.load %arg5[%c0_8, %c0_9] : memref<8x128xbf16, #tpu.memory_space<vmem>>, vector<8x128xbf16>
    tpu.vector_store %arg5[%c0_8, %c0_9], %11 {strides = array<i32>} : memref<8x128xbf16, #tpu.memory_space<vmem>>, vector<8x128xbf16>,
    return
  }
  func.func @transform_0(%arg0: i32) -> (i32, i32) {
    %c0_i32 = arith.constant 0 : i32
    %c0_i32_0 = arith.constant 0 : i32
    return %arg0, %c0_i32 : i32, i32
  }
  func.func @transform_1(%arg0: i32) -> (i32, i32) {
    %c0_i32 = arith.constant 0 : i32
    %c0_i32_0 = arith.constant 0 : i32
    %c0_i32_1 = arith.constant 0 : i32
    return %c0_i32, %c0_i32_0 : i32, i32
  }
  func.func @transform_2(%arg0: i32) -> (i32, i32) {
    %c0_i32 = arith.constant 0 : i32
    %c0_i32_0 = arith.constant 0 : i32
    %c0_i32_1 = arith.constant 0 : i32
    return %c0_i32, %c0_i32_0 : i32, i32
  }
  func.func @transform_3(%arg0: i32) -> (i32, i32) {
    %c0_i32 = arith.constant 0 : i32
    %c0_i32_0 = arith.constant 0 : i32
    %c0_i32_1 = arith.constant 0 : i32
    return %c0_i32, %c0_i32_0 : i32, i32
  }
  func.func @transform_4(%arg0: i32) -> (i32, i32) {
    %c0_i32 = arith.constant 0 : i32
    %c0_i32_0 = arith.constant 0 : i32
    return %arg0, %c0_i32 : i32, i32
  }
}

module attributes {stable_mosaic.version = 11 : i64} {
  func.func @final_conv_classifier_kernel(%arg0: i32, %arg1: memref<4x2x288xbf16, #tpu.memory_space<vmem>>, %arg2: memref<288x128xbf16, #tpu.memory_space<vmem>>, %arg3: memref<1x128xf32, #tpu.memory_space<vmem>>, %arg4: memref<1x128xf32, #tpu.memory_space<vmem>>, %arg5: memref<128x128xf32, #tpu.memory_space<vmem>>, %arg6: memref<1x128xf32, #tpu.memory_space<vmem>>, %arg7: memref<128x128xf32, #tpu.memory_space<vmem>>, %arg8: memref<1x128xf32, #tpu.memory_space<vmem>>, %arg9: memref<2x128xf32, #tpu.memory_space<vmem>>) attributes {dimension_semantics = [#tpu.dimension_semantics<parallel>], iteration_bounds = array<i64: 1>, scalar_prefetch = 0 : i64, scratch_operands = 0 : i64, tpu.core_type = #tpu.core_type<tc>, window_params = [{pipeline_mode = #tpu.pipeline_mode<synchronous>, transform_indices = @transform_0, window_bounds = array<i64: 4, 2, 288>}, {pipeline_mode = #tpu.pipeline_mode<synchronous>, transform_indices = @transform_1, window_bounds = array<i64: 288, 128>}, {pipeline_mode = #tpu.pipeline_mode<synchronous>, transform_indices = @transform_2, window_bounds = array<i64: 1, 128>}, {pipeline_mode = #tpu.pipeline_mode<synchronous>, transform_indices = @transform_3, window_bounds = array<i64: 1, 128>}, {pipeline_mode = #tpu.pipeline_mode<synchronous>, transform_indices = @transform_4, window_bounds = array<i64: 128, 128>}, {pipeline_mode = #tpu.pipeline_mode<synchronous>, transform_indices = @transform_5, window_bounds = array<i64: 1, 128>}, {pipeline_mode = #tpu.pipeline_mode<synchronous>, transform_indices = @transform_6, window_bounds = array<i64: 128, 128>}, {pipeline_mode = #tpu.pipeline_mode<synchronous>, transform_indices = @transform_7, window_bounds = array<i64: 1, 128>}, {transform_indices = @transform_8, window_bounds = array<i64: 2, 128>}]} {
    %c0 = arith.constant 0 : index
    %c0_0 = arith.constant 0 : index
    %0 = vector.load %arg2[%c0, %c0_0] : memref<288x128xbf16, #tpu.memory_space<vmem>>, vector<288x128xbf16>
    %c0_1 = arith.constant 0 : index
    %c0_2 = arith.constant 0 : index
    %1 = vector.load %arg3[%c0_1, %c0_2] : memref<1x128xf32, #tpu.memory_space<vmem>>, vector<1x128xf32>
    %c0_3 = arith.constant 0 : index
    %c0_4 = arith.constant 0 : index
    %2 = vector.load %arg4[%c0_3, %c0_4] : memref<1x128xf32, #tpu.memory_space<vmem>>, vector<1x128xf32>
    %c0_5 = arith.constant 0 : index
    %c0_6 = arith.constant 0 : index
    %c0_7 = arith.constant 0 : index
    %3 = vector.load %arg1[%c0_5, %c0_6, %c0_7] : memref<4x2x288xbf16, #tpu.memory_space<vmem>>, vector<1x2x288xbf16>
    %4 = vector.shape_cast %3 : vector<1x2x288xbf16> to vector<2x288xbf16>
    %cst = arith.constant dense<0.000000e+00> : vector<2x128xf32>
    %5 = tpu.matmul %4, %0, %cst {dimension_numbers = #tpu.dot_dimension_numbers<[1], [0], [0], [1], [0, 0, 1, 1], [], []>} : vector<2x288xbf16>, vector<288x128xbf16>, vector<2x128xf32> -> vector<2x128xf32>
    %6 = vector.broadcast %1 : vector<1x128xf32> to vector<2x128xf32>
    %7 = arith.mulf %5, %6 : vector<2x128xf32>
    %8 = vector.broadcast %2 : vector<1x128xf32> to vector<2x128xf32>
    %9 = arith.addf %7, %8 : vector<2x128xf32>
    %cst_8 = arith.constant 0.000000e+00 : f32
    %10 = vector.broadcast %cst_8 : f32 to vector<2x128xf32>
    %11 = arith.maximumf %9, %10 : vector<2x128xf32>
    %c1 = arith.constant 1 : index
    %c0_9 = arith.constant 0 : index
    %c0_10 = arith.constant 0 : index
    %12 = vector.load %arg1[%c1, %c0_9, %c0_10] : memref<4x2x288xbf16, #tpu.memory_space<vmem>>, vector<1x2x288xbf16>
    %13 = vector.shape_cast %12 : vector<1x2x288xbf16> to vector<2x288xbf16>
    %cst_11 = arith.constant dense<0.000000e+00> : vector<2x128xf32>
    %14 = tpu.matmul %13, %0, %cst_11 {dimension_numbers = #tpu.dot_dimension_numbers<[1], [0], [0], [1], [0, 0, 1, 1], [], []>} : vector<2x288xbf16>, vector<288x128xbf16>, vector<2x128xf32> -> vector<2x128xf32>
    %15 = vector.broadcast %1 : vector<1x128xf32> to vector<2x128xf32>
    %16 = arith.mulf %14, %15 : vector<2x128xf32>
    %17 = vector.broadcast %2 : vector<1x128xf32> to vector<2x128xf32>
    %18 = arith.addf %16, %17 : vector<2x128xf32>
    %cst_12 = arith.constant 0.000000e+00 : f32
    %19 = vector.broadcast %cst_12 : f32 to vector<2x128xf32>
    %20 = arith.maximumf %18, %19 : vector<2x128xf32>
    %21 = arith.maximumf %11, %20 : vector<2x128xf32>
    %c2 = arith.constant 2 : index
    %c0_13 = arith.constant 0 : index
    %c0_14 = arith.constant 0 : index
    %22 = vector.load %arg1[%c2, %c0_13, %c0_14] : memref<4x2x288xbf16, #tpu.memory_space<vmem>>, vector<1x2x288xbf16>
    %23 = vector.shape_cast %22 : vector<1x2x288xbf16> to vector<2x288xbf16>
    %cst_15 = arith.constant dense<0.000000e+00> : vector<2x128xf32>
    %24 = tpu.matmul %23, %0, %cst_15 {dimension_numbers = #tpu.dot_dimension_numbers<[1], [0], [0], [1], [0, 0, 1, 1], [], []>} : vector<2x288xbf16>, vector<288x128xbf16>, vector<2x128xf32> -> vector<2x128xf32>
    %25 = vector.broadcast %1 : vector<1x128xf32> to vector<2x128xf32>
    %26 = arith.mulf %24, %25 : vector<2x128xf32>
    %27 = vector.broadcast %2 : vector<1x128xf32> to vector<2x128xf32>
    %28 = arith.addf %26, %27 : vector<2x128xf32>
    %cst_16 = arith.constant 0.000000e+00 : f32
    %29 = vector.broadcast %cst_16 : f32 to vector<2x128xf32>
    %30 = arith.maximumf %28, %29 : vector<2x128xf32>
    %31 = arith.maximumf %21, %30 : vector<2x128xf32>
    %c3 = arith.constant 3 : index
    %c0_17 = arith.constant 0 : index
    %c0_18 = arith.constant 0 : index
    %32 = vector.load %arg1[%c3, %c0_17, %c0_18] : memref<4x2x288xbf16, #tpu.memory_space<vmem>>, vector<1x2x288xbf16>
    %33 = vector.shape_cast %32 : vector<1x2x288xbf16> to vector<2x288xbf16>
    %cst_19 = arith.constant dense<0.000000e+00> : vector<2x128xf32>
    %34 = tpu.matmul %33, %0, %cst_19 {dimension_numbers = #tpu.dot_dimension_numbers<[1], [0], [0], [1], [0, 0, 1, 1], [], []>} : vector<2x288xbf16>, vector<288x128xbf16>, vector<2x128xf32> -> vector<2x128xf32>
    %35 = vector.broadcast %1 : vector<1x128xf32> to vector<2x128xf32>
    %36 = arith.mulf %34, %35 : vector<2x128xf32>
    %37 = vector.broadcast %2 : vector<1x128xf32> to vector<2x128xf32>
    %38 = arith.addf %36, %37 : vector<2x128xf32>
    %cst_20 = arith.constant 0.000000e+00 : f32
    %39 = vector.broadcast %cst_20 : f32 to vector<2x128xf32>
    %40 = arith.maximumf %38, %39 : vector<2x128xf32>
    %41 = arith.maximumf %31, %40 : vector<2x128xf32>
    %c0_21 = arith.constant 0 : index
    %c0_22 = arith.constant 0 : index
    %42 = vector.load %arg5[%c0_21, %c0_22] : memref<128x128xf32, #tpu.memory_space<vmem>>, vector<128x128xf32>
    %cst_23 = arith.constant dense<0.000000e+00> : vector<2x128xf32>
    %43 = tpu.matmul %41, %42, %cst_23 {dimension_numbers = #tpu.dot_dimension_numbers<[1], [0], [0], [1], [0, 0, 1, 1], [], []>} : vector<2x128xf32>, vector<128x128xf32>, vector<2x128xf32> -> vector<2x128xf32>
    %c0_24 = arith.constant 0 : index
    %c0_25 = arith.constant 0 : index
    %44 = vector.load %arg6[%c0_24, %c0_25] : memref<1x128xf32, #tpu.memory_space<vmem>>, vector<1x128xf32>
    %45 = vector.broadcast %44 : vector<1x128xf32> to vector<2x128xf32>
    %46 = arith.addf %43, %45 : vector<2x128xf32>
    %cst_26 = arith.constant 0.000000e+00 : f32
    %47 = vector.broadcast %cst_26 : f32 to vector<2x128xf32>
    %48 = arith.maximumf %46, %47 : vector<2x128xf32>
    %c0_27 = arith.constant 0 : index
    %c0_28 = arith.constant 0 : index
    %49 = vector.load %arg7[%c0_27, %c0_28] : memref<128x128xf32, #tpu.memory_space<vmem>>, vector<128x128xf32>
    %cst_29 = arith.constant dense<0.000000e+00> : vector<2x128xf32>
    %50 = tpu.matmul %48, %49, %cst_29 {dimension_numbers = #tpu.dot_dimension_numbers<[1], [0], [0], [1], [0, 0, 1, 1], [], []>} : vector<2x128xf32>, vector<128x128xf32>, vector<2x128xf32> -> vector<2x128xf32>
    %c0_30 = arith.constant 0 : index
    %c0_31 = arith.constant 0 : index
    %51 = vector.load %arg8[%c0_30, %c0_31] : memref<1x128xf32, #tpu.memory_space<vmem>>, vector<1x128xf32>
    %52 = vector.broadcast %51 : vector<1x128xf32> to vector<2x128xf32>
    %53 = arith.addf %50, %52 : vector<2x128xf32>
    %cst_32 = arith.constant 0.000000e+00 : f32
    %54 = vector.broadcast %cst_32 : f32 to vector<2x128xf32>
    %55 = arith.maximumf %53, %54 : vector<2x128xf32>
    %c0_33 = arith.constant 0 : index
    %c0_34 = arith.constant 0 : index
    %56 = vector.load %arg9[%c0_33, %c0_34] : memref<2x128xf32, #tpu.memory_space<vmem>>, vector<2x128xf32>
    tpu.vector_store %arg9[%c0_33, %c0_34], %55 {strides = array<i32>} : memref<2x128xf32, #tpu.memory_space<vmem>>, vector<2x128xf32>,
    return
  }
  func.func @transform_0(%arg0: i32) -> (i32, i32, i32) {
    %c0_i32 = arith.constant 0 : i32
    %c0_i32_0 = arith.constant 0 : i32
    %c0_i32_1 = arith.constant 0 : i32
    %c0_i32_2 = arith.constant 0 : i32
    return %c0_i32, %c0_i32_0, %c0_i32_1 : i32, i32, i32
  }
  func.func @transform_1(%arg0: i32) -> (i32, i32) {
    %c0_i32 = arith.constant 0 : i32
    %c0_i32_0 = arith.constant 0 : i32
    %c0_i32_1 = arith.constant 0 : i32
    return %c0_i32, %c0_i32_0 : i32, i32
  }
  func.func @transform_2(%arg0: i32) -> (i32, i32) {
    %c0_i32 = arith.constant 0 : i32
    %c0_i32_0 = arith.constant 0 : i32
    %c0_i32_1 = arith.constant 0 : i32
    return %c0_i32, %c0_i32_0 : i32, i32
  }
  func.func @transform_3(%arg0: i32) -> (i32, i32) {
    %c0_i32 = arith.constant 0 : i32
    %c0_i32_0 = arith.constant 0 : i32
    %c0_i32_1 = arith.constant 0 : i32
    return %c0_i32, %c0_i32_0 : i32, i32
  }
  func.func @transform_4(%arg0: i32) -> (i32, i32) {
    %c0_i32 = arith.constant 0 : i32
    %c0_i32_0 = arith.constant 0 : i32
    %c0_i32_1 = arith.constant 0 : i32
    return %c0_i32, %c0_i32_0 : i32, i32
  }
  func.func @transform_5(%arg0: i32) -> (i32, i32) {
    %c0_i32 = arith.constant 0 : i32
    %c0_i32_0 = arith.constant 0 : i32
    %c0_i32_1 = arith.constant 0 : i32
    return %c0_i32, %c0_i32_0 : i32, i32
  }
  func.func @transform_6(%arg0: i32) -> (i32, i32) {
    %c0_i32 = arith.constant 0 : i32
    %c0_i32_0 = arith.constant 0 : i32
    %c0_i32_1 = arith.constant 0 : i32
    return %c0_i32, %c0_i32_0 : i32, i32
  }
  func.func @transform_7(%arg0: i32) -> (i32, i32) {
    %c0_i32 = arith.constant 0 : i32
    %c0_i32_0 = arith.constant 0 : i32
    %c0_i32_1 = arith.constant 0 : i32
    return %c0_i32, %c0_i32_0 : i32, i32
  }
  func.func @transform_8(%arg0: i32) -> (i32, i32) {
    %c0_i32 = arith.constant 0 : i32
    %c0_i32_0 = arith.constant 0 : i32
    return %arg0, %c0_i32 : i32, i32
  }
}

</mosaic_0001>

<llo_original>
// kernel: vggnet_forward.16
$region0: #{vggnet_forward.16}
  #allocation0 [shape = 'u32[]', space=smem, size = 0x4, offset = 0x4, fixed_abs, tag = 'smem constant byte address 0x4 - core index']
  #allocation1 [shape = 'u32[144,128]{1,0:T(1,128)}', space=vmem, size = 0x12000, scoped, tag = 'internal scratch']
  %s0 = inlined_call_operand.vmem [shape: bf16[2048,27], index: 0, kind: input, shape index: {}]
  %s1 = inlined_call_operand.hbm [shape: bf16[27,128], index: 1, kind: input, shape index: {}]
  %s2 = inlined_call_operand.hbm [shape: f32[1,128], index: 2, kind: input, shape index: {}]
  %s3 = inlined_call_operand.hbm [shape: f32[1,128], index: 3, kind: input, shape index: {}]
  %s4 = inlined_call_operand.vmem [shape: bf16[2048,128], index: 4, kind: output, shape index: {}]
  %s5 = sld [smem:[#allocation0]]
  $region61: #{vggnet_forward.16} parent=0
    _
  %s7 = ssub.s32 1, %s5
  %s8 = scalar_select 0, %s7, %s5
  $region1: #{vggnet_forward.16} parent=0
    #allocation2 [shape = 'u8[8192]{0}', space=vmem, size = 0x2000, scoped, tag = 'input window, operand 1, single buffered']
    #allocation3 [shape = 's32[2]{0}', space=sflag, size = 0x8, scoped, tag = 'scoped memory for vggnet_forward.16']
    #allocation4 [shape = 'u8[512]{0}', space=vmem, size = 0x400, scoped, tag = 'input window, operand 2, single buffered']
    #allocation5 [shape = 's32[1]{0}', space=sflag, size = 0x4, scoped, tag = 'scoped memory for vggnet_forward.16']
    #allocation6 [shape = 'u8[512]{0}', space=vmem, size = 0x400, scoped, tag = 'input window, operand 3, single buffered']
    %9 = vsyncpa [#allocation3], 0
    %10 = vsyncpa [#allocation5], 0
    loop: start=0, step=1, limit=4
    $region2: #{vggnet_forward.16} parent=1 // loop_pre_header
      _
    $region3: #{vggnet_forward.16} parent=1 // loop_header
      %s12 = sphi 0, %s16
      %p13 = scmp.ge.s32.totalorder %s12, 4
      %s22 = sphi 0, %s24
      %s25 = sphi 0, %s22
      %s26 = sphi 0, %s25
      %s42 = sphi 0, %s26
      %s46 = sphi 0, %s46
      %s48 = sphi 0, %s46
      %s49 = sphi 0, %s48
      %s63 = sphi 0, %s49
      %s67 = sphi 0, %s67
      %s69 = sphi 0, %s67
      %s70 = sphi 0, %s69
      %s84 = sphi 0, %s70
      %s88 = sphi 0, %s88
      %s90 = sphi 0, %s88
      %s91 = sphi 0, %s90
      %s105 = sphi 0, %s91
      %s111 = sphi 0, %s113
      %s114 = sphi 0, %s111
      %s115 = sphi 0, %s114
      %s131 = sphi 0, %s115
    $region4: #{vggnet_forward.16} parent=1 // loop_header_branch
      %15 = sbr.rel (%p13) target = $region8
    $region5: #{vggnet_forward.16} parent=1 // loop_body
      %s17 = ssub.s32 %s12, 1
      %s18 = ssub.s32 %s12, 2
      %s19 = sadd.s32 %s12, 1
      %s20 = ssub.s32 %s12, %s19
      %p21 = scmp.eq.s32.totalorder %s20, 0
      %s23 = sadd.s32 %s22, 1
      %s24 = scalar_select %p21, %s22, %s23
      %p27 = pneg %p21
      %p28 = scmp.eq.s32.totalorder %s12, 1
      %p29 = por %p27, %p28
      %p30 = scmp.ne.s32.totalorder %s22, %s25
      %p31 = scmp.eq.s32.totalorder %s12, 0
      %p32 = por %p30, %p31
      %p33 = scmp.ne.s32.totalorder %s22, %s25
      %p34 = scmp.eq.s32.totalorder %s17, 1
      %p35 = por %p33, %p34
      %p36 = scmp.ne.s32.totalorder %s25, %s26
      %p37 = scmp.eq.s32.totalorder %s17, 0
      %p38 = por %p36, %p37
      %p39 = scmp.ne.s32.totalorder %s25, %s26
      %p40 = scmp.eq.s32.totalorder %s18, 1
      %p41 = por %p39, %p40
      %p43 = scmp.ne.s32.totalorder %s26, %s42
      %p44 = scmp.eq.s32.totalorder %s18, 0
      %p45 = por %p43, %p44
      %s47 = sadd.s32 %s46, 1
      %p50 = scmp.eq.s32.totalorder %s12, 1
      %p51 = scmp.ne.s32.totalorder %s46, %s48
      %p52 = scmp.eq.s32.totalorder %s12, 0
      %p53 = por %p51, %p52
      %p54 = scmp.ne.s32.totalorder %s46, %s48
      %p55 = scmp.eq.s32.totalorder %s17, 1
      %p56 = por %p54, %p55
      %p57 = scmp.ne.s32.totalorder %s48, %s49
      %p58 = scmp.eq.s32.totalorder %s17, 0
      %p59 = por %p57, %p58
      %p60 = scmp.ne.s32.totalorder %s48, %s49
      %p61 = scmp.eq.s32.totalorder %s18, 1
      %p62 = por %p60, %p61
      %p64 = scmp.ne.s32.totalorder %s49, %s63
      %p65 = scmp.eq.s32.totalorder %s18, 0
      %p66 = por %p64, %p65
      %s68 = sadd.s32 %s67, 1
      %p71 = scmp.eq.s32.totalorder %s12, 1
      %p72 = scmp.ne.s32.totalorder %s67, %s69
      %p73 = scmp.eq.s32.totalorder %s12, 0
      %p74 = por %p72, %p73
      %p75 = scmp.ne.s32.totalorder %s67, %s69
      %p76 = scmp.eq.s32.totalorder %s17, 1
      %p77 = por %p75, %p76
      %p78 = scmp.ne.s32.totalorder %s69, %s70
      %p79 = scmp.eq.s32.totalorder %s17, 0
      %p80 = por %p78, %p79
      %p81 = scmp.ne.s32.totalorder %s69, %s70
      %p82 = scmp.eq.s32.totalorder %s18, 1
      %p83 = por %p81, %p82
      %p85 = scmp.ne.s32.totalorder %s70, %s84
      %p86 = scmp.eq.s32.totalorder %s18, 0
      %p87 = por %p85, %p86
      %s89 = sadd.s32 %s88, 1
      %p92 = scmp.eq.s32.totalorder %s12, 1
      %p93 = scmp.ne.s32.totalorder %s88, %s90
      %p94 = scmp.eq.s32.totalorder %s12, 0
      %p95 = por %p93, %p94
      %p96 = scmp.ne.s32.totalorder %s88, %s90
      %p97 = scmp.eq.s32.totalorder %s17, 1
      %p98 = por %p96, %p97
      %p99 = scmp.ne.s32.totalorder %s90, %s91
      %p100 = scmp.eq.s32.totalorder %s17, 0
      %p101 = por %p99, %p100
      %p102 = scmp.ne.s32.totalorder %s90, %s91
      %p103 = scmp.eq.s32.totalorder %s18, 1
      %p104 = por %p102, %p103
      %p106 = scmp.ne.s32.totalorder %s91, %s105
      %p107 = scmp.eq.s32.totalorder %s18, 0
      %p108 = por %p106, %p107
      %s109 = ssub.s32 %s12, %s19
      %p110 = scmp.eq.s32.totalorder %s109, 0
      %s112 = sadd.s32 %s111, 1
      %s113 = scalar_select %p110, %s111, %s112
      %p116 = pneg %p110
      %p117 = scmp.eq.s32.totalorder %s12, 1
      %p118 = por %p116, %p117
      %p119 = scmp.ne.s32.totalorder %s111, %s114
      %p120 = scmp.eq.s32.totalorder %s12, 0
      %p121 = por %p119, %p120
      %p122 = scmp.ne.s32.totalorder %s111, %s114
      %p123 = scmp.eq.s32.totalorder %s17, 1
      %p124 = por %p122, %p123
      %p125 = scmp.ne.s32.totalorder %s114, %s115
      %p126 = scmp.eq.s32.totalorder %s17, 0
      %p127 = por %p125, %p126
      %p128 = scmp.ne.s32.totalorder %s114, %s115
      %p129 = scmp.eq.s32.totalorder %s18, 1
      %p130 = por %p128, %p129
      %p132 = scmp.ne.s32.totalorder %s115, %s131
      %p133 = scmp.eq.s32.totalorder %s18, 0
      %p134 = por %p132, %p133
      %p135 = scmp.le.s32.totalorder 1, %s12
      %p136 = scmp.lt.s32.totalorder %s12, 3
      %p137 = pnand %p135, %p136
      %p138 = pneg %p137
      // Predicated region
      $region9: #{vggnet_forward.16} parent=5 // pred_check
        _
      $region10: #{vggnet_forward.16} parent=5 // pred_check_branch
        %140 = sbr.rel (%p137) target = $region12
      $region11: #{vggnet_forward.16} parent=5 // pred_region
        %s141 = ssub.s32 %s12, 1
        // Predicated region
        $region13: #{vggnet_forward.16} parent=11 // pred_check
          %p142 = pneg %p59
        $region14: #{vggnet_forward.16} parent=11 // pred_check_branch
          %144 = sbr.rel (%p142) target = $region16
        $region15: #{vggnet_forward.16} parent=11 // pred_region
          %s146 = ssub.s32 256, 256
          %147 = vsyncadd [#allocation3], %s146
          %s148 = sshll.u32 [#allocation2], 4
          %s149 = int_to_ptr.vmem [resolvable:$true] %s148
          %154 = dma.hbm_to_vmem [thread:$0]  %s1, 256, %s149, [#allocation3], 64, 64, 4
        $region16: #{vggnet_forward.16} parent=11 // pred_fallthru
          _
        // Predicated region
        $region17: #{vggnet_forward.16} parent=11 // pred_check
          %p155 = pneg %p80
        $region18: #{vggnet_forward.16} parent=11 // pred_check_branch
          %157 = sbr.rel (%p155) target = $region20
        $region19: #{vggnet_forward.16} parent=11 // pred_region
          %s159 = ssub.s32 16, 16
          %160 = vsyncadd [#allocation5], %s159
          %s162 = sshll.u32 [#allocation4], 4
          %s163 = int_to_ptr.vmem [resolvable:$true] %s162
          %165 = dma.hbm_to_vmem [thread:$0]  %s2, 16, %s163, [#allocation5]
        $region20: #{vggnet_forward.16} parent=11 // pred_fallthru
          _
        // Predicated region
        $region21: #{vggnet_forward.16} parent=11 // pred_check
          %p166 = pneg %p101
        $region22: #{vggnet_forward.16} parent=11 // pred_check_branch
          %168 = sbr.rel (%p166) target = $region24
        $region23: #{vggnet_forward.16} parent=11 // pred_region
          %s170 = ssub.s32 16, 16
          %171 = vsyncadd [#allocation5], %s170
          %s173 = sshll.u32 [#allocation6], 4
          %s174 = int_to_ptr.vmem [resolvable:$true] %s173
          %176 = dma.hbm_to_vmem [thread:$0]  %s3, 16, %s174, [#allocation5]
        $region24: #{vggnet_forward.16} parent=11 // pred_fallthru
          _
      $region12: #{vggnet_forward.16} parent=5 // pred_fallthru
        _
      %p177 = scmp.lt.s32.totalorder %s12, 2
      // Predicated region
      $region25: #{vggnet_forward.16} parent=5 // pred_check
        %p178 = pneg %p177
      $region26: #{vggnet_forward.16} parent=5 // pred_check_branch
        %180 = sbr.rel (%p178) target = $region28
      $region27: #{vggnet_forward.16} parent=5 // pred_region
        // Predicated region
        $region29: #{vggnet_forward.16} parent=27 // pred_check
          %p181 = pneg %p32
        $region30: #{vggnet_forward.16} parent=27 // pred_check_branch
          %183 = sbr.rel (%p181) target = $region32
        $region31: #{vggnet_forward.16} parent=27 // pred_region
          %s184 = smul.u32 128, %s12
          %p185 = scmp.lt.s32.totalorder %s184, 255
          %s186 = scalar_select %p185, %s184, 255
          %s187 = smul.addr %s186, 4
          %s188 = scalar_lea.vmem %s0, %s187
          %s189 = smul.u32 128, %s12
        $region32: #{vggnet_forward.16} parent=27 // pred_fallthru
          _
      $region28: #{vggnet_forward.16} parent=5 // pred_fallthru
        _
      %p190 = scmp.le.s32.totalorder 1, %s12
      %p191 = scmp.lt.s32.totalorder %s12, 3
      %p192 = pnand %p190, %p191
      %p193 = pneg %p192
      // Predicated region
      $region33: #{vggnet_forward.16} parent=5 // pred_check
        _
      $region34: #{vggnet_forward.16} parent=5 // pred_check_branch
        %195 = sbr.rel (%p192) target = $region36
      $region35: #{vggnet_forward.16} parent=5 // pred_region
        %s196 = ssub.s32 %s12, 1
        // Predicated region
        $region37: #{vggnet_forward.16} parent=35 // pred_check
          %p197 = pneg %p59
        $region38: #{vggnet_forward.16} parent=35 // pred_check_branch
          %199 = sbr.rel (%p197) target = $region40
        $region39: #{vggnet_forward.16} parent=35 // pred_region
          %200 = dma.done [#allocation3], 256
        $region40: #{vggnet_forward.16} parent=35 // pred_fallthru
          _
        // Predicated region
        $region41: #{vggnet_forward.16} parent=35 // pred_check
          %p201 = pneg %p80
        $region42: #{vggnet_forward.16} parent=35 // pred_check_branch
          %203 = sbr.rel (%p201) target = $region44
        $region43: #{vggnet_forward.16} parent=35 // pred_region
          %204 = dma.done [#allocation5], 16
        $region44: #{vggnet_forward.16} parent=35 // pred_fallthru
          _
        // Predicated region
        $region45: #{vggnet_forward.16} parent=35 // pred_check
          %p205 = pneg %p101
        $region46: #{vggnet_forward.16} parent=35 // pred_check_branch
          %207 = sbr.rel (%p205) target = $region48
        $region47: #{vggnet_forward.16} parent=35 // pred_region
          %208 = dma.done [#allocation5], 16
        $region48: #{vggnet_forward.16} parent=35 // pred_fallthru
          _
        %s209 = smul.u32 128, %s17
        %p210 = scmp.lt.s32.totalorder %s209, 255
        %s211 = scalar_select %p210, %s209, 255
        %s212 = smul.addr %s211, 4
        %s213 = scalar_lea.vmem %s0, %s212
        %p214 = pneg %p38
        %p215 = pneg %p35
        %p216 = pneg %p59
        %p217 = pneg %p56
        %p218 = pneg %p80
        %p219 = pneg %p77
        %p220 = pneg %p101
        %p221 = pneg %p98
        %p222 = pneg %p127
        %p223 = pneg %p124
        %s224 = smul.u32 128, %s17
        %p225 = scmp.lt.s32.totalorder %s224, 255
        %s226 = scalar_select %p225, %s224, 255
        %s227 = smul.addr %s226, 4
        %s228 = scalar_lea.vmem %s4, %s227
        %s229 = smul.u32 128, %s17
        %p230 = scmp.lt.s32.totalorder %s229, 255
        %s231 = scalar_select %p230, %s229, 255
        %s232 = smul.addr %s231, 4
        %s233 = scalar_lea.vmem %s0, %s232
        %s234 = smul.u32 128, %s17
        %s235 = smul.u32 128, %s17
        %p236 = scmp.lt.s32.totalorder %s235, 255
        %s237 = scalar_select %p236, %s235, 255
        %s238 = smul.addr %s237, 4
        %s239 = scalar_lea.vmem %s4, %s238
        %s240 = smul.u32 128, %s17
        %v242 = vld [vmem:[%s233] sm:$0xf]
        %v243 = vld [vmem:[%s233 + $0x4] sm:$0xf]
        %v244 = vld [vmem:[%s233 + $0x8] sm:$0xf]
        %v245 = vld [vmem:[%s233 + $0xc] sm:$0xf]
        %v246 = vld [vmem:[%s233 + $0x10] sm:$0xf]
        %v247 = vld [vmem:[%s233 + $0x14] sm:$0xf]
        %v248 = vld [vmem:[%s233 + $0x18] sm:$0xf]
        %v249 = vld [vmem:[%s233 + $0x1c] sm:$0xf]
        %v250 = vld [vmem:[%s233 + $0x20] sm:$0xf]
        %v251 = vld [vmem:[%s233 + $0x24] sm:$0xf]
        %v252 = vld [vmem:[%s233 + $0x28] sm:$0xf]
        %v253 = vld [vmem:[%s233 + $0x2c] sm:$0xf]
        %v254 = vld [vmem:[%s233 + $0x30] sm:$0xf]
        %v255 = vld [vmem:[%s233 + $0x34] sm:$0xf]
        %v256 = vld [vmem:[%s233 + $0x38] sm:$0xf]
        %v257 = vld [vmem:[%s233 + $0x3c] sm:$0xf]
        %v258 = vld [vmem:[%s233 + $0x40] sm:$0xf]
        %v259 = vld [vmem:[%s233 + $0x44] sm:$0xf]
        %v260 = vld [vmem:[%s233 + $0x48] sm:$0xf]
        %v261 = vld [vmem:[%s233 + $0x4c] sm:$0xf]
        %v262 = vld [vmem:[%s233 + $0x50] sm:$0xf]
        %v263 = vld [vmem:[%s233 + $0x54] sm:$0xf]
        %v264 = vld [vmem:[%s233 + $0x58] sm:$0xf]
        %v265 = vld [vmem:[%s233 + $0x5c] sm:$0xf]
        %v266 = vld [vmem:[%s233 + $0x60] sm:$0xf]
        %v267 = vld [vmem:[%s233 + $0x64] sm:$0xf]
        %v268 = vld [vmem:[%s233 + $0x68] sm:$0xf]
        %v269 = vld [vmem:[%s233 + $0x6c] sm:$0xf]
        %v270 = vld [vmem:[%s233 + $0x70] sm:$0xf]
        %v271 = vld [vmem:[%s233 + $0x74] sm:$0xf]
        %v272 = vld [vmem:[%s233 + $0x78] sm:$0xf]
        %v273 = vld [vmem:[%s233 + $0x7c] sm:$0xf]
        %v274 = vld [vmem:[%s233 + $0x80] sm:$0xf]
        %v275 = vld [vmem:[%s233 + $0x84] sm:$0xf]
        %v276 = vld [vmem:[%s233 + $0x88] sm:$0xf]
        %v277 = vld [vmem:[%s233 + $0x8c] sm:$0xf]
        %v278 = vld [vmem:[%s233 + $0x90] sm:$0xf]
        %v279 = vld [vmem:[%s233 + $0x94] sm:$0xf]
        %v280 = vld [vmem:[%s233 + $0x98] sm:$0xf]
        %v281 = vld [vmem:[%s233 + $0x9c] sm:$0xf]
        %v282 = vld [vmem:[%s233 + $0xa0] sm:$0xf]
        %v283 = vld [vmem:[%s233 + $0xa4] sm:$0xf]
        %v284 = vld [vmem:[%s233 + $0xa8] sm:$0xf]
        %v285 = vld [vmem:[%s233 + $0xac] sm:$0xf]
        %v286 = vld [vmem:[%s233 + $0xb0] sm:$0xf]
        %v287 = vld [vmem:[%s233 + $0xb4] sm:$0xf]
        %v288 = vld [vmem:[%s233 + $0xb8] sm:$0xf]
        %v289 = vld [vmem:[%s233 + $0xbc] sm:$0xf]
        %v290 = vld [vmem:[%s233 + $0xc0] sm:$0xf]
        %v291 = vld [vmem:[%s233 + $0xc4] sm:$0xf]
        %v292 = vld [vmem:[%s233 + $0xc8] sm:$0xf]
        %v293 = vld [vmem:[%s233 + $0xcc] sm:$0xf]
        %v294 = vld [vmem:[%s233 + $0xd0] sm:$0xf]
        %v295 = vld [vmem:[%s233 + $0xd4] sm:$0xf]
        %v296 = vld [vmem:[%s233 + $0xd8] sm:$0xf]
        %v297 = vld [vmem:[%s233 + $0xdc] sm:$0xf]
        %v298 = vld [vmem:[%s233 + $0xe0] sm:$0xf]
        %v299 = vld [vmem:[%s233 + $0xe4] sm:$0xf]
        %v300 = vld [vmem:[%s233 + $0xe8] sm:$0xf]
        %v301 = vld [vmem:[%s233 + $0xec] sm:$0xf]
        %v302 = vld [vmem:[%s233 + $0xf0] sm:$0xf]
        %v303 = vld [vmem:[%s233 + $0xf4] sm:$0xf]
        %v304 = vld [vmem:[%s233 + $0xf8] sm:$0xf]
        %v305 = vld [vmem:[%s233 + $0xfc] sm:$0xf]
        %v306 = vld [vmem:[%s233 + $0x100] sm:$0xf]
        %v307 = vld [vmem:[%s233 + $0x104] sm:$0xf]
        %v308 = vld [vmem:[%s233 + $0x108] sm:$0xf]
        %v309 = vld [vmem:[%s233 + $0x10c] sm:$0xf]
        %v310 = vld [vmem:[%s233 + $0x110] sm:$0xf]
        %v311 = vld [vmem:[%s233 + $0x114] sm:$0xf]
        %v312 = vld [vmem:[%s233 + $0x118] sm:$0xf]
        %v313 = vld [vmem:[%s233 + $0x11c] sm:$0xf]
        %v314 = vld [vmem:[%s233 + $0x120] sm:$0xf]
        %v315 = vld [vmem:[%s233 + $0x124] sm:$0xf]
        %v316 = vld [vmem:[%s233 + $0x128] sm:$0xf]
        %v317 = vld [vmem:[%s233 + $0x12c] sm:$0xf]
        %v318 = vld [vmem:[%s233 + $0x130] sm:$0xf]
        %v319 = vld [vmem:[%s233 + $0x134] sm:$0xf]
        %v320 = vld [vmem:[%s233 + $0x138] sm:$0xf]
        %v321 = vld [vmem:[%s233 + $0x13c] sm:$0xf]
        %v322 = vld [vmem:[%s233 + $0x140] sm:$0xf]
        %v323 = vld [vmem:[%s233 + $0x144] sm:$0xf]
        %v324 = vld [vmem:[%s233 + $0x148] sm:$0xf]
        %v325 = vld [vmem:[%s233 + $0x14c] sm:$0xf]
        %v326 = vld [vmem:[%s233 + $0x150] sm:$0xf]
        %v327 = vld [vmem:[%s233 + $0x154] sm:$0xf]
        %v328 = vld [vmem:[%s233 + $0x158] sm:$0xf]
        %v329 = vld [vmem:[%s233 + $0x15c] sm:$0xf]
        %v330 = vld [vmem:[%s233 + $0x160] sm:$0xf]
        %v331 = vld [vmem:[%s233 + $0x164] sm:$0xf]
        %v332 = vld [vmem:[%s233 + $0x168] sm:$0xf]
        %v333 = vld [vmem:[%s233 + $0x16c] sm:$0xf]
        %v334 = vld [vmem:[%s233 + $0x170] sm:$0xf]
        %v335 = vld [vmem:[%s233 + $0x174] sm:$0xf]
        %v336 = vld [vmem:[%s233 + $0x178] sm:$0xf]
        %v337 = vld [vmem:[%s233 + $0x17c] sm:$0xf]
        %v338 = vld [vmem:[%s233 + $0x180] sm:$0xf]
        %v339 = vld [vmem:[%s233 + $0x184] sm:$0xf]
        %v340 = vld [vmem:[%s233 + $0x188] sm:$0xf]
        %v341 = vld [vmem:[%s233 + $0x18c] sm:$0xf]
        %v342 = vld [vmem:[%s233 + $0x190] sm:$0xf]
        %v343 = vld [vmem:[%s233 + $0x194] sm:$0xf]
        %v344 = vld [vmem:[%s233 + $0x198] sm:$0xf]
        %v345 = vld [vmem:[%s233 + $0x19c] sm:$0xf]
        %v346 = vld [vmem:[%s233 + $0x1a0] sm:$0xf]
        %v347 = vld [vmem:[%s233 + $0x1a4] sm:$0xf]
        %v348 = vld [vmem:[%s233 + $0x1a8] sm:$0xf]
        %v349 = vld [vmem:[%s233 + $0x1ac] sm:$0xf]
        %v350 = vld [vmem:[%s233 + $0x1b0] sm:$0xf]
        %v351 = vld [vmem:[%s233 + $0x1b4] sm:$0xf]
        %v352 = vld [vmem:[%s233 + $0x1b8] sm:$0xf]
        %v353 = vld [vmem:[%s233 + $0x1bc] sm:$0xf]
        %v354 = vld [vmem:[%s233 + $0x1c0] sm:$0xf]
        %v355 = vld [vmem:[%s233 + $0x1c4] sm:$0xf]
        %v356 = vld [vmem:[%s233 + $0x1c8] sm:$0xf]
        %v357 = vld [vmem:[%s233 + $0x1cc] sm:$0xf]
        %v358 = vld [vmem:[%s233 + $0x1d0] sm:$0xf]
        %v359 = vld [vmem:[%s233 + $0x1d4] sm:$0xf]
        %v360 = vld [vmem:[%s233 + $0x1d8] sm:$0xf]
        %v361 = vld [vmem:[%s233 + $0x1dc] sm:$0xf]
        %v362 = vld [vmem:[%s233 + $0x1e0] sm:$0xf]
        %v363 = vld [vmem:[%s233 + $0x1e4] sm:$0xf]
        %v364 = vld [vmem:[%s233 + $0x1e8] sm:$0xf]
        %v365 = vld [vmem:[%s233 + $0x1ec] sm:$0xf]
        %v366 = vld [vmem:[%s233 + $0x1f0] sm:$0xf]
        %v367 = vld [vmem:[%s233 + $0x1f4] sm:$0xf]
        %v368 = vld [vmem:[%s233 + $0x1f8] sm:$0xf]
        %v369 = vld [vmem:[%s233 + $0x1fc] sm:$0xf]
        %v370 = vld [vmem:[#allocation2] sm:$0xf]
        %v371 = vld [vmem:[#allocation2 + $0x4] sm:$0xf]
        %v372 = vld [vmem:[#allocation2 + $0x8] sm:$0xf]
        %v373 = vld [vmem:[#allocation2 + $0xc] sm:$0x3]
        %v502 = vunpack.c.l.b16 %v242
        %v503 = vunpack.c.l.b16 %v243
        %v504 = vunpack.c.l.b16 %v244
        %v505 = vunpack.c.l.b16 %v245
        %v506 = vunpack.c.l.b16 %v246
        %v507 = vunpack.c.l.b16 %v247
        %v508 = vunpack.c.l.b16 %v248
        %v509 = vunpack.c.l.b16 %v249
        %v510 = vunpack.c.l.b16 %v250
        %v511 = vunpack.c.l.b16 %v251
        %v512 = vunpack.c.l.b16 %v252
        %v513 = vunpack.c.l.b16 %v253
        %v514 = vunpack.c.l.b16 %v254
        %v515 = vunpack.c.l.b16 %v255
        %v516 = vunpack.c.l.b16 %v256
        %v517 = vunpack.c.l.b16 %v257
        %v518 = vunpack.c.l.b16 %v258
        %v519 = vunpack.c.l.b16 %v259
        %v520 = vunpack.c.l.b16 %v260
        %v521 = vunpack.c.l.b16 %v261
        %v522 = vunpack.c.l.b16 %v262
        %v523 = vunpack.c.l.b16 %v263
        %v524 = vunpack.c.l.b16 %v264
        %v525 = vunpack.c.l.b16 %v265
        %v526 = vunpack.c.l.b16 %v266
        %v527 = vunpack.c.l.b16 %v267
        %v528 = vunpack.c.l.b16 %v268
        %v529 = vunpack.c.l.b16 %v269
        %v530 = vunpack.c.l.b16 %v270
        %v531 = vunpack.c.l.b16 %v271
        %v532 = vunpack.c.l.b16 %v272
        %v533 = vunpack.c.l.b16 %v273
        %v534 = vunpack.c.l.b16 %v274
        %v535 = vunpack.c.l.b16 %v275
        %v536 = vunpack.c.l.b16 %v276
        %v537 = vunpack.c.l.b16 %v277
        %v538 = vunpack.c.l.b16 %v278
        %v539 = vunpack.c.l.b16 %v279
        %v540 = vunpack.c.l.b16 %v280
        %v541 = vunpack.c.l.b16 %v281
        %v542 = vunpack.c.l.b16 %v282
        %v543 = vunpack.c.l.b16 %v283
        %v544 = vunpack.c.l.b16 %v284
        %v545 = vunpack.c.l.b16 %v285
        %v546 = vunpack.c.l.b16 %v286
        %v547 = vunpack.c.l.b16 %v287
        %v548 = vunpack.c.l.b16 %v288
        %v549 = vunpack.c.l.b16 %v289
        %v550 = vunpack.c.l.b16 %v290
        %v551 = vunpack.c.l.b16 %v291
        %v552 = vunpack.c.l.b16 %v292
        %v553 = vunpack.c.l.b16 %v293
        %v554 = vunpack.c.l.b16 %v294
        %v555 = vunpack.c.l.b16 %v295
        %v556 = vunpack.c.l.b16 %v296
        %v557 = vunpack.c.l.b16 %v297
        %v558 = vunpack.c.l.b16 %v298
        %v559 = vunpack.c.l.b16 %v299
        %v560 = vunpack.c.l.b16 %v300
        %v561 = vunpack.c.l.b16 %v301
        %v562 = vunpack.c.l.b16 %v302
        %v563 = vunpack.c.l.b16 %v303
        %v564 = vunpack.c.l.b16 %v304
        %v565 = vunpack.c.l.b16 %v305
        %v566 = vunpack.c.l.b16 %v306
        %v567 = vunpack.c.l.b16 %v307
        %v568 = vunpack.c.l.b16 %v308
        %v569 = vunpack.c.l.b16 %v309
        %v570 = vunpack.c.l.b16 %v310
        %v571 = vunpack.c.l.b16 %v311
        %v572 = vunpack.c.l.b16 %v312
        %v573 = vunpack.c.l.b16 %v313
        %v574 = vunpack.c.l.b16 %v314
        %v575 = vunpack.c.l.b16 %v315
        %v576 = vunpack.c.l.b16 %v316
        %v577 = vunpack.c.l.b16 %v317
        %v578 = vunpack.c.l.b16 %v318
        %v579 = vunpack.c.l.b16 %v319
        %v580 = vunpack.c.l.b16 %v320
        %v581 = vunpack.c.l.b16 %v321
        %v582 = vunpack.c.l.b16 %v322
        %v583 = vunpack.c.l.b16 %v323
        %v584 = vunpack.c.l.b16 %v324
        %v585 = vunpack.c.l.b16 %v325
        %v586 = vunpack.c.l.b16 %v326
        %v587 = vunpack.c.l.b16 %v327
        %v588 = vunpack.c.l.b16 %v328
        %v589 = vunpack.c.l.b16 %v329
        %v590 = vunpack.c.l.b16 %v330
        %v591 = vunpack.c.l.b16 %v331
        %v592 = vunpack.c.l.b16 %v332
        %v593 = vunpack.c.l.b16 %v333
        %v594 = vunpack.c.l.b16 %v334
        %v595 = vunpack.c.l.b16 %v335
        %v596 = vunpack.c.l.b16 %v336
        %v597 = vunpack.c.l.b16 %v337
        %v598 = vunpack.c.l.b16 %v338
        %v599 = vunpack.c.l.b16 %v339
        %v600 = vunpack.c.l.b16 %v340
        %v601 = vunpack.c.l.b16 %v341
        %v602 = vunpack.c.l.b16 %v342
        %v603 = vunpack.c.l.b16 %v343
        %v604 = vunpack.c.l.b16 %v344
        %v605 = vunpack.c.l.b16 %v345
        %v606 = vunpack.c.l.b16 %v346
        %v607 = vunpack.c.l.b16 %v347
        %v608 = vunpack.c.l.b16 %v348
        %v609 = vunpack.c.l.b16 %v349
        %v610 = vunpack.c.l.b16 %v350
        %v611 = vunpack.c.l.b16 %v351
        %v612 = vunpack.c.l.b16 %v352
        %v613 = vunpack.c.l.b16 %v353
        %v614 = vunpack.c.l.b16 %v354
        %v615 = vunpack.c.l.b16 %v355
        %v616 = vunpack.c.l.b16 %v356
        %v617 = vunpack.c.l.b16 %v357
        %v618 = vunpack.c.l.b16 %v358
        %v619 = vunpack.c.l.b16 %v359
        %v620 = vunpack.c.l.b16 %v360
        %v621 = vunpack.c.l.b16 %v361
        %v622 = vunpack.c.l.b16 %v362
        %v623 = vunpack.c.l.b16 %v363
        %v624 = vunpack.c.l.b16 %v364
        %v625 = vunpack.c.l.b16 %v365
        %v626 = vunpack.c.l.b16 %v366
        %v627 = vunpack.c.l.b16 %v367
        %v628 = vunpack.c.l.b16 %v368
        %v629 = vunpack.c.l.b16 %v369
        %v630 = vpack.c.b16 %v503, %v502
        %v631 = vpack.c.b16 %v505, %v504
        %v632 = vpack.c.b16 %v507, %v506
        %v633 = vpack.c.b16 %v509, %v508
        %v634 = vpack.c.b16 %v511, %v510
        %v635 = vpack.c.b16 %v513, %v512
        %v636 = vpack.c.b16 %v515, %v514
        %v637 = vpack.c.b16 %v517, %v516
        %v638 = vpack.c.b16 %v519, %v518
        %v639 = vpack.c.b16 %v521, %v520
        %v640 = vpack.c.b16 %v523, %v522
        %v641 = vpack.c.b16 %v525, %v524
        %v642 = vpack.c.b16 %v527, %v526
        %v643 = vpack.c.b16 %v529, %v528
        %v644 = vpack.c.b16 %v531, %v530
        %v645 = vpack.c.b16 %v533, %v532
        %v646 = vpack.c.b16 %v535, %v534
        %v647 = vpack.c.b16 %v537, %v536
        %v648 = vpack.c.b16 %v539, %v538
        %v649 = vpack.c.b16 %v541, %v540
        %v650 = vpack.c.b16 %v543, %v542
        %v651 = vpack.c.b16 %v545, %v544
        %v652 = vpack.c.b16 %v547, %v546
        %v653 = vpack.c.b16 %v549, %v548
        %v654 = vpack.c.b16 %v551, %v550
        %v655 = vpack.c.b16 %v553, %v552
        %v656 = vpack.c.b16 %v555, %v554
        %v657 = vpack.c.b16 %v557, %v556
        %v658 = vpack.c.b16 %v559, %v558
        %v659 = vpack.c.b16 %v561, %v560
        %v660 = vpack.c.b16 %v563, %v562
        %v661 = vpack.c.b16 %v565, %v564
        %v662 = vpack.c.b16 %v567, %v566
        %v663 = vpack.c.b16 %v569, %v568
        %v664 = vpack.c.b16 %v571, %v570
        %v665 = vpack.c.b16 %v573, %v572
        %v666 = vpack.c.b16 %v575, %v574
        %v667 = vpack.c.b16 %v577, %v576
        %v668 = vpack.c.b16 %v579, %v578
        %v669 = vpack.c.b16 %v581, %v580
        %v670 = vpack.c.b16 %v583, %v582
        %v671 = vpack.c.b16 %v585, %v584
        %v672 = vpack.c.b16 %v587, %v586
        %v673 = vpack.c.b16 %v589, %v588
        %v674 = vpack.c.b16 %v591, %v590
        %v675 = vpack.c.b16 %v593, %v592
        %v676 = vpack.c.b16 %v595, %v594
        %v677 = vpack.c.b16 %v597, %v596
        %v678 = vpack.c.b16 %v599, %v598
        %v679 = vpack.c.b16 %v601, %v600
        %v680 = vpack.c.b16 %v603, %v602
        %v681 = vpack.c.b16 %v605, %v604
        %v682 = vpack.c.b16 %v607, %v606
        %v683 = vpack.c.b16 %v609, %v608
        %v684 = vpack.c.b16 %v611, %v610
        %v685 = vpack.c.b16 %v613, %v612
        %v686 = vpack.c.b16 %v615, %v614
        %v687 = vpack.c.b16 %v617, %v616
        %v688 = vpack.c.b16 %v619, %v618
        %v689 = vpack.c.b16 %v621, %v620
        %v690 = vpack.c.b16 %v623, %v622
        %v691 = vpack.c.b16 %v625, %v624
        %v692 = vpack.c.b16 %v627, %v626
        %v693 = vpack.c.b16 %v629, %v628
        %v698 = vunpack.c.l.b16 %v370
        %v699 = vunpack.c.l.b16 %v371
        %v700 = vunpack.c.l.b16 %v372
        %v701 = vunpack.c.l.b16 %v373
        %v702 = vpack.c.b16 %v699, %v698
        %v703 = vpack.c.b16 %v701, %v700
        %vm705 = vcmask 220160
        %v707 = vsel %vm705, %v630, 0
        %v710 = vsel %vm705, %v631, 0
        %v713 = vsel %vm705, %v632, 0
        %v716 = vsel %vm705, %v633, 0
        %v719 = vsel %vm705, %v634, 0
        %v722 = vsel %vm705, %v635, 0
        %v725 = vsel %vm705, %v636, 0
        %v728 = vsel %vm705, %v637, 0
        %v731 = vsel %vm705, %v638, 0
        %v734 = vsel %vm705, %v639, 0
        %v737 = vsel %vm705, %v640, 0
        %v740 = vsel %vm705, %v641, 0
        %v743 = vsel %vm705, %v642, 0
        %v746 = vsel %vm705, %v643, 0
        %v749 = vsel %vm705, %v644, 0
        %v752 = vsel %vm705, %v645, 0
        %v755 = vsel %vm705, %v646, 0
        %v758 = vsel %vm705, %v647, 0
        %v761 = vsel %vm705, %v648, 0
        %v764 = vsel %vm705, %v649, 0
        %v767 = vsel %vm705, %v650, 0
        %v770 = vsel %vm705, %v651, 0
        %v773 = vsel %vm705, %v652, 0
        %v776 = vsel %vm705, %v653, 0
        %v779 = vsel %vm705, %v654, 0
        %v782 = vsel %vm705, %v655, 0
        %v785 = vsel %vm705, %v656, 0
        %v788 = vsel %vm705, %v657, 0
        %v791 = vsel %vm705, %v658, 0
        %v794 = vsel %vm705, %v659, 0
        %v797 = vsel %vm705, %v660, 0
        %v800 = vsel %vm705, %v661, 0
        %v803 = vsel %vm705, %v662, 0
        %v806 = vsel %vm705, %v663, 0
        %v809 = vsel %vm705, %v664, 0
        %v812 = vsel %vm705, %v665, 0
        %v815 = vsel %vm705, %v666, 0
        %v818 = vsel %vm705, %v667, 0
        %v821 = vsel %vm705, %v668, 0
        %v824 = vsel %vm705, %v669, 0
        %v827 = vsel %vm705, %v670, 0
        %v830 = vsel %vm705, %v671, 0
        %v833 = vsel %vm705, %v672, 0
        %v836 = vsel %vm705, %v673, 0
        %v839 = vsel %vm705, %v674, 0
        %v842 = vsel %vm705, %v675, 0
        %v845 = vsel %vm705, %v676, 0
        %v848 = vsel %vm705, %v677, 0
        %v851 = vsel %vm705, %v678, 0
        %v854 = vsel %vm705, %v679, 0
        %v857 = vsel %vm705, %v680, 0
        %v860 = vsel %vm705, %v681, 0
        %v863 = vsel %vm705, %v682, 0
        %v866 = vsel %vm705, %v683, 0
        %v869 = vsel %vm705, %v684, 0
        %v872 = vsel %vm705, %v685, 0
        %v875 = vsel %vm705, %v686, 0
        %v878 = vsel %vm705, %v687, 0
        %v881 = vsel %vm705, %v688, 0
        %v884 = vsel %vm705, %v689, 0
        %v887 = vsel %vm705, %v690, 0
        %v890 = vsel %vm705, %v691, 0
        %v893 = vsel %vm705, %v692, 0
        %v896 = vsel %vm705, %v693, 0
        %vm898 = vcmask 1044480
        %vm899 = vcmask 1045504
        %v900 = vsel %vm898, 4294967295, 65535
        %v901 = vsel %vm899, %v900, 0
        %v903 = vand.u32 %v703, %v901
        %905 = vmatprep.subr.bf16.mxu0 0
        %906 = vmatpush1.bf16.msra.mxu0 %v702
        %907 = vmatprep.subr.bf16.mxu0 0
        %908 = vmatpush1.bf16.msra.mxu0 %v903
        %909 = vmatprep.subr.bf16.mxu0 0
        %910 = vmatpush1.bf16.msra.mxu0 0
        %911 = vmatprep.subr.bf16.mxu0 0
        %912 = vmatpush1.bf16.msra.mxu0 0
        %913 = vmatprep.subr.bf16.mxu0 0
        %914 = vmatpush1.bf16.msra.mxu0 0
        %915 = vmatprep.subr.bf16.mxu0 0
        %916 = vmatpush1.bf16.msra.mxu0 0
        %917 = vmatprep.subr.bf16.mxu0 0
        %918 = vmatpush1.bf16.msra.mxu0 0
        %919 = vmatprep.subr.bf16.mxu0 0
        %920 = vmatpush1.bf16.msra.mxu0 0
        %921 = vmatprep.subr.bf16.mxu0 0
        %922 = vmatpush1.bf16.msra.mxu0 0
        %923 = vmatprep.subr.bf16.mxu0 0
        %924 = vmatpush1.bf16.msra.mxu0 0
        %925 = vmatprep.subr.bf16.mxu0 0
        %926 = vmatpush1.bf16.msra.mxu0 0
        %927 = vmatprep.subr.bf16.mxu0 0
        %928 = vmatpush1.bf16.msra.mxu0 0
        %929 = vmatprep.subr.bf16.mxu0 0
        %930 = vmatpush1.bf16.msra.mxu0 0
        %931 = vmatprep.subr.bf16.mxu0 0
        %932 = vmatpush1.bf16.msra.mxu0 0
        %933 = vmatprep.subr.bf16.mxu0 0
        %934 = vmatpush1.bf16.msra.mxu0 0
        %935 = vmatprep.subr.bf16.mxu0 0
        %936 = vmatpush1.bf16.msra.mxu0 0
        %937 = vmatprep.mubr.bf16.mxu0 0
        %938 = vmatmul.mubr.bf16.gmra.mrb[0].mxu0 %v707
        %v939 = vpop.f32.mrb[0].mxu0
        %v940 = vadd.f32 0.0, %v939
        %v941 = vpop.f32.mrb[0].mxu0
        %v942 = vpop.f32.mrb[0].mxu0
        %v943 = vadd.f32 0.0, %v942
        %v944 = vpop.f32.mrb[0].mxu0
        %945 = vmatprep.mubr.bf16.mxu0 0
        %946 = vmatmul.mubr.bf16.gmra.mrb[0].mxu0 %v710
        %v947 = vpop.f32.mrb[0].mxu0
        %v948 = vadd.f32 0.0, %v947
        %v949 = vpop.f32.mrb[0].mxu0
        %v950 = vpop.f32.mrb[0].mxu0
        %v951 = vadd.f32 0.0, %v950
        %v952 = vpop.f32.mrb[0].mxu0
        %953 = vmatprep.mubr.bf16.mxu0 0
        %954 = vmatmul.mubr.bf16.gmra.mrb[0].mxu0 %v713
        %v955 = vpop.f32.mrb[0].mxu0
        %v956 = vadd.f32 0.0, %v955
        %v957 = vpop.f32.mrb[0].mxu0
        %v958 = vpop.f32.mrb[0].mxu0
        %v959 = vadd.f32 0.0, %v958
        %v960 = vpop.f32.mrb[0].mxu0
        %961 = vmatprep.mubr.bf16.mxu0 0
        %962 = vmatmul.mubr.bf16.gmra.mrb[0].mxu0 %v716
        %v963 = vpop.f32.mrb[0].mxu0
        %v964 = vadd.f32 0.0, %v963
        %v965 = vpop.f32.mrb[0].mxu0
        %v966 = vpop.f32.mrb[0].mxu0
        %v967 = vadd.f32 0.0, %v966
        %v968 = vpop.f32.mrb[0].mxu0
        %969 = vmatprep.mubr.bf16.mxu0 0
        %970 = vmatmul.mubr.bf16.gmra.mrb[0].mxu0 %v719
        %v971 = vpop.f32.mrb[0].mxu0
        %v972 = vadd.f32 0.0, %v971
        %v973 = vpop.f32.mrb[0].mxu0
        %v974 = vpop.f32.mrb[0].mxu0
        %v975 = vadd.f32 0.0, %v974
        %v976 = vpop.f32.mrb[0].mxu0
        %977 = vmatprep.mubr.bf16.mxu0 0
        %978 = vmatmul.mubr.bf16.gmra.mrb[0].mxu0 %v722
        %v979 = vpop.f32.mrb[0].mxu0
        %v980 = vadd.f32 0.0, %v979
        %v981 = vpop.f32.mrb[0].mxu0
        %v982 = vpop.f32.mrb[0].mxu0
        %v983 = vadd.f32 0.0, %v982
        %v984 = vpop.f32.mrb[0].mxu0
        %985 = vmatprep.mubr.bf16.mxu0 0
        %986 = vmatmul.mubr.bf16.gmra.mrb[0].mxu0 %v725
        %v987 = vpop.f32.mrb[0].mxu0
        %v988 = vadd.f32 0.0, %v987
        %v989 = vpop.f32.mrb[0].mxu0
        %v990 = vpop.f32.mrb[0].mxu0
        %v991 = vadd.f32 0.0, %v990
        %v992 = vpop.f32.mrb[0].mxu0
        %993 = vmatprep.mubr.bf16.mxu0 0
        %994 = vmatmul.mubr.bf16.gmra.mrb[0].mxu0 %v728
        %v995 = vpop.f32.mrb[0].mxu0
        %v996 = vadd.f32 0.0, %v995
        %v997 = vpop.f32.mrb[0].mxu0
        %v998 = vpop.f32.mrb[0].mxu0
        %v999 = vadd.f32 0.0, %v998
        %v1000 = vpop.f32.mrb[0].mxu0
        %1001 = vmatprep.mubr.bf16.mxu0 0
        %1002 = vmatmul.mubr.bf16.gmra.mrb[0].mxu0 %v731
        %v1003 = vpop.f32.mrb[0].mxu0
        %v1004 = vadd.f32 0.0, %v1003
        %v1005 = vpop.f32.mrb[0].mxu0
        %v1006 = vpop.f32.mrb[0].mxu0
        %v1007 = vadd.f32 0.0, %v1006
        %v1008 = vpop.f32.mrb[0].mxu0
        %1009 = vmatprep.mubr.bf16.mxu0 0
        %1010 = vmatmul.mubr.bf16.gmra.mrb[0].mxu0 %v734
        %v1011 = vpop.f32.mrb[0].mxu0
        %v1012 = vadd.f32 0.0, %v1011
        %v1013 = vpop.f32.mrb[0].mxu0
        %v1014 = vpop.f32.mrb[0].mxu0
        %v1015 = vadd.f32 0.0, %v1014
        %v1016 = vpop.f32.mrb[0].mxu0
        %1017 = vmatprep.mubr.bf16.mxu0 0
        %1018 = vmatmul.mubr.bf16.gmra.mrb[0].mxu0 %v737
        %v1019 = vpop.f32.mrb[0].mxu0
        %v1020 = vadd.f32 0.0, %v1019
        %v1021 = vpop.f32.mrb[0].mxu0
        %v1022 = vpop.f32.mrb[0].mxu0
        %v1023 = vadd.f32 0.0, %v1022
        %v1024 = vpop.f32.mrb[0].mxu0
        %1025 = vmatprep.mubr.bf16.mxu0 0
        %1026 = vmatmul.mubr.bf16.gmra.mrb[0].mxu0 %v740
        %v1027 = vpop.f32.mrb[0].mxu0
        %v1028 = vadd.f32 0.0, %v1027
        %v1029 = vpop.f32.mrb[0].mxu0
        %v1030 = vpop.f32.mrb[0].mxu0
        %v1031 = vadd.f32 0.0, %v1030
        %v1032 = vpop.f32.mrb[0].mxu0
        %1033 = vmatprep.mubr.bf16.mxu0 0
        %1034 = vmatmul.mubr.bf16.gmra.mrb[0].mxu0 %v743
        %v1035 = vpop.f32.mrb[0].mxu0
        %v1036 = vadd.f32 0.0, %v1035
        %v1037 = vpop.f32.mrb[0].mxu0
        %v1038 = vpop.f32.mrb[0].mxu0
        %v1039 = vadd.f32 0.0, %v1038
        %v1040 = vpop.f32.mrb[0].mxu0
        %1041 = vmatprep.mubr.bf16.mxu0 0
        %1042 = vmatmul.mubr.bf16.gmra.mrb[0].mxu0 %v746
        %v1043 = vpop.f32.mrb[0].mxu0
        %v1044 = vadd.f32 0.0, %v1043
        %v1045 = vpop.f32.mrb[0].mxu0
        %v1046 = vpop.f32.mrb[0].mxu0
        %v1047 = vadd.f32 0.0, %v1046
        %v1048 = vpop.f32.mrb[0].mxu0
        %1049 = vmatprep.mubr.bf16.mxu0 0
        %1050 = vmatmul.mubr.bf16.gmra.mrb[0].mxu0 %v749
        %v1051 = vpop.f32.mrb[0].mxu0
        %v1052 = vadd.f32 0.0, %v1051
        %v1053 = vpop.f32.mrb[0].mxu0
        %v1054 = vpop.f32.mrb[0].mxu0
        %v1055 = vadd.f32 0.0, %v1054
        %v1056 = vpop.f32.mrb[0].mxu0
        %1057 = vmatprep.mubr.bf16.mxu0 0
        %1058 = vmatmul.mubr.bf16.gmra.mrb[0].mxu0 %v752
        %v1059 = vpop.f32.mrb[0].mxu0
        %v1060 = vadd.f32 0.0, %v1059
        %v1061 = vpop.f32.mrb[0].mxu0
        %v1062 = vpop.f32.mrb[0].mxu0
        %v1063 = vadd.f32 0.0, %v1062
        %v1064 = vpop.f32.mrb[0].mxu0
        %1065 = vmatprep.mubr.bf16.mxu0 0
        %1066 = vmatmul.mubr.bf16.gmra.mrb[0].mxu0 %v755
        %v1067 = vpop.f32.mrb[0].mxu0
        %v1068 = vadd.f32 0.0, %v1067
        %v1069 = vpop.f32.mrb[0].mxu0
        %v1070 = vpop.f32.mrb[0].mxu0
        %v1071 = vadd.f32 0.0, %v1070
        %v1072 = vpop.f32.mrb[0].mxu0
        %1073 = vmatprep.mubr.bf16.mxu0 0
        %1074 = vmatmul.mubr.bf16.gmra.mrb[0].mxu0 %v758
        %v1075 = vpop.f32.mrb[0].mxu0
        %v1076 = vadd.f32 0.0, %v1075
        %v1077 = vpop.f32.mrb[0].mxu0
        %v1078 = vpop.f32.mrb[0].mxu0
        %v1079 = vadd.f32 0.0, %v1078
        %v1080 = vpop.f32.mrb[0].mxu0
        %1081 = vmatprep.mubr.bf16.mxu0 0
        %1082 = vmatmul.mubr.bf16.gmra.mrb[0].mxu0 %v761
        %v1083 = vpop.f32.mrb[0].mxu0
        %v1084 = vadd.f32 0.0, %v1083
        %v1085 = vpop.f32.mrb[0].mxu0
        %v1086 = vpop.f32.mrb[0].mxu0
        %v1087 = vadd.f32 0.0, %v1086
        %v1088 = vpop.f32.mrb[0].mxu0
        %1089 = vmatprep.mubr.bf16.mxu0 0
        %1090 = vmatmul.mubr.bf16.gmra.mrb[0].mxu0 %v764
        %v1091 = vpop.f32.mrb[0].mxu0
        %v1092 = vadd.f32 0.0, %v1091
        %v1093 = vpop.f32.mrb[0].mxu0
        %v1094 = vpop.f32.mrb[0].mxu0
        %v1095 = vadd.f32 0.0, %v1094
        %v1096 = vpop.f32.mrb[0].mxu0
        %1097 = vmatprep.mubr.bf16.mxu0 0
        %1098 = vmatmul.mubr.bf16.gmra.mrb[0].mxu0 %v767
        %v1099 = vpop.f32.mrb[0].mxu0
        %v1100 = vadd.f32 0.0, %v1099
        %v1101 = vpop.f32.mrb[0].mxu0
        %v1102 = vpop.f32.mrb[0].mxu0
        %v1103 = vadd.f32 0.0, %v1102
        %v1104 = vpop.f32.mrb[0].mxu0
        %1105 = vmatprep.mubr.bf16.mxu0 0
        %1106 = vmatmul.mubr.bf16.gmra.mrb[0].mxu0 %v770
        %v1107 = vpop.f32.mrb[0].mxu0
        %v1108 = vadd.f32 0.0, %v1107
        %v1109 = vpop.f32.mrb[0].mxu0
        %v1110 = vpop.f32.mrb[0].mxu0
        %v1111 = vadd.f32 0.0, %v1110
        %v1112 = vpop.f32.mrb[0].mxu0
        %1113 = vmatprep.mubr.bf16.mxu0 0
        %1114 = vmatmul.mubr.bf16.gmra.mrb[0].mxu0 %v773
        %v1115 = vpop.f32.mrb[0].mxu0
        %v1116 = vadd.f32 0.0, %v1115
        %v1117 = vpop.f32.mrb[0].mxu0
        %v1118 = vpop.f32.mrb[0].mxu0
        %v1119 = vadd.f32 0.0, %v1118
        %v1120 = vpop.f32.mrb[0].mxu0
        %1121 = vmatprep.mubr.bf16.mxu0 0
        %1122 = vmatmul.mubr.bf16.gmra.mrb[0].mxu0 %v776
        %v1123 = vpop.f32.mrb[0].mxu0
        %v1124 = vadd.f32 0.0, %v1123
        %v1125 = vpop.f32.mrb[0].mxu0
        %v1126 = vpop.f32.mrb[0].mxu0
        %v1127 = vadd.f32 0.0, %v1126
        %v1128 = vpop.f32.mrb[0].mxu0
        %1129 = vmatprep.mubr.bf16.mxu0 0
        %1130 = vmatmul.mubr.bf16.gmra.mrb[0].mxu0 %v779
        %v1131 = vpop.f32.mrb[0].mxu0
        %v1132 = vadd.f32 0.0, %v1131
        %v1133 = vpop.f32.mrb[0].mxu0
        %v1134 = vpop.f32.mrb[0].mxu0
        %v1135 = vadd.f32 0.0, %v1134
        %v1136 = vpop.f32.mrb[0].mxu0
        %1137 = vmatprep.mubr.bf16.mxu0 0
        %1138 = vmatmul.mubr.bf16.gmra.mrb[0].mxu0 %v782
        %v1139 = vpop.f32.mrb[0].mxu0
        %v1140 = vadd.f32 0.0, %v1139
        %v1141 = vpop.f32.mrb[0].mxu0
        %v1142 = vpop.f32.mrb[0].mxu0
        %v1143 = vadd.f32 0.0, %v1142
        %v1144 = vpop.f32.mrb[0].mxu0
        %1145 = vmatprep.mubr.bf16.mxu0 0
        %1146 = vmatmul.mubr.bf16.gmra.mrb[0].mxu0 %v785
        %v1147 = vpop.f32.mrb[0].mxu0
        %v1148 = vadd.f32 0.0, %v1147
        %v1149 = vpop.f32.mrb[0].mxu0
        %v1150 = vpop.f32.mrb[0].mxu0
        %v1151 = vadd.f32 0.0, %v1150
        %v1152 = vpop.f32.mrb[0].mxu0
        %1153 = vmatprep.mubr.bf16.mxu0 0
        %1154 = vmatmul.mubr.bf16.gmra.mrb[0].mxu0 %v788
        %v1155 = vpop.f32.mrb[0].mxu0
        %v1156 = vadd.f32 0.0, %v1155
        %v1157 = vpop.f32.mrb[0].mxu0
        %v1158 = vpop.f32.mrb[0].mxu0
        %v1159 = vadd.f32 0.0, %v1158
        %v1160 = vpop.f32.mrb[0].mxu0
        %1161 = vmatprep.mubr.bf16.mxu0 0
        %1162 = vmatmul.mubr.bf16.gmra.mrb[0].mxu0 %v791
        %v1163 = vpop.f32.mrb[0].mxu0
        %v1164 = vadd.f32 0.0, %v1163
        %v1165 = vpop.f32.mrb[0].mxu0
        %v1166 = vpop.f32.mrb[0].mxu0
        %v1167 = vadd.f32 0.0, %v1166
        %v1168 = vpop.f32.mrb[0].mxu0
        %1169 = vmatprep.mubr.bf16.mxu0 0
        %1170 = vmatmul.mubr.bf16.gmra.mrb[0].mxu0 %v794
        %v1171 = vpop.f32.mrb[0].mxu0
        %v1172 = vadd.f32 0.0, %v1171
        %v1173 = vpop.f32.mrb[0].mxu0
        %v1174 = vpop.f32.mrb[0].mxu0
        %v1175 = vadd.f32 0.0, %v1174
        %v1176 = vpop.f32.mrb[0].mxu0
        %1177 = vmatprep.mubr.bf16.mxu0 0
        %1178 = vmatmul.mubr.bf16.gmra.mrb[0].mxu0 %v797
        %v1179 = vpop.f32.mrb[0].mxu0
        %v1180 = vadd.f32 0.0, %v1179
        %v1181 = vpop.f32.mrb[0].mxu0
        %v1182 = vpop.f32.mrb[0].mxu0
        %v1183 = vadd.f32 0.0, %v1182
        %v1184 = vpop.f32.mrb[0].mxu0
        %1185 = vmatprep.mubr.bf16.mxu0 0
        %1186 = vmatmul.mubr.bf16.gmra.mrb[0].mxu0 %v800
        %v1187 = vpop.f32.mrb[0].mxu0
        %v1188 = vadd.f32 0.0, %v1187
        %v1189 = vpop.f32.mrb[0].mxu0
        %v1190 = vpop.f32.mrb[0].mxu0
        %v1191 = vadd.f32 0.0, %v1190
        %v1192 = vpop.f32.mrb[0].mxu0
        %1193 = vmatprep.mubr.bf16.mxu0 0
        %1194 = vmatmul.mubr.bf16.gmra.mrb[0].mxu0 %v803
        %v1195 = vpop.f32.mrb[0].mxu0
        %v1196 = vadd.f32 0.0, %v1195
        %v1197 = vpop.f32.mrb[0].mxu0
        %v1198 = vpop.f32.mrb[0].mxu0
        %v1199 = vadd.f32 0.0, %v1198
        %v1200 = vpop.f32.mrb[0].mxu0
        %1201 = vmatprep.mubr.bf16.mxu0 0
        %1202 = vmatmul.mubr.bf16.gmra.mrb[0].mxu0 %v806
        %v1203 = vpop.f32.mrb[0].mxu0
        %v1204 = vadd.f32 0.0, %v1203
        %v1205 = vpop.f32.mrb[0].mxu0
        %v1206 = vpop.f32.mrb[0].mxu0
        %v1207 = vadd.f32 0.0, %v1206
        %v1208 = vpop.f32.mrb[0].mxu0
        %1209 = vmatprep.mubr.bf16.mxu0 0
        %1210 = vmatmul.mubr.bf16.gmra.mrb[0].mxu0 %v809
        %v1211 = vpop.f32.mrb[0].mxu0
        %v1212 = vadd.f32 0.0, %v1211
        %v1213 = vpop.f32.mrb[0].mxu0
        %v1214 = vpop.f32.mrb[0].mxu0
        %v1215 = vadd.f32 0.0, %v1214
        %v1216 = vpop.f32.mrb[0].mxu0
        %1217 = vmatprep.mubr.bf16.mxu0 0
        %1218 = vmatmul.mubr.bf16.gmra.mrb[0].mxu0 %v812
        %v1219 = vpop.f32.mrb[0].mxu0
        %v1220 = vadd.f32 0.0, %v1219
        %v1221 = vpop.f32.mrb[0].mxu0
        %v1222 = vpop.f32.mrb[0].mxu0
        %v1223 = vadd.f32 0.0, %v1222
        %v1224 = vpop.f32.mrb[0].mxu0
        %1225 = vmatprep.mubr.bf16.mxu0 0
        %1226 = vmatmul.mubr.bf16.gmra.mrb[0].mxu0 %v815
        %v1227 = vpop.f32.mrb[0].mxu0
        %v1228 = vadd.f32 0.0, %v1227
        %v1229 = vpop.f32.mrb[0].mxu0
        %v1230 = vpop.f32.mrb[0].mxu0
        %v1231 = vadd.f32 0.0, %v1230
        %v1232 = vpop.f32.mrb[0].mxu0
        %1233 = vmatprep.mubr.bf16.mxu0 0
        %1234 = vmatmul.mubr.bf16.gmra.mrb[0].mxu0 %v818
        %v1235 = vpop.f32.mrb[0].mxu0
        %v1236 = vadd.f32 0.0, %v1235
        %v1237 = vpop.f32.mrb[0].mxu0
        %v1238 = vpop.f32.mrb[0].mxu0
        %v1239 = vadd.f32 0.0, %v1238
        %v1240 = vpop.f32.mrb[0].mxu0
        %1241 = vmatprep.mubr.bf16.mxu0 0
        %1242 = vmatmul.mubr.bf16.gmra.mrb[0].mxu0 %v821
        %v1243 = vpop.f32.mrb[0].mxu0
        %v1244 = vadd.f32 0.0, %v1243
        %v1245 = vpop.f32.mrb[0].mxu0
        %v1246 = vpop.f32.mrb[0].mxu0
        %v1247 = vadd.f32 0.0, %v1246
        %v1248 = vpop.f32.mrb[0].mxu0
        %1249 = vmatprep.mubr.bf16.mxu0 0
        %1250 = vmatmul.mubr.bf16.gmra.mrb[0].mxu0 %v824
        %v1251 = vpop.f32.mrb[0].mxu0
        %v1252 = vadd.f32 0.0, %v1251
        %v1253 = vpop.f32.mrb[0].mxu0
        %v1254 = vpop.f32.mrb[0].mxu0
        %v1255 = vadd.f32 0.0, %v1254
        %v1256 = vpop.f32.mrb[0].mxu0
        %1257 = vmatprep.mubr.bf16.mxu0 0
        %1258 = vmatmul.mubr.bf16.gmra.mrb[0].mxu0 %v827
        %v1259 = vpop.f32.mrb[0].mxu0
        %v1260 = vadd.f32 0.0, %v1259
        %v1261 = vpop.f32.mrb[0].mxu0
        %v1262 = vpop.f32.mrb[0].mxu0
        %v1263 = vadd.f32 0.0, %v1262
        %v1264 = vpop.f32.mrb[0].mxu0
        %1265 = vmatprep.mubr.bf16.mxu0 0
        %1266 = vmatmul.mubr.bf16.gmra.mrb[0].mxu0 %v830
        %v1267 = vpop.f32.mrb[0].mxu0
        %v1268 = vadd.f32 0.0, %v1267
        %v1269 = vpop.f32.mrb[0].mxu0
        %v1270 = vpop.f32.mrb[0].mxu0
        %v1271 = vadd.f32 0.0, %v1270
        %v1272 = vpop.f32.mrb[0].mxu0
        %1273 = vmatprep.mubr.bf16.mxu0 0
        %1274 = vmatmul.mubr.bf16.gmra.mrb[0].mxu0 %v833
        %v1275 = vpop.f32.mrb[0].mxu0
        %v1276 = vadd.f32 0.0, %v1275
        %v1277 = vpop.f32.mrb[0].mxu0
        %v1278 = vpop.f32.mrb[0].mxu0
        %v1279 = vadd.f32 0.0, %v1278
        %v1280 = vpop.f32.mrb[0].mxu0
        %1281 = vmatprep.mubr.bf16.mxu0 0
        %1282 = vmatmul.mubr.bf16.gmra.mrb[0].mxu0 %v836
        %v1283 = vpop.f32.mrb[0].mxu0
        %v1284 = vadd.f32 0.0, %v1283
        %v1285 = vpop.f32.mrb[0].mxu0
        %v1286 = vpop.f32.mrb[0].mxu0
        %v1287 = vadd.f32 0.0, %v1286
        %v1288 = vpop.f32.mrb[0].mxu0
        %1289 = vmatprep.mubr.bf16.mxu0 0
        %1290 = vmatmul.mubr.bf16.gmra.mrb[0].mxu0 %v839
        %v1291 = vpop.f32.mrb[0].mxu0
        %v1292 = vadd.f32 0.0, %v1291
        %v1293 = vpop.f32.mrb[0].mxu0
        %v1294 = vpop.f32.mrb[0].mxu0
        %v1295 = vadd.f32 0.0, %v1294
        %v1296 = vpop.f32.mrb[0].mxu0
        %1297 = vmatprep.mubr.bf16.mxu0 0
        %1298 = vmatmul.mubr.bf16.gmra.mrb[0].mxu0 %v842
        %v1299 = vpop.f32.mrb[0].mxu0
        %v1300 = vadd.f32 0.0, %v1299
        %v1301 = vpop.f32.mrb[0].mxu0
        %v1302 = vpop.f32.mrb[0].mxu0
        %v1303 = vadd.f32 0.0, %v1302
        %v1304 = vpop.f32.mrb[0].mxu0
        %1305 = vmatprep.mubr.bf16.mxu0 0
        %1306 = vmatmul.mubr.bf16.gmra.mrb[0].mxu0 %v845
        %v1307 = vpop.f32.mrb[0].mxu0
        %v1308 = vadd.f32 0.0, %v1307
        %v1309 = vpop.f32.mrb[0].mxu0
        %v1310 = vpop.f32.mrb[0].mxu0
        %v1311 = vadd.f32 0.0, %v1310
        %v1312 = vpop.f32.mrb[0].mxu0
        %1313 = vmatprep.mubr.bf16.mxu0 0
        %1314 = vmatmul.mubr.bf16.gmra.mrb[0].mxu0 %v848
        %v1315 = vpop.f32.mrb[0].mxu0
        %v1316 = vadd.f32 0.0, %v1315
        %v1317 = vpop.f32.mrb[0].mxu0
        %v1318 = vpop.f32.mrb[0].mxu0
        %v1319 = vadd.f32 0.0, %v1318
        %v1320 = vpop.f32.mrb[0].mxu0
        %1321 = vmatprep.mubr.bf16.mxu0 0
        %1322 = vmatmul.mubr.bf16.gmra.mrb[0].mxu0 %v851
        %v1323 = vpop.f32.mrb[0].mxu0
        %v1324 = vadd.f32 0.0, %v1323
        %v1325 = vpop.f32.mrb[0].mxu0
        %v1326 = vpop.f32.mrb[0].mxu0
        %v1327 = vadd.f32 0.0, %v1326
        %v1328 = vpop.f32.mrb[0].mxu0
        %1329 = vmatprep.mubr.bf16.mxu0 0
        %1330 = vmatmul.mubr.bf16.gmra.mrb[0].mxu0 %v854
        %v1331 = vpop.f32.mrb[0].mxu0
        %v1332 = vadd.f32 0.0, %v1331
        %v1333 = vpop.f32.mrb[0].mxu0
        %v1334 = vpop.f32.mrb[0].mxu0
        %v1335 = vadd.f32 0.0, %v1334
        %v1336 = vpop.f32.mrb[0].mxu0
        %1337 = vmatprep.mubr.bf16.mxu0 0
        %1338 = vmatmul.mubr.bf16.gmra.mrb[0].mxu0 %v857
        %v1339 = vpop.f32.mrb[0].mxu0
        %v1340 = vadd.f32 0.0, %v1339
        %v1341 = vpop.f32.mrb[0].mxu0
        %v1342 = vpop.f32.mrb[0].mxu0
        %v1343 = vadd.f32 0.0, %v1342
        %v1344 = vpop.f32.mrb[0].mxu0
        %1345 = vmatprep.mubr.bf16.mxu0 0
        %1346 = vmatmul.mubr.bf16.gmra.mrb[0].mxu0 %v860
        %v1347 = vpop.f32.mrb[0].mxu0
        %v1348 = vadd.f32 0.0, %v1347
        %v1349 = vpop.f32.mrb[0].mxu0
        %v1350 = vpop.f32.mrb[0].mxu0
        %v1351 = vadd.f32 0.0, %v1350
        %v1352 = vpop.f32.mrb[0].mxu0
        %1353 = vmatprep.mubr.bf16.mxu0 0
        %1354 = vmatmul.mubr.bf16.gmra.mrb[0].mxu0 %v863
        %v1355 = vpop.f32.mrb[0].mxu0
        %v1356 = vadd.f32 0.0, %v1355
        %v1357 = vpop.f32.mrb[0].mxu0
        %v1358 = vpop.f32.mrb[0].mxu0
        %v1359 = vadd.f32 0.0, %v1358
        %v1360 = vpop.f32.mrb[0].mxu0
        %1361 = vmatprep.mubr.bf16.mxu0 0
        %1362 = vmatmul.mubr.bf16.gmra.mrb[0].mxu0 %v866
        %v1363 = vpop.f32.mrb[0].mxu0
        %v1364 = vadd.f32 0.0, %v1363
        %v1365 = vpop.f32.mrb[0].mxu0
        %v1366 = vpop.f32.mrb[0].mxu0
        %v1367 = vadd.f32 0.0, %v1366
        %v1368 = vpop.f32.mrb[0].mxu0
        %1369 = vmatprep.mubr.bf16.mxu0 0
        %1370 = vmatmul.mubr.bf16.gmra.mrb[0].mxu0 %v869
        %v1371 = vpop.f32.mrb[0].mxu0
        %v1372 = vadd.f32 0.0, %v1371
        %v1373 = vpop.f32.mrb[0].mxu0
        %v1374 = vpop.f32.mrb[0].mxu0
        %v1375 = vadd.f32 0.0, %v1374
        %v1376 = vpop.f32.mrb[0].mxu0
        %1377 = vmatprep.mubr.bf16.mxu0 0
        %1378 = vmatmul.mubr.bf16.gmra.mrb[0].mxu0 %v872
        %v1379 = vpop.f32.mrb[0].mxu0
        %v1380 = vadd.f32 0.0, %v1379
        %v1381 = vpop.f32.mrb[0].mxu0
        %v1382 = vpop.f32.mrb[0].mxu0
        %v1383 = vadd.f32 0.0, %v1382
        %v1384 = vpop.f32.mrb[0].mxu0
        %1385 = vmatprep.mubr.bf16.mxu0 0
        %1386 = vmatmul.mubr.bf16.gmra.mrb[0].mxu0 %v875
        %v1387 = vpop.f32.mrb[0].mxu0
        %v1388 = vadd.f32 0.0, %v1387
        %v1389 = vpop.f32.mrb[0].mxu0
        %v1390 = vpop.f32.mrb[0].mxu0
        %v1391 = vadd.f32 0.0, %v1390
        %v1392 = vpop.f32.mrb[0].mxu0
        %1393 = vmatprep.mubr.bf16.mxu0 0
        %1394 = vmatmul.mubr.bf16.gmra.mrb[0].mxu0 %v878
        %v1395 = vpop.f32.mrb[0].mxu0
        %v1396 = vadd.f32 0.0, %v1395
        %v1397 = vpop.f32.mrb[0].mxu0
        %v1398 = vpop.f32.mrb[0].mxu0
        %v1399 = vadd.f32 0.0, %v1398
        %v1400 = vpop.f32.mrb[0].mxu0
        %1401 = vmatprep.mubr.bf16.mxu0 0
        %1402 = vmatmul.mubr.bf16.gmra.mrb[0].mxu0 %v881
        %v1403 = vpop.f32.mrb[0].mxu0
        %v1404 = vadd.f32 0.0, %v1403
        %v1405 = vpop.f32.mrb[0].mxu0
        %v1406 = vpop.f32.mrb[0].mxu0
        %v1407 = vadd.f32 0.0, %v1406
        %v1408 = vpop.f32.mrb[0].mxu0
        %1409 = vmatprep.mubr.bf16.mxu0 0
        %1410 = vmatmul.mubr.bf16.gmra.mrb[0].mxu0 %v884
        %v1411 = vpop.f32.mrb[0].mxu0
        %v1412 = vadd.f32 0.0, %v1411
        %v1413 = vpop.f32.mrb[0].mxu0
        %v1414 = vpop.f32.mrb[0].mxu0
        %v1415 = vadd.f32 0.0, %v1414
        %v1416 = vpop.f32.mrb[0].mxu0
        %1417 = vmatprep.mubr.bf16.mxu0 0
        %1418 = vmatmul.mubr.bf16.gmra.mrb[0].mxu0 %v887
        %v1419 = vpop.f32.mrb[0].mxu0
        %v1420 = vadd.f32 0.0, %v1419
        %v1421 = vpop.f32.mrb[0].mxu0
        %v1422 = vpop.f32.mrb[0].mxu0
        %v1423 = vadd.f32 0.0, %v1422
        %v1424 = vpop.f32.mrb[0].mxu0
        %1425 = vmatprep.mubr.bf16.mxu0 0
        %1426 = vmatmul.mubr.bf16.gmra.mrb[0].mxu0 %v890
        %v1427 = vpop.f32.mrb[0].mxu0
        %v1428 = vadd.f32 0.0, %v1427
        %v1429 = vpop.f32.mrb[0].mxu0
        %v1430 = vpop.f32.mrb[0].mxu0
        %v1431 = vadd.f32 0.0, %v1430
        %v1432 = vpop.f32.mrb[0].mxu0
        %1433 = vmatprep.mubr.bf16.mxu0 0
        %1434 = vmatmul.mubr.bf16.gmra.mrb[0].mxu0 %v893
        %v1435 = vpop.f32.mrb[0].mxu0
        %v1436 = vadd.f32 0.0, %v1435
        %v1437 = vpop.f32.mrb[0].mxu0
        %v1438 = vpop.f32.mrb[0].mxu0
        %v1439 = vadd.f32 0.0, %v1438
        %v1440 = vpop.f32.mrb[0].mxu0
        %1441 = vmatprep.mubr.bf16.mxu0 0
        %1442 = vmatmul.mubr.bf16.gmra.mrb[0].mxu0 %v896
        %v1443 = vpop.f32.mrb[0].mxu0
        %v1444 = vadd.f32 0.0, %v1443
        %v1445 = vpop.f32.mrb[0].mxu0
        %v1446 = vpop.f32.mrb[0].mxu0
        %v1447 = vadd.f32 0.0, %v1446
        %v1448 = vpop.f32.mrb[0].mxu0
        %1449 = vdwg.mxu0
        %v1450 = vld [vmem:[#allocation4] sm:$0x1]
        %v1452 = vlaneseq
        %v1453 = vshrl.u32 %v1452, 7
        %v1454 = vsub.s32 0, %v1453
        %v1455 = vrot.slane %v1450, %v1454
        %v1457 = vmul.f32 %v940, %v1455
        %v1458 = vmul.f32 %v943, %v1455
        %v1459 = vmul.f32 %v948, %v1455
        %v1460 = vmul.f32 %v951, %v1455
        %v1461 = vmul.f32 %v956, %v1455
        %v1462 = vmul.f32 %v959, %v1455
        %v1463 = vmul.f32 %v964, %v1455
        %v1464 = vmul.f32 %v967, %v1455
        %v1465 = vmul.f32 %v972, %v1455
        %v1466 = vmul.f32 %v975, %v1455
        %v1467 = vmul.f32 %v980, %v1455
        %v1468 = vmul.f32 %v983, %v1455
        %v1469 = vmul.f32 %v988, %v1455
        %v1470 = vmul.f32 %v991, %v1455
        %v1471 = vmul.f32 %v996, %v1455
        %v1472 = vmul.f32 %v999, %v1455
        %v1473 = vmul.f32 %v1004, %v1455
        %v1474 = vmul.f32 %v1007, %v1455
        %v1475 = vmul.f32 %v1012, %v1455
        %v1476 = vmul.f32 %v1015, %v1455
        %v1477 = vmul.f32 %v1020, %v1455
        %v1478 = vmul.f32 %v1023, %v1455
        %v1479 = vmul.f32 %v1028, %v1455
        %v1480 = vmul.f32 %v1031, %v1455
        %v1481 = vmul.f32 %v1036, %v1455
        %v1482 = vmul.f32 %v1039, %v1455
        %v1483 = vmul.f32 %v1044, %v1455
        %v1484 = vmul.f32 %v1047, %v1455
        %v1485 = vmul.f32 %v1052, %v1455
        %v1486 = vmul.f32 %v1055, %v1455
        %v1487 = vmul.f32 %v1060, %v1455
        %v1488 = vmul.f32 %v1063, %v1455
        %v1489 = vmul.f32 %v1068, %v1455
        %v1490 = vmul.f32 %v1071, %v1455
        %v1491 = vmul.f32 %v1076, %v1455
        %v1492 = vmul.f32 %v1079, %v1455
        %v1493 = vmul.f32 %v1084, %v1455
        %v1494 = vmul.f32 %v1087, %v1455
        %v1495 = vmul.f32 %v1092, %v1455
        %v1496 = vmul.f32 %v1095, %v1455
        %v1497 = vmul.f32 %v1100, %v1455
        %v1498 = vmul.f32 %v1103, %v1455
        %v1499 = vmul.f32 %v1108, %v1455
        %v1500 = vmul.f32 %v1111, %v1455
        %v1501 = vmul.f32 %v1116, %v1455
        %v1502 = vmul.f32 %v1119, %v1455
        %v1503 = vmul.f32 %v1124, %v1455
        %v1504 = vmul.f32 %v1127, %v1455
        %v1505 = vmul.f32 %v1132, %v1455
        %v1506 = vmul.f32 %v1135, %v1455
        %v1507 = vmul.f32 %v1140, %v1455
        %v1508 = vmul.f32 %v1143, %v1455
        %v1509 = vmul.f32 %v1148, %v1455
        %v1510 = vmul.f32 %v1151, %v1455
        %v1511 = vmul.f32 %v1156, %v1455
        %v1512 = vmul.f32 %v1159, %v1455
        %v1513 = vmul.f32 %v1164, %v1455
        %v1514 = vmul.f32 %v1167, %v1455
        %v1515 = vmul.f32 %v1172, %v1455
        %v1516 = vmul.f32 %v1175, %v1455
        %v1517 = vmul.f32 %v1180, %v1455
        %v1518 = vmul.f32 %v1183, %v1455
        %v1519 = vmul.f32 %v1188, %v1455
        %v1520 = vmul.f32 %v1191, %v1455
        %v1521 = vmul.f32 %v1196, %v1455
        %v1522 = vmul.f32 %v1199, %v1455
        %v1523 = vmul.f32 %v1204, %v1455
        %v1524 = vmul.f32 %v1207, %v1455
        %v1525 = vmul.f32 %v1212, %v1455
        %v1526 = vmul.f32 %v1215, %v1455
        %v1527 = vmul.f32 %v1220, %v1455
        %v1528 = vmul.f32 %v1223, %v1455
        %v1529 = vmul.f32 %v1228, %v1455
        %v1530 = vmul.f32 %v1231, %v1455
        %v1531 = vmul.f32 %v1236, %v1455
        %v1532 = vmul.f32 %v1239, %v1455
        %v1533 = vmul.f32 %v1244, %v1455
        %v1534 = vmul.f32 %v1247, %v1455
        %v1535 = vmul.f32 %v1252, %v1455
        %v1536 = vmul.f32 %v1255, %v1455
        %v1537 = vmul.f32 %v1260, %v1455
        %v1538 = vmul.f32 %v1263, %v1455
        %v1539 = vmul.f32 %v1268, %v1455
        %v1540 = vmul.f32 %v1271, %v1455
        %v1541 = vmul.f32 %v1276, %v1455
        %v1542 = vmul.f32 %v1279, %v1455
        %v1543 = vmul.f32 %v1284, %v1455
        %v1544 = vmul.f32 %v1287, %v1455
        %v1545 = vmul.f32 %v1292, %v1455
        %v1546 = vmul.f32 %v1295, %v1455
        %v1547 = vmul.f32 %v1300, %v1455
        %v1548 = vmul.f32 %v1303, %v1455
        %v1549 = vmul.f32 %v1308, %v1455
        %v1550 = vmul.f32 %v1311, %v1455
        %v1551 = vmul.f32 %v1316, %v1455
        %v1552 = vmul.f32 %v1319, %v1455
        %v1553 = vmul.f32 %v1324, %v1455
        %v1554 = vmul.f32 %v1327, %v1455
        %v1555 = vmul.f32 %v1332, %v1455
        %v1556 = vmul.f32 %v1335, %v1455
        %v1557 = vmul.f32 %v1340, %v1455
        %v1558 = vmul.f32 %v1343, %v1455
        %v1559 = vmul.f32 %v1348, %v1455
        %v1560 = vmul.f32 %v1351, %v1455
        %v1561 = vmul.f32 %v1356, %v1455
        %v1562 = vmul.f32 %v1359, %v1455
        %v1563 = vmul.f32 %v1364, %v1455
        %v1564 = vmul.f32 %v1367, %v1455
        %v1565 = vmul.f32 %v1372, %v1455
        %v1566 = vmul.f32 %v1375, %v1455
        %v1567 = vmul.f32 %v1380, %v1455
        %v1568 = vmul.f32 %v1383, %v1455
        %v1569 = vmul.f32 %v1388, %v1455
        %v1570 = vmul.f32 %v1391, %v1455
        %v1571 = vmul.f32 %v1396, %v1455
        %v1572 = vmul.f32 %v1399, %v1455
        %v1573 = vmul.f32 %v1404, %v1455
        %v1574 = vmul.f32 %v1407, %v1455
        %v1575 = vmul.f32 %v1412, %v1455
        %v1576 = vmul.f32 %v1415, %v1455
        %v1577 = vmul.f32 %v1420, %v1455
        %v1578 = vmul.f32 %v1423, %v1455
        %v1579 = vmul.f32 %v1428, %v1455
        %v1580 = vmul.f32 %v1431, %v1455
        %v1581 = vmul.f32 %v1436, %v1455
        %v1582 = vmul.f32 %v1439, %v1455
        %v1583 = vmul.f32 %v1444, %v1455
        %v1584 = vmul.f32 %v1447, %v1455
        %v1585 = vld [vmem:[#allocation6] sm:$0x1]
        %v1587 = vlaneseq
        %v1588 = vshrl.u32 %v1587, 7
        %v1589 = vsub.s32 0, %v1588
        %v1590 = vrot.slane %v1585, %v1589
        %v1592 = vadd.f32 %v1457, %v1590
        %v1593 = vadd.f32 %v1458, %v1590
        %v1594 = vadd.f32 %v1459, %v1590
        %v1595 = vadd.f32 %v1460, %v1590
        %v1596 = vadd.f32 %v1461, %v1590
        %v1597 = vadd.f32 %v1462, %v1590
        %v1598 = vadd.f32 %v1463, %v1590
        %v1599 = vadd.f32 %v1464, %v1590
        %v1600 = vadd.f32 %v1465, %v1590
        %v1601 = vadd.f32 %v1466, %v1590
        %v1602 = vadd.f32 %v1467, %v1590
        %v1603 = vadd.f32 %v1468, %v1590
        %v1604 = vadd.f32 %v1469, %v1590
        %v1605 = vadd.f32 %v1470, %v1590
        %v1606 = vadd.f32 %v1471, %v1590
        %v1607 = vadd.f32 %v1472, %v1590
        %v1608 = vadd.f32 %v1473, %v1590
        %v1609 = vadd.f32 %v1474, %v1590
        %v1610 = vadd.f32 %v1475, %v1590
        %v1611 = vadd.f32 %v1476, %v1590
        %v1612 = vadd.f32 %v1477, %v1590
        %v1613 = vadd.f32 %v1478, %v1590
        %v1614 = vadd.f32 %v1479, %v1590
        %v1615 = vadd.f32 %v1480, %v1590
        %v1616 = vadd.f32 %v1481, %v1590
        %v1617 = vadd.f32 %v1482, %v1590
        %v1618 = vadd.f32 %v1483, %v1590
        %v1619 = vadd.f32 %v1484, %v1590
        %v1620 = vadd.f32 %v1485, %v1590
        %v1621 = vadd.f32 %v1486, %v1590
        %v1622 = vadd.f32 %v1487, %v1590
        %v1623 = vadd.f32 %v1488, %v1590
        %v1624 = vadd.f32 %v1489, %v1590
        %v1625 = vadd.f32 %v1490, %v1590
        %v1626 = vadd.f32 %v1491, %v1590
        %v1627 = vadd.f32 %v1492, %v1590
        %v1628 = vadd.f32 %v1493, %v1590
        %v1629 = vadd.f32 %v1494, %v1590
        %v1630 = vadd.f32 %v1495, %v1590
        %v1631 = vadd.f32 %v1496, %v1590
        %v1632 = vadd.f32 %v1497, %v1590
        %v1633 = vadd.f32 %v1498, %v1590
        %v1634 = vadd.f32 %v1499, %v1590
        %v1635 = vadd.f32 %v1500, %v1590
        %v1636 = vadd.f32 %v1501, %v1590
        %v1637 = vadd.f32 %v1502, %v1590
        %v1638 = vadd.f32 %v1503, %v1590
        %v1639 = vadd.f32 %v1504, %v1590
        %v1640 = vadd.f32 %v1505, %v1590
        %v1641 = vadd.f32 %v1506, %v1590
        %v1642 = vadd.f32 %v1507, %v1590
        %v1643 = vadd.f32 %v1508, %v1590
        %v1644 = vadd.f32 %v1509, %v1590
        %v1645 = vadd.f32 %v1510, %v1590
        %v1646 = vadd.f32 %v1511, %v1590
        %v1647 = vadd.f32 %v1512, %v1590
        %v1648 = vadd.f32 %v1513, %v1590
        %v1649 = vadd.f32 %v1514, %v1590
        %v1650 = vadd.f32 %v1515, %v1590
        %v1651 = vadd.f32 %v1516, %v1590
        %v1652 = vadd.f32 %v1517, %v1590
        %v1653 = vadd.f32 %v1518, %v1590
        %v1654 = vadd.f32 %v1519, %v1590
        %v1655 = vadd.f32 %v1520, %v1590
        %v1656 = vadd.f32 %v1521, %v1590
        %v1657 = vadd.f32 %v1522, %v1590
        %v1658 = vadd.f32 %v1523, %v1590
        %v1659 = vadd.f32 %v1524, %v1590
        %v1660 = vadd.f32 %v1525, %v1590
        %v1661 = vadd.f32 %v1526, %v1590
        %v1662 = vadd.f32 %v1527, %v1590
        %v1663 = vadd.f32 %v1528, %v1590
        %v1664 = vadd.f32 %v1529, %v1590
        %v1665 = vadd.f32 %v1530, %v1590
        %v1666 = vadd.f32 %v1531, %v1590
        %v1667 = vadd.f32 %v1532, %v1590
        %v1668 = vadd.f32 %v1533, %v1590
        %v1669 = vadd.f32 %v1534, %v1590
        %v1670 = vadd.f32 %v1535, %v1590
        %v1671 = vadd.f32 %v1536, %v1590
        %v1672 = vadd.f32 %v1537, %v1590
        %v1673 = vadd.f32 %v1538, %v1590
        %v1674 = vadd.f32 %v1539, %v1590
        %v1675 = vadd.f32 %v1540, %v1590
        %v1676 = vadd.f32 %v1541, %v1590
        %v1677 = vadd.f32 %v1542, %v1590
        %v1678 = vadd.f32 %v1543, %v1590
        %v1679 = vadd.f32 %v1544, %v1590
        %v1680 = vadd.f32 %v1545, %v1590
        %v1681 = vadd.f32 %v1546, %v1590
        %v1682 = vadd.f32 %v1547, %v1590
        %v1683 = vadd.f32 %v1548, %v1590
        %v1684 = vadd.f32 %v1549, %v1590
        %v1685 = vadd.f32 %v1550, %v1590
        %v1686 = vadd.f32 %v1551, %v1590
        %v1687 = vadd.f32 %v1552, %v1590
        %v1688 = vadd.f32 %v1553, %v1590
        %v1689 = vadd.f32 %v1554, %v1590
        %v1690 = vadd.f32 %v1555, %v1590
        %v1691 = vadd.f32 %v1556, %v1590
        %v1692 = vadd.f32 %v1557, %v1590
        %v1693 = vadd.f32 %v1558, %v1590
        %v1694 = vadd.f32 %v1559, %v1590
        %v1695 = vadd.f32 %v1560, %v1590
        %v1696 = vadd.f32 %v1561, %v1590
        %v1697 = vadd.f32 %v1562, %v1590
        %v1698 = vadd.f32 %v1563, %v1590
        %v1699 = vadd.f32 %v1564, %v1590
        %v1700 = vadd.f32 %v1565, %v1590
        %v1701 = vadd.f32 %v1566, %v1590
        %v1702 = vadd.f32 %v1567, %v1590
        %v1703 = vadd.f32 %v1568, %v1590
        %v1704 = vadd.f32 %v1569, %v1590
        %v1705 = vadd.f32 %v1570, %v1590
        %v1706 = vadd.f32 %v1571, %v1590
        %v1707 = vadd.f32 %v1572, %v1590
        %v1708 = vadd.f32 %v1573, %v1590
        %v1709 = vadd.f32 %v1574, %v1590
        %v1710 = vadd.f32 %v1575, %v1590
        %v1711 = vadd.f32 %v1576, %v1590
        %v1712 = vadd.f32 %v1577, %v1590
        %v1713 = vadd.f32 %v1578, %v1590
        %v1714 = vadd.f32 %v1579, %v1590
        %v1715 = vadd.f32 %v1580, %v1590
        %v1716 = vadd.f32 %v1581, %v1590
        %v1717 = vadd.f32 %v1582, %v1590
        %v1718 = vadd.f32 %v1583, %v1590
        %v1719 = vadd.f32 %v1584, %v1590
        %v1720 = vmax.f32 %v1592, 0.0
        %v1721 = vmax.f32 %v1593, 0.0
        %v1722 = vmax.f32 %v1594, 0.0
        %v1723 = vmax.f32 %v1595, 0.0
        %v1724 = vmax.f32 %v1596, 0.0
        %v1725 = vmax.f32 %v1597, 0.0
        %v1726 = vmax.f32 %v1598, 0.0
        %v1727 = vmax.f32 %v1599, 0.0
        %v1728 = vmax.f32 %v1600, 0.0
        %v1729 = vmax.f32 %v1601, 0.0
        %v1730 = vmax.f32 %v1602, 0.0
        %v1731 = vmax.f32 %v1603, 0.0
        %v1732 = vmax.f32 %v1604, 0.0
        %v1733 = vmax.f32 %v1605, 0.0
        %v1734 = vmax.f32 %v1606, 0.0
        %v1735 = vmax.f32 %v1607, 0.0
        %v1736 = vmax.f32 %v1608, 0.0
        %v1737 = vmax.f32 %v1609, 0.0
        %v1738 = vmax.f32 %v1610, 0.0
        %v1739 = vmax.f32 %v1611, 0.0
        %v1740 = vmax.f32 %v1612, 0.0
        %v1741 = vmax.f32 %v1613, 0.0
        %v1742 = vmax.f32 %v1614, 0.0
        %v1743 = vmax.f32 %v1615, 0.0
        %v1744 = vmax.f32 %v1616, 0.0
        %v1745 = vmax.f32 %v1617, 0.0
        %v1746 = vmax.f32 %v1618, 0.0
        %v1747 = vmax.f32 %v1619, 0.0
        %v1748 = vmax.f32 %v1620, 0.0
        %v1749 = vmax.f32 %v1621, 0.0
        %v1750 = vmax.f32 %v1622, 0.0
        %v1751 = vmax.f32 %v1623, 0.0
        %v1752 = vmax.f32 %v1624, 0.0
        %v1753 = vmax.f32 %v1625, 0.0
        %v1754 = vmax.f32 %v1626, 0.0
        %v1755 = vmax.f32 %v1627, 0.0
        %v1756 = vmax.f32 %v1628, 0.0
        %v1757 = vmax.f32 %v1629, 0.0
        %v1758 = vmax.f32 %v1630, 0.0
        %v1759 = vmax.f32 %v1631, 0.0
        %v1760 = vmax.f32 %v1632, 0.0
        %v1761 = vmax.f32 %v1633, 0.0
        %v1762 = vmax.f32 %v1634, 0.0
        %v1763 = vmax.f32 %v1635, 0.0
        %v1764 = vmax.f32 %v1636, 0.0
        %v1765 = vmax.f32 %v1637, 0.0
        %v1766 = vmax.f32 %v1638, 0.0
        %v1767 = vmax.f32 %v1639, 0.0
        %v1768 = vmax.f32 %v1640, 0.0
        %v1769 = vmax.f32 %v1641, 0.0
        %v1770 = vmax.f32 %v1642, 0.0
        %v1771 = vmax.f32 %v1643, 0.0
        %v1772 = vmax.f32 %v1644, 0.0
        %v1773 = vmax.f32 %v1645, 0.0
        %v1774 = vmax.f32 %v1646, 0.0
        %v1775 = vmax.f32 %v1647, 0.0
        %v1776 = vmax.f32 %v1648, 0.0
        %v1777 = vmax.f32 %v1649, 0.0
        %v1778 = vmax.f32 %v1650, 0.0
        %v1779 = vmax.f32 %v1651, 0.0
        %v1780 = vmax.f32 %v1652, 0.0
        %v1781 = vmax.f32 %v1653, 0.0
        %v1782 = vmax.f32 %v1654, 0.0
        %v1783 = vmax.f32 %v1655, 0.0
        %v1784 = vmax.f32 %v1656, 0.0
        %v1785 = vmax.f32 %v1657, 0.0
        %v1786 = vmax.f32 %v1658, 0.0
        %v1787 = vmax.f32 %v1659, 0.0
        %v1788 = vmax.f32 %v1660, 0.0
        %v1789 = vmax.f32 %v1661, 0.0
        %v1790 = vmax.f32 %v1662, 0.0
        %v1791 = vmax.f32 %v1663, 0.0
        %v1792 = vmax.f32 %v1664, 0.0
        %v1793 = vmax.f32 %v1665, 0.0
        %v1794 = vmax.f32 %v1666, 0.0
        %v1795 = vmax.f32 %v1667, 0.0
        %v1796 = vmax.f32 %v1668, 0.0
        %v1797 = vmax.f32 %v1669, 0.0
        %v1798 = vmax.f32 %v1670, 0.0
        %v1799 = vmax.f32 %v1671, 0.0
        %v1800 = vmax.f32 %v1672, 0.0
        %v1801 = vmax.f32 %v1673, 0.0
        %v1802 = vmax.f32 %v1674, 0.0
        %v1803 = vmax.f32 %v1675, 0.0
        %v1804 = vmax.f32 %v1676, 0.0
        %v1805 = vmax.f32 %v1677, 0.0
        %v1806 = vmax.f32 %v1678, 0.0
        %v1807 = vmax.f32 %v1679, 0.0
        %v1808 = vmax.f32 %v1680, 0.0
        %v1809 = vmax.f32 %v1681, 0.0
        %v1810 = vmax.f32 %v1682, 0.0
        %v1811 = vmax.f32 %v1683, 0.0
        %v1812 = vmax.f32 %v1684, 0.0
        %v1813 = vmax.f32 %v1685, 0.0
        %v1814 = vmax.f32 %v1686, 0.0
        %v1815 = vmax.f32 %v1687, 0.0
        %v1816 = vmax.f32 %v1688, 0.0
        %v1817 = vmax.f32 %v1689, 0.0
        %v1818 = vmax.f32 %v1690, 0.0
        %v1819 = vmax.f32 %v1691, 0.0
        %v1820 = vmax.f32 %v1692, 0.0
        %v1821 = vmax.f32 %v1693, 0.0
        %v1822 = vmax.f32 %v1694, 0.0
        %v1823 = vmax.f32 %v1695, 0.0
        %v1824 = vmax.f32 %v1696, 0.0
        %v1825 = vmax.f32 %v1697, 0.0
        %v1826 = vmax.f32 %v1698, 0.0
        %v1827 = vmax.f32 %v1699, 0.0
        %v1828 = vmax.f32 %v1700, 0.0
        %v1829 = vmax.f32 %v1701, 0.0
        %v1830 = vmax.f32 %v1702, 0.0
        %v1831 = vmax.f32 %v1703, 0.0
        %v1832 = vmax.f32 %v1704, 0.0
        %v1833 = vmax.f32 %v1705, 0.0
        %v1834 = vmax.f32 %v1706, 0.0
        %v1835 = vmax.f32 %v1707, 0.0
        %v1836 = vmax.f32 %v1708, 0.0
        %v1837 = vmax.f32 %v1709, 0.0
        %v1838 = vmax.f32 %v1710, 0.0
        %v1839 = vmax.f32 %v1711, 0.0
        %v1840 = vmax.f32 %v1712, 0.0
        %v1841 = vmax.f32 %v1713, 0.0
        %v1842 = vmax.f32 %v1714, 0.0
        %v1843 = vmax.f32 %v1715, 0.0
        %v1844 = vmax.f32 %v1716, 0.0
        %v1845 = vmax.f32 %v1717, 0.0
        %v1846 = vmax.f32 %v1718, 0.0
        %v1847 = vmax.f32 %v1719, 0.0
        %v1848 = vpack.c.bf16 %v1721, %v1720
        %v1849 = vpack.c.bf16 %v1723, %v1722
        %v1850 = vpack.c.bf16 %v1725, %v1724
        %v1851 = vpack.c.bf16 %v1727, %v1726
        %v1852 = vpack.c.bf16 %v1729, %v1728
        %v1853 = vpack.c.bf16 %v1731, %v1730
        %v1854 = vpack.c.bf16 %v1733, %v1732
        %v1855 = vpack.c.bf16 %v1735, %v1734
        %v1856 = vpack.c.bf16 %v1737, %v1736
        %v1857 = vpack.c.bf16 %v1739, %v1738
        %v1858 = vpack.c.bf16 %v1741, %v1740
        %v1859 = vpack.c.bf16 %v1743, %v1742
        %v1860 = vpack.c.bf16 %v1745, %v1744
        %v1861 = vpack.c.bf16 %v1747, %v1746
        %v1862 = vpack.c.bf16 %v1749, %v1748
        %v1863 = vpack.c.bf16 %v1751, %v1750
        %v1864 = vpack.c.bf16 %v1753, %v1752
        %v1865 = vpack.c.bf16 %v1755, %v1754
        %v1866 = vpack.c.bf16 %v1757, %v1756
        %v1867 = vpack.c.bf16 %v1759, %v1758
        %v1868 = vpack.c.bf16 %v1761, %v1760
        %v1869 = vpack.c.bf16 %v1763, %v1762
        %v1870 = vpack.c.bf16 %v1765, %v1764
        %v1871 = vpack.c.bf16 %v1767, %v1766
        %v1872 = vpack.c.bf16 %v1769, %v1768
        %v1873 = vpack.c.bf16 %v1771, %v1770
        %v1874 = vpack.c.bf16 %v1773, %v1772
        %v1875 = vpack.c.bf16 %v1775, %v1774
        %v1876 = vpack.c.bf16 %v1777, %v1776
        %v1877 = vpack.c.bf16 %v1779, %v1778
        %v1878 = vpack.c.bf16 %v1781, %v1780
        %v1879 = vpack.c.bf16 %v1783, %v1782
        %v1880 = vpack.c.bf16 %v1785, %v1784
        %v1881 = vpack.c.bf16 %v1787, %v1786
        %v1882 = vpack.c.bf16 %v1789, %v1788
        %v1883 = vpack.c.bf16 %v1791, %v1790
        %v1884 = vpack.c.bf16 %v1793, %v1792
        %v1885 = vpack.c.bf16 %v1795, %v1794
        %v1886 = vpack.c.bf16 %v1797, %v1796
        %v1887 = vpack.c.bf16 %v1799, %v1798
        %v1888 = vpack.c.bf16 %v1801, %v1800
        %v1889 = vpack.c.bf16 %v1803, %v1802
        %v1890 = vpack.c.bf16 %v1805, %v1804
        %v1891 = vpack.c.bf16 %v1807, %v1806
        %v1892 = vpack.c.bf16 %v1809, %v1808
        %v1893 = vpack.c.bf16 %v1811, %v1810
        %v1894 = vpack.c.bf16 %v1813, %v1812
        %v1895 = vpack.c.bf16 %v1815, %v1814
        %v1896 = vpack.c.bf16 %v1817, %v1816
        %v1897 = vpack.c.bf16 %v1819, %v1818
        %v1898 = vpack.c.bf16 %v1821, %v1820
        %v1899 = vpack.c.bf16 %v1823, %v1822
        %v1900 = vpack.c.bf16 %v1825, %v1824
        %v1901 = vpack.c.bf16 %v1827, %v1826
        %v1902 = vpack.c.bf16 %v1829, %v1828
        %v1903 = vpack.c.bf16 %v1831, %v1830
        %v1904 = vpack.c.bf16 %v1833, %v1832
        %v1905 = vpack.c.bf16 %v1835, %v1834
        %v1906 = vpack.c.bf16 %v1837, %v1836
        %v1907 = vpack.c.bf16 %v1839, %v1838
        %v1908 = vpack.c.bf16 %v1841, %v1840
        %v1909 = vpack.c.bf16 %v1843, %v1842
        %v1910 = vpack.c.bf16 %v1845, %v1844
        %v1911 = vpack.c.bf16 %v1847, %v1846
        %v1976 = vunpack.c.l.b16 %v1848
        %v1977 = vunpack.c.h.b16 %v1848
        %v1978 = vunpack.c.l.b16 %v1849
        %v1979 = vunpack.c.h.b16 %v1849
        %v1980 = vunpack.c.l.b16 %v1850
        %v1981 = vunpack.c.h.b16 %v1850
        %v1982 = vunpack.c.l.b16 %v1851
        %v1983 = vunpack.c.h.b16 %v1851
        %v1984 = vunpack.c.l.b16 %v1852
        %v1985 = vunpack.c.h.b16 %v1852
        %v1986 = vunpack.c.l.b16 %v1853
        %v1987 = vunpack.c.h.b16 %v1853
        %v1988 = vunpack.c.l.b16 %v1854
        %v1989 = vunpack.c.h.b16 %v1854
        %v1990 = vunpack.c.l.b16 %v1855
        %v1991 = vunpack.c.h.b16 %v1855
        %v1992 = vunpack.c.l.b16 %v1856
        %v1993 = vunpack.c.h.b16 %v1856
        %v1994 = vunpack.c.l.b16 %v1857
        %v1995 = vunpack.c.h.b16 %v1857
        %v1996 = vunpack.c.l.b16 %v1858
        %v1997 = vunpack.c.h.b16 %v1858
        %v1998 = vunpack.c.l.b16 %v1859
        %v1999 = vunpack.c.h.b16 %v1859
        %v2000 = vunpack.c.l.b16 %v1860
        %v2001 = vunpack.c.h.b16 %v1860
        %v2002 = vunpack.c.l.b16 %v1861
        %v2003 = vunpack.c.h.b16 %v1861
        %v2004 = vunpack.c.l.b16 %v1862
        %v2005 = vunpack.c.h.b16 %v1862
        %v2006 = vunpack.c.l.b16 %v1863
        %v2007 = vunpack.c.h.b16 %v1863
        %v2008 = vunpack.c.l.b16 %v1864
        %v2009 = vunpack.c.h.b16 %v1864
        %v2010 = vunpack.c.l.b16 %v1865
        %v2011 = vunpack.c.h.b16 %v1865
        %v2012 = vunpack.c.l.b16 %v1866
        %v2013 = vunpack.c.h.b16 %v1866
        %v2014 = vunpack.c.l.b16 %v1867
        %v2015 = vunpack.c.h.b16 %v1867
        %v2016 = vunpack.c.l.b16 %v1868
        %v2017 = vunpack.c.h.b16 %v1868
        %v2018 = vunpack.c.l.b16 %v1869
        %v2019 = vunpack.c.h.b16 %v1869
        %v2020 = vunpack.c.l.b16 %v1870
        %v2021 = vunpack.c.h.b16 %v1870
        %v2022 = vunpack.c.l.b16 %v1871
        %v2023 = vunpack.c.h.b16 %v1871
        %v2024 = vunpack.c.l.b16 %v1872
        %v2025 = vunpack.c.h.b16 %v1872
        %v2026 = vunpack.c.l.b16 %v1873
        %v2027 = vunpack.c.h.b16 %v1873
        %v2028 = vunpack.c.l.b16 %v1874
        %v2029 = vunpack.c.h.b16 %v1874
        %v2030 = vunpack.c.l.b16 %v1875
        %v2031 = vunpack.c.h.b16 %v1875
        %v2032 = vunpack.c.l.b16 %v1876
        %v2033 = vunpack.c.h.b16 %v1876
        %v2034 = vunpack.c.l.b16 %v1877
        %v2035 = vunpack.c.h.b16 %v1877
        %v2036 = vunpack.c.l.b16 %v1878
        %v2037 = vunpack.c.h.b16 %v1878
        %v2038 = vunpack.c.l.b16 %v1879
        %v2039 = vunpack.c.h.b16 %v1879
        %v2040 = vunpack.c.l.b16 %v1880
        %v2041 = vunpack.c.h.b16 %v1880
        %v2042 = vunpack.c.l.b16 %v1881
        %v2043 = vunpack.c.h.b16 %v1881
        %v2044 = vunpack.c.l.b16 %v1882
        %v2045 = vunpack.c.h.b16 %v1882
        %v2046 = vunpack.c.l.b16 %v1883
        %v2047 = vunpack.c.h.b16 %v1883
        %v2048 = vunpack.c.l.b16 %v1884
        %v2049 = vunpack.c.h.b16 %v1884
        %v2050 = vunpack.c.l.b16 %v1885
        %v2051 = vunpack.c.h.b16 %v1885
        %v2052 = vunpack.c.l.b16 %v1886
        %v2053 = vunpack.c.h.b16 %v1886
        %v2054 = vunpack.c.l.b16 %v1887
        %v2055 = vunpack.c.h.b16 %v1887
        %v2056 = vunpack.c.l.b16 %v1888
        %v2057 = vunpack.c.h.b16 %v1888
        %v2058 = vunpack.c.l.b16 %v1889
        %v2059 = vunpack.c.h.b16 %v1889
        %v2060 = vunpack.c.l.b16 %v1890
        %v2061 = vunpack.c.h.b16 %v1890
        %v2062 = vunpack.c.l.b16 %v1891
        %v2063 = vunpack.c.h.b16 %v1891
        %v2064 = vunpack.c.l.b16 %v1892
        %v2065 = vunpack.c.h.b16 %v1892
        %v2066 = vunpack.c.l.b16 %v1893
        %v2067 = vunpack.c.h.b16 %v1893
        %v2068 = vunpack.c.l.b16 %v1894
        %v2069 = vunpack.c.h.b16 %v1894
        %v2070 = vunpack.c.l.b16 %v1895
        %v2071 = vunpack.c.h.b16 %v1895
        %v2072 = vunpack.c.l.b16 %v1896
        %v2073 = vunpack.c.h.b16 %v1896
        %v2074 = vunpack.c.l.b16 %v1897
        %v2075 = vunpack.c.h.b16 %v1897
        %v2076 = vunpack.c.l.b16 %v1898
        %v2077 = vunpack.c.h.b16 %v1898
        %v2078 = vunpack.c.l.b16 %v1899
        %v2079 = vunpack.c.h.b16 %v1899
        %v2080 = vunpack.c.l.b16 %v1900
        %v2081 = vunpack.c.h.b16 %v1900
        %v2082 = vunpack.c.l.b16 %v1901
        %v2083 = vunpack.c.h.b16 %v1901
        %v2084 = vunpack.c.l.b16 %v1902
        %v2085 = vunpack.c.h.b16 %v1902
        %v2086 = vunpack.c.l.b16 %v1903
        %v2087 = vunpack.c.h.b16 %v1903
        %v2088 = vunpack.c.l.b16 %v1904
        %v2089 = vunpack.c.h.b16 %v1904
        %v2090 = vunpack.c.l.b16 %v1905
        %v2091 = vunpack.c.h.b16 %v1905
        %v2092 = vunpack.c.l.b16 %v1906
        %v2093 = vunpack.c.h.b16 %v1906
        %v2094 = vunpack.c.l.b16 %v1907
        %v2095 = vunpack.c.h.b16 %v1907
        %v2096 = vunpack.c.l.b16 %v1908
        %v2097 = vunpack.c.h.b16 %v1908
        %v2098 = vunpack.c.l.b16 %v1909
        %v2099 = vunpack.c.h.b16 %v1909
        %v2100 = vunpack.c.l.b16 %v1910
        %v2101 = vunpack.c.h.b16 %v1910
        %v2102 = vunpack.c.l.b16 %v1911
        %v2103 = vunpack.c.h.b16 %v1911
        %v2104 = vpack.c.b16 %v1976, %v1976
        %v2105 = vpack.c.b16 %v1977, %v1977
        %v2106 = vpack.c.b16 %v1978, %v1978
        %v2107 = vpack.c.b16 %v1979, %v1979
        %v2108 = vpack.c.b16 %v1980, %v1980
        %v2109 = vpack.c.b16 %v1981, %v1981
        %v2110 = vpack.c.b16 %v1982, %v1982
        %v2111 = vpack.c.b16 %v1983, %v1983
        %v2112 = vpack.c.b16 %v1984, %v1984
        %v2113 = vpack.c.b16 %v1985, %v1985
        %v2114 = vpack.c.b16 %v1986, %v1986
        %v2115 = vpack.c.b16 %v1987, %v1987
        %v2116 = vpack.c.b16 %v1988, %v1988
        %v2117 = vpack.c.b16 %v1989, %v1989
        %v2118 = vpack.c.b16 %v1990, %v1990
        %v2119 = vpack.c.b16 %v1991, %v1991
        %v2120 = vpack.c.b16 %v1992, %v1992
        %v2121 = vpack.c.b16 %v1993, %v1993
        %v2122 = vpack.c.b16 %v1994, %v1994
        %v2123 = vpack.c.b16 %v1995, %v1995
        %v2124 = vpack.c.b16 %v1996, %v1996
        %v2125 = vpack.c.b16 %v1997, %v1997
        %v2126 = vpack.c.b16 %v1998, %v1998
        %v2127 = vpack.c.b16 %v1999, %v1999
        %v2128 = vpack.c.b16 %v2000, %v2000
        %v2129 = vpack.c.b16 %v2001, %v2001
        %v2130 = vpack.c.b16 %v2002, %v2002
        %v2131 = vpack.c.b16 %v2003, %v2003
        %v2132 = vpack.c.b16 %v2004, %v2004
        %v2133 = vpack.c.b16 %v2005, %v2005
        %v2134 = vpack.c.b16 %v2006, %v2006
        %v2135 = vpack.c.b16 %v2007, %v2007
        %v2136 = vpack.c.b16 %v2008, %v2008
        %v2137 = vpack.c.b16 %v2009, %v2009
        %v2138 = vpack.c.b16 %v2010, %v2010
        %v2139 = vpack.c.b16 %v2011, %v2011
        %v2140 = vpack.c.b16 %v2012, %v2012
        %v2141 = vpack.c.b16 %v2013, %v2013
        %v2142 = vpack.c.b16 %v2014, %v2014
        %v2143 = vpack.c.b16 %v2015, %v2015
        %v2144 = vpack.c.b16 %v2016, %v2016
        %v2145 = vpack.c.b16 %v2017, %v2017
        %v2146 = vpack.c.b16 %v2018, %v2018
        %v2147 = vpack.c.b16 %v2019, %v2019
        %v2148 = vpack.c.b16 %v2020, %v2020
        %v2149 = vpack.c.b16 %v2021, %v2021
        %v2150 = vpack.c.b16 %v2022, %v2022
        %v2151 = vpack.c.b16 %v2023, %v2023
        %v2152 = vpack.c.b16 %v2024, %v2024
        %v2153 = vpack.c.b16 %v2025, %v2025
        %v2154 = vpack.c.b16 %v2026, %v2026
        %v2155 = vpack.c.b16 %v2027, %v2027
        %v2156 = vpack.c.b16 %v2028, %v2028
        %v2157 = vpack.c.b16 %v2029, %v2029
        %v2158 = vpack.c.b16 %v2030, %v2030
        %v2159 = vpack.c.b16 %v2031, %v2031
        %v2160 = vpack.c.b16 %v2032, %v2032
        %v2161 = vpack.c.b16 %v2033, %v2033
        %v2162 = vpack.c.b16 %v2034, %v2034
        %v2163 = vpack.c.b16 %v2035, %v2035
        %v2164 = vpack.c.b16 %v2036, %v2036
        %v2165 = vpack.c.b16 %v2037, %v2037
        %v2166 = vpack.c.b16 %v2038, %v2038
        %v2167 = vpack.c.b16 %v2039, %v2039
        %v2168 = vpack.c.b16 %v2040, %v2040
        %v2169 = vpack.c.b16 %v2041, %v2041
        %v2170 = vpack.c.b16 %v2042, %v2042
        %v2171 = vpack.c.b16 %v2043, %v2043
        %v2172 = vpack.c.b16 %v2044, %v2044
        %v2173 = vpack.c.b16 %v2045, %v2045
        %v2174 = vpack.c.b16 %v2046, %v2046
        %v2175 = vpack.c.b16 %v2047, %v2047
        %v2176 = vpack.c.b16 %v2048, %v2048
        %v2177 = vpack.c.b16 %v2049, %v2049
        %v2178 = vpack.c.b16 %v2050, %v2050
        %v2179 = vpack.c.b16 %v2051, %v2051
        %v2180 = vpack.c.b16 %v2052, %v2052
        %v2181 = vpack.c.b16 %v2053, %v2053
        %v2182 = vpack.c.b16 %v2054, %v2054
        %v2183 = vpack.c.b16 %v2055, %v2055
        %v2184 = vpack.c.b16 %v2056, %v2056
        %v2185 = vpack.c.b16 %v2057, %v2057
        %v2186 = vpack.c.b16 %v2058, %v2058
        %v2187 = vpack.c.b16 %v2059, %v2059
        %v2188 = vpack.c.b16 %v2060, %v2060
        %v2189 = vpack.c.b16 %v2061, %v2061
        %v2190 = vpack.c.b16 %v2062, %v2062
        %v2191 = vpack.c.b16 %v2063, %v2063
        %v2192 = vpack.c.b16 %v2064, %v2064
        %v2193 = vpack.c.b16 %v2065, %v2065
        %v2194 = vpack.c.b16 %v2066, %v2066
        %v2195 = vpack.c.b16 %v2067, %v2067
        %v2196 = vpack.c.b16 %v2068, %v2068
        %v2197 = vpack.c.b16 %v2069, %v2069
        %v2198 = vpack.c.b16 %v2070, %v2070
        %v2199 = vpack.c.b16 %v2071, %v2071
        %v2200 = vpack.c.b16 %v2072, %v2072
        %v2201 = vpack.c.b16 %v2073, %v2073
        %v2202 = vpack.c.b16 %v2074, %v2074
        %v2203 = vpack.c.b16 %v2075, %v2075
        %v2204 = vpack.c.b16 %v2076, %v2076
        %v2205 = vpack.c.b16 %v2077, %v2077
        %v2206 = vpack.c.b16 %v2078, %v2078
        %v2207 = vpack.c.b16 %v2079, %v2079
        %v2208 = vpack.c.b16 %v2080, %v2080
        %v2209 = vpack.c.b16 %v2081, %v2081
        %v2210 = vpack.c.b16 %v2082, %v2082
        %v2211 = vpack.c.b16 %v2083, %v2083
        %v2212 = vpack.c.b16 %v2084, %v2084
        %v2213 = vpack.c.b16 %v2085, %v2085
        %v2214 = vpack.c.b16 %v2086, %v2086
        %v2215 = vpack.c.b16 %v2087, %v2087
        %v2216 = vpack.c.b16 %v2088, %v2088
        %v2217 = vpack.c.b16 %v2089, %v2089
        %v2218 = vpack.c.b16 %v2090, %v2090
        %v2219 = vpack.c.b16 %v2091, %v2091
        %v2220 = vpack.c.b16 %v2092, %v2092
        %v2221 = vpack.c.b16 %v2093, %v2093
        %v2222 = vpack.c.b16 %v2094, %v2094
        %v2223 = vpack.c.b16 %v2095, %v2095
        %v2224 = vpack.c.b16 %v2096, %v2096
        %v2225 = vpack.c.b16 %v2097, %v2097
        %v2226 = vpack.c.b16 %v2098, %v2098
        %v2227 = vpack.c.b16 %v2099, %v2099
        %v2228 = vpack.c.b16 %v2100, %v2100
        %v2229 = vpack.c.b16 %v2101, %v2101
        %v2230 = vpack.c.b16 %v2102, %v2102
        %v2231 = vpack.c.b16 %v2103, %v2103
        %2360 = vst [vmem:[%s239] sm:$0xf] %v2104
        %2361 = vst [vmem:[%s239 + $0x4] sm:$0xf] %v2105
        %2362 = vst [vmem:[%s239 + $0x8] sm:$0xf] %v2106
        %2363 = vst [vmem:[%s239 + $0xc] sm:$0xf] %v2107
        %2364 = vst [vmem:[%s239 + $0x10] sm:$0xf] %v2108
        %2365 = vst [vmem:[%s239 + $0x14] sm:$0xf] %v2109
        %2366 = vst [vmem:[%s239 + $0x18] sm:$0xf] %v2110
        %2367 = vst [vmem:[%s239 + $0x1c] sm:$0xf] %v2111
        %2368 = vst [vmem:[%s239 + $0x20] sm:$0xf] %v2112
        %2369 = vst [vmem:[%s239 + $0x24] sm:$0xf] %v2113
        %2370 = vst [vmem:[%s239 + $0x28] sm:$0xf] %v2114
        %2371 = vst [vmem:[%s239 + $0x2c] sm:$0xf] %v2115
        %2372 = vst [vmem:[%s239 + $0x30] sm:$0xf] %v2116
        %2373 = vst [vmem:[%s239 + $0x34] sm:$0xf] %v2117
        %2374 = vst [vmem:[%s239 + $0x38] sm:$0xf] %v2118
        %2375 = vst [vmem:[%s239 + $0x3c] sm:$0xf] %v2119
        %2376 = vst [vmem:[%s239 + $0x40] sm:$0xf] %v2120
        %2377 = vst [vmem:[%s239 + $0x44] sm:$0xf] %v2121
        %2378 = vst [vmem:[%s239 + $0x48] sm:$0xf] %v2122
        %2379 = vst [vmem:[%s239 + $0x4c] sm:$0xf] %v2123
        %2380 = vst [vmem:[%s239 + $0x50] sm:$0xf] %v2124
        %2381 = vst [vmem:[%s239 + $0x54] sm:$0xf] %v2125
        %2382 = vst [vmem:[%s239 + $0x58] sm:$0xf] %v2126
        %2383 = vst [vmem:[%s239 + $0x5c] sm:$0xf] %v2127
        %2384 = vst [vmem:[%s239 + $0x60] sm:$0xf] %v2128
        %2385 = vst [vmem:[%s239 + $0x64] sm:$0xf] %v2129
        %2386 = vst [vmem:[%s239 + $0x68] sm:$0xf] %v2130
        %2387 = vst [vmem:[%s239 + $0x6c] sm:$0xf] %v2131
        %2388 = vst [vmem:[%s239 + $0x70] sm:$0xf] %v2132
        %2389 = vst [vmem:[%s239 + $0x74] sm:$0xf] %v2133
        %2390 = vst [vmem:[%s239 + $0x78] sm:$0xf] %v2134
        %2391 = vst [vmem:[%s239 + $0x7c] sm:$0xf] %v2135
        %2392 = vst [vmem:[%s239 + $0x80] sm:$0xf] %v2136
        %2393 = vst [vmem:[%s239 + $0x84] sm:$0xf] %v2137
        %2394 = vst [vmem:[%s239 + $0x88] sm:$0xf] %v2138
        %2395 = vst [vmem:[%s239 + $0x8c] sm:$0xf] %v2139
        %2396 = vst [vmem:[%s239 + $0x90] sm:$0xf] %v2140
        %2397 = vst [vmem:[%s239 + $0x94] sm:$0xf] %v2141
        %2398 = vst [vmem:[%s239 + $0x98] sm:$0xf] %v2142
        %2399 = vst [vmem:[%s239 + $0x9c] sm:$0xf] %v2143
        %2400 = vst [vmem:[%s239 + $0xa0] sm:$0xf] %v2144
        %2401 = vst [vmem:[%s239 + $0xa4] sm:$0xf] %v2145
        %2402 = vst [vmem:[%s239 + $0xa8] sm:$0xf] %v2146
        %2403 = vst [vmem:[%s239 + $0xac] sm:$0xf] %v2147
        %2404 = vst [vmem:[%s239 + $0xb0] sm:$0xf] %v2148
        %2405 = vst [vmem:[%s239 + $0xb4] sm:$0xf] %v2149
        %2406 = vst [vmem:[%s239 + $0xb8] sm:$0xf] %v2150
        %2407 = vst [vmem:[%s239 + $0xbc] sm:$0xf] %v2151
        %2408 = vst [vmem:[%s239 + $0xc0] sm:$0xf] %v2152
        %2409 = vst [vmem:[%s239 + $0xc4] sm:$0xf] %v2153
        %2410 = vst [vmem:[%s239 + $0xc8] sm:$0xf] %v2154
        %2411 = vst [vmem:[%s239 + $0xcc] sm:$0xf] %v2155
        %2412 = vst [vmem:[%s239 + $0xd0] sm:$0xf] %v2156
        %2413 = vst [vmem:[%s239 + $0xd4] sm:$0xf] %v2157
        %2414 = vst [vmem:[%s239 + $0xd8] sm:$0xf] %v2158
        %2415 = vst [vmem:[%s239 + $0xdc] sm:$0xf] %v2159
        %2416 = vst [vmem:[%s239 + $0xe0] sm:$0xf] %v2160
        %2417 = vst [vmem:[%s239 + $0xe4] sm:$0xf] %v2161
        %2418 = vst [vmem:[%s239 + $0xe8] sm:$0xf] %v2162
        %2419 = vst [vmem:[%s239 + $0xec] sm:$0xf] %v2163
        %2420 = vst [vmem:[%s239 + $0xf0] sm:$0xf] %v2164
        %2421 = vst [vmem:[%s239 + $0xf4] sm:$0xf] %v2165
        %2422 = vst [vmem:[%s239 + $0xf8] sm:$0xf] %v2166
        %2423 = vst [vmem:[%s239 + $0xfc] sm:$0xf] %v2167
        %2424 = vst [vmem:[%s239 + $0x100] sm:$0xf] %v2168
        %2425 = vst [vmem:[%s239 + $0x104] sm:$0xf] %v2169
        %2426 = vst [vmem:[%s239 + $0x108] sm:$0xf] %v2170
        %2427 = vst [vmem:[%s239 + $0x10c] sm:$0xf] %v2171
        %2428 = vst [vmem:[%s239 + $0x110] sm:$0xf] %v2172
        %2429 = vst [vmem:[%s239 + $0x114] sm:$0xf] %v2173
        %2430 = vst [vmem:[%s239 + $0x118] sm:$0xf] %v2174
        %2431 = vst [vmem:[%s239 + $0x11c] sm:$0xf] %v2175
        %2432 = vst [vmem:[%s239 + $0x120] sm:$0xf] %v2176
        %2433 = vst [vmem:[%s239 + $0x124] sm:$0xf] %v2177
        %2434 = vst [vmem:[%s239 + $0x128] sm:$0xf] %v2178
        %2435 = vst [vmem:[%s239 + $0x12c] sm:$0xf] %v2179
        %2436 = vst [vmem:[%s239 + $0x130] sm:$0xf] %v2180
        %2437 = vst [vmem:[%s239 + $0x134] sm:$0xf] %v2181
        %2438 = vst [vmem:[%s239 + $0x138] sm:$0xf] %v2182
        %2439 = vst [vmem:[%s239 + $0x13c] sm:$0xf] %v2183
        %2440 = vst [vmem:[%s239 + $0x140] sm:$0xf] %v2184
        %2441 = vst [vmem:[%s239 + $0x144] sm:$0xf] %v2185
        %2442 = vst [vmem:[%s239 + $0x148] sm:$0xf] %v2186
        %2443 = vst [vmem:[%s239 + $0x14c] sm:$0xf] %v2187
        %2444 = vst [vmem:[%s239 + $0x150] sm:$0xf] %v2188
        %2445 = vst [vmem:[%s239 + $0x154] sm:$0xf] %v2189
        %2446 = vst [vmem:[%s239 + $0x158] sm:$0xf] %v2190
        %2447 = vst [vmem:[%s239 + $0x15c] sm:$0xf] %v2191
        %2448 = vst [vmem:[%s239 + $0x160] sm:$0xf] %v2192
        %2449 = vst [vmem:[%s239 + $0x164] sm:$0xf] %v2193
        %2450 = vst [vmem:[%s239 + $0x168] sm:$0xf] %v2194
        %2451 = vst [vmem:[%s239 + $0x16c] sm:$0xf] %v2195
        %2452 = vst [vmem:[%s239 + $0x170] sm:$0xf] %v2196
        %2453 = vst [vmem:[%s239 + $0x174] sm:$0xf] %v2197
        %2454 = vst [vmem:[%s239 + $0x178] sm:$0xf] %v2198
        %2455 = vst [vmem:[%s239 + $0x17c] sm:$0xf] %v2199
        %2456 = vst [vmem:[%s239 + $0x180] sm:$0xf] %v2200
        %2457 = vst [vmem:[%s239 + $0x184] sm:$0xf] %v2201
        %2458 = vst [vmem:[%s239 + $0x188] sm:$0xf] %v2202
        %2459 = vst [vmem:[%s239 + $0x18c] sm:$0xf] %v2203
        %2460 = vst [vmem:[%s239 + $0x190] sm:$0xf] %v2204
        %2461 = vst [vmem:[%s239 + $0x194] sm:$0xf] %v2205
        %2462 = vst [vmem:[%s239 + $0x198] sm:$0xf] %v2206
        %2463 = vst [vmem:[%s239 + $0x19c] sm:$0xf] %v2207
        %2464 = vst [vmem:[%s239 + $0x1a0] sm:$0xf] %v2208
        %2465 = vst [vmem:[%s239 + $0x1a4] sm:$0xf] %v2209
        %2466 = vst [vmem:[%s239 + $0x1a8] sm:$0xf] %v2210
        %2467 = vst [vmem:[%s239 + $0x1ac] sm:$0xf] %v2211
        %2468 = vst [vmem:[%s239 + $0x1b0] sm:$0xf] %v2212
        %2469 = vst [vmem:[%s239 + $0x1b4] sm:$0xf] %v2213
        %2470 = vst [vmem:[%s239 + $0x1b8] sm:$0xf] %v2214
        %2471 = vst [vmem:[%s239 + $0x1bc] sm:$0xf] %v2215
        %2472 = vst [vmem:[%s239 + $0x1c0] sm:$0xf] %v2216
        %2473 = vst [vmem:[%s239 + $0x1c4] sm:$0xf] %v2217
        %2474 = vst [vmem:[%s239 + $0x1c8] sm:$0xf] %v2218
        %2475 = vst [vmem:[%s239 + $0x1cc] sm:$0xf] %v2219
        %2476 = vst [vmem:[%s239 + $0x1d0] sm:$0xf] %v2220
        %2477 = vst [vmem:[%s239 + $0x1d4] sm:$0xf] %v2221
        %2478 = vst [vmem:[%s239 + $0x1d8] sm:$0xf] %v2222
        %2479 = vst [vmem:[%s239 + $0x1dc] sm:$0xf] %v2223
        %2480 = vst [vmem:[%s239 + $0x1e0] sm:$0xf] %v2224
        %2481 = vst [vmem:[%s239 + $0x1e4] sm:$0xf] %v2225
        %2482 = vst [vmem:[%s239 + $0x1e8] sm:$0xf] %v2226
        %2483 = vst [vmem:[%s239 + $0x1ec] sm:$0xf] %v2227
        %2484 = vst [vmem:[%s239 + $0x1f0] sm:$0xf] %v2228
        %2485 = vst [vmem:[%s239 + $0x1f4] sm:$0xf] %v2229
        %2486 = vst [vmem:[%s239 + $0x1f8] sm:$0xf] %v2230
        %2487 = vst [vmem:[%s239 + $0x1fc] sm:$0xf] %v2231
        %s2488 = smul.u32 128, %s17
        %p2489 = scmp.lt.s32.totalorder %s2488, 255
        %s2490 = scalar_select %p2489, %s2488, 255
        %s2491 = smul.addr %s2490, 4
        %s2492 = scalar_lea.vmem %s4, %s2491
        // Predicated region
        $region49: #{vggnet_forward.16} parent=35 // pred_check
          %p2493 = pneg %p124
        $region50: #{vggnet_forward.16} parent=35 // pred_check_branch
          %2495 = sbr.rel (%p2493) target = $region52
        $region51: #{vggnet_forward.16} parent=35 // pred_region
          %s2496 = smul.u32 128, %s17
        $region52: #{vggnet_forward.16} parent=35 // pred_fallthru
          _
      $region36: #{vggnet_forward.16} parent=5 // pred_fallthru
        _
      %p2497 = scmp.le.s32.totalorder 2, %s12
      // Predicated region
      $region53: #{vggnet_forward.16} parent=5 // pred_check
        %p2498 = pneg %p2497
      $region54: #{vggnet_forward.16} parent=5 // pred_check_branch
        %2500 = sbr.rel (%p2498) target = $region56
      $region55: #{vggnet_forward.16} parent=5 // pred_region
        %s2501 = ssub.s32 %s12, 2
        // Predicated region
        $region57: #{vggnet_forward.16} parent=55 // pred_check
          %p2502 = pneg %p130
        $region58: #{vggnet_forward.16} parent=55 // pred_check_branch
          %2504 = sbr.rel (%p2502) target = $region60
        $region59: #{vggnet_forward.16} parent=55 // pred_region
          %s2505 = smul.u32 128, %s18
          %p2506 = scmp.lt.s32.totalorder %s2505, 255
          %s2507 = scalar_select %p2506, %s2505, 255
          %s2508 = smul.addr %s2507, 4
          %s2509 = scalar_lea.vmem %s4, %s2508
        $region60: #{vggnet_forward.16} parent=55 // pred_fallthru
          _
      $region56: #{vggnet_forward.16} parent=5 // pred_fallthru
        _
    $region6: #{vggnet_forward.16} parent=1 // loop_footer
      %s16 = sadd.s32 1, %s12
    $region7: #{vggnet_forward.16} parent=1 // loop_footer_branch
      %11 = sbr.rel target = $region3
    $region8: #{vggnet_forward.16} parent=1 // loop_exit
      _
    %2510 = vsyncpa [#allocation3], 1
    %s2511 = scalar_lea.sflag [#allocation3], 1
    %2512 = vsyncpa %s2511, 1
    %2513 = vsyncpa [#allocation5], 1

// kernel: vggnet_forward.17
$region0: #{vggnet_forward.17}
  #allocation0 [shape = 'u32[]', space=smem, size = 0x4, offset = 0x4, fixed_abs, tag = 'smem constant byte address 0x4 - core index']
  #allocation1 [shape = 'u32[144,128]{1,0:T(1,128)}', space=vmem, size = 0x12000, scoped, tag = 'internal scratch']
  %s0 = inlined_call_operand.vmem [shape: bf16[4,512,36], index: 0, kind: input, shape index: {}]
  %s1 = inlined_call_operand.vmem [shape: bf16[36,128], index: 1, kind: input, shape index: {}]
  %s2 = inlined_call_operand.vmem [shape: f32[1,128], index: 2, kind: input, shape index: {}]
  %s3 = inlined_call_operand.vmem [shape: f32[1,128], index: 3, kind: input, shape index: {}]
  %s4 = inlined_call_operand.vmem [shape: bf16[512,128], index: 4, kind: output, shape index: {}]
  %s5 = sld [smem:[#allocation0]]
  $region26: #{vggnet_forward.17} parent=0
    _
  %s7 = ssub.s32 1, %s5
  %s8 = scalar_select 0, %s7, %s5
  // Predicated region
  $region2: #{vggnet_forward.17} parent=0 // pred_check
    _
  $region3: #{vggnet_forward.17} parent=0 // pred_check_branch
    %10 = sbr.rel (0) target = $region5
  $region4: #{vggnet_forward.17} parent=0 // pred_region
    _
  $region5: #{vggnet_forward.17} parent=0 // pred_fallthru
    _
  // Predicated region
  $region6: #{vggnet_forward.17} parent=0 // pred_check
    _
  $region7: #{vggnet_forward.17} parent=0 // pred_check_branch
    %12 = sbr.rel (0) target = $region9
  $region8: #{vggnet_forward.17} parent=0 // pred_region
    _
  $region9: #{vggnet_forward.17} parent=0 // pred_fallthru
    _
  // Predicated region
  $region10: #{vggnet_forward.17} parent=0 // pred_check
    _
  $region11: #{vggnet_forward.17} parent=0 // pred_check_branch
    %14 = sbr.rel (0) target = $region13
  $region12: #{vggnet_forward.17} parent=0 // pred_region
    _
  $region13: #{vggnet_forward.17} parent=0 // pred_fallthru
    _
  // Predicated region
  $region14: #{vggnet_forward.17} parent=0 // pred_check
    _
  $region15: #{vggnet_forward.17} parent=0 // pred_check_branch
    %16 = sbr.rel (0) target = $region17
  $region16: #{vggnet_forward.17} parent=0 // pred_region
    _
  $region17: #{vggnet_forward.17} parent=0 // pred_fallthru
    _
  %v18 = vld [vmem:[%s1] sm:$0xf]
  %v19 = vld [vmem:[%s1 + $0x4] sm:$0xf]
  %v20 = vld [vmem:[%s1 + $0x8] sm:$0xf]
  %v21 = vld [vmem:[%s1 + $0xc] sm:$0xf]
  %v22 = vld [vmem:[%s1 + $0x10] sm:$0x3]
  %v23 = vld [vmem:[%s2] sm:$0x1]
  %v24 = vld [vmem:[%s3] sm:$0x1]
  %v25 = vld [vmem:[%s0] sm:$0xf]
  %v26 = vld [vmem:[%s0 + $0x4] sm:$0xf]
  %v27 = vld [vmem:[%s0 + $0x8] sm:$0xf]
  %v28 = vld [vmem:[%s0 + $0xc] sm:$0xf]
  %v29 = vld [vmem:[%s0 + $0x10] sm:$0xf]
  %v30 = vld [vmem:[%s0 + $0x14] sm:$0xf]
  %v31 = vld [vmem:[%s0 + $0x18] sm:$0xf]
  %v32 = vld [vmem:[%s0 + $0x1c] sm:$0xf]
  %v33 = vld [vmem:[%s0 + $0x20] sm:$0xf]
  %v34 = vld [vmem:[%s0 + $0x24] sm:$0xf]
  %v35 = vld [vmem:[%s0 + $0x28] sm:$0xf]
  %v36 = vld [vmem:[%s0 + $0x2c] sm:$0xf]
  %v37 = vld [vmem:[%s0 + $0x30] sm:$0xf]
  %v38 = vld [vmem:[%s0 + $0x34] sm:$0xf]
  %v39 = vld [vmem:[%s0 + $0x38] sm:$0xf]
  %v40 = vld [vmem:[%s0 + $0x3c] sm:$0xf]
  %v41 = vld [vmem:[%s0 + $0x40] sm:$0xf]
  %v42 = vld [vmem:[%s0 + $0x44] sm:$0xf]
  %v43 = vld [vmem:[%s0 + $0x48] sm:$0xf]
  %v44 = vld [vmem:[%s0 + $0x4c] sm:$0xf]
  %v45 = vld [vmem:[%s0 + $0x50] sm:$0xf]
  %v46 = vld [vmem:[%s0 + $0x54] sm:$0xf]
  %v47 = vld [vmem:[%s0 + $0x58] sm:$0xf]
  %v48 = vld [vmem:[%s0 + $0x5c] sm:$0xf]
  %v49 = vld [vmem:[%s0 + $0x60] sm:$0xf]
  %v50 = vld [vmem:[%s0 + $0x64] sm:$0xf]
  %v51 = vld [vmem:[%s0 + $0x68] sm:$0xf]
  %v52 = vld [vmem:[%s0 + $0x6c] sm:$0xf]
  %v53 = vld [vmem:[%s0 + $0x70] sm:$0xf]
  %v54 = vld [vmem:[%s0 + $0x74] sm:$0xf]
  %v55 = vld [vmem:[%s0 + $0x78] sm:$0xf]
  %v56 = vld [vmem:[%s0 + $0x7c] sm:$0xf]
  %v57 = vld [vmem:[%s0 + $0x80] sm:$0xf]
  %v58 = vld [vmem:[%s0 + $0x84] sm:$0xf]
  %v59 = vld [vmem:[%s0 + $0x88] sm:$0xf]
  %v60 = vld [vmem:[%s0 + $0x8c] sm:$0xf]
  %v61 = vld [vmem:[%s0 + $0x90] sm:$0xf]
  %v62 = vld [vmem:[%s0 + $0x94] sm:$0xf]
  %v63 = vld [vmem:[%s0 + $0x98] sm:$0xf]
  %v64 = vld [vmem:[%s0 + $0x9c] sm:$0xf]
  %v65 = vld [vmem:[%s0 + $0xa0] sm:$0xf]
  %v66 = vld [vmem:[%s0 + $0xa4] sm:$0xf]
  %v67 = vld [vmem:[%s0 + $0xa8] sm:$0xf]
  %v68 = vld [vmem:[%s0 + $0xac] sm:$0xf]
  %v69 = vld [vmem:[%s0 + $0xb0] sm:$0xf]
  %v70 = vld [vmem:[%s0 + $0xb4] sm:$0xf]
  %v71 = vld [vmem:[%s0 + $0xb8] sm:$0xf]
  %v72 = vld [vmem:[%s0 + $0xbc] sm:$0xf]
  %v73 = vld [vmem:[%s0 + $0xc0] sm:$0xf]
  %v74 = vld [vmem:[%s0 + $0xc4] sm:$0xf]
  %v75 = vld [vmem:[%s0 + $0xc8] sm:$0xf]
  %v76 = vld [vmem:[%s0 + $0xcc] sm:$0xf]
  %v77 = vld [vmem:[%s0 + $0xd0] sm:$0xf]
  %v78 = vld [vmem:[%s0 + $0xd4] sm:$0xf]
  %v79 = vld [vmem:[%s0 + $0xd8] sm:$0xf]
  %v80 = vld [vmem:[%s0 + $0xdc] sm:$0xf]
  %v81 = vld [vmem:[%s0 + $0xe0] sm:$0xf]
  %v82 = vld [vmem:[%s0 + $0xe4] sm:$0xf]
  %v83 = vld [vmem:[%s0 + $0xe8] sm:$0xf]
  %v84 = vld [vmem:[%s0 + $0xec] sm:$0xf]
  %v85 = vld [vmem:[%s0 + $0xf0] sm:$0xf]
  %v86 = vld [vmem:[%s0 + $0xf4] sm:$0xf]
  %v87 = vld [vmem:[%s0 + $0xf8] sm:$0xf]
  %v88 = vld [vmem:[%s0 + $0xfc] sm:$0xf]
  %v153 = vunpack.c.l.b16 %v25
  %v154 = vunpack.c.l.b16 %v26
  %v155 = vunpack.c.l.b16 %v27
  %v156 = vunpack.c.l.b16 %v28
  %v157 = vunpack.c.l.b16 %v29
  %v158 = vunpack.c.l.b16 %v30
  %v159 = vunpack.c.l.b16 %v31
  %v160 = vunpack.c.l.b16 %v32
  %v161 = vunpack.c.l.b16 %v33
  %v162 = vunpack.c.l.b16 %v34
  %v163 = vunpack.c.l.b16 %v35
  %v164 = vunpack.c.l.b16 %v36
  %v165 = vunpack.c.l.b16 %v37
  %v166 = vunpack.c.l.b16 %v38
  %v167 = vunpack.c.l.b16 %v39
  %v168 = vunpack.c.l.b16 %v40
  %v169 = vunpack.c.l.b16 %v41
  %v170 = vunpack.c.l.b16 %v42
  %v171 = vunpack.c.l.b16 %v43
  %v172 = vunpack.c.l.b16 %v44
  %v173 = vunpack.c.l.b16 %v45
  %v174 = vunpack.c.l.b16 %v46
  %v175 = vunpack.c.l.b16 %v47
  %v176 = vunpack.c.l.b16 %v48
  %v177 = vunpack.c.l.b16 %v49
  %v178 = vunpack.c.l.b16 %v50
  %v179 = vunpack.c.l.b16 %v51
  %v180 = vunpack.c.l.b16 %v52
  %v181 = vunpack.c.l.b16 %v53
  %v182 = vunpack.c.l.b16 %v54
  %v183 = vunpack.c.l.b16 %v55
  %v184 = vunpack.c.l.b16 %v56
  %v185 = vunpack.c.l.b16 %v57
  %v186 = vunpack.c.l.b16 %v58
  %v187 = vunpack.c.l.b16 %v59
  %v188 = vunpack.c.l.b16 %v60
  %v189 = vunpack.c.l.b16 %v61
  %v190 = vunpack.c.l.b16 %v62
  %v191 = vunpack.c.l.b16 %v63
  %v192 = vunpack.c.l.b16 %v64
  %v193 = vunpack.c.l.b16 %v65
  %v194 = vunpack.c.l.b16 %v66
  %v195 = vunpack.c.l.b16 %v67
  %v196 = vunpack.c.l.b16 %v68
  %v197 = vunpack.c.l.b16 %v69
  %v198 = vunpack.c.l.b16 %v70
  %v199 = vunpack.c.l.b16 %v71
  %v200 = vunpack.c.l.b16 %v72
  %v201 = vunpack.c.l.b16 %v73
  %v202 = vunpack.c.l.b16 %v74
  %v203 = vunpack.c.l.b16 %v75
  %v204 = vunpack.c.l.b16 %v76
  %v205 = vunpack.c.l.b16 %v77
  %v206 = vunpack.c.l.b16 %v78
  %v207 = vunpack.c.l.b16 %v79
  %v208 = vunpack.c.l.b16 %v80
  %v209 = vunpack.c.l.b16 %v81
  %v210 = vunpack.c.l.b16 %v82
  %v211 = vunpack.c.l.b16 %v83
  %v212 = vunpack.c.l.b16 %v84
  %v213 = vunpack.c.l.b16 %v85
  %v214 = vunpack.c.l.b16 %v86
  %v215 = vunpack.c.l.b16 %v87
  %v216 = vunpack.c.l.b16 %v88
  %v217 = vpack.c.b16 %v154, %v153
  %v218 = vpack.c.b16 %v156, %v155
  %v219 = vpack.c.b16 %v158, %v157
  %v220 = vpack.c.b16 %v160, %v159
  %v221 = vpack.c.b16 %v162, %v161
  %v222 = vpack.c.b16 %v164, %v163
  %v223 = vpack.c.b16 %v166, %v165
  %v224 = vpack.c.b16 %v168, %v167
  %v225 = vpack.c.b16 %v170, %v169
  %v226 = vpack.c.b16 %v172, %v171
  %v227 = vpack.c.b16 %v174, %v173
  %v228 = vpack.c.b16 %v176, %v175
  %v229 = vpack.c.b16 %v178, %v177
  %v230 = vpack.c.b16 %v180, %v179
  %v231 = vpack.c.b16 %v182, %v181
  %v232 = vpack.c.b16 %v184, %v183
  %v233 = vpack.c.b16 %v186, %v185
  %v234 = vpack.c.b16 %v188, %v187
  %v235 = vpack.c.b16 %v190, %v189
  %v236 = vpack.c.b16 %v192, %v191
  %v237 = vpack.c.b16 %v194, %v193
  %v238 = vpack.c.b16 %v196, %v195
  %v239 = vpack.c.b16 %v198, %v197
  %v240 = vpack.c.b16 %v200, %v199
  %v241 = vpack.c.b16 %v202, %v201
  %v242 = vpack.c.b16 %v204, %v203
  %v243 = vpack.c.b16 %v206, %v205
  %v244 = vpack.c.b16 %v208, %v207
  %v245 = vpack.c.b16 %v210, %v209
  %v246 = vpack.c.b16 %v212, %v211
  %v247 = vpack.c.b16 %v214, %v213
  %v248 = vpack.c.b16 %v216, %v215
  %v254 = vunpack.c.l.b16 %v18
  %v255 = vunpack.c.l.b16 %v19
  %v256 = vunpack.c.l.b16 %v20
  %v257 = vunpack.c.l.b16 %v21
  %v258 = vunpack.c.l.b16 %v22
  %v259 = vpack.c.b16 %v255, %v254
  %v260 = vpack.c.b16 %v257, %v256
  %v261 = vpack.c.b16 %v258, %v258
  %vm264 = vcmask 293888
  %v266 = vsel %vm264, %v217, 0
  %v269 = vsel %vm264, %v218, 0
  %v272 = vsel %vm264, %v219, 0
  %v275 = vsel %vm264, %v220, 0
  %v278 = vsel %vm264, %v221, 0
  %v281 = vsel %vm264, %v222, 0
  %v284 = vsel %vm264, %v223, 0
  %v287 = vsel %vm264, %v224, 0
  %v290 = vsel %vm264, %v225, 0
  %v293 = vsel %vm264, %v226, 0
  %v296 = vsel %vm264, %v227, 0
  %v299 = vsel %vm264, %v228, 0
  %v302 = vsel %vm264, %v229, 0
  %v305 = vsel %vm264, %v230, 0
  %v308 = vsel %vm264, %v231, 0
  %v311 = vsel %vm264, %v232, 0
  %v314 = vsel %vm264, %v233, 0
  %v317 = vsel %vm264, %v234, 0
  %v320 = vsel %vm264, %v235, 0
  %v323 = vsel %vm264, %v236, 0
  %v326 = vsel %vm264, %v237, 0
  %v329 = vsel %vm264, %v238, 0
  %v332 = vsel %vm264, %v239, 0
  %v335 = vsel %vm264, %v240, 0
  %v338 = vsel %vm264, %v241, 0
  %v341 = vsel %vm264, %v242, 0
  %v344 = vsel %vm264, %v243, 0
  %v347 = vsel %vm264, %v244, 0
  %v350 = vsel %vm264, %v245, 0
  %v353 = vsel %vm264, %v246, 0
  %v356 = vsel %vm264, %v247, 0
  %v359 = vsel %vm264, %v248, 0
  %vm361 = vcmask 1041408
  %v363 = vsel %vm361, %v261, 0
  %365 = vmatprep.subr.bf16.mxu0 0
  %366 = vmatpush1.bf16.msra.mxu0 %v259
  %367 = vmatprep.subr.bf16.mxu0 0
  %368 = vmatpush1.bf16.msra.mxu0 %v260
  %369 = vmatprep.subr.bf16.mxu0 0
  %370 = vmatpush1.bf16.msra.mxu0 %v363
  %371 = vmatprep.subr.bf16.mxu0 0
  %372 = vmatpush1.bf16.msra.mxu0 0
  %373 = vmatprep.subr.bf16.mxu0 0
  %374 = vmatpush1.bf16.msra.mxu0 0
  %375 = vmatprep.subr.bf16.mxu0 0
  %376 = vmatpush1.bf16.msra.mxu0 0
  %377 = vmatprep.subr.bf16.mxu0 0
  %378 = vmatpush1.bf16.msra.mxu0 0
  %379 = vmatprep.subr.bf16.mxu0 0
  %380 = vmatpush1.bf16.msra.mxu0 0
  %381 = vmatprep.subr.bf16.mxu0 0
  %382 = vmatpush1.bf16.msra.mxu0 0
  %383 = vmatprep.subr.bf16.mxu0 0
  %384 = vmatpush1.bf16.msra.mxu0 0
  %385 = vmatprep.subr.bf16.mxu0 0
  %386 = vmatpush1.bf16.msra.mxu0 0
  %387 = vmatprep.subr.bf16.mxu0 0
  %388 = vmatpush1.bf16.msra.mxu0 0
  %389 = vmatprep.subr.bf16.mxu0 0
  %390 = vmatpush1.bf16.msra.mxu0 0
  %391 = vmatprep.subr.bf16.mxu0 0
  %392 = vmatpush1.bf16.msra.mxu0 0
  %393 = vmatprep.subr.bf16.mxu0 0
  %394 = vmatpush1.bf16.msra.mxu0 0
  %395 = vmatprep.subr.bf16.mxu0 0
  %396 = vmatpush1.bf16.msra.mxu0 0
  %397 = vmatprep.mubr.bf16.mxu0 0
  %398 = vmatmul.mubr.bf16.gmra.mrb[0].mxu0 %v266
  %v399 = vpop.f32.mrb[0].mxu0
  %v400 = vadd.f32 0.0, %v399
  %v401 = vpop.f32.mrb[0].mxu0
  %v402 = vpop.f32.mrb[0].mxu0
  %v403 = vadd.f32 0.0, %v402
  %v404 = vpop.f32.mrb[0].mxu0
  %405 = vmatprep.mubr.bf16.mxu0 0
  %406 = vmatmul.mubr.bf16.gmra.mrb[0].mxu0 %v269
  %v407 = vpop.f32.mrb[0].mxu0
  %v408 = vadd.f32 0.0, %v407
  %v409 = vpop.f32.mrb[0].mxu0
  %v410 = vpop.f32.mrb[0].mxu0
  %v411 = vadd.f32 0.0, %v410
  %v412 = vpop.f32.mrb[0].mxu0
  %413 = vmatprep.mubr.bf16.mxu0 0
  %414 = vmatmul.mubr.bf16.gmra.mrb[0].mxu0 %v272
  %v415 = vpop.f32.mrb[0].mxu0
  %v416 = vadd.f32 0.0, %v415
  %v417 = vpop.f32.mrb[0].mxu0
  %v418 = vpop.f32.mrb[0].mxu0
  %v419 = vadd.f32 0.0, %v418
  %v420 = vpop.f32.mrb[0].mxu0
  %421 = vmatprep.mubr.bf16.mxu0 0
  %422 = vmatmul.mubr.bf16.gmra.mrb[0].mxu0 %v275
  %v423 = vpop.f32.mrb[0].mxu0
  %v424 = vadd.f32 0.0, %v423
  %v425 = vpop.f32.mrb[0].mxu0
  %v426 = vpop.f32.mrb[0].mxu0
  %v427 = vadd.f32 0.0, %v426
  %v428 = vpop.f32.mrb[0].mxu0
  %429 = vmatprep.mubr.bf16.mxu0 0
  %430 = vmatmul.mubr.bf16.gmra.mrb[0].mxu0 %v278
  %v431 = vpop.f32.mrb[0].mxu0
  %v432 = vadd.f32 0.0, %v431
  %v433 = vpop.f32.mrb[0].mxu0
  %v434 = vpop.f32.mrb[0].mxu0
  %v435 = vadd.f32 0.0, %v434
  %v436 = vpop.f32.mrb[0].mxu0
  %437 = vmatprep.mubr.bf16.mxu0 0
  %438 = vmatmul.mubr.bf16.gmra.mrb[0].mxu0 %v281
  %v439 = vpop.f32.mrb[0].mxu0
  %v440 = vadd.f32 0.0, %v439
  %v441 = vpop.f32.mrb[0].mxu0
  %v442 = vpop.f32.mrb[0].mxu0
  %v443 = vadd.f32 0.0, %v442
  %v444 = vpop.f32.mrb[0].mxu0
  %445 = vmatprep.mubr.bf16.mxu0 0
  %446 = vmatmul.mubr.bf16.gmra.mrb[0].mxu0 %v284
  %v447 = vpop.f32.mrb[0].mxu0
  %v448 = vadd.f32 0.0, %v447
  %v449 = vpop.f32.mrb[0].mxu0
  %v450 = vpop.f32.mrb[0].mxu0
  %v451 = vadd.f32 0.0, %v450
  %v452 = vpop.f32.mrb[0].mxu0
  %453 = vmatprep.mubr.bf16.mxu0 0
  %454 = vmatmul.mubr.bf16.gmra.mrb[0].mxu0 %v287
  %v455 = vpop.f32.mrb[0].mxu0
  %v456 = vadd.f32 0.0, %v455
  %v457 = vpop.f32.mrb[0].mxu0
  %v458 = vpop.f32.mrb[0].mxu0
  %v459 = vadd.f32 0.0, %v458
  %v460 = vpop.f32.mrb[0].mxu0
  %461 = vmatprep.mubr.bf16.mxu0 0
  %462 = vmatmul.mubr.bf16.gmra.mrb[0].mxu0 %v290
  %v463 = vpop.f32.mrb[0].mxu0
  %v464 = vadd.f32 0.0, %v463
  %v465 = vpop.f32.mrb[0].mxu0
  %v466 = vpop.f32.mrb[0].mxu0
  %v467 = vadd.f32 0.0, %v466
  %v468 = vpop.f32.mrb[0].mxu0
  %469 = vmatprep.mubr.bf16.mxu0 0
  %470 = vmatmul.mubr.bf16.gmra.mrb[0].mxu0 %v293
  %v471 = vpop.f32.mrb[0].mxu0
  %v472 = vadd.f32 0.0, %v471
  %v473 = vpop.f32.mrb[0].mxu0
  %v474 = vpop.f32.mrb[0].mxu0
  %v475 = vadd.f32 0.0, %v474
  %v476 = vpop.f32.mrb[0].mxu0
  %477 = vmatprep.mubr.bf16.mxu0 0
  %478 = vmatmul.mubr.bf16.gmra.mrb[0].mxu0 %v296
  %v479 = vpop.f32.mrb[0].mxu0
  %v480 = vadd.f32 0.0, %v479
  %v481 = vpop.f32.mrb[0].mxu0
  %v482 = vpop.f32.mrb[0].mxu0
  %v483 = vadd.f32 0.0, %v482
  %v484 = vpop.f32.mrb[0].mxu0
  %485 = vmatprep.mubr.bf16.mxu0 0
  %486 = vmatmul.mubr.bf16.gmra.mrb[0].mxu0 %v299
  %v487 = vpop.f32.mrb[0].mxu0
  %v488 = vadd.f32 0.0, %v487
  %v489 = vpop.f32.mrb[0].mxu0
  %v490 = vpop.f32.mrb[0].mxu0
  %v491 = vadd.f32 0.0, %v490
  %v492 = vpop.f32.mrb[0].mxu0
  %493 = vmatprep.mubr.bf16.mxu0 0
  %494 = vmatmul.mubr.bf16.gmra.mrb[0].mxu0 %v302
  %v495 = vpop.f32.mrb[0].mxu0
  %v496 = vadd.f32 0.0, %v495
  %v497 = vpop.f32.mrb[0].mxu0
  %v498 = vpop.f32.mrb[0].mxu0
  %v499 = vadd.f32 0.0, %v498
  %v500 = vpop.f32.mrb[0].mxu0
  %501 = vmatprep.mubr.bf16.mxu0 0
  %502 = vmatmul.mubr.bf16.gmra.mrb[0].mxu0 %v305
  %v503 = vpop.f32.mrb[0].mxu0
  %v504 = vadd.f32 0.0, %v503
  %v505 = vpop.f32.mrb[0].mxu0
  %v506 = vpop.f32.mrb[0].mxu0
  %v507 = vadd.f32 0.0, %v506
  %v508 = vpop.f32.mrb[0].mxu0
  %509 = vmatprep.mubr.bf16.mxu0 0
  %510 = vmatmul.mubr.bf16.gmra.mrb[0].mxu0 %v308
  %v511 = vpop.f32.mrb[0].mxu0
  %v512 = vadd.f32 0.0, %v511
  %v513 = vpop.f32.mrb[0].mxu0
  %v514 = vpop.f32.mrb[0].mxu0
  %v515 = vadd.f32 0.0, %v514
  %v516 = vpop.f32.mrb[0].mxu0
  %517 = vmatprep.mubr.bf16.mxu0 0
  %518 = vmatmul.mubr.bf16.gmra.mrb[0].mxu0 %v311
  %v519 = vpop.f32.mrb[0].mxu0
  %v520 = vadd.f32 0.0, %v519
  %v521 = vpop.f32.mrb[0].mxu0
  %v522 = vpop.f32.mrb[0].mxu0
  %v523 = vadd.f32 0.0, %v522
  %v524 = vpop.f32.mrb[0].mxu0
  %525 = vmatprep.mubr.bf16.mxu0 0
  %526 = vmatmul.mubr.bf16.gmra.mrb[0].mxu0 %v314
  %v527 = vpop.f32.mrb[0].mxu0
  %v528 = vadd.f32 0.0, %v527
  %v529 = vpop.f32.mrb[0].mxu0
  %v530 = vpop.f32.mrb[0].mxu0
  %v531 = vadd.f32 0.0, %v530
  %v532 = vpop.f32.mrb[0].mxu0
  %533 = vmatprep.mubr.bf16.mxu0 0
  %534 = vmatmul.mubr.bf16.gmra.mrb[0].mxu0 %v317
  %v535 = vpop.f32.mrb[0].mxu0
  %v536 = vadd.f32 0.0, %v535
  %v537 = vpop.f32.mrb[0].mxu0
  %v538 = vpop.f32.mrb[0].mxu0
  %v539 = vadd.f32 0.0, %v538
  %v540 = vpop.f32.mrb[0].mxu0
  %541 = vmatprep.mubr.bf16.mxu0 0
  %542 = vmatmul.mubr.bf16.gmra.mrb[0].mxu0 %v320
  %v543 = vpop.f32.mrb[0].mxu0
  %v544 = vadd.f32 0.0, %v543
  %v545 = vpop.f32.mrb[0].mxu0
  %v546 = vpop.f32.mrb[0].mxu0
  %v547 = vadd.f32 0.0, %v546
  %v548 = vpop.f32.mrb[0].mxu0
  %549 = vmatprep.mubr.bf16.mxu0 0
  %550 = vmatmul.mubr.bf16.gmra.mrb[0].mxu0 %v323
  %v551 = vpop.f32.mrb[0].mxu0
  %v552 = vadd.f32 0.0, %v551
  %v553 = vpop.f32.mrb[0].mxu0
  %v554 = vpop.f32.mrb[0].mxu0
  %v555 = vadd.f32 0.0, %v554
  %v556 = vpop.f32.mrb[0].mxu0
  %557 = vmatprep.mubr.bf16.mxu0 0
  %558 = vmatmul.mubr.bf16.gmra.mrb[0].mxu0 %v326
  %v559 = vpop.f32.mrb[0].mxu0
  %v560 = vadd.f32 0.0, %v559
  %v561 = vpop.f32.mrb[0].mxu0
  %v562 = vpop.f32.mrb[0].mxu0
  %v563 = vadd.f32 0.0, %v562
  %v564 = vpop.f32.mrb[0].mxu0
  %565 = vmatprep.mubr.bf16.mxu0 0
  %566 = vmatmul.mubr.bf16.gmra.mrb[0].mxu0 %v329
  %v567 = vpop.f32.mrb[0].mxu0
  %v568 = vadd.f32 0.0, %v567
  %v569 = vpop.f32.mrb[0].mxu0
  %v570 = vpop.f32.mrb[0].mxu0
  %v571 = vadd.f32 0.0, %v570
  %v572 = vpop.f32.mrb[0].mxu0
  %573 = vmatprep.mubr.bf16.mxu0 0
  %574 = vmatmul.mubr.bf16.gmra.mrb[0].mxu0 %v332
  %v575 = vpop.f32.mrb[0].mxu0
  %v576 = vadd.f32 0.0, %v575
  %v577 = vpop.f32.mrb[0].mxu0
  %v578 = vpop.f32.mrb[0].mxu0
  %v579 = vadd.f32 0.0, %v578
  %v580 = vpop.f32.mrb[0].mxu0
  %581 = vmatprep.mubr.bf16.mxu0 0
  %582 = vmatmul.mubr.bf16.gmra.mrb[0].mxu0 %v335
  %v583 = vpop.f32.mrb[0].mxu0
  %v584 = vadd.f32 0.0, %v583
  %v585 = vpop.f32.mrb[0].mxu0
  %v586 = vpop.f32.mrb[0].mxu0
  %v587 = vadd.f32 0.0, %v586
  %v588 = vpop.f32.mrb[0].mxu0
  %589 = vmatprep.mubr.bf16.mxu0 0
  %590 = vmatmul.mubr.bf16.gmra.mrb[0].mxu0 %v338
  %v591 = vpop.f32.mrb[0].mxu0
  %v592 = vadd.f32 0.0, %v591
  %v593 = vpop.f32.mrb[0].mxu0
  %v594 = vpop.f32.mrb[0].mxu0
  %v595 = vadd.f32 0.0, %v594
  %v596 = vpop.f32.mrb[0].mxu0
  %597 = vmatprep.mubr.bf16.mxu0 0
  %598 = vmatmul.mubr.bf16.gmra.mrb[0].mxu0 %v341
  %v599 = vpop.f32.mrb[0].mxu0
  %v600 = vadd.f32 0.0, %v599
  %v601 = vpop.f32.mrb[0].mxu0
  %v602 = vpop.f32.mrb[0].mxu0
  %v603 = vadd.f32 0.0, %v602
  %v604 = vpop.f32.mrb[0].mxu0
  %605 = vmatprep.mubr.bf16.mxu0 0
  %606 = vmatmul.mubr.bf16.gmra.mrb[0].mxu0 %v344
  %v607 = vpop.f32.mrb[0].mxu0
  %v608 = vadd.f32 0.0, %v607
  %v609 = vpop.f32.mrb[0].mxu0
  %v610 = vpop.f32.mrb[0].mxu0
  %v611 = vadd.f32 0.0, %v610
  %v612 = vpop.f32.mrb[0].mxu0
  %613 = vmatprep.mubr.bf16.mxu0 0
  %614 = vmatmul.mubr.bf16.gmra.mrb[0].mxu0 %v347
  %v615 = vpop.f32.mrb[0].mxu0
  %v616 = vadd.f32 0.0, %v615
  %v617 = vpop.f32.mrb[0].mxu0
  %v618 = vpop.f32.mrb[0].mxu0
  %v619 = vadd.f32 0.0, %v618
  %v620 = vpop.f32.mrb[0].mxu0
  %621 = vmatprep.mubr.bf16.mxu0 0
  %622 = vmatmul.mubr.bf16.gmra.mrb[0].mxu0 %v350
  %v623 = vpop.f32.mrb[0].mxu0
  %v624 = vadd.f32 0.0, %v623
  %v625 = vpop.f32.mrb[0].mxu0
  %v626 = vpop.f32.mrb[0].mxu0
  %v627 = vadd.f32 0.0, %v626
  %v628 = vpop.f32.mrb[0].mxu0
  %629 = vmatprep.mubr.bf16.mxu0 0
  %630 = vmatmul.mubr.bf16.gmra.mrb[0].mxu0 %v353
  %v631 = vpop.f32.mrb[0].mxu0
  %v632 = vadd.f32 0.0, %v631
  %v633 = vpop.f32.mrb[0].mxu0
  %v634 = vpop.f32.mrb[0].mxu0
  %v635 = vadd.f32 0.0, %v634
  %v636 = vpop.f32.mrb[0].mxu0
  %637 = vmatprep.mubr.bf16.mxu0 0
  %638 = vmatmul.mubr.bf16.gmra.mrb[0].mxu0 %v356
  %v639 = vpop.f32.mrb[0].mxu0
  %v640 = vadd.f32 0.0, %v639
  %v641 = vpop.f32.mrb[0].mxu0
  %v642 = vpop.f32.mrb[0].mxu0
  %v643 = vadd.f32 0.0, %v642
  %v644 = vpop.f32.mrb[0].mxu0
  %645 = vmatprep.mubr.bf16.mxu0 0
  %646 = vmatmul.mubr.bf16.gmra.mrb[0].mxu0 %v359
  %v647 = vpop.f32.mrb[0].mxu0
  %v648 = vadd.f32 0.0, %v647
  %v649 = vpop.f32.mrb[0].mxu0
  %v650 = vpop.f32.mrb[0].mxu0
  %v651 = vadd.f32 0.0, %v650
  %v652 = vpop.f32.mrb[0].mxu0
  %653 = vdwg.mxu0
  %v655 = vlaneseq
  %v656 = vshrl.u32 %v655, 7
  %v657 = vsub.s32 0, %v656
  %v658 = vrot.slane %v23, %v657
  %v660 = vmul.f32 %v400, %v658
  %v661 = vmul.f32 %v403, %v658
  %v662 = vmul.f32 %v408, %v658
  %v663 = vmul.f32 %v411, %v658
  %v664 = vmul.f32 %v416, %v658
  %v665 = vmul.f32 %v419, %v658
  %v666 = vmul.f32 %v424, %v658
  %v667 = vmul.f32 %v427, %v658
  %v668 = vmul.f32 %v432, %v658
  %v669 = vmul.f32 %v435, %v658
  %v670 = vmul.f32 %v440, %v658
  %v671 = vmul.f32 %v443, %v658
  %v672 = vmul.f32 %v448, %v658
  %v673 = vmul.f32 %v451, %v658
  %v674 = vmul.f32 %v456, %v658
  %v675 = vmul.f32 %v459, %v658
  %v676 = vmul.f32 %v464, %v658
  %v677 = vmul.f32 %v467, %v658
  %v678 = vmul.f32 %v472, %v658
  %v679 = vmul.f32 %v475, %v658
  %v680 = vmul.f32 %v480, %v658
  %v681 = vmul.f32 %v483, %v658
  %v682 = vmul.f32 %v488, %v658
  %v683 = vmul.f32 %v491, %v658
  %v684 = vmul.f32 %v496, %v658
  %v685 = vmul.f32 %v499, %v658
  %v686 = vmul.f32 %v504, %v658
  %v687 = vmul.f32 %v507, %v658
  %v688 = vmul.f32 %v512, %v658
  %v689 = vmul.f32 %v515, %v658
  %v690 = vmul.f32 %v520, %v658
  %v691 = vmul.f32 %v523, %v658
  %v692 = vmul.f32 %v528, %v658
  %v693 = vmul.f32 %v531, %v658
  %v694 = vmul.f32 %v536, %v658
  %v695 = vmul.f32 %v539, %v658
  %v696 = vmul.f32 %v544, %v658
  %v697 = vmul.f32 %v547, %v658
  %v698 = vmul.f32 %v552, %v658
  %v699 = vmul.f32 %v555, %v658
  %v700 = vmul.f32 %v560, %v658
  %v701 = vmul.f32 %v563, %v658
  %v702 = vmul.f32 %v568, %v658
  %v703 = vmul.f32 %v571, %v658
  %v704 = vmul.f32 %v576, %v658
  %v705 = vmul.f32 %v579, %v658
  %v706 = vmul.f32 %v584, %v658
  %v707 = vmul.f32 %v587, %v658
  %v708 = vmul.f32 %v592, %v658
  %v709 = vmul.f32 %v595, %v658
  %v710 = vmul.f32 %v600, %v658
  %v711 = vmul.f32 %v603, %v658
  %v712 = vmul.f32 %v608, %v658
  %v713 = vmul.f32 %v611, %v658
  %v714 = vmul.f32 %v616, %v658
  %v715 = vmul.f32 %v619, %v658
  %v716 = vmul.f32 %v624, %v658
  %v717 = vmul.f32 %v627, %v658
  %v718 = vmul.f32 %v632, %v658
  %v719 = vmul.f32 %v635, %v658
  %v720 = vmul.f32 %v640, %v658
  %v721 = vmul.f32 %v643, %v658
  %v722 = vmul.f32 %v648, %v658
  %v723 = vmul.f32 %v651, %v658
  %v725 = vlaneseq
  %v726 = vshrl.u32 %v725, 7
  %v727 = vsub.s32 0, %v726
  %v728 = vrot.slane %v24, %v727
  %v730 = vadd.f32 %v660, %v728
  %v731 = vadd.f32 %v661, %v728
  %v732 = vadd.f32 %v662, %v728
  %v733 = vadd.f32 %v663, %v728
  %v734 = vadd.f32 %v664, %v728
  %v735 = vadd.f32 %v665, %v728
  %v736 = vadd.f32 %v666, %v728
  %v737 = vadd.f32 %v667, %v728
  %v738 = vadd.f32 %v668, %v728
  %v739 = vadd.f32 %v669, %v728
  %v740 = vadd.f32 %v670, %v728
  %v741 = vadd.f32 %v671, %v728
  %v742 = vadd.f32 %v672, %v728
  %v743 = vadd.f32 %v673, %v728
  %v744 = vadd.f32 %v674, %v728
  %v745 = vadd.f32 %v675, %v728
  %v746 = vadd.f32 %v676, %v728
  %v747 = vadd.f32 %v677, %v728
  %v748 = vadd.f32 %v678, %v728
  %v749 = vadd.f32 %v679, %v728
  %v750 = vadd.f32 %v680, %v728
  %v751 = vadd.f32 %v681, %v728
  %v752 = vadd.f32 %v682, %v728
  %v753 = vadd.f32 %v683, %v728
  %v754 = vadd.f32 %v684, %v728
  %v755 = vadd.f32 %v685, %v728
  %v756 = vadd.f32 %v686, %v728
  %v757 = vadd.f32 %v687, %v728
  %v758 = vadd.f32 %v688, %v728
  %v759 = vadd.f32 %v689, %v728
  %v760 = vadd.f32 %v690, %v728
  %v761 = vadd.f32 %v691, %v728
  %v762 = vadd.f32 %v692, %v728
  %v763 = vadd.f32 %v693, %v728
  %v764 = vadd.f32 %v694, %v728
  %v765 = vadd.f32 %v695, %v728
  %v766 = vadd.f32 %v696, %v728
  %v767 = vadd.f32 %v697, %v728
  %v768 = vadd.f32 %v698, %v728
  %v769 = vadd.f32 %v699, %v728
  %v770 = vadd.f32 %v700, %v728
  %v771 = vadd.f32 %v701, %v728
  %v772 = vadd.f32 %v702, %v728
  %v773 = vadd.f32 %v703, %v728
  %v774 = vadd.f32 %v704, %v728
  %v775 = vadd.f32 %v705, %v728
  %v776 = vadd.f32 %v706, %v728
  %v777 = vadd.f32 %v707, %v728
  %v778 = vadd.f32 %v708, %v728
  %v779 = vadd.f32 %v709, %v728
  %v780 = vadd.f32 %v710, %v728
  %v781 = vadd.f32 %v711, %v728
  %v782 = vadd.f32 %v712, %v728
  %v783 = vadd.f32 %v713, %v728
  %v784 = vadd.f32 %v714, %v728
  %v785 = vadd.f32 %v715, %v728
  %v786 = vadd.f32 %v716, %v728
  %v787 = vadd.f32 %v717, %v728
  %v788 = vadd.f32 %v718, %v728
  %v789 = vadd.f32 %v719, %v728
  %v790 = vadd.f32 %v720, %v728
  %v791 = vadd.f32 %v721, %v728
  %v792 = vadd.f32 %v722, %v728
  %v793 = vadd.f32 %v723, %v728
  %v794 = vmax.f32 %v730, 0.0
  %v795 = vmax.f32 %v731, 0.0
  %v796 = vmax.f32 %v732, 0.0
  %v797 = vmax.f32 %v733, 0.0
  %v798 = vmax.f32 %v734, 0.0
  %v799 = vmax.f32 %v735, 0.0
  %v800 = vmax.f32 %v736, 0.0
  %v801 = vmax.f32 %v737, 0.0
  %v802 = vmax.f32 %v738, 0.0
  %v803 = vmax.f32 %v739, 0.0
  %v804 = vmax.f32 %v740, 0.0
  %v805 = vmax.f32 %v741, 0.0
  %v806 = vmax.f32 %v742, 0.0
  %v807 = vmax.f32 %v743, 0.0
  %v808 = vmax.f32 %v744, 0.0
  %v809 = vmax.f32 %v745, 0.0
  %v810 = vmax.f32 %v746, 0.0
  %v811 = vmax.f32 %v747, 0.0
  %v812 = vmax.f32 %v748, 0.0
  %v813 = vmax.f32 %v749, 0.0
  %v814 = vmax.f32 %v750, 0.0
  %v815 = vmax.f32 %v751, 0.0
  %v816 = vmax.f32 %v752, 0.0
  %v817 = vmax.f32 %v753, 0.0
  %v818 = vmax.f32 %v754, 0.0
  %v819 = vmax.f32 %v755, 0.0
  %v820 = vmax.f32 %v756, 0.0
  %v821 = vmax.f32 %v757, 0.0
  %v822 = vmax.f32 %v758, 0.0
  %v823 = vmax.f32 %v759, 0.0
  %v824 = vmax.f32 %v760, 0.0
  %v825 = vmax.f32 %v761, 0.0
  %v826 = vmax.f32 %v762, 0.0
  %v827 = vmax.f32 %v763, 0.0
  %v828 = vmax.f32 %v764, 0.0
  %v829 = vmax.f32 %v765, 0.0
  %v830 = vmax.f32 %v766, 0.0
  %v831 = vmax.f32 %v767, 0.0
  %v832 = vmax.f32 %v768, 0.0
  %v833 = vmax.f32 %v769, 0.0
  %v834 = vmax.f32 %v770, 0.0
  %v835 = vmax.f32 %v771, 0.0
  %v836 = vmax.f32 %v772, 0.0
  %v837 = vmax.f32 %v773, 0.0
  %v838 = vmax.f32 %v774, 0.0
  %v839 = vmax.f32 %v775, 0.0
  %v840 = vmax.f32 %v776, 0.0
  %v841 = vmax.f32 %v777, 0.0
  %v842 = vmax.f32 %v778, 0.0
  %v843 = vmax.f32 %v779, 0.0
  %v844 = vmax.f32 %v780, 0.0
  %v845 = vmax.f32 %v781, 0.0
  %v846 = vmax.f32 %v782, 0.0
  %v847 = vmax.f32 %v783, 0.0
  %v848 = vmax.f32 %v784, 0.0
  %v849 = vmax.f32 %v785, 0.0
  %v850 = vmax.f32 %v786, 0.0
  %v851 = vmax.f32 %v787, 0.0
  %v852 = vmax.f32 %v788, 0.0
  %v853 = vmax.f32 %v789, 0.0
  %v854 = vmax.f32 %v790, 0.0
  %v855 = vmax.f32 %v791, 0.0
  %v856 = vmax.f32 %v792, 0.0
  %v857 = vmax.f32 %v793, 0.0
  %s858 = scalar_lea.vmem %s0, 256
  %v859 = vld [vmem:[%s858] sm:$0xf]
  %v860 = vld [vmem:[%s858 + $0x4] sm:$0xf]
  %v861 = vld [vmem:[%s858 + $0x8] sm:$0xf]
  %v862 = vld [vmem:[%s858 + $0xc] sm:$0xf]
  %v863 = vld [vmem:[%s858 + $0x10] sm:$0xf]
  %v864 = vld [vmem:[%s858 + $0x14] sm:$0xf]
  %v865 = vld [vmem:[%s858 + $0x18] sm:$0xf]
  %v866 = vld [vmem:[%s858 + $0x1c] sm:$0xf]
  %v867 = vld [vmem:[%s858 + $0x20] sm:$0xf]
  %v868 = vld [vmem:[%s858 + $0x24] sm:$0xf]
  %v869 = vld [vmem:[%s858 + $0x28] sm:$0xf]
  %v870 = vld [vmem:[%s858 + $0x2c] sm:$0xf]
  %v871 = vld [vmem:[%s858 + $0x30] sm:$0xf]
  %v872 = vld [vmem:[%s858 + $0x34] sm:$0xf]
  %v873 = vld [vmem:[%s858 + $0x38] sm:$0xf]
  %v874 = vld [vmem:[%s858 + $0x3c] sm:$0xf]
  %v875 = vld [vmem:[%s858 + $0x40] sm:$0xf]
  %v876 = vld [vmem:[%s858 + $0x44] sm:$0xf]
  %v877 = vld [vmem:[%s858 + $0x48] sm:$0xf]
  %v878 = vld [vmem:[%s858 + $0x4c] sm:$0xf]
  %v879 = vld [vmem:[%s858 + $0x50] sm:$0xf]
  %v880 = vld [vmem:[%s858 + $0x54] sm:$0xf]
  %v881 = vld [vmem:[%s858 + $0x58] sm:$0xf]
  %v882 = vld [vmem:[%s858 + $0x5c] sm:$0xf]
  %v883 = vld [vmem:[%s858 + $0x60] sm:$0xf]
  %v884 = vld [vmem:[%s858 + $0x64] sm:$0xf]
  %v885 = vld [vmem:[%s858 + $0x68] sm:$0xf]
  %v886 = vld [vmem:[%s858 + $0x6c] sm:$0xf]
  %v887 = vld [vmem:[%s858 + $0x70] sm:$0xf]
  %v888 = vld [vmem:[%s858 + $0x74] sm:$0xf]
  %v889 = vld [vmem:[%s858 + $0x78] sm:$0xf]
  %v890 = vld [vmem:[%s858 + $0x7c] sm:$0xf]
  %v891 = vld [vmem:[%s858 + $0x80] sm:$0xf]
  %v892 = vld [vmem:[%s858 + $0x84] sm:$0xf]
  %v893 = vld [vmem:[%s858 + $0x88] sm:$0xf]
  %v894 = vld [vmem:[%s858 + $0x8c] sm:$0xf]
  %v895 = vld [vmem:[%s858 + $0x90] sm:$0xf]
  %v896 = vld [vmem:[%s858 + $0x94] sm:$0xf]
  %v897 = vld [vmem:[%s858 + $0x98] sm:$0xf]
  %v898 = vld [vmem:[%s858 + $0x9c] sm:$0xf]
  %v899 = vld [vmem:[%s858 + $0xa0] sm:$0xf]
  %v900 = vld [vmem:[%s858 + $0xa4] sm:$0xf]
  %v901 = vld [vmem:[%s858 + $0xa8] sm:$0xf]
  %v902 = vld [vmem:[%s858 + $0xac] sm:$0xf]
  %v903 = vld [vmem:[%s858 + $0xb0] sm:$0xf]
  %v904 = vld [vmem:[%s858 + $0xb4] sm:$0xf]
  %v905 = vld [vmem:[%s858 + $0xb8] sm:$0xf]
  %v906 = vld [vmem:[%s858 + $0xbc] sm:$0xf]
  %v907 = vld [vmem:[%s858 + $0xc0] sm:$0xf]
  %v908 = vld [vmem:[%s858 + $0xc4] sm:$0xf]
  %v909 = vld [vmem:[%s858 + $0xc8] sm:$0xf]
  %v910 = vld [vmem:[%s858 + $0xcc] sm:$0xf]
  %v911 = vld [vmem:[%s858 + $0xd0] sm:$0xf]
  %v912 = vld [vmem:[%s858 + $0xd4] sm:$0xf]
  %v913 = vld [vmem:[%s858 + $0xd8] sm:$0xf]
  %v914 = vld [vmem:[%s858 + $0xdc] sm:$0xf]
  %v915 = vld [vmem:[%s858 + $0xe0] sm:$0xf]
  %v916 = vld [vmem:[%s858 + $0xe4] sm:$0xf]
  %v917 = vld [vmem:[%s858 + $0xe8] sm:$0xf]
  %v918 = vld [vmem:[%s858 + $0xec] sm:$0xf]
  %v919 = vld [vmem:[%s858 + $0xf0] sm:$0xf]
  %v920 = vld [vmem:[%s858 + $0xf4] sm:$0xf]
  %v921 = vld [vmem:[%s858 + $0xf8] sm:$0xf]
  %v922 = vld [vmem:[%s858 + $0xfc] sm:$0xf]
  %v987 = vunpack.c.l.b16 %v859
  %v988 = vunpack.c.l.b16 %v860
  %v989 = vunpack.c.l.b16 %v861
  %v990 = vunpack.c.l.b16 %v862
  %v991 = vunpack.c.l.b16 %v863
  %v992 = vunpack.c.l.b16 %v864
  %v993 = vunpack.c.l.b16 %v865
  %v994 = vunpack.c.l.b16 %v866
  %v995 = vunpack.c.l.b16 %v867
  %v996 = vunpack.c.l.b16 %v868
  %v997 = vunpack.c.l.b16 %v869
  %v998 = vunpack.c.l.b16 %v870
  %v999 = vunpack.c.l.b16 %v871
  %v1000 = vunpack.c.l.b16 %v872
  %v1001 = vunpack.c.l.b16 %v873
  %v1002 = vunpack.c.l.b16 %v874
  %v1003 = vunpack.c.l.b16 %v875
  %v1004 = vunpack.c.l.b16 %v876
  %v1005 = vunpack.c.l.b16 %v877
  %v1006 = vunpack.c.l.b16 %v878
  %v1007 = vunpack.c.l.b16 %v879
  %v1008 = vunpack.c.l.b16 %v880
  %v1009 = vunpack.c.l.b16 %v881
  %v1010 = vunpack.c.l.b16 %v882
  %v1011 = vunpack.c.l.b16 %v883
  %v1012 = vunpack.c.l.b16 %v884
  %v1013 = vunpack.c.l.b16 %v885
  %v1014 = vunpack.c.l.b16 %v886
  %v1015 = vunpack.c.l.b16 %v887
  %v1016 = vunpack.c.l.b16 %v888
  %v1017 = vunpack.c.l.b16 %v889
  %v1018 = vunpack.c.l.b16 %v890
  %v1019 = vunpack.c.l.b16 %v891
  %v1020 = vunpack.c.l.b16 %v892
  %v1021 = vunpack.c.l.b16 %v893
  %v1022 = vunpack.c.l.b16 %v894
  %v1023 = vunpack.c.l.b16 %v895
  %v1024 = vunpack.c.l.b16 %v896
  %v1025 = vunpack.c.l.b16 %v897
  %v1026 = vunpack.c.l.b16 %v898
  %v1027 = vunpack.c.l.b16 %v899
  %v1028 = vunpack.c.l.b16 %v900
  %v1029 = vunpack.c.l.b16 %v901
  %v1030 = vunpack.c.l.b16 %v902
  %v1031 = vunpack.c.l.b16 %v903
  %v1032 = vunpack.c.l.b16 %v904
  %v1033 = vunpack.c.l.b16 %v905
  %v1034 = vunpack.c.l.b16 %v906
  %v1035 = vunpack.c.l.b16 %v907
  %v1036 = vunpack.c.l.b16 %v908
  %v1037 = vunpack.c.l.b16 %v909
  %v1038 = vunpack.c.l.b16 %v910
  %v1039 = vunpack.c.l.b16 %v911
  %v1040 = vunpack.c.l.b16 %v912
  %v1041 = vunpack.c.l.b16 %v913
  %v1042 = vunpack.c.l.b16 %v914
  %v1043 = vunpack.c.l.b16 %v915
  %v1044 = vunpack.c.l.b16 %v916
  %v1045 = vunpack.c.l.b16 %v917
  %v1046 = vunpack.c.l.b16 %v918
  %v1047 = vunpack.c.l.b16 %v919
  %v1048 = vunpack.c.l.b16 %v920
  %v1049 = vunpack.c.l.b16 %v921
  %v1050 = vunpack.c.l.b16 %v922
  %v1051 = vpack.c.b16 %v988, %v987
  %v1052 = vpack.c.b16 %v990, %v989
  %v1053 = vpack.c.b16 %v992, %v991
  %v1054 = vpack.c.b16 %v994, %v993
  %v1055 = vpack.c.b16 %v996, %v995
  %v1056 = vpack.c.b16 %v998, %v997
  %v1057 = vpack.c.b16 %v1000, %v999
  %v1058 = vpack.c.b16 %v1002, %v1001
  %v1059 = vpack.c.b16 %v1004, %v1003
  %v1060 = vpack.c.b16 %v1006, %v1005
  %v1061 = vpack.c.b16 %v1008, %v1007
  %v1062 = vpack.c.b16 %v1010, %v1009
  %v1063 = vpack.c.b16 %v1012, %v1011
  %v1064 = vpack.c.b16 %v1014, %v1013
  %v1065 = vpack.c.b16 %v1016, %v1015
  %v1066 = vpack.c.b16 %v1018, %v1017
  %v1067 = vpack.c.b16 %v1020, %v1019
  %v1068 = vpack.c.b16 %v1022, %v1021
  %v1069 = vpack.c.b16 %v1024, %v1023
  %v1070 = vpack.c.b16 %v1026, %v1025
  %v1071 = vpack.c.b16 %v1028, %v1027
  %v1072 = vpack.c.b16 %v1030, %v1029
  %v1073 = vpack.c.b16 %v1032, %v1031
  %v1074 = vpack.c.b16 %v1034, %v1033
  %v1075 = vpack.c.b16 %v1036, %v1035
  %v1076 = vpack.c.b16 %v1038, %v1037
  %v1077 = vpack.c.b16 %v1040, %v1039
  %v1078 = vpack.c.b16 %v1042, %v1041
  %v1079 = vpack.c.b16 %v1044, %v1043
  %v1080 = vpack.c.b16 %v1046, %v1045
  %v1081 = vpack.c.b16 %v1048, %v1047
  %v1082 = vpack.c.b16 %v1050, %v1049
  %v1084 = vsel %vm264, %v1051, 0
  %v1087 = vsel %vm264, %v1052, 0
  %v1090 = vsel %vm264, %v1053, 0
  %v1093 = vsel %vm264, %v1054, 0
  %v1096 = vsel %vm264, %v1055, 0
  %v1099 = vsel %vm264, %v1056, 0
  %v1102 = vsel %vm264, %v1057, 0
  %v1105 = vsel %vm264, %v1058, 0
  %v1108 = vsel %vm264, %v1059, 0
  %v1111 = vsel %vm264, %v1060, 0
  %v1114 = vsel %vm264, %v1061, 0
  %v1117 = vsel %vm264, %v1062, 0
  %v1120 = vsel %vm264, %v1063, 0
  %v1123 = vsel %vm264, %v1064, 0
  %v1126 = vsel %vm264, %v1065, 0
  %v1129 = vsel %vm264, %v1066, 0
  %v1132 = vsel %vm264, %v1067, 0
  %v1135 = vsel %vm264, %v1068, 0
  %v1138 = vsel %vm264, %v1069, 0
  %v1141 = vsel %vm264, %v1070, 0
  %v1144 = vsel %vm264, %v1071, 0
  %v1147 = vsel %vm264, %v1072, 0
  %v1150 = vsel %vm264, %v1073, 0
  %v1153 = vsel %vm264, %v1074, 0
  %v1156 = vsel %vm264, %v1075, 0
  %v1159 = vsel %vm264, %v1076, 0
  %v1162 = vsel %vm264, %v1077, 0
  %v1165 = vsel %vm264, %v1078, 0
  %v1168 = vsel %vm264, %v1079, 0
  %v1171 = vsel %vm264, %v1080, 0
  %v1174 = vsel %vm264, %v1081, 0
  %v1177 = vsel %vm264, %v1082, 0
  %1179 = vmatprep.subr.bf16.mxu0 0
  %1180 = vmatpush1.bf16.msra.mxu0 %v259
  %1181 = vmatprep.subr.bf16.mxu0 0
  %1182 = vmatpush1.bf16.msra.mxu0 %v260
  %1183 = vmatprep.subr.bf16.mxu0 0
  %1184 = vmatpush1.bf16.msra.mxu0 %v363
  %1185 = vmatprep.subr.bf16.mxu0 0
  %1186 = vmatpush1.bf16.msra.mxu0 0
  %1187 = vmatprep.subr.bf16.mxu0 0
  %1188 = vmatpush1.bf16.msra.mxu0 0
  %1189 = vmatprep.subr.bf16.mxu0 0
  %1190 = vmatpush1.bf16.msra.mxu0 0
  %1191 = vmatprep.subr.bf16.mxu0 0
  %1192 = vmatpush1.bf16.msra.mxu0 0
  %1193 = vmatprep.subr.bf16.mxu0 0
  %1194 = vmatpush1.bf16.msra.mxu0 0
  %1195 = vmatprep.subr.bf16.mxu0 0
  %1196 = vmatpush1.bf16.msra.mxu0 0
  %1197 = vmatprep.subr.bf16.mxu0 0
  %1198 = vmatpush1.bf16.msra.mxu0 0
  %1199 = vmatprep.subr.bf16.mxu0 0
  %1200 = vmatpush1.bf16.msra.mxu0 0
  %1201 = vmatprep.subr.bf16.mxu0 0
  %1202 = vmatpush1.bf16.msra.mxu0 0
  %1203 = vmatprep.subr.bf16.mxu0 0
  %1204 = vmatpush1.bf16.msra.mxu0 0
  %1205 = vmatprep.subr.bf16.mxu0 0
  %1206 = vmatpush1.bf16.msra.mxu0 0
  %1207 = vmatprep.subr.bf16.mxu0 0
  %1208 = vmatpush1.bf16.msra.mxu0 0
  %1209 = vmatprep.subr.bf16.mxu0 0
  %1210 = vmatpush1.bf16.msra.mxu0 0
  %1211 = vmatprep.mubr.bf16.mxu0 0
  %1212 = vmatmul.mubr.bf16.gmra.mrb[0].mxu0 %v1084
  %v1213 = vpop.f32.mrb[0].mxu0
  %v1214 = vadd.f32 0.0, %v1213
  %v1215 = vpop.f32.mrb[0].mxu0
  %v1216 = vpop.f32.mrb[0].mxu0
  %v1217 = vadd.f32 0.0, %v1216
  %v1218 = vpop.f32.mrb[0].mxu0
  %1219 = vmatprep.mubr.bf16.mxu0 0
  %1220 = vmatmul.mubr.bf16.gmra.mrb[0].mxu0 %v1087
  %v1221 = vpop.f32.mrb[0].mxu0
  %v1222 = vadd.f32 0.0, %v1221
  %v1223 = vpop.f32.mrb[0].mxu0
  %v1224 = vpop.f32.mrb[0].mxu0
  %v1225 = vadd.f32 0.0, %v1224
  %v1226 = vpop.f32.mrb[0].mxu0
  %1227 = vmatprep.mubr.bf16.mxu0 0
  %1228 = vmatmul.mubr.bf16.gmra.mrb[0].mxu0 %v1090
  %v1229 = vpop.f32.mrb[0].mxu0
  %v1230 = vadd.f32 0.0, %v1229
  %v1231 = vpop.f32.mrb[0].mxu0
  %v1232 = vpop.f32.mrb[0].mxu0
  %v1233 = vadd.f32 0.0, %v1232
  %v1234 = vpop.f32.mrb[0].mxu0
  %1235 = vmatprep.mubr.bf16.mxu0 0
  %1236 = vmatmul.mubr.bf16.gmra.mrb[0].mxu0 %v1093
  %v1237 = vpop.f32.mrb[0].mxu0
  %v1238 = vadd.f32 0.0, %v1237
  %v1239 = vpop.f32.mrb[0].mxu0
  %v1240 = vpop.f32.mrb[0].mxu0
  %v1241 = vadd.f32 0.0, %v1240
  %v1242 = vpop.f32.mrb[0].mxu0
  %1243 = vmatprep.mubr.bf16.mxu0 0
  %1244 = vmatmul.mubr.bf16.gmra.mrb[0].mxu0 %v1096
  %v1245 = vpop.f32.mrb[0].mxu0
  %v1246 = vadd.f32 0.0, %v1245
  %v1247 = vpop.f32.mrb[0].mxu0
  %v1248 = vpop.f32.mrb[0].mxu0
  %v1249 = vadd.f32 0.0, %v1248
  %v1250 = vpop.f32.mrb[0].mxu0
  %1251 = vmatprep.mubr.bf16.mxu0 0
  %1252 = vmatmul.mubr.bf16.gmra.mrb[0].mxu0 %v1099
  %v1253 = vpop.f32.mrb[0].mxu0
  %v1254 = vadd.f32 0.0, %v1253
  %v1255 = vpop.f32.mrb[0].mxu0
  %v1256 = vpop.f32.mrb[0].mxu0
  %v1257 = vadd.f32 0.0, %v1256
  %v1258 = vpop.f32.mrb[0].mxu0
  %1259 = vmatprep.mubr.bf16.mxu0 0
  %1260 = vmatmul.mubr.bf16.gmra.mrb[0].mxu0 %v1102
  %v1261 = vpop.f32.mrb[0].mxu0
  %v1262 = vadd.f32 0.0, %v1261
  %v1263 = vpop.f32.mrb[0].mxu0
  %v1264 = vpop.f32.mrb[0].mxu0
  %v1265 = vadd.f32 0.0, %v1264
  %v1266 = vpop.f32.mrb[0].mxu0
  %1267 = vmatprep.mubr.bf16.mxu0 0
  %1268 = vmatmul.mubr.bf16.gmra.mrb[0].mxu0 %v1105
  %v1269 = vpop.f32.mrb[0].mxu0
  %v1270 = vadd.f32 0.0, %v1269
  %v1271 = vpop.f32.mrb[0].mxu0
  %v1272 = vpop.f32.mrb[0].mxu0
  %v1273 = vadd.f32 0.0, %v1272
  %v1274 = vpop.f32.mrb[0].mxu0
  %1275 = vmatprep.mubr.bf16.mxu0 0
  %1276 = vmatmul.mubr.bf16.gmra.mrb[0].mxu0 %v1108
  %v1277 = vpop.f32.mrb[0].mxu0
  %v1278 = vadd.f32 0.0, %v1277
  %v1279 = vpop.f32.mrb[0].mxu0
  %v1280 = vpop.f32.mrb[0].mxu0
  %v1281 = vadd.f32 0.0, %v1280
  %v1282 = vpop.f32.mrb[0].mxu0
  %1283 = vmatprep.mubr.bf16.mxu0 0
  %1284 = vmatmul.mubr.bf16.gmra.mrb[0].mxu0 %v1111
  %v1285 = vpop.f32.mrb[0].mxu0
  %v1286 = vadd.f32 0.0, %v1285
  %v1287 = vpop.f32.mrb[0].mxu0
  %v1288 = vpop.f32.mrb[0].mxu0
  %v1289 = vadd.f32 0.0, %v1288
  %v1290 = vpop.f32.mrb[0].mxu0
  %1291 = vmatprep.mubr.bf16.mxu0 0
  %1292 = vmatmul.mubr.bf16.gmra.mrb[0].mxu0 %v1114
  %v1293 = vpop.f32.mrb[0].mxu0
  %v1294 = vadd.f32 0.0, %v1293
  %v1295 = vpop.f32.mrb[0].mxu0
  %v1296 = vpop.f32.mrb[0].mxu0
  %v1297 = vadd.f32 0.0, %v1296
  %v1298 = vpop.f32.mrb[0].mxu0
  %1299 = vmatprep.mubr.bf16.mxu0 0
  %1300 = vmatmul.mubr.bf16.gmra.mrb[0].mxu0 %v1117
  %v1301 = vpop.f32.mrb[0].mxu0
  %v1302 = vadd.f32 0.0, %v1301
  %v1303 = vpop.f32.mrb[0].mxu0
  %v1304 = vpop.f32.mrb[0].mxu0
  %v1305 = vadd.f32 0.0, %v1304
  %v1306 = vpop.f32.mrb[0].mxu0
  %1307 = vmatprep.mubr.bf16.mxu0 0
  %1308 = vmatmul.mubr.bf16.gmra.mrb[0].mxu0 %v1120
  %v1309 = vpop.f32.mrb[0].mxu0
  %v1310 = vadd.f32 0.0, %v1309
  %v1311 = vpop.f32.mrb[0].mxu0
  %v1312 = vpop.f32.mrb[0].mxu0
  %v1313 = vadd.f32 0.0, %v1312
  %v1314 = vpop.f32.mrb[0].mxu0
  %1315 = vmatprep.mubr.bf16.mxu0 0
  %1316 = vmatmul.mubr.bf16.gmra.mrb[0].mxu0 %v1123
  %v1317 = vpop.f32.mrb[0].mxu0
  %v1318 = vadd.f32 0.0, %v1317
  %v1319 = vpop.f32.mrb[0].mxu0
  %v1320 = vpop.f32.mrb[0].mxu0
  %v1321 = vadd.f32 0.0, %v1320
  %v1322 = vpop.f32.mrb[0].mxu0
  %1323 = vmatprep.mubr.bf16.mxu0 0
  %1324 = vmatmul.mubr.bf16.gmra.mrb[0].mxu0 %v1126
  %v1325 = vpop.f32.mrb[0].mxu0
  %v1326 = vadd.f32 0.0, %v1325
  %v1327 = vpop.f32.mrb[0].mxu0
  %v1328 = vpop.f32.mrb[0].mxu0
  %v1329 = vadd.f32 0.0, %v1328
  %v1330 = vpop.f32.mrb[0].mxu0
  %1331 = vmatprep.mubr.bf16.mxu0 0
  %1332 = vmatmul.mubr.bf16.gmra.mrb[0].mxu0 %v1129
  %v1333 = vpop.f32.mrb[0].mxu0
  %v1334 = vadd.f32 0.0, %v1333
  %v1335 = vpop.f32.mrb[0].mxu0
  %v1336 = vpop.f32.mrb[0].mxu0
  %v1337 = vadd.f32 0.0, %v1336
  %v1338 = vpop.f32.mrb[0].mxu0
  %1339 = vmatprep.mubr.bf16.mxu0 0
  %1340 = vmatmul.mubr.bf16.gmra.mrb[0].mxu0 %v1132
  %v1341 = vpop.f32.mrb[0].mxu0
  %v1342 = vadd.f32 0.0, %v1341
  %v1343 = vpop.f32.mrb[0].mxu0
  %v1344 = vpop.f32.mrb[0].mxu0
  %v1345 = vadd.f32 0.0, %v1344
  %v1346 = vpop.f32.mrb[0].mxu0
  %1347 = vmatprep.mubr.bf16.mxu0 0
  %1348 = vmatmul.mubr.bf16.gmra.mrb[0].mxu0 %v1135
  %v1349 = vpop.f32.mrb[0].mxu0
  %v1350 = vadd.f32 0.0, %v1349
  %v1351 = vpop.f32.mrb[0].mxu0
  %v1352 = vpop.f32.mrb[0].mxu0
  %v1353 = vadd.f32 0.0, %v1352
  %v1354 = vpop.f32.mrb[0].mxu0
  %1355 = vmatprep.mubr.bf16.mxu0 0
  %1356 = vmatmul.mubr.bf16.gmra.mrb[0].mxu0 %v1138
  %v1357 = vpop.f32.mrb[0].mxu0
  %v1358 = vadd.f32 0.0, %v1357
  %v1359 = vpop.f32.mrb[0].mxu0
  %v1360 = vpop.f32.mrb[0].mxu0
  %v1361 = vadd.f32 0.0, %v1360
  %v1362 = vpop.f32.mrb[0].mxu0
  %1363 = vmatprep.mubr.bf16.mxu0 0
  %1364 = vmatmul.mubr.bf16.gmra.mrb[0].mxu0 %v1141
  %v1365 = vpop.f32.mrb[0].mxu0
  %v1366 = vadd.f32 0.0, %v1365
  %v1367 = vpop.f32.mrb[0].mxu0
  %v1368 = vpop.f32.mrb[0].mxu0
  %v1369 = vadd.f32 0.0, %v1368
  %v1370 = vpop.f32.mrb[0].mxu0
  %1371 = vmatprep.mubr.bf16.mxu0 0
  %1372 = vmatmul.mubr.bf16.gmra.mrb[0].mxu0 %v1144
  %v1373 = vpop.f32.mrb[0].mxu0
  %v1374 = vadd.f32 0.0, %v1373
  %v1375 = vpop.f32.mrb[0].mxu0
  %v1376 = vpop.f32.mrb[0].mxu0
  %v1377 = vadd.f32 0.0, %v1376
  %v1378 = vpop.f32.mrb[0].mxu0
  %1379 = vmatprep.mubr.bf16.mxu0 0
  %1380 = vmatmul.mubr.bf16.gmra.mrb[0].mxu0 %v1147
  %v1381 = vpop.f32.mrb[0].mxu0
  %v1382 = vadd.f32 0.0, %v1381
  %v1383 = vpop.f32.mrb[0].mxu0
  %v1384 = vpop.f32.mrb[0].mxu0
  %v1385 = vadd.f32 0.0, %v1384
  %v1386 = vpop.f32.mrb[0].mxu0
  %1387 = vmatprep.mubr.bf16.mxu0 0
  %1388 = vmatmul.mubr.bf16.gmra.mrb[0].mxu0 %v1150
  %v1389 = vpop.f32.mrb[0].mxu0
  %v1390 = vadd.f32 0.0, %v1389
  %v1391 = vpop.f32.mrb[0].mxu0
  %v1392 = vpop.f32.mrb[0].mxu0
  %v1393 = vadd.f32 0.0, %v1392
  %v1394 = vpop.f32.mrb[0].mxu0
  %1395 = vmatprep.mubr.bf16.mxu0 0
  %1396 = vmatmul.mubr.bf16.gmra.mrb[0].mxu0 %v1153
  %v1397 = vpop.f32.mrb[0].mxu0
  %v1398 = vadd.f32 0.0, %v1397
  %v1399 = vpop.f32.mrb[0].mxu0
  %v1400 = vpop.f32.mrb[0].mxu0
  %v1401 = vadd.f32 0.0, %v1400
  %v1402 = vpop.f32.mrb[0].mxu0
  %1403 = vmatprep.mubr.bf16.mxu0 0
  %1404 = vmatmul.mubr.bf16.gmra.mrb[0].mxu0 %v1156
  %v1405 = vpop.f32.mrb[0].mxu0
  %v1406 = vadd.f32 0.0, %v1405
  %v1407 = vpop.f32.mrb[0].mxu0
  %v1408 = vpop.f32.mrb[0].mxu0
  %v1409 = vadd.f32 0.0, %v1408
  %v1410 = vpop.f32.mrb[0].mxu0
  %1411 = vmatprep.mubr.bf16.mxu0 0
  %1412 = vmatmul.mubr.bf16.gmra.mrb[0].mxu0 %v1159
  %v1413 = vpop.f32.mrb[0].mxu0
  %v1414 = vadd.f32 0.0, %v1413
  %v1415 = vpop.f32.mrb[0].mxu0
  %v1416 = vpop.f32.mrb[0].mxu0
  %v1417 = vadd.f32 0.0, %v1416
  %v1418 = vpop.f32.mrb[0].mxu0
  %1419 = vmatprep.mubr.bf16.mxu0 0
  %1420 = vmatmul.mubr.bf16.gmra.mrb[0].mxu0 %v1162
  %v1421 = vpop.f32.mrb[0].mxu0
  %v1422 = vadd.f32 0.0, %v1421
  %v1423 = vpop.f32.mrb[0].mxu0
  %v1424 = vpop.f32.mrb[0].mxu0
  %v1425 = vadd.f32 0.0, %v1424
  %v1426 = vpop.f32.mrb[0].mxu0
  %1427 = vmatprep.mubr.bf16.mxu0 0
  %1428 = vmatmul.mubr.bf16.gmra.mrb[0].mxu0 %v1165
  %v1429 = vpop.f32.mrb[0].mxu0
  %v1430 = vadd.f32 0.0, %v1429
  %v1431 = vpop.f32.mrb[0].mxu0
  %v1432 = vpop.f32.mrb[0].mxu0
  %v1433 = vadd.f32 0.0, %v1432
  %v1434 = vpop.f32.mrb[0].mxu0
  %1435 = vmatprep.mubr.bf16.mxu0 0
  %1436 = vmatmul.mubr.bf16.gmra.mrb[0].mxu0 %v1168
  %v1437 = vpop.f32.mrb[0].mxu0
  %v1438 = vadd.f32 0.0, %v1437
  %v1439 = vpop.f32.mrb[0].mxu0
  %v1440 = vpop.f32.mrb[0].mxu0
  %v1441 = vadd.f32 0.0, %v1440
  %v1442 = vpop.f32.mrb[0].mxu0
  %1443 = vmatprep.mubr.bf16.mxu0 0
  %1444 = vmatmul.mubr.bf16.gmra.mrb[0].mxu0 %v1171
  %v1445 = vpop.f32.mrb[0].mxu0
  %v1446 = vadd.f32 0.0, %v1445
  %v1447 = vpop.f32.mrb[0].mxu0
  %v1448 = vpop.f32.mrb[0].mxu0
  %v1449 = vadd.f32 0.0, %v1448
  %v1450 = vpop.f32.mrb[0].mxu0
  %1451 = vmatprep.mubr.bf16.mxu0 0
  %1452 = vmatmul.mubr.bf16.gmra.mrb[0].mxu0 %v1174
  %v1453 = vpop.f32.mrb[0].mxu0
  %v1454 = vadd.f32 0.0, %v1453
  %v1455 = vpop.f32.mrb[0].mxu0
  %v1456 = vpop.f32.mrb[0].mxu0
  %v1457 = vadd.f32 0.0, %v1456
  %v1458 = vpop.f32.mrb[0].mxu0
  %1459 = vmatprep.mubr.bf16.mxu0 0
  %1460 = vmatmul.mubr.bf16.gmra.mrb[0].mxu0 %v1177
  %v1461 = vpop.f32.mrb[0].mxu0
  %v1462 = vadd.f32 0.0, %v1461
  %v1463 = vpop.f32.mrb[0].mxu0
  %v1464 = vpop.f32.mrb[0].mxu0
  %v1465 = vadd.f32 0.0, %v1464
  %v1466 = vpop.f32.mrb[0].mxu0
  %1467 = vdwg.mxu0
  %v1468 = vmul.f32 %v1214, %v658
  %v1469 = vmul.f32 %v1217, %v658
  %v1470 = vmul.f32 %v1222, %v658
  %v1471 = vmul.f32 %v1225, %v658
  %v1472 = vmul.f32 %v1230, %v658
  %v1473 = vmul.f32 %v1233, %v658
  %v1474 = vmul.f32 %v1238, %v658
  %v1475 = vmul.f32 %v1241, %v658
  %v1476 = vmul.f32 %v1246, %v658
  %v1477 = vmul.f32 %v1249, %v658
  %v1478 = vmul.f32 %v1254, %v658
  %v1479 = vmul.f32 %v1257, %v658
  %v1480 = vmul.f32 %v1262, %v658
  %v1481 = vmul.f32 %v1265, %v658
  %v1482 = vmul.f32 %v1270, %v658
  %v1483 = vmul.f32 %v1273, %v658
  %v1484 = vmul.f32 %v1278, %v658
  %v1485 = vmul.f32 %v1281, %v658
  %v1486 = vmul.f32 %v1286, %v658
  %v1487 = vmul.f32 %v1289, %v658
  %v1488 = vmul.f32 %v1294, %v658
  %v1489 = vmul.f32 %v1297, %v658
  %v1490 = vmul.f32 %v1302, %v658
  %v1491 = vmul.f32 %v1305, %v658
  %v1492 = vmul.f32 %v1310, %v658
  %v1493 = vmul.f32 %v1313, %v658
  %v1494 = vmul.f32 %v1318, %v658
  %v1495 = vmul.f32 %v1321, %v658
  %v1496 = vmul.f32 %v1326, %v658
  %v1497 = vmul.f32 %v1329, %v658
  %v1498 = vmul.f32 %v1334, %v658
  %v1499 = vmul.f32 %v1337, %v658
  %v1500 = vmul.f32 %v1342, %v658
  %v1501 = vmul.f32 %v1345, %v658
  %v1502 = vmul.f32 %v1350, %v658
  %v1503 = vmul.f32 %v1353, %v658
  %v1504 = vmul.f32 %v1358, %v658
  %v1505 = vmul.f32 %v1361, %v658
  %v1506 = vmul.f32 %v1366, %v658
  %v1507 = vmul.f32 %v1369, %v658
  %v1508 = vmul.f32 %v1374, %v658
  %v1509 = vmul.f32 %v1377, %v658
  %v1510 = vmul.f32 %v1382, %v658
  %v1511 = vmul.f32 %v1385, %v658
  %v1512 = vmul.f32 %v1390, %v658
  %v1513 = vmul.f32 %v1393, %v658
  %v1514 = vmul.f32 %v1398, %v658
  %v1515 = vmul.f32 %v1401, %v658
  %v1516 = vmul.f32 %v1406, %v658
  %v1517 = vmul.f32 %v1409, %v658
  %v1518 = vmul.f32 %v1414, %v658
  %v1519 = vmul.f32 %v1417, %v658
  %v1520 = vmul.f32 %v1422, %v658
  %v1521 = vmul.f32 %v1425, %v658
  %v1522 = vmul.f32 %v1430, %v658
  %v1523 = vmul.f32 %v1433, %v658
  %v1524 = vmul.f32 %v1438, %v658
  %v1525 = vmul.f32 %v1441, %v658
  %v1526 = vmul.f32 %v1446, %v658
  %v1527 = vmul.f32 %v1449, %v658
  %v1528 = vmul.f32 %v1454, %v658
  %v1529 = vmul.f32 %v1457, %v658
  %v1530 = vmul.f32 %v1462, %v658
  %v1531 = vmul.f32 %v1465, %v658
  %v1532 = vadd.f32 %v1468, %v728
  %v1533 = vadd.f32 %v1469, %v728
  %v1534 = vadd.f32 %v1470, %v728
  %v1535 = vadd.f32 %v1471, %v728
  %v1536 = vadd.f32 %v1472, %v728
  %v1537 = vadd.f32 %v1473, %v728
  %v1538 = vadd.f32 %v1474, %v728
  %v1539 = vadd.f32 %v1475, %v728
  %v1540 = vadd.f32 %v1476, %v728
  %v1541 = vadd.f32 %v1477, %v728
  %v1542 = vadd.f32 %v1478, %v728
  %v1543 = vadd.f32 %v1479, %v728
  %v1544 = vadd.f32 %v1480, %v728
  %v1545 = vadd.f32 %v1481, %v728
  %v1546 = vadd.f32 %v1482, %v728
  %v1547 = vadd.f32 %v1483, %v728
  %v1548 = vadd.f32 %v1484, %v728
  %v1549 = vadd.f32 %v1485, %v728
  %v1550 = vadd.f32 %v1486, %v728
  %v1551 = vadd.f32 %v1487, %v728
  %v1552 = vadd.f32 %v1488, %v728
  %v1553 = vadd.f32 %v1489, %v728
  %v1554 = vadd.f32 %v1490, %v728
  %v1555 = vadd.f32 %v1491, %v728
  %v1556 = vadd.f32 %v1492, %v728
  %v1557 = vadd.f32 %v1493, %v728
  %v1558 = vadd.f32 %v1494, %v728
  %v1559 = vadd.f32 %v1495, %v728
  %v1560 = vadd.f32 %v1496, %v728
  %v1561 = vadd.f32 %v1497, %v728
  %v1562 = vadd.f32 %v1498, %v728
  %v1563 = vadd.f32 %v1499, %v728
  %v1564 = vadd.f32 %v1500, %v728
  %v1565 = vadd.f32 %v1501, %v728
  %v1566 = vadd.f32 %v1502, %v728
  %v1567 = vadd.f32 %v1503, %v728
  %v1568 = vadd.f32 %v1504, %v728
  %v1569 = vadd.f32 %v1505, %v728
  %v1570 = vadd.f32 %v1506, %v728
  %v1571 = vadd.f32 %v1507, %v728
  %v1572 = vadd.f32 %v1508, %v728
  %v1573 = vadd.f32 %v1509, %v728
  %v1574 = vadd.f32 %v1510, %v728
  %v1575 = vadd.f32 %v1511, %v728
  %v1576 = vadd.f32 %v1512, %v728
  %v1577 = vadd.f32 %v1513, %v728
  %v1578 = vadd.f32 %v1514, %v728
  %v1579 = vadd.f32 %v1515, %v728
  %v1580 = vadd.f32 %v1516, %v728
  %v1581 = vadd.f32 %v1517, %v728
  %v1582 = vadd.f32 %v1518, %v728
  %v1583 = vadd.f32 %v1519, %v728
  %v1584 = vadd.f32 %v1520, %v728
  %v1585 = vadd.f32 %v1521, %v728
  %v1586 = vadd.f32 %v1522, %v728
  %v1587 = vadd.f32 %v1523, %v728
  %v1588 = vadd.f32 %v1524, %v728
  %v1589 = vadd.f32 %v1525, %v728
  %v1590 = vadd.f32 %v1526, %v728
  %v1591 = vadd.f32 %v1527, %v728
  %v1592 = vadd.f32 %v1528, %v728
  %v1593 = vadd.f32 %v1529, %v728
  %v1594 = vadd.f32 %v1530, %v728
  %v1595 = vadd.f32 %v1531, %v728
  %v1596 = vmax.f32 %v1532, 0.0
  %v1597 = vmax.f32 %v1533, 0.0
  %v1598 = vmax.f32 %v1534, 0.0
  %v1599 = vmax.f32 %v1535, 0.0
  %v1600 = vmax.f32 %v1536, 0.0
  %v1601 = vmax.f32 %v1537, 0.0
  %v1602 = vmax.f32 %v1538, 0.0
  %v1603 = vmax.f32 %v1539, 0.0
  %v1604 = vmax.f32 %v1540, 0.0
  %v1605 = vmax.f32 %v1541, 0.0
  %v1606 = vmax.f32 %v1542, 0.0
  %v1607 = vmax.f32 %v1543, 0.0
  %v1608 = vmax.f32 %v1544, 0.0
  %v1609 = vmax.f32 %v1545, 0.0
  %v1610 = vmax.f32 %v1546, 0.0
  %v1611 = vmax.f32 %v1547, 0.0
  %v1612 = vmax.f32 %v1548, 0.0
  %v1613 = vmax.f32 %v1549, 0.0
  %v1614 = vmax.f32 %v1550, 0.0
  %v1615 = vmax.f32 %v1551, 0.0
  %v1616 = vmax.f32 %v1552, 0.0
  %v1617 = vmax.f32 %v1553, 0.0
  %v1618 = vmax.f32 %v1554, 0.0
  %v1619 = vmax.f32 %v1555, 0.0
  %v1620 = vmax.f32 %v1556, 0.0
  %v1621 = vmax.f32 %v1557, 0.0
  %v1622 = vmax.f32 %v1558, 0.0
  %v1623 = vmax.f32 %v1559, 0.0
  %v1624 = vmax.f32 %v1560, 0.0
  %v1625 = vmax.f32 %v1561, 0.0
  %v1626 = vmax.f32 %v1562, 0.0
  %v1627 = vmax.f32 %v1563, 0.0
  %v1628 = vmax.f32 %v1564, 0.0
  %v1629 = vmax.f32 %v1565, 0.0
  %v1630 = vmax.f32 %v1566, 0.0
  %v1631 = vmax.f32 %v1567, 0.0
  %v1632 = vmax.f32 %v1568, 0.0
  %v1633 = vmax.f32 %v1569, 0.0
  %v1634 = vmax.f32 %v1570, 0.0
  %v1635 = vmax.f32 %v1571, 0.0
  %v1636 = vmax.f32 %v1572, 0.0
  %v1637 = vmax.f32 %v1573, 0.0
  %v1638 = vmax.f32 %v1574, 0.0
  %v1639 = vmax.f32 %v1575, 0.0
  %v1640 = vmax.f32 %v1576, 0.0
  %v1641 = vmax.f32 %v1577, 0.0
  %v1642 = vmax.f32 %v1578, 0.0
  %v1643 = vmax.f32 %v1579, 0.0
  %v1644 = vmax.f32 %v1580, 0.0
  %v1645 = vmax.f32 %v1581, 0.0
  %v1646 = vmax.f32 %v1582, 0.0
  %v1647 = vmax.f32 %v1583, 0.0
  %v1648 = vmax.f32 %v1584, 0.0
  %v1649 = vmax.f32 %v1585, 0.0
  %v1650 = vmax.f32 %v1586, 0.0
  %v1651 = vmax.f32 %v1587, 0.0
  %v1652 = vmax.f32 %v1588, 0.0
  %v1653 = vmax.f32 %v1589, 0.0
  %v1654 = vmax.f32 %v1590, 0.0
  %v1655 = vmax.f32 %v1591, 0.0
  %v1656 = vmax.f32 %v1592, 0.0
  %v1657 = vmax.f32 %v1593, 0.0
  %v1658 = vmax.f32 %v1594, 0.0
  %v1659 = vmax.f32 %v1595, 0.0
  %v1660 = vmax.f32 %v794, %v1596
  %v1661 = vmax.f32 %v795, %v1597
  %v1662 = vmax.f32 %v796, %v1598
  %v1663 = vmax.f32 %v797, %v1599
  %v1664 = vmax.f32 %v798, %v1600
  %v1665 = vmax.f32 %v799, %v1601
  %v1666 = vmax.f32 %v800, %v1602
  %v1667 = vmax.f32 %v801, %v1603
  %v1668 = vmax.f32 %v802, %v1604
  %v1669 = vmax.f32 %v803, %v1605
  %v1670 = vmax.f32 %v804, %v1606
  %v1671 = vmax.f32 %v805, %v1607
  %v1672 = vmax.f32 %v806, %v1608
  %v1673 = vmax.f32 %v807, %v1609
  %v1674 = vmax.f32 %v808, %v1610
  %v1675 = vmax.f32 %v809, %v1611
  %v1676 = vmax.f32 %v810, %v1612
  %v1677 = vmax.f32 %v811, %v1613
  %v1678 = vmax.f32 %v812, %v1614
  %v1679 = vmax.f32 %v813, %v1615
  %v1680 = vmax.f32 %v814, %v1616
  %v1681 = vmax.f32 %v815, %v1617
  %v1682 = vmax.f32 %v816, %v1618
  %v1683 = vmax.f32 %v817, %v1619
  %v1684 = vmax.f32 %v818, %v1620
  %v1685 = vmax.f32 %v819, %v1621
  %v1686 = vmax.f32 %v820, %v1622
  %v1687 = vmax.f32 %v821, %v1623
  %v1688 = vmax.f32 %v822, %v1624
  %v1689 = vmax.f32 %v823, %v1625
  %v1690 = vmax.f32 %v824, %v1626
  %v1691 = vmax.f32 %v825, %v1627
  %v1692 = vmax.f32 %v826, %v1628
  %v1693 = vmax.f32 %v827, %v1629
  %v1694 = vmax.f32 %v828, %v1630
  %v1695 = vmax.f32 %v829, %v1631
  %v1696 = vmax.f32 %v830, %v1632
  %v1697 = vmax.f32 %v831, %v1633
  %v1698 = vmax.f32 %v832, %v1634
  %v1699 = vmax.f32 %v833, %v1635
  %v1700 = vmax.f32 %v834, %v1636
  %v1701 = vmax.f32 %v835, %v1637
  %v1702 = vmax.f32 %v836, %v1638
  %v1703 = vmax.f32 %v837, %v1639
  %v1704 = vmax.f32 %v838, %v1640
  %v1705 = vmax.f32 %v839, %v1641
  %v1706 = vmax.f32 %v840, %v1642
  %v1707 = vmax.f32 %v841, %v1643
  %v1708 = vmax.f32 %v842, %v1644
  %v1709 = vmax.f32 %v843, %v1645
  %v1710 = vmax.f32 %v844, %v1646
  %v1711 = vmax.f32 %v845, %v1647
  %v1712 = vmax.f32 %v846, %v1648
  %v1713 = vmax.f32 %v847, %v1649
  %v1714 = vmax.f32 %v848, %v1650
  %v1715 = vmax.f32 %v849, %v1651
  %v1716 = vmax.f32 %v850, %v1652
  %v1717 = vmax.f32 %v851, %v1653
  %v1718 = vmax.f32 %v852, %v1654
  %v1719 = vmax.f32 %v853, %v1655
  %v1720 = vmax.f32 %v854, %v1656
  %v1721 = vmax.f32 %v855, %v1657
  %v1722 = vmax.f32 %v856, %v1658
  %v1723 = vmax.f32 %v857, %v1659
  %s1724 = scalar_lea.vmem %s0, 512
  %v1725 = vld [vmem:[%s1724] sm:$0xf]
  %v1726 = vld [vmem:[%s1724 + $0x4] sm:$0xf]
  %v1727 = vld [vmem:[%s1724 + $0x8] sm:$0xf]
  %v1728 = vld [vmem:[%s1724 + $0xc] sm:$0xf]
  %v1729 = vld [vmem:[%s1724 + $0x10] sm:$0xf]
  %v1730 = vld [vmem:[%s1724 + $0x14] sm:$0xf]
  %v1731 = vld [vmem:[%s1724 + $0x18] sm:$0xf]
  %v1732 = vld [vmem:[%s1724 + $0x1c] sm:$0xf]
  %v1733 = vld [vmem:[%s1724 + $0x20] sm:$0xf]
  %v1734 = vld [vmem:[%s1724 + $0x24] sm:$0xf]
  %v1735 = vld [vmem:[%s1724 + $0x28] sm:$0xf]
  %v1736 = vld [vmem:[%s1724 + $0x2c] sm:$0xf]
  %v1737 = vld [vmem:[%s1724 + $0x30] sm:$0xf]
  %v1738 = vld [vmem:[%s1724 + $0x34] sm:$0xf]
  %v1739 = vld [vmem:[%s1724 + $0x38] sm:$0xf]
  %v1740 = vld [vmem:[%s1724 + $0x3c] sm:$0xf]
  %v1741 = vld [vmem:[%s1724 + $0x40] sm:$0xf]
  %v1742 = vld [vmem:[%s1724 + $0x44] sm:$0xf]
  %v1743 = vld [vmem:[%s1724 + $0x48] sm:$0xf]
  %v1744 = vld [vmem:[%s1724 + $0x4c] sm:$0xf]
  %v1745 = vld [vmem:[%s1724 + $0x50] sm:$0xf]
  %v1746 = vld [vmem:[%s1724 + $0x54] sm:$0xf]
  %v1747 = vld [vmem:[%s1724 + $0x58] sm:$0xf]
  %v1748 = vld [vmem:[%s1724 + $0x5c] sm:$0xf]
  %v1749 = vld [vmem:[%s1724 + $0x60] sm:$0xf]
  %v1750 = vld [vmem:[%s1724 + $0x64] sm:$0xf]
  %v1751 = vld [vmem:[%s1724 + $0x68] sm:$0xf]
  %v1752 = vld [vmem:[%s1724 + $0x6c] sm:$0xf]
  %v1753 = vld [vmem:[%s1724 + $0x70] sm:$0xf]
  %v1754 = vld [vmem:[%s1724 + $0x74] sm:$0xf]
  %v1755 = vld [vmem:[%s1724 + $0x78] sm:$0xf]
  %v1756 = vld [vmem:[%s1724 + $0x7c] sm:$0xf]
  %v1757 = vld [vmem:[%s1724 + $0x80] sm:$0xf]
  %v1758 = vld [vmem:[%s1724 + $0x84] sm:$0xf]
  %v1759 = vld [vmem:[%s1724 + $0x88] sm:$0xf]
  %v1760 = vld [vmem:[%s1724 + $0x8c] sm:$0xf]
  %v1761 = vld [vmem:[%s1724 + $0x90] sm:$0xf]
  %v1762 = vld [vmem:[%s1724 + $0x94] sm:$0xf]
  %v1763 = vld [vmem:[%s1724 + $0x98] sm:$0xf]
  %v1764 = vld [vmem:[%s1724 + $0x9c] sm:$0xf]
  %v1765 = vld [vmem:[%s1724 + $0xa0] sm:$0xf]
  %v1766 = vld [vmem:[%s1724 + $0xa4] sm:$0xf]
  %v1767 = vld [vmem:[%s1724 + $0xa8] sm:$0xf]
  %v1768 = vld [vmem:[%s1724 + $0xac] sm:$0xf]
  %v1769 = vld [vmem:[%s1724 + $0xb0] sm:$0xf]
  %v1770 = vld [vmem:[%s1724 + $0xb4] sm:$0xf]
  %v1771 = vld [vmem:[%s1724 + $0xb8] sm:$0xf]
  %v1772 = vld [vmem:[%s1724 + $0xbc] sm:$0xf]
  %v1773 = vld [vmem:[%s1724 + $0xc0] sm:$0xf]
  %v1774 = vld [vmem:[%s1724 + $0xc4] sm:$0xf]
  %v1775 = vld [vmem:[%s1724 + $0xc8] sm:$0xf]
  %v1776 = vld [vmem:[%s1724 + $0xcc] sm:$0xf]
  %v1777 = vld [vmem:[%s1724 + $0xd0] sm:$0xf]
  %v1778 = vld [vmem:[%s1724 + $0xd4] sm:$0xf]
  %v1779 = vld [vmem:[%s1724 + $0xd8] sm:$0xf]
  %v1780 = vld [vmem:[%s1724 + $0xdc] sm:$0xf]
  %v1781 = vld [vmem:[%s1724 + $0xe0] sm:$0xf]
  %v1782 = vld [vmem:[%s1724 + $0xe4] sm:$0xf]
  %v1783 = vld [vmem:[%s1724 + $0xe8] sm:$0xf]
  %v1784 = vld [vmem:[%s1724 + $0xec] sm:$0xf]
  %v1785 = vld [vmem:[%s1724 + $0xf0] sm:$0xf]
  %v1786 = vld [vmem:[%s1724 + $0xf4] sm:$0xf]
  %v1787 = vld [vmem:[%s1724 + $0xf8] sm:$0xf]
  %v1788 = vld [vmem:[%s1724 + $0xfc] sm:$0xf]
  %v1853 = vunpack.c.l.b16 %v1725
  %v1854 = vunpack.c.l.b16 %v1726
  %v1855 = vunpack.c.l.b16 %v1727
  %v1856 = vunpack.c.l.b16 %v1728
  %v1857 = vunpack.c.l.b16 %v1729
  %v1858 = vunpack.c.l.b16 %v1730
  %v1859 = vunpack.c.l.b16 %v1731
  %v1860 = vunpack.c.l.b16 %v1732
  %v1861 = vunpack.c.l.b16 %v1733
  %v1862 = vunpack.c.l.b16 %v1734
  %v1863 = vunpack.c.l.b16 %v1735
  %v1864 = vunpack.c.l.b16 %v1736
  %v1865 = vunpack.c.l.b16 %v1737
  %v1866 = vunpack.c.l.b16 %v1738
  %v1867 = vunpack.c.l.b16 %v1739
  %v1868 = vunpack.c.l.b16 %v1740
  %v1869 = vunpack.c.l.b16 %v1741
  %v1870 = vunpack.c.l.b16 %v1742
  %v1871 = vunpack.c.l.b16 %v1743
  %v1872 = vunpack.c.l.b16 %v1744
  %v1873 = vunpack.c.l.b16 %v1745
  %v1874 = vunpack.c.l.b16 %v1746
  %v1875 = vunpack.c.l.b16 %v1747
  %v1876 = vunpack.c.l.b16 %v1748
  %v1877 = vunpack.c.l.b16 %v1749
  %v1878 = vunpack.c.l.b16 %v1750
  %v1879 = vunpack.c.l.b16 %v1751
  %v1880 = vunpack.c.l.b16 %v1752
  %v1881 = vunpack.c.l.b16 %v1753
  %v1882 = vunpack.c.l.b16 %v1754
  %v1883 = vunpack.c.l.b16 %v1755
  %v1884 = vunpack.c.l.b16 %v1756
  %v1885 = vunpack.c.l.b16 %v1757
  %v1886 = vunpack.c.l.b16 %v1758
  %v1887 = vunpack.c.l.b16 %v1759
  %v1888 = vunpack.c.l.b16 %v1760
  %v1889 = vunpack.c.l.b16 %v1761
  %v1890 = vunpack.c.l.b16 %v1762
  %v1891 = vunpack.c.l.b16 %v1763
  %v1892 = vunpack.c.l.b16 %v1764
  %v1893 = vunpack.c.l.b16 %v1765
  %v1894 = vunpack.c.l.b16 %v1766
  %v1895 = vunpack.c.l.b16 %v1767
  %v1896 = vunpack.c.l.b16 %v1768
  %v1897 = vunpack.c.l.b16 %v1769
  %v1898 = vunpack.c.l.b16 %v1770
  %v1899 = vunpack.c.l.b16 %v1771
  %v1900 = vunpack.c.l.b16 %v1772
  %v1901 = vunpack.c.l.b16 %v1773
  %v1902 = vunpack.c.l.b16 %v1774
  %v1903 = vunpack.c.l.b16 %v1775
  %v1904 = vunpack.c.l.b16 %v1776
  %v1905 = vunpack.c.l.b16 %v1777
  %v1906 = vunpack.c.l.b16 %v1778
  %v1907 = vunpack.c.l.b16 %v1779
  %v1908 = vunpack.c.l.b16 %v1780
  %v1909 = vunpack.c.l.b16 %v1781
  %v1910 = vunpack.c.l.b16 %v1782
  %v1911 = vunpack.c.l.b16 %v1783
  %v1912 = vunpack.c.l.b16 %v1784
  %v1913 = vunpack.c.l.b16 %v1785
  %v1914 = vunpack.c.l.b16 %v1786
  %v1915 = vunpack.c.l.b16 %v1787
  %v1916 = vunpack.c.l.b16 %v1788
  %v1917 = vpack.c.b16 %v1854, %v1853
  %v1918 = vpack.c.b16 %v1856, %v1855
  %v1919 = vpack.c.b16 %v1858, %v1857
  %v1920 = vpack.c.b16 %v1860, %v1859
  %v1921 = vpack.c.b16 %v1862, %v1861
  %v1922 = vpack.c.b16 %v1864, %v1863
  %v1923 = vpack.c.b16 %v1866, %v1865
  %v1924 = vpack.c.b16 %v1868, %v1867
  %v1925 = vpack.c.b16 %v1870, %v1869
  %v1926 = vpack.c.b16 %v1872, %v1871
  %v1927 = vpack.c.b16 %v1874, %v1873
  %v1928 = vpack.c.b16 %v1876, %v1875
  %v1929 = vpack.c.b16 %v1878, %v1877
  %v1930 = vpack.c.b16 %v1880, %v1879
  %v1931 = vpack.c.b16 %v1882, %v1881
  %v1932 = vpack.c.b16 %v1884, %v1883
  %v1933 = vpack.c.b16 %v1886, %v1885
  %v1934 = vpack.c.b16 %v1888, %v1887
  %v1935 = vpack.c.b16 %v1890, %v1889
  %v1936 = vpack.c.b16 %v1892, %v1891
  %v1937 = vpack.c.b16 %v1894, %v1893
  %v1938 = vpack.c.b16 %v1896, %v1895
  %v1939 = vpack.c.b16 %v1898, %v1897
  %v1940 = vpack.c.b16 %v1900, %v1899
  %v1941 = vpack.c.b16 %v1902, %v1901
  %v1942 = vpack.c.b16 %v1904, %v1903
  %v1943 = vpack.c.b16 %v1906, %v1905
  %v1944 = vpack.c.b16 %v1908, %v1907
  %v1945 = vpack.c.b16 %v1910, %v1909
  %v1946 = vpack.c.b16 %v1912, %v1911
  %v1947 = vpack.c.b16 %v1914, %v1913
  %v1948 = vpack.c.b16 %v1916, %v1915
  %v1950 = vsel %vm264, %v1917, 0
  %v1953 = vsel %vm264, %v1918, 0
  %v1956 = vsel %vm264, %v1919, 0
  %v1959 = vsel %vm264, %v1920, 0
  %v1962 = vsel %vm264, %v1921, 0
  %v1965 = vsel %vm264, %v1922, 0
  %v1968 = vsel %vm264, %v1923, 0
  %v1971 = vsel %vm264, %v1924, 0
  %v1974 = vsel %vm264, %v1925, 0
  %v1977 = vsel %vm264, %v1926, 0
  %v1980 = vsel %vm264, %v1927, 0
  %v1983 = vsel %vm264, %v1928, 0
  %v1986 = vsel %vm264, %v1929, 0
  %v1989 = vsel %vm264, %v1930, 0
  %v1992 = vsel %vm264, %v1931, 0
  %v1995 = vsel %vm264, %v1932, 0
  %v1998 = vsel %vm264, %v1933, 0
  %v2001 = vsel %vm264, %v1934, 0
  %v2004 = vsel %vm264, %v1935, 0
  %v2007 = vsel %vm264, %v1936, 0
  %v2010 = vsel %vm264, %v1937, 0
  %v2013 = vsel %vm264, %v1938, 0
  %v2016 = vsel %vm264, %v1939, 0
  %v2019 = vsel %vm264, %v1940, 0
  %v2022 = vsel %vm264, %v1941, 0
  %v2025 = vsel %vm264, %v1942, 0
  %v2028 = vsel %vm264, %v1943, 0
  %v2031 = vsel %vm264, %v1944, 0
  %v2034 = vsel %vm264, %v1945, 0
  %v2037 = vsel %vm264, %v1946, 0
  %v2040 = vsel %vm264, %v1947, 0
  %v2043 = vsel %vm264, %v1948, 0
  %2045 = vmatprep.subr.bf16.mxu0 0
  %2046 = vmatpush1.bf16.msra.mxu0 %v259
  %2047 = vmatprep.subr.bf16.mxu0 0
  %2048 = vmatpush1.bf16.msra.mxu0 %v260
  %2049 = vmatprep.subr.bf16.mxu0 0
  %2050 = vmatpush1.bf16.msra.mxu0 %v363
  %2051 = vmatprep.subr.bf16.mxu0 0
  %2052 = vmatpush1.bf16.msra.mxu0 0
  %2053 = vmatprep.subr.bf16.mxu0 0
  %2054 = vmatpush1.bf16.msra.mxu0 0
  %2055 = vmatprep.subr.bf16.mxu0 0
  %2056 = vmatpush1.bf16.msra.mxu0 0
  %2057 = vmatprep.subr.bf16.mxu0 0
  %2058 = vmatpush1.bf16.msra.mxu0 0
  %2059 = vmatprep.subr.bf16.mxu0 0
  %2060 = vmatpush1.bf16.msra.mxu0 0
  %2061 = vmatprep.subr.bf16.mxu0 0
  %2062 = vmatpush1.bf16.msra.mxu0 0
  %2063 = vmatprep.subr.bf16.mxu0 0
  %2064 = vmatpush1.bf16.msra.mxu0 0
  %2065 = vmatprep.subr.bf16.mxu0 0
  %2066 = vmatpush1.bf16.msra.mxu0 0
  %2067 = vmatprep.subr.bf16.mxu0 0
  %2068 = vmatpush1.bf16.msra.mxu0 0
  %2069 = vmatprep.subr.bf16.mxu0 0
  %2070 = vmatpush1.bf16.msra.mxu0 0
  %2071 = vmatprep.subr.bf16.mxu0 0
  %2072 = vmatpush1.bf16.msra.mxu0 0
  %2073 = vmatprep.subr.bf16.mxu0 0
  %2074 = vmatpush1.bf16.msra.mxu0 0
  %2075 = vmatprep.subr.bf16.mxu0 0
  %2076 = vmatpush1.bf16.msra.mxu0 0
  %2077 = vmatprep.mubr.bf16.mxu0 0
  %2078 = vmatmul.mubr.bf16.gmra.mrb[0].mxu0 %v1950
  %v2079 = vpop.f32.mrb[0].mxu0
  %v2080 = vadd.f32 0.0, %v2079
  %v2081 = vpop.f32.mrb[0].mxu0
  %v2082 = vpop.f32.mrb[0].mxu0
  %v2083 = vadd.f32 0.0, %v2082
  %v2084 = vpop.f32.mrb[0].mxu0
  %2085 = vmatprep.mubr.bf16.mxu0 0
  %2086 = vmatmul.mubr.bf16.gmra.mrb[0].mxu0 %v1953
  %v2087 = vpop.f32.mrb[0].mxu0
  %v2088 = vadd.f32 0.0, %v2087
  %v2089 = vpop.f32.mrb[0].mxu0
  %v2090 = vpop.f32.mrb[0].mxu0
  %v2091 = vadd.f32 0.0, %v2090
  %v2092 = vpop.f32.mrb[0].mxu0
  %2093 = vmatprep.mubr.bf16.mxu0 0
  %2094 = vmatmul.mubr.bf16.gmra.mrb[0].mxu0 %v1956
  %v2095 = vpop.f32.mrb[0].mxu0
  %v2096 = vadd.f32 0.0, %v2095
  %v2097 = vpop.f32.mrb[0].mxu0
  %v2098 = vpop.f32.mrb[0].mxu0
  %v2099 = vadd.f32 0.0, %v2098
  %v2100 = vpop.f32.mrb[0].mxu0
  %2101 = vmatprep.mubr.bf16.mxu0 0
  %2102 = vmatmul.mubr.bf16.gmra.mrb[0].mxu0 %v1959
  %v2103 = vpop.f32.mrb[0].mxu0
  %v2104 = vadd.f32 0.0, %v2103
  %v2105 = vpop.f32.mrb[0].mxu0
  %v2106 = vpop.f32.mrb[0].mxu0
  %v2107 = vadd.f32 0.0, %v2106
  %v2108 = vpop.f32.mrb[0].mxu0
  %2109 = vmatprep.mubr.bf16.mxu0 0
  %2110 = vmatmul.mubr.bf16.gmra.mrb[0].mxu0 %v1962
  %v2111 = vpop.f32.mrb[0].mxu0
  %v2112 = vadd.f32 0.0, %v2111
  %v2113 = vpop.f32.mrb[0].mxu0
  %v2114 = vpop.f32.mrb[0].mxu0
  %v2115 = vadd.f32 0.0, %v2114
  %v2116 = vpop.f32.mrb[0].mxu0
  %2117 = vmatprep.mubr.bf16.mxu0 0
  %2118 = vmatmul.mubr.bf16.gmra.mrb[0].mxu0 %v1965
  %v2119 = vpop.f32.mrb[0].mxu0
  %v2120 = vadd.f32 0.0, %v2119
  %v2121 = vpop.f32.mrb[0].mxu0
  %v2122 = vpop.f32.mrb[0].mxu0
  %v2123 = vadd.f32 0.0, %v2122
  %v2124 = vpop.f32.mrb[0].mxu0
  %2125 = vmatprep.mubr.bf16.mxu0 0
  %2126 = vmatmul.mubr.bf16.gmra.mrb[0].mxu0 %v1968
  %v2127 = vpop.f32.mrb[0].mxu0
  %v2128 = vadd.f32 0.0, %v2127
  %v2129 = vpop.f32.mrb[0].mxu0
  %v2130 = vpop.f32.mrb[0].mxu0
  %v2131 = vadd.f32 0.0, %v2130
  %v2132 = vpop.f32.mrb[0].mxu0
  %2133 = vmatprep.mubr.bf16.mxu0 0
  %2134 = vmatmul.mubr.bf16.gmra.mrb[0].mxu0 %v1971
  %v2135 = vpop.f32.mrb[0].mxu0
  %v2136 = vadd.f32 0.0, %v2135
  %v2137 = vpop.f32.mrb[0].mxu0
  %v2138 = vpop.f32.mrb[0].mxu0
  %v2139 = vadd.f32 0.0, %v2138
  %v2140 = vpop.f32.mrb[0].mxu0
  %2141 = vmatprep.mubr.bf16.mxu0 0
  %2142 = vmatmul.mubr.bf16.gmra.mrb[0].mxu0 %v1974
  %v2143 = vpop.f32.mrb[0].mxu0
  %v2144 = vadd.f32 0.0, %v2143
  %v2145 = vpop.f32.mrb[0].mxu0
  %v2146 = vpop.f32.mrb[0].mxu0
  %v2147 = vadd.f32 0.0, %v2146
  %v2148 = vpop.f32.mrb[0].mxu0
  %2149 = vmatprep.mubr.bf16.mxu0 0
  %2150 = vmatmul.mubr.bf16.gmra.mrb[0].mxu0 %v1977
  %v2151 = vpop.f32.mrb[0].mxu0
  %v2152 = vadd.f32 0.0, %v2151
  %v2153 = vpop.f32.mrb[0].mxu0
  %v2154 = vpop.f32.mrb[0].mxu0
  %v2155 = vadd.f32 0.0, %v2154
  %v2156 = vpop.f32.mrb[0].mxu0
  %2157 = vmatprep.mubr.bf16.mxu0 0
  %2158 = vmatmul.mubr.bf16.gmra.mrb[0].mxu0 %v1980
  %v2159 = vpop.f32.mrb[0].mxu0
  %v2160 = vadd.f32 0.0, %v2159
  %v2161 = vpop.f32.mrb[0].mxu0
  %v2162 = vpop.f32.mrb[0].mxu0
  %v2163 = vadd.f32 0.0, %v2162
  %v2164 = vpop.f32.mrb[0].mxu0
  %2165 = vmatprep.mubr.bf16.mxu0 0
  %2166 = vmatmul.mubr.bf16.gmra.mrb[0].mxu0 %v1983
  %v2167 = vpop.f32.mrb[0].mxu0
  %v2168 = vadd.f32 0.0, %v2167
  %v2169 = vpop.f32.mrb[0].mxu0
  %v2170 = vpop.f32.mrb[0].mxu0
  %v2171 = vadd.f32 0.0, %v2170
  %v2172 = vpop.f32.mrb[0].mxu0
  %2173 = vmatprep.mubr.bf16.mxu0 0
  %2174 = vmatmul.mubr.bf16.gmra.mrb[0].mxu0 %v1986
  %v2175 = vpop.f32.mrb[0].mxu0
  %v2176 = vadd.f32 0.0, %v2175
  %v2177 = vpop.f32.mrb[0].mxu0
  %v2178 = vpop.f32.mrb[0].mxu0
  %v2179 = vadd.f32 0.0, %v2178
  %v2180 = vpop.f32.mrb[0].mxu0
  %2181 = vmatprep.mubr.bf16.mxu0 0
  %2182 = vmatmul.mubr.bf16.gmra.mrb[0].mxu0 %v1989
  %v2183 = vpop.f32.mrb[0].mxu0
  %v2184 = vadd.f32 0.0, %v2183
  %v2185 = vpop.f32.mrb[0].mxu0
  %v2186 = vpop.f32.mrb[0].mxu0
  %v2187 = vadd.f32 0.0, %v2186
  %v2188 = vpop.f32.mrb[0].mxu0
  %2189 = vmatprep.mubr.bf16.mxu0 0
  %2190 = vmatmul.mubr.bf16.gmra.mrb[0].mxu0 %v1992
  %v2191 = vpop.f32.mrb[0].mxu0
  %v2192 = vadd.f32 0.0, %v2191
  %v2193 = vpop.f32.mrb[0].mxu0
  %v2194 = vpop.f32.mrb[0].mxu0
  %v2195 = vadd.f32 0.0, %v2194
  %v2196 = vpop.f32.mrb[0].mxu0
  %2197 = vmatprep.mubr.bf16.mxu0 0
  %2198 = vmatmul.mubr.bf16.gmra.mrb[0].mxu0 %v1995
  %v2199 = vpop.f32.mrb[0].mxu0
  %v2200 = vadd.f32 0.0, %v2199
  %v2201 = vpop.f32.mrb[0].mxu0
  %v2202 = vpop.f32.mrb[0].mxu0
  %v2203 = vadd.f32 0.0, %v2202
  %v2204 = vpop.f32.mrb[0].mxu0
  %2205 = vmatprep.mubr.bf16.mxu0 0
  %2206 = vmatmul.mubr.bf16.gmra.mrb[0].mxu0 %v1998
  %v2207 = vpop.f32.mrb[0].mxu0
  %v2208 = vadd.f32 0.0, %v2207
  %v2209 = vpop.f32.mrb[0].mxu0
  %v2210 = vpop.f32.mrb[0].mxu0
  %v2211 = vadd.f32 0.0, %v2210
  %v2212 = vpop.f32.mrb[0].mxu0
  %2213 = vmatprep.mubr.bf16.mxu0 0
  %2214 = vmatmul.mubr.bf16.gmra.mrb[0].mxu0 %v2001
  %v2215 = vpop.f32.mrb[0].mxu0
  %v2216 = vadd.f32 0.0, %v2215
  %v2217 = vpop.f32.mrb[0].mxu0
  %v2218 = vpop.f32.mrb[0].mxu0
  %v2219 = vadd.f32 0.0, %v2218
  %v2220 = vpop.f32.mrb[0].mxu0
  %2221 = vmatprep.mubr.bf16.mxu0 0
  %2222 = vmatmul.mubr.bf16.gmra.mrb[0].mxu0 %v2004
  %v2223 = vpop.f32.mrb[0].mxu0
  %v2224 = vadd.f32 0.0, %v2223
  %v2225 = vpop.f32.mrb[0].mxu0
  %v2226 = vpop.f32.mrb[0].mxu0
  %v2227 = vadd.f32 0.0, %v2226
  %v2228 = vpop.f32.mrb[0].mxu0
  %2229 = vmatprep.mubr.bf16.mxu0 0
  %2230 = vmatmul.mubr.bf16.gmra.mrb[0].mxu0 %v2007
  %v2231 = vpop.f32.mrb[0].mxu0
  %v2232 = vadd.f32 0.0, %v2231
  %v2233 = vpop.f32.mrb[0].mxu0
  %v2234 = vpop.f32.mrb[0].mxu0
  %v2235 = vadd.f32 0.0, %v2234
  %v2236 = vpop.f32.mrb[0].mxu0
  %2237 = vmatprep.mubr.bf16.mxu0 0
  %2238 = vmatmul.mubr.bf16.gmra.mrb[0].mxu0 %v2010
  %v2239 = vpop.f32.mrb[0].mxu0
  %v2240 = vadd.f32 0.0, %v2239
  %v2241 = vpop.f32.mrb[0].mxu0
  %v2242 = vpop.f32.mrb[0].mxu0
  %v2243 = vadd.f32 0.0, %v2242
  %v2244 = vpop.f32.mrb[0].mxu0
  %2245 = vmatprep.mubr.bf16.mxu0 0
  %2246 = vmatmul.mubr.bf16.gmra.mrb[0].mxu0 %v2013
  %v2247 = vpop.f32.mrb[0].mxu0
  %v2248 = vadd.f32 0.0, %v2247
  %v2249 = vpop.f32.mrb[0].mxu0
  %v2250 = vpop.f32.mrb[0].mxu0
  %v2251 = vadd.f32 0.0, %v2250
  %v2252 = vpop.f32.mrb[0].mxu0
  %2253 = vmatprep.mubr.bf16.mxu0 0
  %2254 = vmatmul.mubr.bf16.gmra.mrb[0].mxu0 %v2016
  %v2255 = vpop.f32.mrb[0].mxu0
  %v2256 = vadd.f32 0.0, %v2255
  %v2257 = vpop.f32.mrb[0].mxu0
  %v2258 = vpop.f32.mrb[0].mxu0
  %v2259 = vadd.f32 0.0, %v2258
  %v2260 = vpop.f32.mrb[0].mxu0
  %2261 = vmatprep.mubr.bf16.mxu0 0
  %2262 = vmatmul.mubr.bf16.gmra.mrb[0].mxu0 %v2019
  %v2263 = vpop.f32.mrb[0].mxu0
  %v2264 = vadd.f32 0.0, %v2263
  %v2265 = vpop.f32.mrb[0].mxu0
  %v2266 = vpop.f32.mrb[0].mxu0
  %v2267 = vadd.f32 0.0, %v2266
  %v2268 = vpop.f32.mrb[0].mxu0
  %2269 = vmatprep.mubr.bf16.mxu0 0
  %2270 = vmatmul.mubr.bf16.gmra.mrb[0].mxu0 %v2022
  %v2271 = vpop.f32.mrb[0].mxu0
  %v2272 = vadd.f32 0.0, %v2271
  %v2273 = vpop.f32.mrb[0].mxu0
  %v2274 = vpop.f32.mrb[0].mxu0
  %v2275 = vadd.f32 0.0, %v2274
  %v2276 = vpop.f32.mrb[0].mxu0
  %2277 = vmatprep.mubr.bf16.mxu0 0
  %2278 = vmatmul.mubr.bf16.gmra.mrb[0].mxu0 %v2025
  %v2279 = vpop.f32.mrb[0].mxu0
  %v2280 = vadd.f32 0.0, %v2279
  %v2281 = vpop.f32.mrb[0].mxu0
  %v2282 = vpop.f32.mrb[0].mxu0
  %v2283 = vadd.f32 0.0, %v2282
  %v2284 = vpop.f32.mrb[0].mxu0
  %2285 = vmatprep.mubr.bf16.mxu0 0
  %2286 = vmatmul.mubr.bf16.gmra.mrb[0].mxu0 %v2028
  %v2287 = vpop.f32.mrb[0].mxu0
  %v2288 = vadd.f32 0.0, %v2287
  %v2289 = vpop.f32.mrb[0].mxu0
  %v2290 = vpop.f32.mrb[0].mxu0
  %v2291 = vadd.f32 0.0, %v2290
  %v2292 = vpop.f32.mrb[0].mxu0
  %2293 = vmatprep.mubr.bf16.mxu0 0
  %2294 = vmatmul.mubr.bf16.gmra.mrb[0].mxu0 %v2031
  %v2295 = vpop.f32.mrb[0].mxu0
  %v2296 = vadd.f32 0.0, %v2295
  %v2297 = vpop.f32.mrb[0].mxu0
  %v2298 = vpop.f32.mrb[0].mxu0
  %v2299 = vadd.f32 0.0, %v2298
  %v2300 = vpop.f32.mrb[0].mxu0
  %2301 = vmatprep.mubr.bf16.mxu0 0
  %2302 = vmatmul.mubr.bf16.gmra.mrb[0].mxu0 %v2034
  %v2303 = vpop.f32.mrb[0].mxu0
  %v2304 = vadd.f32 0.0, %v2303
  %v2305 = vpop.f32.mrb[0].mxu0
  %v2306 = vpop.f32.mrb[0].mxu0
  %v2307 = vadd.f32 0.0, %v2306
  %v2308 = vpop.f32.mrb[0].mxu0
  %2309 = vmatprep.mubr.bf16.mxu0 0
  %2310 = vmatmul.mubr.bf16.gmra.mrb[0].mxu0 %v2037
  %v2311 = vpop.f32.mrb[0].mxu0
  %v2312 = vadd.f32 0.0, %v2311
  %v2313 = vpop.f32.mrb[0].mxu0
  %v2314 = vpop.f32.mrb[0].mxu0
  %v2315 = vadd.f32 0.0, %v2314
  %v2316 = vpop.f32.mrb[0].mxu0
  %2317 = vmatprep.mubr.bf16.mxu0 0
  %2318 = vmatmul.mubr.bf16.gmra.mrb[0].mxu0 %v2040
  %v2319 = vpop.f32.mrb[0].mxu0
  %v2320 = vadd.f32 0.0, %v2319
  %v2321 = vpop.f32.mrb[0].mxu0
  %v2322 = vpop.f32.mrb[0].mxu0
  %v2323 = vadd.f32 0.0, %v2322
  %v2324 = vpop.f32.mrb[0].mxu0
  %2325 = vmatprep.mubr.bf16.mxu0 0
  %2326 = vmatmul.mubr.bf16.gmra.mrb[0].mxu0 %v2043
  %v2327 = vpop.f32.mrb[0].mxu0
  %v2328 = vadd.f32 0.0, %v2327
  %v2329 = vpop.f32.mrb[0].mxu0
  %v2330 = vpop.f32.mrb[0].mxu0
  %v2331 = vadd.f32 0.0, %v2330
  %v2332 = vpop.f32.mrb[0].mxu0
  %2333 = vdwg.mxu0
  %v2334 = vmul.f32 %v2080, %v658
  %v2335 = vmul.f32 %v2083, %v658
  %v2336 = vmul.f32 %v2088, %v658
  %v2337 = vmul.f32 %v2091, %v658
  %v2338 = vmul.f32 %v2096, %v658
  %v2339 = vmul.f32 %v2099, %v658
  %v2340 = vmul.f32 %v2104, %v658
  %v2341 = vmul.f32 %v2107, %v658
  %v2342 = vmul.f32 %v2112, %v658
  %v2343 = vmul.f32 %v2115, %v658
  %v2344 = vmul.f32 %v2120, %v658
  %v2345 = vmul.f32 %v2123, %v658
  %v2346 = vmul.f32 %v2128, %v658
  %v2347 = vmul.f32 %v2131, %v658
  %v2348 = vmul.f32 %v2136, %v658
  %v2349 = vmul.f32 %v2139, %v658
  %v2350 = vmul.f32 %v2144, %v658
  %v2351 = vmul.f32 %v2147, %v658
  %v2352 = vmul.f32 %v2152, %v658
  %v2353 = vmul.f32 %v2155, %v658
  %v2354 = vmul.f32 %v2160, %v658
  %v2355 = vmul.f32 %v2163, %v658
  %v2356 = vmul.f32 %v2168, %v658
  %v2357 = vmul.f32 %v2171, %v658
  %v2358 = vmul.f32 %v2176, %v658
  %v2359 = vmul.f32 %v2179, %v658
  %v2360 = vmul.f32 %v2184, %v658
  %v2361 = vmul.f32 %v2187, %v658
  %v2362 = vmul.f32 %v2192, %v658
  %v2363 = vmul.f32 %v2195, %v658
  %v2364 = vmul.f32 %v2200, %v658
  %v2365 = vmul.f32 %v2203, %v658
  %v2366 = vmul.f32 %v2208, %v658
  %v2367 = vmul.f32 %v2211, %v658
  %v2368 = vmul.f32 %v2216, %v658
  %v2369 = vmul.f32 %v2219, %v658
  %v2370 = vmul.f32 %v2224, %v658
  %v2371 = vmul.f32 %v2227, %v658
  %v2372 = vmul.f32 %v2232, %v658
  %v2373 = vmul.f32 %v2235, %v658
  %v2374 = vmul.f32 %v2240, %v658
  %v2375 = vmul.f32 %v2243, %v658
  %v2376 = vmul.f32 %v2248, %v658
  %v2377 = vmul.f32 %v2251, %v658
  %v2378 = vmul.f32 %v2256, %v658
  %v2379 = vmul.f32 %v2259, %v658
  %v2380 = vmul.f32 %v2264, %v658
  %v2381 = vmul.f32 %v2267, %v658
  %v2382 = vmul.f32 %v2272, %v658
  %v2383 = vmul.f32 %v2275, %v658
  %v2384 = vmul.f32 %v2280, %v658
  %v2385 = vmul.f32 %v2283, %v658
  %v2386 = vmul.f32 %v2288, %v658
  %v2387 = vmul.f32 %v2291, %v658
  %v2388 = vmul.f32 %v2296, %v658
  %v2389 = vmul.f32 %v2299, %v658
  %v2390 = vmul.f32 %v2304, %v658
  %v2391 = vmul.f32 %v2307, %v658
  %v2392 = vmul.f32 %v2312, %v658
  %v2393 = vmul.f32 %v2315, %v658
  %v2394 = vmul.f32 %v2320, %v658
  %v2395 = vmul.f32 %v2323, %v658
  %v2396 = vmul.f32 %v2328, %v658
  %v2397 = vmul.f32 %v2331, %v658
  %v2398 = vadd.f32 %v2334, %v728
  %v2399 = vadd.f32 %v2335, %v728
  %v2400 = vadd.f32 %v2336, %v728
  %v2401 = vadd.f32 %v2337, %v728
  %v2402 = vadd.f32 %v2338, %v728
  %v2403 = vadd.f32 %v2339, %v728
  %v2404 = vadd.f32 %v2340, %v728
  %v2405 = vadd.f32 %v2341, %v728
  %v2406 = vadd.f32 %v2342, %v728
  %v2407 = vadd.f32 %v2343, %v728
  %v2408 = vadd.f32 %v2344, %v728
  %v2409 = vadd.f32 %v2345, %v728
  %v2410 = vadd.f32 %v2346, %v728
  %v2411 = vadd.f32 %v2347, %v728
  %v2412 = vadd.f32 %v2348, %v728
  %v2413 = vadd.f32 %v2349, %v728
  %v2414 = vadd.f32 %v2350, %v728
  %v2415 = vadd.f32 %v2351, %v728
  %v2416 = vadd.f32 %v2352, %v728
  %v2417 = vadd.f32 %v2353, %v728
  %v2418 = vadd.f32 %v2354, %v728
  %v2419 = vadd.f32 %v2355, %v728
  %v2420 = vadd.f32 %v2356, %v728
  %v2421 = vadd.f32 %v2357, %v728
  %v2422 = vadd.f32 %v2358, %v728
  %v2423 = vadd.f32 %v2359, %v728
  %v2424 = vadd.f32 %v2360, %v728
  %v2425 = vadd.f32 %v2361, %v728
  %v2426 = vadd.f32 %v2362, %v728
  %v2427 = vadd.f32 %v2363, %v728
  %v2428 = vadd.f32 %v2364, %v728
  %v2429 = vadd.f32 %v2365, %v728
  %v2430 = vadd.f32 %v2366, %v728
  %v2431 = vadd.f32 %v2367, %v728
  %v2432 = vadd.f32 %v2368, %v728
  %v2433 = vadd.f32 %v2369, %v728
  %v2434 = vadd.f32 %v2370, %v728
  %v2435 = vadd.f32 %v2371, %v728
  %v2436 = vadd.f32 %v2372, %v728
  %v2437 = vadd.f32 %v2373, %v728
  %v2438 = vadd.f32 %v2374, %v728
  %v2439 = vadd.f32 %v2375, %v728
  %v2440 = vadd.f32 %v2376, %v728
  %v2441 = vadd.f32 %v2377, %v728
  %v2442 = vadd.f32 %v2378, %v728
  %v2443 = vadd.f32 %v2379, %v728
  %v2444 = vadd.f32 %v2380, %v728
  %v2445 = vadd.f32 %v2381, %v728
  %v2446 = vadd.f32 %v2382, %v728
  %v2447 = vadd.f32 %v2383, %v728
  %v2448 = vadd.f32 %v2384, %v728
  %v2449 = vadd.f32 %v2385, %v728
  %v2450 = vadd.f32 %v2386, %v728
  %v2451 = vadd.f32 %v2387, %v728
  %v2452 = vadd.f32 %v2388, %v728
  %v2453 = vadd.f32 %v2389, %v728
  %v2454 = vadd.f32 %v2390, %v728
  %v2455 = vadd.f32 %v2391, %v728
  %v2456 = vadd.f32 %v2392, %v728
  %v2457 = vadd.f32 %v2393, %v728
  %v2458 = vadd.f32 %v2394, %v728
  %v2459 = vadd.f32 %v2395, %v728
  %v2460 = vadd.f32 %v2396, %v728
  %v2461 = vadd.f32 %v2397, %v728
  %v2462 = vmax.f32 %v2398, 0.0
  %v2463 = vmax.f32 %v2399, 0.0
  %v2464 = vmax.f32 %v2400, 0.0
  %v2465 = vmax.f32 %v2401, 0.0
  %v2466 = vmax.f32 %v2402, 0.0
  %v2467 = vmax.f32 %v2403, 0.0
  %v2468 = vmax.f32 %v2404, 0.0
  %v2469 = vmax.f32 %v2405, 0.0
  %v2470 = vmax.f32 %v2406, 0.0
  %v2471 = vmax.f32 %v2407, 0.0
  %v2472 = vmax.f32 %v2408, 0.0
  %v2473 = vmax.f32 %v2409, 0.0
  %v2474 = vmax.f32 %v2410, 0.0
  %v2475 = vmax.f32 %v2411, 0.0
  %v2476 = vmax.f32 %v2412, 0.0
  %v2477 = vmax.f32 %v2413, 0.0
  %v2478 = vmax.f32 %v2414, 0.0
  %v2479 = vmax.f32 %v2415, 0.0
  %v2480 = vmax.f32 %v2416, 0.0
  %v2481 = vmax.f32 %v2417, 0.0
  %v2482 = vmax.f32 %v2418, 0.0
  %v2483 = vmax.f32 %v2419, 0.0
  %v2484 = vmax.f32 %v2420, 0.0
  %v2485 = vmax.f32 %v2421, 0.0
  %v2486 = vmax.f32 %v2422, 0.0
  %v2487 = vmax.f32 %v2423, 0.0
  %v2488 = vmax.f32 %v2424, 0.0
  %v2489 = vmax.f32 %v2425, 0.0
  %v2490 = vmax.f32 %v2426, 0.0
  %v2491 = vmax.f32 %v2427, 0.0
  %v2492 = vmax.f32 %v2428, 0.0
  %v2493 = vmax.f32 %v2429, 0.0
  %v2494 = vmax.f32 %v2430, 0.0
  %v2495 = vmax.f32 %v2431, 0.0
  %v2496 = vmax.f32 %v2432, 0.0
  %v2497 = vmax.f32 %v2433, 0.0
  %v2498 = vmax.f32 %v2434, 0.0
  %v2499 = vmax.f32 %v2435, 0.0
  %v2500 = vmax.f32 %v2436, 0.0
  %v2501 = vmax.f32 %v2437, 0.0
  %v2502 = vmax.f32 %v2438, 0.0
  %v2503 = vmax.f32 %v2439, 0.0
  %v2504 = vmax.f32 %v2440, 0.0
  %v2505 = vmax.f32 %v2441, 0.0
  %v2506 = vmax.f32 %v2442, 0.0
  %v2507 = vmax.f32 %v2443, 0.0
  %v2508 = vmax.f32 %v2444, 0.0
  %v2509 = vmax.f32 %v2445, 0.0
  %v2510 = vmax.f32 %v2446, 0.0
  %v2511 = vmax.f32 %v2447, 0.0
  %v2512 = vmax.f32 %v2448, 0.0
  %v2513 = vmax.f32 %v2449, 0.0
  %v2514 = vmax.f32 %v2450, 0.0
  %v2515 = vmax.f32 %v2451, 0.0
  %v2516 = vmax.f32 %v2452, 0.0
  %v2517 = vmax.f32 %v2453, 0.0
  %v2518 = vmax.f32 %v2454, 0.0
  %v2519 = vmax.f32 %v2455, 0.0
  %v2520 = vmax.f32 %v2456, 0.0
  %v2521 = vmax.f32 %v2457, 0.0
  %v2522 = vmax.f32 %v2458, 0.0
  %v2523 = vmax.f32 %v2459, 0.0
  %v2524 = vmax.f32 %v2460, 0.0
  %v2525 = vmax.f32 %v2461, 0.0
  %v2526 = vmax.f32 %v1660, %v2462
  %v2527 = vmax.f32 %v1661, %v2463
  %v2528 = vmax.f32 %v1662, %v2464
  %v2529 = vmax.f32 %v1663, %v2465
  %v2530 = vmax.f32 %v1664, %v2466
  %v2531 = vmax.f32 %v1665, %v2467
  %v2532 = vmax.f32 %v1666, %v2468
  %v2533 = vmax.f32 %v1667, %v2469
  %v2534 = vmax.f32 %v1668, %v2470
  %v2535 = vmax.f32 %v1669, %v2471
  %v2536 = vmax.f32 %v1670, %v2472
  %v2537 = vmax.f32 %v1671, %v2473
  %v2538 = vmax.f32 %v1672, %v2474
  %v2539 = vmax.f32 %v1673, %v2475
  %v2540 = vmax.f32 %v1674, %v2476
  %v2541 = vmax.f32 %v1675, %v2477
  %v2542 = vmax.f32 %v1676, %v2478
  %v2543 = vmax.f32 %v1677, %v2479
  %v2544 = vmax.f32 %v1678, %v2480
  %v2545 = vmax.f32 %v1679, %v2481
  %v2546 = vmax.f32 %v1680, %v2482
  %v2547 = vmax.f32 %v1681, %v2483
  %v2548 = vmax.f32 %v1682, %v2484
  %v2549 = vmax.f32 %v1683, %v2485
  %v2550 = vmax.f32 %v1684, %v2486
  %v2551 = vmax.f32 %v1685, %v2487
  %v2552 = vmax.f32 %v1686, %v2488
  %v2553 = vmax.f32 %v1687, %v2489
  %v2554 = vmax.f32 %v1688, %v2490
  %v2555 = vmax.f32 %v1689, %v2491
  %v2556 = vmax.f32 %v1690, %v2492
  %v2557 = vmax.f32 %v1691, %v2493
  %v2558 = vmax.f32 %v1692, %v2494
  %v2559 = vmax.f32 %v1693, %v2495
  %v2560 = vmax.f32 %v1694, %v2496
  %v2561 = vmax.f32 %v1695, %v2497
  %v2562 = vmax.f32 %v1696, %v2498
  %v2563 = vmax.f32 %v1697, %v2499
  %v2564 = vmax.f32 %v1698, %v2500
  %v2565 = vmax.f32 %v1699, %v2501
  %v2566 = vmax.f32 %v1700, %v2502
  %v2567 = vmax.f32 %v1701, %v2503
  %v2568 = vmax.f32 %v1702, %v2504
  %v2569 = vmax.f32 %v1703, %v2505
  %v2570 = vmax.f32 %v1704, %v2506
  %v2571 = vmax.f32 %v1705, %v2507
  %v2572 = vmax.f32 %v1706, %v2508
  %v2573 = vmax.f32 %v1707, %v2509
  %v2574 = vmax.f32 %v1708, %v2510
  %v2575 = vmax.f32 %v1709, %v2511
  %v2576 = vmax.f32 %v1710, %v2512
  %v2577 = vmax.f32 %v1711, %v2513
  %v2578 = vmax.f32 %v1712, %v2514
  %v2579 = vmax.f32 %v1713, %v2515
  %v2580 = vmax.f32 %v1714, %v2516
  %v2581 = vmax.f32 %v1715, %v2517
  %v2582 = vmax.f32 %v1716, %v2518
  %v2583 = vmax.f32 %v1717, %v2519
  %v2584 = vmax.f32 %v1718, %v2520
  %v2585 = vmax.f32 %v1719, %v2521
  %v2586 = vmax.f32 %v1720, %v2522
  %v2587 = vmax.f32 %v1721, %v2523
  %v2588 = vmax.f32 %v1722, %v2524
  %v2589 = vmax.f32 %v1723, %v2525
  %s2590 = scalar_lea.vmem %s0, 768
  %v2591 = vld [vmem:[%s2590] sm:$0xf]
  %v2592 = vld [vmem:[%s2590 + $0x4] sm:$0xf]
  %v2593 = vld [vmem:[%s2590 + $0x8] sm:$0xf]
  %v2594 = vld [vmem:[%s2590 + $0xc] sm:$0xf]
  %v2595 = vld [vmem:[%s2590 + $0x10] sm:$0xf]
  %v2596 = vld [vmem:[%s2590 + $0x14] sm:$0xf]
  %v2597 = vld [vmem:[%s2590 + $0x18] sm:$0xf]
  %v2598 = vld [vmem:[%s2590 + $0x1c] sm:$0xf]
  %v2599 = vld [vmem:[%s2590 + $0x20] sm:$0xf]
  %v2600 = vld [vmem:[%s2590 + $0x24] sm:$0xf]
  %v2601 = vld [vmem:[%s2590 + $0x28] sm:$0xf]
  %v2602 = vld [vmem:[%s2590 + $0x2c] sm:$0xf]
  %v2603 = vld [vmem:[%s2590 + $0x30] sm:$0xf]
  %v2604 = vld [vmem:[%s2590 + $0x34] sm:$0xf]
  %v2605 = vld [vmem:[%s2590 + $0x38] sm:$0xf]
  %v2606 = vld [vmem:[%s2590 + $0x3c] sm:$0xf]
  %v2607 = vld [vmem:[%s2590 + $0x40] sm:$0xf]
  %v2608 = vld [vmem:[%s2590 + $0x44] sm:$0xf]
  %v2609 = vld [vmem:[%s2590 + $0x48] sm:$0xf]
  %v2610 = vld [vmem:[%s2590 + $0x4c] sm:$0xf]
  %v2611 = vld [vmem:[%s2590 + $0x50] sm:$0xf]
  %v2612 = vld [vmem:[%s2590 + $0x54] sm:$0xf]
  %v2613 = vld [vmem:[%s2590 + $0x58] sm:$0xf]
  %v2614 = vld [vmem:[%s2590 + $0x5c] sm:$0xf]
  %v2615 = vld [vmem:[%s2590 + $0x60] sm:$0xf]
  %v2616 = vld [vmem:[%s2590 + $0x64] sm:$0xf]
  %v2617 = vld [vmem:[%s2590 + $0x68] sm:$0xf]
  %v2618 = vld [vmem:[%s2590 + $0x6c] sm:$0xf]
  %v2619 = vld [vmem:[%s2590 + $0x70] sm:$0xf]
  %v2620 = vld [vmem:[%s2590 + $0x74] sm:$0xf]
  %v2621 = vld [vmem:[%s2590 + $0x78] sm:$0xf]
  %v2622 = vld [vmem:[%s2590 + $0x7c] sm:$0xf]
  %v2623 = vld [vmem:[%s2590 + $0x80] sm:$0xf]
  %v2624 = vld [vmem:[%s2590 + $0x84] sm:$0xf]
  %v2625 = vld [vmem:[%s2590 + $0x88] sm:$0xf]
  %v2626 = vld [vmem:[%s2590 + $0x8c] sm:$0xf]
  %v2627 = vld [vmem:[%s2590 + $0x90] sm:$0xf]
  %v2628 = vld [vmem:[%s2590 + $0x94] sm:$0xf]
  %v2629 = vld [vmem:[%s2590 + $0x98] sm:$0xf]
  %v2630 = vld [vmem:[%s2590 + $0x9c] sm:$0xf]
  %v2631 = vld [vmem:[%s2590 + $0xa0] sm:$0xf]
  %v2632 = vld [vmem:[%s2590 + $0xa4] sm:$0xf]
  %v2633 = vld [vmem:[%s2590 + $0xa8] sm:$0xf]
  %v2634 = vld [vmem:[%s2590 + $0xac] sm:$0xf]
  %v2635 = vld [vmem:[%s2590 + $0xb0] sm:$0xf]
  %v2636 = vld [vmem:[%s2590 + $0xb4] sm:$0xf]
  %v2637 = vld [vmem:[%s2590 + $0xb8] sm:$0xf]
  %v2638 = vld [vmem:[%s2590 + $0xbc] sm:$0xf]
  %v2639 = vld [vmem:[%s2590 + $0xc0] sm:$0xf]
  %v2640 = vld [vmem:[%s2590 + $0xc4] sm:$0xf]
  %v2641 = vld [vmem:[%s2590 + $0xc8] sm:$0xf]
  %v2642 = vld [vmem:[%s2590 + $0xcc] sm:$0xf]
  %v2643 = vld [vmem:[%s2590 + $0xd0] sm:$0xf]
  %v2644 = vld [vmem:[%s2590 + $0xd4] sm:$0xf]
  %v2645 = vld [vmem:[%s2590 + $0xd8] sm:$0xf]
  %v2646 = vld [vmem:[%s2590 + $0xdc] sm:$0xf]
  %v2647 = vld [vmem:[%s2590 + $0xe0] sm:$0xf]
  %v2648 = vld [vmem:[%s2590 + $0xe4] sm:$0xf]
  %v2649 = vld [vmem:[%s2590 + $0xe8] sm:$0xf]
  %v2650 = vld [vmem:[%s2590 + $0xec] sm:$0xf]
  %v2651 = vld [vmem:[%s2590 + $0xf0] sm:$0xf]
  %v2652 = vld [vmem:[%s2590 + $0xf4] sm:$0xf]
  %v2653 = vld [vmem:[%s2590 + $0xf8] sm:$0xf]
  %v2654 = vld [vmem:[%s2590 + $0xfc] sm:$0xf]
  %v2719 = vunpack.c.l.b16 %v2591
  %v2720 = vunpack.c.l.b16 %v2592
  %v2721 = vunpack.c.l.b16 %v2593
  %v2722 = vunpack.c.l.b16 %v2594
  %v2723 = vunpack.c.l.b16 %v2595
  %v2724 = vunpack.c.l.b16 %v2596
  %v2725 = vunpack.c.l.b16 %v2597
  %v2726 = vunpack.c.l.b16 %v2598
  %v2727 = vunpack.c.l.b16 %v2599
  %v2728 = vunpack.c.l.b16 %v2600
  %v2729 = vunpack.c.l.b16 %v2601
  %v2730 = vunpack.c.l.b16 %v2602
  %v2731 = vunpack.c.l.b16 %v2603
  %v2732 = vunpack.c.l.b16 %v2604
  %v2733 = vunpack.c.l.b16 %v2605
  %v2734 = vunpack.c.l.b16 %v2606
  %v2735 = vunpack.c.l.b16 %v2607
  %v2736 = vunpack.c.l.b16 %v2608
  %v2737 = vunpack.c.l.b16 %v2609
  %v2738 = vunpack.c.l.b16 %v2610
  %v2739 = vunpack.c.l.b16 %v2611
  %v2740 = vunpack.c.l.b16 %v2612
  %v2741 = vunpack.c.l.b16 %v2613
  %v2742 = vunpack.c.l.b16 %v2614
  %v2743 = vunpack.c.l.b16 %v2615
  %v2744 = vunpack.c.l.b16 %v2616
  %v2745 = vunpack.c.l.b16 %v2617
  %v2746 = vunpack.c.l.b16 %v2618
  %v2747 = vunpack.c.l.b16 %v2619
  %v2748 = vunpack.c.l.b16 %v2620
  %v2749 = vunpack.c.l.b16 %v2621
  %v2750 = vunpack.c.l.b16 %v2622
  %v2751 = vunpack.c.l.b16 %v2623
  %v2752 = vunpack.c.l.b16 %v2624
  %v2753 = vunpack.c.l.b16 %v2625
  %v2754 = vunpack.c.l.b16 %v2626
  %v2755 = vunpack.c.l.b16 %v2627
  %v2756 = vunpack.c.l.b16 %v2628
  %v2757 = vunpack.c.l.b16 %v2629
  %v2758 = vunpack.c.l.b16 %v2630
  %v2759 = vunpack.c.l.b16 %v2631
  %v2760 = vunpack.c.l.b16 %v2632
  %v2761 = vunpack.c.l.b16 %v2633
  %v2762 = vunpack.c.l.b16 %v2634
  %v2763 = vunpack.c.l.b16 %v2635
  %v2764 = vunpack.c.l.b16 %v2636
  %v2765 = vunpack.c.l.b16 %v2637
  %v2766 = vunpack.c.l.b16 %v2638
  %v2767 = vunpack.c.l.b16 %v2639
  %v2768 = vunpack.c.l.b16 %v2640
  %v2769 = vunpack.c.l.b16 %v2641
  %v2770 = vunpack.c.l.b16 %v2642
  %v2771 = vunpack.c.l.b16 %v2643
  %v2772 = vunpack.c.l.b16 %v2644
  %v2773 = vunpack.c.l.b16 %v2645
  %v2774 = vunpack.c.l.b16 %v2646
  %v2775 = vunpack.c.l.b16 %v2647
  %v2776 = vunpack.c.l.b16 %v2648
  %v2777 = vunpack.c.l.b16 %v2649
  %v2778 = vunpack.c.l.b16 %v2650
  %v2779 = vunpack.c.l.b16 %v2651
  %v2780 = vunpack.c.l.b16 %v2652
  %v2781 = vunpack.c.l.b16 %v2653
  %v2782 = vunpack.c.l.b16 %v2654
  %v2783 = vpack.c.b16 %v2720, %v2719
  %v2784 = vpack.c.b16 %v2722, %v2721
  %v2785 = vpack.c.b16 %v2724, %v2723
  %v2786 = vpack.c.b16 %v2726, %v2725
  %v2787 = vpack.c.b16 %v2728, %v2727
  %v2788 = vpack.c.b16 %v2730, %v2729
  %v2789 = vpack.c.b16 %v2732, %v2731
  %v2790 = vpack.c.b16 %v2734, %v2733
  %v2791 = vpack.c.b16 %v2736, %v2735
  %v2792 = vpack.c.b16 %v2738, %v2737
  %v2793 = vpack.c.b16 %v2740, %v2739
  %v2794 = vpack.c.b16 %v2742, %v2741
  %v2795 = vpack.c.b16 %v2744, %v2743
  %v2796 = vpack.c.b16 %v2746, %v2745
  %v2797 = vpack.c.b16 %v2748, %v2747
  %v2798 = vpack.c.b16 %v2750, %v2749
  %v2799 = vpack.c.b16 %v2752, %v2751
  %v2800 = vpack.c.b16 %v2754, %v2753
  %v2801 = vpack.c.b16 %v2756, %v2755
  %v2802 = vpack.c.b16 %v2758, %v2757
  %v2803 = vpack.c.b16 %v2760, %v2759
  %v2804 = vpack.c.b16 %v2762, %v2761
  %v2805 = vpack.c.b16 %v2764, %v2763
  %v2806 = vpack.c.b16 %v2766, %v2765
  %v2807 = vpack.c.b16 %v2768, %v2767
  %v2808 = vpack.c.b16 %v2770, %v2769
  %v2809 = vpack.c.b16 %v2772, %v2771
  %v2810 = vpack.c.b16 %v2774, %v2773
  %v2811 = vpack.c.b16 %v2776, %v2775
  %v2812 = vpack.c.b16 %v2778, %v2777
  %v2813 = vpack.c.b16 %v2780, %v2779
  %v2814 = vpack.c.b16 %v2782, %v2781
  %v2816 = vsel %vm264, %v2783, 0
  %v2819 = vsel %vm264, %v2784, 0
  %v2822 = vsel %vm264, %v2785, 0
  %v2825 = vsel %vm264, %v2786, 0
  %v2828 = vsel %vm264, %v2787, 0
  %v2831 = vsel %vm264, %v2788, 0
  %v2834 = vsel %vm264, %v2789, 0
  %v2837 = vsel %vm264, %v2790, 0
  %v2840 = vsel %vm264, %v2791, 0
  %v2843 = vsel %vm264, %v2792, 0
  %v2846 = vsel %vm264, %v2793, 0
  %v2849 = vsel %vm264, %v2794, 0
  %v2852 = vsel %vm264, %v2795, 0
  %v2855 = vsel %vm264, %v2796, 0
  %v2858 = vsel %vm264, %v2797, 0
  %v2861 = vsel %vm264, %v2798, 0
  %v2864 = vsel %vm264, %v2799, 0
  %v2867 = vsel %vm264, %v2800, 0
  %v2870 = vsel %vm264, %v2801, 0
  %v2873 = vsel %vm264, %v2802, 0
  %v2876 = vsel %vm264, %v2803, 0
  %v2879 = vsel %vm264, %v2804, 0
  %v2882 = vsel %vm264, %v2805, 0
  %v2885 = vsel %vm264, %v2806, 0
  %v2888 = vsel %vm264, %v2807, 0
  %v2891 = vsel %vm264, %v2808, 0
  %v2894 = vsel %vm264, %v2809, 0
  %v2897 = vsel %vm264, %v2810, 0
  %v2900 = vsel %vm264, %v2811, 0
  %v2903 = vsel %vm264, %v2812, 0
  %v2906 = vsel %vm264, %v2813, 0
  %v2909 = vsel %vm264, %v2814, 0
  %2911 = vmatprep.subr.bf16.mxu0 0
  %2912 = vmatpush1.bf16.msra.mxu0 %v259
  %2913 = vmatprep.subr.bf16.mxu0 0
  %2914 = vmatpush1.bf16.msra.mxu0 %v260
  %2915 = vmatprep.subr.bf16.mxu0 0
  %2916 = vmatpush1.bf16.msra.mxu0 %v363
  %2917 = vmatprep.subr.bf16.mxu0 0
  %2918 = vmatpush1.bf16.msra.mxu0 0
  %2919 = vmatprep.subr.bf16.mxu0 0
  %2920 = vmatpush1.bf16.msra.mxu0 0
  %2921 = vmatprep.subr.bf16.mxu0 0
  %2922 = vmatpush1.bf16.msra.mxu0 0
  %2923 = vmatprep.subr.bf16.mxu0 0
  %2924 = vmatpush1.bf16.msra.mxu0 0
  %2925 = vmatprep.subr.bf16.mxu0 0
  %2926 = vmatpush1.bf16.msra.mxu0 0
  %2927 = vmatprep.subr.bf16.mxu0 0
  %2928 = vmatpush1.bf16.msra.mxu0 0
  %2929 = vmatprep.subr.bf16.mxu0 0
  %2930 = vmatpush1.bf16.msra.mxu0 0
  %2931 = vmatprep.subr.bf16.mxu0 0
  %2932 = vmatpush1.bf16.msra.mxu0 0
  %2933 = vmatprep.subr.bf16.mxu0 0
  %2934 = vmatpush1.bf16.msra.mxu0 0
  %2935 = vmatprep.subr.bf16.mxu0 0
  %2936 = vmatpush1.bf16.msra.mxu0 0
  %2937 = vmatprep.subr.bf16.mxu0 0
  %2938 = vmatpush1.bf16.msra.mxu0 0
  %2939 = vmatprep.subr.bf16.mxu0 0
  %2940 = vmatpush1.bf16.msra.mxu0 0
  %2941 = vmatprep.subr.bf16.mxu0 0
  %2942 = vmatpush1.bf16.msra.mxu0 0
  %2943 = vmatprep.mubr.bf16.mxu0 0
  %2944 = vmatmul.mubr.bf16.gmra.mrb[0].mxu0 %v2816
  %v2945 = vpop.f32.mrb[0].mxu0
  %v2946 = vadd.f32 0.0, %v2945
  %v2947 = vpop.f32.mrb[0].mxu0
  %v2948 = vpop.f32.mrb[0].mxu0
  %v2949 = vadd.f32 0.0, %v2948
  %v2950 = vpop.f32.mrb[0].mxu0
  %2951 = vmatprep.mubr.bf16.mxu0 0
  %2952 = vmatmul.mubr.bf16.gmra.mrb[0].mxu0 %v2819
  %v2953 = vpop.f32.mrb[0].mxu0
  %v2954 = vadd.f32 0.0, %v2953
  %v2955 = vpop.f32.mrb[0].mxu0
  %v2956 = vpop.f32.mrb[0].mxu0
  %v2957 = vadd.f32 0.0, %v2956
  %v2958 = vpop.f32.mrb[0].mxu0
  %2959 = vmatprep.mubr.bf16.mxu0 0
  %2960 = vmatmul.mubr.bf16.gmra.mrb[0].mxu0 %v2822
  %v2961 = vpop.f32.mrb[0].mxu0
  %v2962 = vadd.f32 0.0, %v2961
  %v2963 = vpop.f32.mrb[0].mxu0
  %v2964 = vpop.f32.mrb[0].mxu0
  %v2965 = vadd.f32 0.0, %v2964
  %v2966 = vpop.f32.mrb[0].mxu0
  %2967 = vmatprep.mubr.bf16.mxu0 0
  %2968 = vmatmul.mubr.bf16.gmra.mrb[0].mxu0 %v2825
  %v2969 = vpop.f32.mrb[0].mxu0
  %v2970 = vadd.f32 0.0, %v2969
  %v2971 = vpop.f32.mrb[0].mxu0
  %v2972 = vpop.f32.mrb[0].mxu0
  %v2973 = vadd.f32 0.0, %v2972
  %v2974 = vpop.f32.mrb[0].mxu0
  %2975 = vmatprep.mubr.bf16.mxu0 0
  %2976 = vmatmul.mubr.bf16.gmra.mrb[0].mxu0 %v2828
  %v2977 = vpop.f32.mrb[0].mxu0
  %v2978 = vadd.f32 0.0, %v2977
  %v2979 = vpop.f32.mrb[0].mxu0
  %v2980 = vpop.f32.mrb[0].mxu0
  %v2981 = vadd.f32 0.0, %v2980
  %v2982 = vpop.f32.mrb[0].mxu0
  %2983 = vmatprep.mubr.bf16.mxu0 0
  %2984 = vmatmul.mubr.bf16.gmra.mrb[0].mxu0 %v2831
  %v2985 = vpop.f32.mrb[0].mxu0
  %v2986 = vadd.f32 0.0, %v2985
  %v2987 = vpop.f32.mrb[0].mxu0
  %v2988 = vpop.f32.mrb[0].mxu0
  %v2989 = vadd.f32 0.0, %v2988
  %v2990 = vpop.f32.mrb[0].mxu0
  %2991 = vmatprep.mubr.bf16.mxu0 0
  %2992 = vmatmul.mubr.bf16.gmra.mrb[0].mxu0 %v2834
  %v2993 = vpop.f32.mrb[0].mxu0
  %v2994 = vadd.f32 0.0, %v2993
  %v2995 = vpop.f32.mrb[0].mxu0
  %v2996 = vpop.f32.mrb[0].mxu0
  %v2997 = vadd.f32 0.0, %v2996
  %v2998 = vpop.f32.mrb[0].mxu0
  %2999 = vmatprep.mubr.bf16.mxu0 0
  %3000 = vmatmul.mubr.bf16.gmra.mrb[0].mxu0 %v2837
  %v3001 = vpop.f32.mrb[0].mxu0
  %v3002 = vadd.f32 0.0, %v3001
  %v3003 = vpop.f32.mrb[0].mxu0
  %v3004 = vpop.f32.mrb[0].mxu0
  %v3005 = vadd.f32 0.0, %v3004
  %v3006 = vpop.f32.mrb[0].mxu0
  %3007 = vmatprep.mubr.bf16.mxu0 0
  %3008 = vmatmul.mubr.bf16.gmra.mrb[0].mxu0 %v2840
  %v3009 = vpop.f32.mrb[0].mxu0
  %v3010 = vadd.f32 0.0, %v3009
  %v3011 = vpop.f32.mrb[0].mxu0
  %v3012 = vpop.f32.mrb[0].mxu0
  %v3013 = vadd.f32 0.0, %v3012
  %v3014 = vpop.f32.mrb[0].mxu0
  %3015 = vmatprep.mubr.bf16.mxu0 0
  %3016 = vmatmul.mubr.bf16.gmra.mrb[0].mxu0 %v2843
  %v3017 = vpop.f32.mrb[0].mxu0
  %v3018 = vadd.f32 0.0, %v3017
  %v3019 = vpop.f32.mrb[0].mxu0
  %v3020 = vpop.f32.mrb[0].mxu0
  %v3021 = vadd.f32 0.0, %v3020
  %v3022 = vpop.f32.mrb[0].mxu0
  %3023 = vmatprep.mubr.bf16.mxu0 0
  %3024 = vmatmul.mubr.bf16.gmra.mrb[0].mxu0 %v2846
  %v3025 = vpop.f32.mrb[0].mxu0
  %v3026 = vadd.f32 0.0, %v3025
  %v3027 = vpop.f32.mrb[0].mxu0
  %v3028 = vpop.f32.mrb[0].mxu0
  %v3029 = vadd.f32 0.0, %v3028
  %v3030 = vpop.f32.mrb[0].mxu0
  %3031 = vmatprep.mubr.bf16.mxu0 0
  %3032 = vmatmul.mubr.bf16.gmra.mrb[0].mxu0 %v2849
  %v3033 = vpop.f32.mrb[0].mxu0
  %v3034 = vadd.f32 0.0, %v3033
  %v3035 = vpop.f32.mrb[0].mxu0
  %v3036 = vpop.f32.mrb[0].mxu0
  %v3037 = vadd.f32 0.0, %v3036
  %v3038 = vpop.f32.mrb[0].mxu0
  %3039 = vmatprep.mubr.bf16.mxu0 0
  %3040 = vmatmul.mubr.bf16.gmra.mrb[0].mxu0 %v2852
  %v3041 = vpop.f32.mrb[0].mxu0
  %v3042 = vadd.f32 0.0, %v3041
  %v3043 = vpop.f32.mrb[0].mxu0
  %v3044 = vpop.f32.mrb[0].mxu0
  %v3045 = vadd.f32 0.0, %v3044
  %v3046 = vpop.f32.mrb[0].mxu0
  %3047 = vmatprep.mubr.bf16.mxu0 0
  %3048 = vmatmul.mubr.bf16.gmra.mrb[0].mxu0 %v2855
  %v3049 = vpop.f32.mrb[0].mxu0
  %v3050 = vadd.f32 0.0, %v3049
  %v3051 = vpop.f32.mrb[0].mxu0
  %v3052 = vpop.f32.mrb[0].mxu0
  %v3053 = vadd.f32 0.0, %v3052
  %v3054 = vpop.f32.mrb[0].mxu0
  %3055 = vmatprep.mubr.bf16.mxu0 0
  %3056 = vmatmul.mubr.bf16.gmra.mrb[0].mxu0 %v2858
  %v3057 = vpop.f32.mrb[0].mxu0
  %v3058 = vadd.f32 0.0, %v3057
  %v3059 = vpop.f32.mrb[0].mxu0
  %v3060 = vpop.f32.mrb[0].mxu0
  %v3061 = vadd.f32 0.0, %v3060
  %v3062 = vpop.f32.mrb[0].mxu0
  %3063 = vmatprep.mubr.bf16.mxu0 0
  %3064 = vmatmul.mubr.bf16.gmra.mrb[0].mxu0 %v2861
  %v3065 = vpop.f32.mrb[0].mxu0
  %v3066 = vadd.f32 0.0, %v3065
  %v3067 = vpop.f32.mrb[0].mxu0
  %v3068 = vpop.f32.mrb[0].mxu0
  %v3069 = vadd.f32 0.0, %v3068
  %v3070 = vpop.f32.mrb[0].mxu0
  %3071 = vmatprep.mubr.bf16.mxu0 0
  %3072 = vmatmul.mubr.bf16.gmra.mrb[0].mxu0 %v2864
  %v3073 = vpop.f32.mrb[0].mxu0
  %v3074 = vadd.f32 0.0, %v3073
  %v3075 = vpop.f32.mrb[0].mxu0
  %v3076 = vpop.f32.mrb[0].mxu0
  %v3077 = vadd.f32 0.0, %v3076
  %v3078 = vpop.f32.mrb[0].mxu0
  %3079 = vmatprep.mubr.bf16.mxu0 0
  %3080 = vmatmul.mubr.bf16.gmra.mrb[0].mxu0 %v2867
  %v3081 = vpop.f32.mrb[0].mxu0
  %v3082 = vadd.f32 0.0, %v3081
  %v3083 = vpop.f32.mrb[0].mxu0
  %v3084 = vpop.f32.mrb[0].mxu0
  %v3085 = vadd.f32 0.0, %v3084
  %v3086 = vpop.f32.mrb[0].mxu0
  %3087 = vmatprep.mubr.bf16.mxu0 0
  %3088 = vmatmul.mubr.bf16.gmra.mrb[0].mxu0 %v2870
  %v3089 = vpop.f32.mrb[0].mxu0
  %v3090 = vadd.f32 0.0, %v3089
  %v3091 = vpop.f32.mrb[0].mxu0
  %v3092 = vpop.f32.mrb[0].mxu0
  %v3093 = vadd.f32 0.0, %v3092
  %v3094 = vpop.f32.mrb[0].mxu0
  %3095 = vmatprep.mubr.bf16.mxu0 0
  %3096 = vmatmul.mubr.bf16.gmra.mrb[0].mxu0 %v2873
  %v3097 = vpop.f32.mrb[0].mxu0
  %v3098 = vadd.f32 0.0, %v3097
  %v3099 = vpop.f32.mrb[0].mxu0
  %v3100 = vpop.f32.mrb[0].mxu0
  %v3101 = vadd.f32 0.0, %v3100
  %v3102 = vpop.f32.mrb[0].mxu0
  %3103 = vmatprep.mubr.bf16.mxu0 0
  %3104 = vmatmul.mubr.bf16.gmra.mrb[0].mxu0 %v2876
  %v3105 = vpop.f32.mrb[0].mxu0
  %v3106 = vadd.f32 0.0, %v3105
  %v3107 = vpop.f32.mrb[0].mxu0
  %v3108 = vpop.f32.mrb[0].mxu0
  %v3109 = vadd.f32 0.0, %v3108
  %v3110 = vpop.f32.mrb[0].mxu0
  %3111 = vmatprep.mubr.bf16.mxu0 0
  %3112 = vmatmul.mubr.bf16.gmra.mrb[0].mxu0 %v2879
  %v3113 = vpop.f32.mrb[0].mxu0
  %v3114 = vadd.f32 0.0, %v3113
  %v3115 = vpop.f32.mrb[0].mxu0
  %v3116 = vpop.f32.mrb[0].mxu0
  %v3117 = vadd.f32 0.0, %v3116
  %v3118 = vpop.f32.mrb[0].mxu0
  %3119 = vmatprep.mubr.bf16.mxu0 0
  %3120 = vmatmul.mubr.bf16.gmra.mrb[0].mxu0 %v2882
  %v3121 = vpop.f32.mrb[0].mxu0
  %v3122 = vadd.f32 0.0, %v3121
  %v3123 = vpop.f32.mrb[0].mxu0
  %v3124 = vpop.f32.mrb[0].mxu0
  %v3125 = vadd.f32 0.0, %v3124
  %v3126 = vpop.f32.mrb[0].mxu0
  %3127 = vmatprep.mubr.bf16.mxu0 0
  %3128 = vmatmul.mubr.bf16.gmra.mrb[0].mxu0 %v2885
  %v3129 = vpop.f32.mrb[0].mxu0
  %v3130 = vadd.f32 0.0, %v3129
  %v3131 = vpop.f32.mrb[0].mxu0
  %v3132 = vpop.f32.mrb[0].mxu0
  %v3133 = vadd.f32 0.0, %v3132
  %v3134 = vpop.f32.mrb[0].mxu0
  %3135 = vmatprep.mubr.bf16.mxu0 0
  %3136 = vmatmul.mubr.bf16.gmra.mrb[0].mxu0 %v2888
  %v3137 = vpop.f32.mrb[0].mxu0
  %v3138 = vadd.f32 0.0, %v3137
  %v3139 = vpop.f32.mrb[0].mxu0
  %v3140 = vpop.f32.mrb[0].mxu0
  %v3141 = vadd.f32 0.0, %v3140
  %v3142 = vpop.f32.mrb[0].mxu0
  %3143 = vmatprep.mubr.bf16.mxu0 0
  %3144 = vmatmul.mubr.bf16.gmra.mrb[0].mxu0 %v2891
  %v3145 = vpop.f32.mrb[0].mxu0
  %v3146 = vadd.f32 0.0, %v3145
  %v3147 = vpop.f32.mrb[0].mxu0
  %v3148 = vpop.f32.mrb[0].mxu0
  %v3149 = vadd.f32 0.0, %v3148
  %v3150 = vpop.f32.mrb[0].mxu0
  %3151 = vmatprep.mubr.bf16.mxu0 0
  %3152 = vmatmul.mubr.bf16.gmra.mrb[0].mxu0 %v2894
  %v3153 = vpop.f32.mrb[0].mxu0
  %v3154 = vadd.f32 0.0, %v3153
  %v3155 = vpop.f32.mrb[0].mxu0
  %v3156 = vpop.f32.mrb[0].mxu0
  %v3157 = vadd.f32 0.0, %v3156
  %v3158 = vpop.f32.mrb[0].mxu0
  %3159 = vmatprep.mubr.bf16.mxu0 0
  %3160 = vmatmul.mubr.bf16.gmra.mrb[0].mxu0 %v2897
  %v3161 = vpop.f32.mrb[0].mxu0
  %v3162 = vadd.f32 0.0, %v3161
  %v3163 = vpop.f32.mrb[0].mxu0
  %v3164 = vpop.f32.mrb[0].mxu0
  %v3165 = vadd.f32 0.0, %v3164
  %v3166 = vpop.f32.mrb[0].mxu0
  %3167 = vmatprep.mubr.bf16.mxu0 0
  %3168 = vmatmul.mubr.bf16.gmra.mrb[0].mxu0 %v2900
  %v3169 = vpop.f32.mrb[0].mxu0
  %v3170 = vadd.f32 0.0, %v3169
  %v3171 = vpop.f32.mrb[0].mxu0
  %v3172 = vpop.f32.mrb[0].mxu0
  %v3173 = vadd.f32 0.0, %v3172
  %v3174 = vpop.f32.mrb[0].mxu0
  %3175 = vmatprep.mubr.bf16.mxu0 0
  %3176 = vmatmul.mubr.bf16.gmra.mrb[0].mxu0 %v2903
  %v3177 = vpop.f32.mrb[0].mxu0
  %v3178 = vadd.f32 0.0, %v3177
  %v3179 = vpop.f32.mrb[0].mxu0
  %v3180 = vpop.f32.mrb[0].mxu0
  %v3181 = vadd.f32 0.0, %v3180
  %v3182 = vpop.f32.mrb[0].mxu0
  %3183 = vmatprep.mubr.bf16.mxu0 0
  %3184 = vmatmul.mubr.bf16.gmra.mrb[0].mxu0 %v2906
  %v3185 = vpop.f32.mrb[0].mxu0
  %v3186 = vadd.f32 0.0, %v3185
  %v3187 = vpop.f32.mrb[0].mxu0
  %v3188 = vpop.f32.mrb[0].mxu0
  %v3189 = vadd.f32 0.0, %v3188
  %v3190 = vpop.f32.mrb[0].mxu0
  %3191 = vmatprep.mubr.bf16.mxu0 0
  %3192 = vmatmul.mubr.bf16.gmra.mrb[0].mxu0 %v2909
  %v3193 = vpop.f32.mrb[0].mxu0
  %v3194 = vadd.f32 0.0, %v3193
  %v3195 = vpop.f32.mrb[0].mxu0
  %v3196 = vpop.f32.mrb[0].mxu0
  %v3197 = vadd.f32 0.0, %v3196
  %v3198 = vpop.f32.mrb[0].mxu0
  %3199 = vdwg.mxu0
  %v3200 = vmul.f32 %v2946, %v658
  %v3201 = vmul.f32 %v2949, %v658
  %v3202 = vmul.f32 %v2954, %v658
  %v3203 = vmul.f32 %v2957, %v658
  %v3204 = vmul.f32 %v2962, %v658
  %v3205 = vmul.f32 %v2965, %v658
  %v3206 = vmul.f32 %v2970, %v658
  %v3207 = vmul.f32 %v2973, %v658
  %v3208 = vmul.f32 %v2978, %v658
  %v3209 = vmul.f32 %v2981, %v658
  %v3210 = vmul.f32 %v2986, %v658
  %v3211 = vmul.f32 %v2989, %v658
  %v3212 = vmul.f32 %v2994, %v658
  %v3213 = vmul.f32 %v2997, %v658
  %v3214 = vmul.f32 %v3002, %v658
  %v3215 = vmul.f32 %v3005, %v658
  %v3216 = vmul.f32 %v3010, %v658
  %v3217 = vmul.f32 %v3013, %v658
  %v3218 = vmul.f32 %v3018, %v658
  %v3219 = vmul.f32 %v3021, %v658
  %v3220 = vmul.f32 %v3026, %v658
  %v3221 = vmul.f32 %v3029, %v658
  %v3222 = vmul.f32 %v3034, %v658
  %v3223 = vmul.f32 %v3037, %v658
  %v3224 = vmul.f32 %v3042, %v658
  %v3225 = vmul.f32 %v3045, %v658
  %v3226 = vmul.f32 %v3050, %v658
  %v3227 = vmul.f32 %v3053, %v658
  %v3228 = vmul.f32 %v3058, %v658
  %v3229 = vmul.f32 %v3061, %v658
  %v3230 = vmul.f32 %v3066, %v658
  %v3231 = vmul.f32 %v3069, %v658
  %v3232 = vmul.f32 %v3074, %v658
  %v3233 = vmul.f32 %v3077, %v658
  %v3234 = vmul.f32 %v3082, %v658
  %v3235 = vmul.f32 %v3085, %v658
  %v3236 = vmul.f32 %v3090, %v658
  %v3237 = vmul.f32 %v3093, %v658
  %v3238 = vmul.f32 %v3098, %v658
  %v3239 = vmul.f32 %v3101, %v658
  %v3240 = vmul.f32 %v3106, %v658
  %v3241 = vmul.f32 %v3109, %v658
  %v3242 = vmul.f32 %v3114, %v658
  %v3243 = vmul.f32 %v3117, %v658
  %v3244 = vmul.f32 %v3122, %v658
  %v3245 = vmul.f32 %v3125, %v658
  %v3246 = vmul.f32 %v3130, %v658
  %v3247 = vmul.f32 %v3133, %v658
  %v3248 = vmul.f32 %v3138, %v658
  %v3249 = vmul.f32 %v3141, %v658
  %v3250 = vmul.f32 %v3146, %v658
  %v3251 = vmul.f32 %v3149, %v658
  %v3252 = vmul.f32 %v3154, %v658
  %v3253 = vmul.f32 %v3157, %v658
  %v3254 = vmul.f32 %v3162, %v658
  %v3255 = vmul.f32 %v3165, %v658
  %v3256 = vmul.f32 %v3170, %v658
  %v3257 = vmul.f32 %v3173, %v658
  %v3258 = vmul.f32 %v3178, %v658
  %v3259 = vmul.f32 %v3181, %v658
  %v3260 = vmul.f32 %v3186, %v658
  %v3261 = vmul.f32 %v3189, %v658
  %v3262 = vmul.f32 %v3194, %v658
  %v3263 = vmul.f32 %v3197, %v658
  %v3264 = vadd.f32 %v3200, %v728
  %v3265 = vadd.f32 %v3201, %v728
  %v3266 = vadd.f32 %v3202, %v728
  %v3267 = vadd.f32 %v3203, %v728
  %v3268 = vadd.f32 %v3204, %v728
  %v3269 = vadd.f32 %v3205, %v728
  %v3270 = vadd.f32 %v3206, %v728
  %v3271 = vadd.f32 %v3207, %v728
  %v3272 = vadd.f32 %v3208, %v728
  %v3273 = vadd.f32 %v3209, %v728
  %v3274 = vadd.f32 %v3210, %v728
  %v3275 = vadd.f32 %v3211, %v728
  %v3276 = vadd.f32 %v3212, %v728
  %v3277 = vadd.f32 %v3213, %v728
  %v3278 = vadd.f32 %v3214, %v728
  %v3279 = vadd.f32 %v3215, %v728
  %v3280 = vadd.f32 %v3216, %v728
  %v3281 = vadd.f32 %v3217, %v728
  %v3282 = vadd.f32 %v3218, %v728
  %v3283 = vadd.f32 %v3219, %v728
  %v3284 = vadd.f32 %v3220, %v728
  %v3285 = vadd.f32 %v3221, %v728
  %v3286 = vadd.f32 %v3222, %v728
  %v3287 = vadd.f32 %v3223, %v728
  %v3288 = vadd.f32 %v3224, %v728
  %v3289 = vadd.f32 %v3225, %v728
  %v3290 = vadd.f32 %v3226, %v728
  %v3291 = vadd.f32 %v3227, %v728
  %v3292 = vadd.f32 %v3228, %v728
  %v3293 = vadd.f32 %v3229, %v728
  %v3294 = vadd.f32 %v3230, %v728
  %v3295 = vadd.f32 %v3231, %v728
  %v3296 = vadd.f32 %v3232, %v728
  %v3297 = vadd.f32 %v3233, %v728
  %v3298 = vadd.f32 %v3234, %v728
  %v3299 = vadd.f32 %v3235, %v728
  %v3300 = vadd.f32 %v3236, %v728
  %v3301 = vadd.f32 %v3237, %v728
  %v3302 = vadd.f32 %v3238, %v728
  %v3303 = vadd.f32 %v3239, %v728
  %v3304 = vadd.f32 %v3240, %v728
  %v3305 = vadd.f32 %v3241, %v728
  %v3306 = vadd.f32 %v3242, %v728
  %v3307 = vadd.f32 %v3243, %v728
  %v3308 = vadd.f32 %v3244, %v728
  %v3309 = vadd.f32 %v3245, %v728
  %v3310 = vadd.f32 %v3246, %v728
  %v3311 = vadd.f32 %v3247, %v728
  %v3312 = vadd.f32 %v3248, %v728
  %v3313 = vadd.f32 %v3249, %v728
  %v3314 = vadd.f32 %v3250, %v728
  %v3315 = vadd.f32 %v3251, %v728
  %v3316 = vadd.f32 %v3252, %v728
  %v3317 = vadd.f32 %v3253, %v728
  %v3318 = vadd.f32 %v3254, %v728
  %v3319 = vadd.f32 %v3255, %v728
  %v3320 = vadd.f32 %v3256, %v728
  %v3321 = vadd.f32 %v3257, %v728
  %v3322 = vadd.f32 %v3258, %v728
  %v3323 = vadd.f32 %v3259, %v728
  %v3324 = vadd.f32 %v3260, %v728
  %v3325 = vadd.f32 %v3261, %v728
  %v3326 = vadd.f32 %v3262, %v728
  %v3327 = vadd.f32 %v3263, %v728
  %v3328 = vmax.f32 %v3264, 0.0
  %v3329 = vmax.f32 %v3265, 0.0
  %v3330 = vmax.f32 %v3266, 0.0
  %v3331 = vmax.f32 %v3267, 0.0
  %v3332 = vmax.f32 %v3268, 0.0
  %v3333 = vmax.f32 %v3269, 0.0
  %v3334 = vmax.f32 %v3270, 0.0
  %v3335 = vmax.f32 %v3271, 0.0
  %v3336 = vmax.f32 %v3272, 0.0
  %v3337 = vmax.f32 %v3273, 0.0
  %v3338 = vmax.f32 %v3274, 0.0
  %v3339 = vmax.f32 %v3275, 0.0
  %v3340 = vmax.f32 %v3276, 0.0
  %v3341 = vmax.f32 %v3277, 0.0
  %v3342 = vmax.f32 %v3278, 0.0
  %v3343 = vmax.f32 %v3279, 0.0
  %v3344 = vmax.f32 %v3280, 0.0
  %v3345 = vmax.f32 %v3281, 0.0
  %v3346 = vmax.f32 %v3282, 0.0
  %v3347 = vmax.f32 %v3283, 0.0
  %v3348 = vmax.f32 %v3284, 0.0
  %v3349 = vmax.f32 %v3285, 0.0
  %v3350 = vmax.f32 %v3286, 0.0
  %v3351 = vmax.f32 %v3287, 0.0
  %v3352 = vmax.f32 %v3288, 0.0
  %v3353 = vmax.f32 %v3289, 0.0
  %v3354 = vmax.f32 %v3290, 0.0
  %v3355 = vmax.f32 %v3291, 0.0
  %v3356 = vmax.f32 %v3292, 0.0
  %v3357 = vmax.f32 %v3293, 0.0
  %v3358 = vmax.f32 %v3294, 0.0
  %v3359 = vmax.f32 %v3295, 0.0
  %v3360 = vmax.f32 %v3296, 0.0
  %v3361 = vmax.f32 %v3297, 0.0
  %v3362 = vmax.f32 %v3298, 0.0
  %v3363 = vmax.f32 %v3299, 0.0
  %v3364 = vmax.f32 %v3300, 0.0
  %v3365 = vmax.f32 %v3301, 0.0
  %v3366 = vmax.f32 %v3302, 0.0
  %v3367 = vmax.f32 %v3303, 0.0
  %v3368 = vmax.f32 %v3304, 0.0
  %v3369 = vmax.f32 %v3305, 0.0
  %v3370 = vmax.f32 %v3306, 0.0
  %v3371 = vmax.f32 %v3307, 0.0
  %v3372 = vmax.f32 %v3308, 0.0
  %v3373 = vmax.f32 %v3309, 0.0
  %v3374 = vmax.f32 %v3310, 0.0
  %v3375 = vmax.f32 %v3311, 0.0
  %v3376 = vmax.f32 %v3312, 0.0
  %v3377 = vmax.f32 %v3313, 0.0
  %v3378 = vmax.f32 %v3314, 0.0
  %v3379 = vmax.f32 %v3315, 0.0
  %v3380 = vmax.f32 %v3316, 0.0
  %v3381 = vmax.f32 %v3317, 0.0
  %v3382 = vmax.f32 %v3318, 0.0
  %v3383 = vmax.f32 %v3319, 0.0
  %v3384 = vmax.f32 %v3320, 0.0
  %v3385 = vmax.f32 %v3321, 0.0
  %v3386 = vmax.f32 %v3322, 0.0
  %v3387 = vmax.f32 %v3323, 0.0
  %v3388 = vmax.f32 %v3324, 0.0
  %v3389 = vmax.f32 %v3325, 0.0
  %v3390 = vmax.f32 %v3326, 0.0
  %v3391 = vmax.f32 %v3327, 0.0
  %v3392 = vmax.f32 %v2526, %v3328
  %v3393 = vmax.f32 %v2527, %v3329
  %v3394 = vmax.f32 %v2528, %v3330
  %v3395 = vmax.f32 %v2529, %v3331
  %v3396 = vmax.f32 %v2530, %v3332
  %v3397 = vmax.f32 %v2531, %v3333
  %v3398 = vmax.f32 %v2532, %v3334
  %v3399 = vmax.f32 %v2533, %v3335
  %v3400 = vmax.f32 %v2534, %v3336
  %v3401 = vmax.f32 %v2535, %v3337
  %v3402 = vmax.f32 %v2536, %v3338
  %v3403 = vmax.f32 %v2537, %v3339
  %v3404 = vmax.f32 %v2538, %v3340
  %v3405 = vmax.f32 %v2539, %v3341
  %v3406 = vmax.f32 %v2540, %v3342
  %v3407 = vmax.f32 %v2541, %v3343
  %v3408 = vmax.f32 %v2542, %v3344
  %v3409 = vmax.f32 %v2543, %v3345
  %v3410 = vmax.f32 %v2544, %v3346
  %v3411 = vmax.f32 %v2545, %v3347
  %v3412 = vmax.f32 %v2546, %v3348
  %v3413 = vmax.f32 %v2547, %v3349
  %v3414 = vmax.f32 %v2548, %v3350
  %v3415 = vmax.f32 %v2549, %v3351
  %v3416 = vmax.f32 %v2550, %v3352
  %v3417 = vmax.f32 %v2551, %v3353
  %v3418 = vmax.f32 %v2552, %v3354
  %v3419 = vmax.f32 %v2553, %v3355
  %v3420 = vmax.f32 %v2554, %v3356
  %v3421 = vmax.f32 %v2555, %v3357
  %v3422 = vmax.f32 %v2556, %v3358
  %v3423 = vmax.f32 %v2557, %v3359
  %v3424 = vmax.f32 %v2558, %v3360
  %v3425 = vmax.f32 %v2559, %v3361
  %v3426 = vmax.f32 %v2560, %v3362
  %v3427 = vmax.f32 %v2561, %v3363
  %v3428 = vmax.f32 %v2562, %v3364
  %v3429 = vmax.f32 %v2563, %v3365
  %v3430 = vmax.f32 %v2564, %v3366
  %v3431 = vmax.f32 %v2565, %v3367
  %v3432 = vmax.f32 %v2566, %v3368
  %v3433 = vmax.f32 %v2567, %v3369
  %v3434 = vmax.f32 %v2568, %v3370
  %v3435 = vmax.f32 %v2569, %v3371
  %v3436 = vmax.f32 %v2570, %v3372
  %v3437 = vmax.f32 %v2571, %v3373
  %v3438 = vmax.f32 %v2572, %v3374
  %v3439 = vmax.f32 %v2573, %v3375
  %v3440 = vmax.f32 %v2574, %v3376
  %v3441 = vmax.f32 %v2575, %v3377
  %v3442 = vmax.f32 %v2576, %v3378
  %v3443 = vmax.f32 %v2577, %v3379
  %v3444 = vmax.f32 %v2578, %v3380
  %v3445 = vmax.f32 %v2579, %v3381
  %v3446 = vmax.f32 %v2580, %v3382
  %v3447 = vmax.f32 %v2581, %v3383
  %v3448 = vmax.f32 %v2582, %v3384
  %v3449 = vmax.f32 %v2583, %v3385
  %v3450 = vmax.f32 %v2584, %v3386
  %v3451 = vmax.f32 %v2585, %v3387
  %v3452 = vmax.f32 %v2586, %v3388
  %v3453 = vmax.f32 %v2587, %v3389
  %v3454 = vmax.f32 %v2588, %v3390
  %v3455 = vmax.f32 %v2589, %v3391
  %v3456 = vpack.c.bf16 %v3393, %v3392
  %v3457 = vpack.c.bf16 %v3395, %v3394
  %v3458 = vpack.c.bf16 %v3397, %v3396
  %v3459 = vpack.c.bf16 %v3399, %v3398
  %v3460 = vpack.c.bf16 %v3401, %v3400
  %v3461 = vpack.c.bf16 %v3403, %v3402
  %v3462 = vpack.c.bf16 %v3405, %v3404
  %v3463 = vpack.c.bf16 %v3407, %v3406
  %v3464 = vpack.c.bf16 %v3409, %v3408
  %v3465 = vpack.c.bf16 %v3411, %v3410
  %v3466 = vpack.c.bf16 %v3413, %v3412
  %v3467 = vpack.c.bf16 %v3415, %v3414
  %v3468 = vpack.c.bf16 %v3417, %v3416
  %v3469 = vpack.c.bf16 %v3419, %v3418
  %v3470 = vpack.c.bf16 %v3421, %v3420
  %v3471 = vpack.c.bf16 %v3423, %v3422
  %v3472 = vpack.c.bf16 %v3425, %v3424
  %v3473 = vpack.c.bf16 %v3427, %v3426
  %v3474 = vpack.c.bf16 %v3429, %v3428
  %v3475 = vpack.c.bf16 %v3431, %v3430
  %v3476 = vpack.c.bf16 %v3433, %v3432
  %v3477 = vpack.c.bf16 %v3435, %v3434
  %v3478 = vpack.c.bf16 %v3437, %v3436
  %v3479 = vpack.c.bf16 %v3439, %v3438
  %v3480 = vpack.c.bf16 %v3441, %v3440
  %v3481 = vpack.c.bf16 %v3443, %v3442
  %v3482 = vpack.c.bf16 %v3445, %v3444
  %v3483 = vpack.c.bf16 %v3447, %v3446
  %v3484 = vpack.c.bf16 %v3449, %v3448
  %v3485 = vpack.c.bf16 %v3451, %v3450
  %v3486 = vpack.c.bf16 %v3453, %v3452
  %v3487 = vpack.c.bf16 %v3455, %v3454
  %v3520 = vunpack.c.l.b16 %v3456
  %v3521 = vunpack.c.h.b16 %v3456
  %v3522 = vunpack.c.l.b16 %v3457
  %v3523 = vunpack.c.h.b16 %v3457
  %v3524 = vunpack.c.l.b16 %v3458
  %v3525 = vunpack.c.h.b16 %v3458
  %v3526 = vunpack.c.l.b16 %v3459
  %v3527 = vunpack.c.h.b16 %v3459
  %v3528 = vunpack.c.l.b16 %v3460
  %v3529 = vunpack.c.h.b16 %v3460
  %v3530 = vunpack.c.l.b16 %v3461
  %v3531 = vunpack.c.h.b16 %v3461
  %v3532 = vunpack.c.l.b16 %v3462
  %v3533 = vunpack.c.h.b16 %v3462
  %v3534 = vunpack.c.l.b16 %v3463
  %v3535 = vunpack.c.h.b16 %v3463
  %v3536 = vunpack.c.l.b16 %v3464
  %v3537 = vunpack.c.h.b16 %v3464
  %v3538 = vunpack.c.l.b16 %v3465
  %v3539 = vunpack.c.h.b16 %v3465
  %v3540 = vunpack.c.l.b16 %v3466
  %v3541 = vunpack.c.h.b16 %v3466
  %v3542 = vunpack.c.l.b16 %v3467
  %v3543 = vunpack.c.h.b16 %v3467
  %v3544 = vunpack.c.l.b16 %v3468
  %v3545 = vunpack.c.h.b16 %v3468
  %v3546 = vunpack.c.l.b16 %v3469
  %v3547 = vunpack.c.h.b16 %v3469
  %v3548 = vunpack.c.l.b16 %v3470
  %v3549 = vunpack.c.h.b16 %v3470
  %v3550 = vunpack.c.l.b16 %v3471
  %v3551 = vunpack.c.h.b16 %v3471
  %v3552 = vunpack.c.l.b16 %v3472
  %v3553 = vunpack.c.h.b16 %v3472
  %v3554 = vunpack.c.l.b16 %v3473
  %v3555 = vunpack.c.h.b16 %v3473
  %v3556 = vunpack.c.l.b16 %v3474
  %v3557 = vunpack.c.h.b16 %v3474
  %v3558 = vunpack.c.l.b16 %v3475
  %v3559 = vunpack.c.h.b16 %v3475
  %v3560 = vunpack.c.l.b16 %v3476
  %v3561 = vunpack.c.h.b16 %v3476
  %v3562 = vunpack.c.l.b16 %v3477
  %v3563 = vunpack.c.h.b16 %v3477
  %v3564 = vunpack.c.l.b16 %v3478
  %v3565 = vunpack.c.h.b16 %v3478
  %v3566 = vunpack.c.l.b16 %v3479
  %v3567 = vunpack.c.h.b16 %v3479
  %v3568 = vunpack.c.l.b16 %v3480
  %v3569 = vunpack.c.h.b16 %v3480
  %v3570 = vunpack.c.l.b16 %v3481
  %v3571 = vunpack.c.h.b16 %v3481
  %v3572 = vunpack.c.l.b16 %v3482
  %v3573 = vunpack.c.h.b16 %v3482
  %v3574 = vunpack.c.l.b16 %v3483
  %v3575 = vunpack.c.h.b16 %v3483
  %v3576 = vunpack.c.l.b16 %v3484
  %v3577 = vunpack.c.h.b16 %v3484
  %v3578 = vunpack.c.l.b16 %v3485
  %v3579 = vunpack.c.h.b16 %v3485
  %v3580 = vunpack.c.l.b16 %v3486
  %v3581 = vunpack.c.h.b16 %v3486
  %v3582 = vunpack.c.l.b16 %v3487
  %v3583 = vunpack.c.h.b16 %v3487
  %v3584 = vpack.c.b16 %v3520, %v3520
  %v3585 = vpack.c.b16 %v3521, %v3521
  %v3586 = vpack.c.b16 %v3522, %v3522
  %v3587 = vpack.c.b16 %v3523, %v3523
  %v3588 = vpack.c.b16 %v3524, %v3524
  %v3589 = vpack.c.b16 %v3525, %v3525
  %v3590 = vpack.c.b16 %v3526, %v3526
  %v3591 = vpack.c.b16 %v3527, %v3527
  %v3592 = vpack.c.b16 %v3528, %v3528
  %v3593 = vpack.c.b16 %v3529, %v3529
  %v3594 = vpack.c.b16 %v3530, %v3530
  %v3595 = vpack.c.b16 %v3531, %v3531
  %v3596 = vpack.c.b16 %v3532, %v3532
  %v3597 = vpack.c.b16 %v3533, %v3533
  %v3598 = vpack.c.b16 %v3534, %v3534
  %v3599 = vpack.c.b16 %v3535, %v3535
  %v3600 = vpack.c.b16 %v3536, %v3536
  %v3601 = vpack.c.b16 %v3537, %v3537
  %v3602 = vpack.c.b16 %v3538, %v3538
  %v3603 = vpack.c.b16 %v3539, %v3539
  %v3604 = vpack.c.b16 %v3540, %v3540
  %v3605 = vpack.c.b16 %v3541, %v3541
  %v3606 = vpack.c.b16 %v3542, %v3542
  %v3607 = vpack.c.b16 %v3543, %v3543
  %v3608 = vpack.c.b16 %v3544, %v3544
  %v3609 = vpack.c.b16 %v3545, %v3545
  %v3610 = vpack.c.b16 %v3546, %v3546
  %v3611 = vpack.c.b16 %v3547, %v3547
  %v3612 = vpack.c.b16 %v3548, %v3548
  %v3613 = vpack.c.b16 %v3549, %v3549
  %v3614 = vpack.c.b16 %v3550, %v3550
  %v3615 = vpack.c.b16 %v3551, %v3551
  %v3616 = vpack.c.b16 %v3552, %v3552
  %v3617 = vpack.c.b16 %v3553, %v3553
  %v3618 = vpack.c.b16 %v3554, %v3554
  %v3619 = vpack.c.b16 %v3555, %v3555
  %v3620 = vpack.c.b16 %v3556, %v3556
  %v3621 = vpack.c.b16 %v3557, %v3557
  %v3622 = vpack.c.b16 %v3558, %v3558
  %v3623 = vpack.c.b16 %v3559, %v3559
  %v3624 = vpack.c.b16 %v3560, %v3560
  %v3625 = vpack.c.b16 %v3561, %v3561
  %v3626 = vpack.c.b16 %v3562, %v3562
  %v3627 = vpack.c.b16 %v3563, %v3563
  %v3628 = vpack.c.b16 %v3564, %v3564
  %v3629 = vpack.c.b16 %v3565, %v3565
  %v3630 = vpack.c.b16 %v3566, %v3566
  %v3631 = vpack.c.b16 %v3567, %v3567
  %v3632 = vpack.c.b16 %v3568, %v3568
  %v3633 = vpack.c.b16 %v3569, %v3569
  %v3634 = vpack.c.b16 %v3570, %v3570
  %v3635 = vpack.c.b16 %v3571, %v3571
  %v3636 = vpack.c.b16 %v3572, %v3572
  %v3637 = vpack.c.b16 %v3573, %v3573
  %v3638 = vpack.c.b16 %v3574, %v3574
  %v3639 = vpack.c.b16 %v3575, %v3575
  %v3640 = vpack.c.b16 %v3576, %v3576
  %v3641 = vpack.c.b16 %v3577, %v3577
  %v3642 = vpack.c.b16 %v3578, %v3578
  %v3643 = vpack.c.b16 %v3579, %v3579
  %v3644 = vpack.c.b16 %v3580, %v3580
  %v3645 = vpack.c.b16 %v3581, %v3581
  %v3646 = vpack.c.b16 %v3582, %v3582
  %v3647 = vpack.c.b16 %v3583, %v3583
  %3712 = vst [vmem:[%s4] sm:$0xf] %v3584
  %3713 = vst [vmem:[%s4 + $0x4] sm:$0xf] %v3585
  %3714 = vst [vmem:[%s4 + $0x8] sm:$0xf] %v3586
  %3715 = vst [vmem:[%s4 + $0xc] sm:$0xf] %v3587
  %3716 = vst [vmem:[%s4 + $0x10] sm:$0xf] %v3588
  %3717 = vst [vmem:[%s4 + $0x14] sm:$0xf] %v3589
  %3718 = vst [vmem:[%s4 + $0x18] sm:$0xf] %v3590
  %3719 = vst [vmem:[%s4 + $0x1c] sm:$0xf] %v3591
  %3720 = vst [vmem:[%s4 + $0x20] sm:$0xf] %v3592
  %3721 = vst [vmem:[%s4 + $0x24] sm:$0xf] %v3593
  %3722 = vst [vmem:[%s4 + $0x28] sm:$0xf] %v3594
  %3723 = vst [vmem:[%s4 + $0x2c] sm:$0xf] %v3595
  %3724 = vst [vmem:[%s4 + $0x30] sm:$0xf] %v3596
  %3725 = vst [vmem:[%s4 + $0x34] sm:$0xf] %v3597
  %3726 = vst [vmem:[%s4 + $0x38] sm:$0xf] %v3598
  %3727 = vst [vmem:[%s4 + $0x3c] sm:$0xf] %v3599
  %3728 = vst [vmem:[%s4 + $0x40] sm:$0xf] %v3600
  %3729 = vst [vmem:[%s4 + $0x44] sm:$0xf] %v3601
  %3730 = vst [vmem:[%s4 + $0x48] sm:$0xf] %v3602
  %3731 = vst [vmem:[%s4 + $0x4c] sm:$0xf] %v3603
  %3732 = vst [vmem:[%s4 + $0x50] sm:$0xf] %v3604
  %3733 = vst [vmem:[%s4 + $0x54] sm:$0xf] %v3605
  %3734 = vst [vmem:[%s4 + $0x58] sm:$0xf] %v3606
  %3735 = vst [vmem:[%s4 + $0x5c] sm:$0xf] %v3607
  %3736 = vst [vmem:[%s4 + $0x60] sm:$0xf] %v3608
  %3737 = vst [vmem:[%s4 + $0x64] sm:$0xf] %v3609
  %3738 = vst [vmem:[%s4 + $0x68] sm:$0xf] %v3610
  %3739 = vst [vmem:[%s4 + $0x6c] sm:$0xf] %v3611
  %3740 = vst [vmem:[%s4 + $0x70] sm:$0xf] %v3612
  %3741 = vst [vmem:[%s4 + $0x74] sm:$0xf] %v3613
  %3742 = vst [vmem:[%s4 + $0x78] sm:$0xf] %v3614
  %3743 = vst [vmem:[%s4 + $0x7c] sm:$0xf] %v3615
  %3744 = vst [vmem:[%s4 + $0x80] sm:$0xf] %v3616
  %3745 = vst [vmem:[%s4 + $0x84] sm:$0xf] %v3617
  %3746 = vst [vmem:[%s4 + $0x88] sm:$0xf] %v3618
  %3747 = vst [vmem:[%s4 + $0x8c] sm:$0xf] %v3619
  %3748 = vst [vmem:[%s4 + $0x90] sm:$0xf] %v3620
  %3749 = vst [vmem:[%s4 + $0x94] sm:$0xf] %v3621
  %3750 = vst [vmem:[%s4 + $0x98] sm:$0xf] %v3622
  %3751 = vst [vmem:[%s4 + $0x9c] sm:$0xf] %v3623
  %3752 = vst [vmem:[%s4 + $0xa0] sm:$0xf] %v3624
  %3753 = vst [vmem:[%s4 + $0xa4] sm:$0xf] %v3625
  %3754 = vst [vmem:[%s4 + $0xa8] sm:$0xf] %v3626
  %3755 = vst [vmem:[%s4 + $0xac] sm:$0xf] %v3627
  %3756 = vst [vmem:[%s4 + $0xb0] sm:$0xf] %v3628
  %3757 = vst [vmem:[%s4 + $0xb4] sm:$0xf] %v3629
  %3758 = vst [vmem:[%s4 + $0xb8] sm:$0xf] %v3630
  %3759 = vst [vmem:[%s4 + $0xbc] sm:$0xf] %v3631
  %3760 = vst [vmem:[%s4 + $0xc0] sm:$0xf] %v3632
  %3761 = vst [vmem:[%s4 + $0xc4] sm:$0xf] %v3633
  %3762 = vst [vmem:[%s4 + $0xc8] sm:$0xf] %v3634
  %3763 = vst [vmem:[%s4 + $0xcc] sm:$0xf] %v3635
  %3764 = vst [vmem:[%s4 + $0xd0] sm:$0xf] %v3636
  %3765 = vst [vmem:[%s4 + $0xd4] sm:$0xf] %v3637
  %3766 = vst [vmem:[%s4 + $0xd8] sm:$0xf] %v3638
  %3767 = vst [vmem:[%s4 + $0xdc] sm:$0xf] %v3639
  %3768 = vst [vmem:[%s4 + $0xe0] sm:$0xf] %v3640
  %3769 = vst [vmem:[%s4 + $0xe4] sm:$0xf] %v3641
  %3770 = vst [vmem:[%s4 + $0xe8] sm:$0xf] %v3642
  %3771 = vst [vmem:[%s4 + $0xec] sm:$0xf] %v3643
  %3772 = vst [vmem:[%s4 + $0xf0] sm:$0xf] %v3644
  %3773 = vst [vmem:[%s4 + $0xf4] sm:$0xf] %v3645
  %3774 = vst [vmem:[%s4 + $0xf8] sm:$0xf] %v3646
  %3775 = vst [vmem:[%s4 + $0xfc] sm:$0xf] %v3647
  // Predicated region
  $region18: #{vggnet_forward.17} parent=0 // pred_check
    _
  $region19: #{vggnet_forward.17} parent=0 // pred_check_branch
    %3777 = sbr.rel (0) target = $region21
  $region20: #{vggnet_forward.17} parent=0 // pred_region
    _
  $region21: #{vggnet_forward.17} parent=0 // pred_fallthru
    _
  // Predicated region
  $region22: #{vggnet_forward.17} parent=0 // pred_check
    _
  $region23: #{vggnet_forward.17} parent=0 // pred_check_branch
    %3779 = sbr.rel (0) target = $region25
  $region24: #{vggnet_forward.17} parent=0 // pred_region
    _
  $region25: #{vggnet_forward.17} parent=0 // pred_fallthru
    _

// kernel: vggnet_forward.18
$region0: #{vggnet_forward.18}
  #allocation0 [shape = 'u32[]', space=smem, size = 0x4, offset = 0x4, fixed_abs, tag = 'smem constant byte address 0x4 - core index']
  #allocation1 [shape = 'u32[144,128]{1,0:T(1,128)}', space=vmem, size = 0x12000, scoped, tag = 'internal scratch']
  %s0 = inlined_call_operand.vmem [shape: bf16[512,36], index: 0, kind: input, shape index: {}]
  %s1 = inlined_call_operand.vmem [shape: bf16[36,128], index: 1, kind: input, shape index: {}]
  %s2 = inlined_call_operand.vmem [shape: f32[1,128], index: 2, kind: input, shape index: {}]
  %s3 = inlined_call_operand.vmem [shape: f32[1,128], index: 3, kind: input, shape index: {}]
  %s4 = inlined_call_operand.vmem [shape: bf16[512,128], index: 4, kind: output, shape index: {}]
  %s5 = sld [smem:[#allocation0]]
  $region26: #{vggnet_forward.18} parent=0
    _
  %s7 = ssub.s32 1, %s5
  %s8 = scalar_select 0, %s7, %s5
  // Predicated region
  $region2: #{vggnet_forward.18} parent=0 // pred_check
    _
  $region3: #{vggnet_forward.18} parent=0 // pred_check_branch
    %10 = sbr.rel (0) target = $region5
  $region4: #{vggnet_forward.18} parent=0 // pred_region
    _
  $region5: #{vggnet_forward.18} parent=0 // pred_fallthru
    _
  // Predicated region
  $region6: #{vggnet_forward.18} parent=0 // pred_check
    _
  $region7: #{vggnet_forward.18} parent=0 // pred_check_branch
    %12 = sbr.rel (0) target = $region9
  $region8: #{vggnet_forward.18} parent=0 // pred_region
    _
  $region9: #{vggnet_forward.18} parent=0 // pred_fallthru
    _
  // Predicated region
  $region10: #{vggnet_forward.18} parent=0 // pred_check
    _
  $region11: #{vggnet_forward.18} parent=0 // pred_check_branch
    %14 = sbr.rel (0) target = $region13
  $region12: #{vggnet_forward.18} parent=0 // pred_region
    _
  $region13: #{vggnet_forward.18} parent=0 // pred_fallthru
    _
  // Predicated region
  $region14: #{vggnet_forward.18} parent=0 // pred_check
    _
  $region15: #{vggnet_forward.18} parent=0 // pred_check_branch
    %16 = sbr.rel (0) target = $region17
  $region16: #{vggnet_forward.18} parent=0 // pred_region
    _
  $region17: #{vggnet_forward.18} parent=0 // pred_fallthru
    _
  %v18 = vld [vmem:[%s0] sm:$0xf]
  %v19 = vld [vmem:[%s0 + $0x4] sm:$0xf]
  %v20 = vld [vmem:[%s0 + $0x8] sm:$0xf]
  %v21 = vld [vmem:[%s0 + $0xc] sm:$0xf]
  %v22 = vld [vmem:[%s0 + $0x10] sm:$0xf]
  %v23 = vld [vmem:[%s0 + $0x14] sm:$0xf]
  %v24 = vld [vmem:[%s0 + $0x18] sm:$0xf]
  %v25 = vld [vmem:[%s0 + $0x1c] sm:$0xf]
  %v26 = vld [vmem:[%s0 + $0x20] sm:$0xf]
  %v27 = vld [vmem:[%s0 + $0x24] sm:$0xf]
  %v28 = vld [vmem:[%s0 + $0x28] sm:$0xf]
  %v29 = vld [vmem:[%s0 + $0x2c] sm:$0xf]
  %v30 = vld [vmem:[%s0 + $0x30] sm:$0xf]
  %v31 = vld [vmem:[%s0 + $0x34] sm:$0xf]
  %v32 = vld [vmem:[%s0 + $0x38] sm:$0xf]
  %v33 = vld [vmem:[%s0 + $0x3c] sm:$0xf]
  %v34 = vld [vmem:[%s0 + $0x40] sm:$0xf]
  %v35 = vld [vmem:[%s0 + $0x44] sm:$0xf]
  %v36 = vld [vmem:[%s0 + $0x48] sm:$0xf]
  %v37 = vld [vmem:[%s0 + $0x4c] sm:$0xf]
  %v38 = vld [vmem:[%s0 + $0x50] sm:$0xf]
  %v39 = vld [vmem:[%s0 + $0x54] sm:$0xf]
  %v40 = vld [vmem:[%s0 + $0x58] sm:$0xf]
  %v41 = vld [vmem:[%s0 + $0x5c] sm:$0xf]
  %v42 = vld [vmem:[%s0 + $0x60] sm:$0xf]
  %v43 = vld [vmem:[%s0 + $0x64] sm:$0xf]
  %v44 = vld [vmem:[%s0 + $0x68] sm:$0xf]
  %v45 = vld [vmem:[%s0 + $0x6c] sm:$0xf]
  %v46 = vld [vmem:[%s0 + $0x70] sm:$0xf]
  %v47 = vld [vmem:[%s0 + $0x74] sm:$0xf]
  %v48 = vld [vmem:[%s0 + $0x78] sm:$0xf]
  %v49 = vld [vmem:[%s0 + $0x7c] sm:$0xf]
  %v50 = vld [vmem:[%s0 + $0x80] sm:$0xf]
  %v51 = vld [vmem:[%s0 + $0x84] sm:$0xf]
  %v52 = vld [vmem:[%s0 + $0x88] sm:$0xf]
  %v53 = vld [vmem:[%s0 + $0x8c] sm:$0xf]
  %v54 = vld [vmem:[%s0 + $0x90] sm:$0xf]
  %v55 = vld [vmem:[%s0 + $0x94] sm:$0xf]
  %v56 = vld [vmem:[%s0 + $0x98] sm:$0xf]
  %v57 = vld [vmem:[%s0 + $0x9c] sm:$0xf]
  %v58 = vld [vmem:[%s0 + $0xa0] sm:$0xf]
  %v59 = vld [vmem:[%s0 + $0xa4] sm:$0xf]
  %v60 = vld [vmem:[%s0 + $0xa8] sm:$0xf]
  %v61 = vld [vmem:[%s0 + $0xac] sm:$0xf]
  %v62 = vld [vmem:[%s0 + $0xb0] sm:$0xf]
  %v63 = vld [vmem:[%s0 + $0xb4] sm:$0xf]
  %v64 = vld [vmem:[%s0 + $0xb8] sm:$0xf]
  %v65 = vld [vmem:[%s0 + $0xbc] sm:$0xf]
  %v66 = vld [vmem:[%s0 + $0xc0] sm:$0xf]
  %v67 = vld [vmem:[%s0 + $0xc4] sm:$0xf]
  %v68 = vld [vmem:[%s0 + $0xc8] sm:$0xf]
  %v69 = vld [vmem:[%s0 + $0xcc] sm:$0xf]
  %v70 = vld [vmem:[%s0 + $0xd0] sm:$0xf]
  %v71 = vld [vmem:[%s0 + $0xd4] sm:$0xf]
  %v72 = vld [vmem:[%s0 + $0xd8] sm:$0xf]
  %v73 = vld [vmem:[%s0 + $0xdc] sm:$0xf]
  %v74 = vld [vmem:[%s0 + $0xe0] sm:$0xf]
  %v75 = vld [vmem:[%s0 + $0xe4] sm:$0xf]
  %v76 = vld [vmem:[%s0 + $0xe8] sm:$0xf]
  %v77 = vld [vmem:[%s0 + $0xec] sm:$0xf]
  %v78 = vld [vmem:[%s0 + $0xf0] sm:$0xf]
  %v79 = vld [vmem:[%s0 + $0xf4] sm:$0xf]
  %v80 = vld [vmem:[%s0 + $0xf8] sm:$0xf]
  %v81 = vld [vmem:[%s0 + $0xfc] sm:$0xf]
  %v82 = vld [vmem:[%s1] sm:$0xf]
  %v83 = vld [vmem:[%s1 + $0x4] sm:$0xf]
  %v84 = vld [vmem:[%s1 + $0x8] sm:$0xf]
  %v85 = vld [vmem:[%s1 + $0xc] sm:$0xf]
  %v86 = vld [vmem:[%s1 + $0x10] sm:$0x3]
  %v151 = vunpack.c.l.b16 %v18
  %v152 = vunpack.c.l.b16 %v19
  %v153 = vunpack.c.l.b16 %v20
  %v154 = vunpack.c.l.b16 %v21
  %v155 = vunpack.c.l.b16 %v22
  %v156 = vunpack.c.l.b16 %v23
  %v157 = vunpack.c.l.b16 %v24
  %v158 = vunpack.c.l.b16 %v25
  %v159 = vunpack.c.l.b16 %v26
  %v160 = vunpack.c.l.b16 %v27
  %v161 = vunpack.c.l.b16 %v28
  %v162 = vunpack.c.l.b16 %v29
  %v163 = vunpack.c.l.b16 %v30
  %v164 = vunpack.c.l.b16 %v31
  %v165 = vunpack.c.l.b16 %v32
  %v166 = vunpack.c.l.b16 %v33
  %v167 = vunpack.c.l.b16 %v34
  %v168 = vunpack.c.l.b16 %v35
  %v169 = vunpack.c.l.b16 %v36
  %v170 = vunpack.c.l.b16 %v37
  %v171 = vunpack.c.l.b16 %v38
  %v172 = vunpack.c.l.b16 %v39
  %v173 = vunpack.c.l.b16 %v40
  %v174 = vunpack.c.l.b16 %v41
  %v175 = vunpack.c.l.b16 %v42
  %v176 = vunpack.c.l.b16 %v43
  %v177 = vunpack.c.l.b16 %v44
  %v178 = vunpack.c.l.b16 %v45
  %v179 = vunpack.c.l.b16 %v46
  %v180 = vunpack.c.l.b16 %v47
  %v181 = vunpack.c.l.b16 %v48
  %v182 = vunpack.c.l.b16 %v49
  %v183 = vunpack.c.l.b16 %v50
  %v184 = vunpack.c.l.b16 %v51
  %v185 = vunpack.c.l.b16 %v52
  %v186 = vunpack.c.l.b16 %v53
  %v187 = vunpack.c.l.b16 %v54
  %v188 = vunpack.c.l.b16 %v55
  %v189 = vunpack.c.l.b16 %v56
  %v190 = vunpack.c.l.b16 %v57
  %v191 = vunpack.c.l.b16 %v58
  %v192 = vunpack.c.l.b16 %v59
  %v193 = vunpack.c.l.b16 %v60
  %v194 = vunpack.c.l.b16 %v61
  %v195 = vunpack.c.l.b16 %v62
  %v196 = vunpack.c.l.b16 %v63
  %v197 = vunpack.c.l.b16 %v64
  %v198 = vunpack.c.l.b16 %v65
  %v199 = vunpack.c.l.b16 %v66
  %v200 = vunpack.c.l.b16 %v67
  %v201 = vunpack.c.l.b16 %v68
  %v202 = vunpack.c.l.b16 %v69
  %v203 = vunpack.c.l.b16 %v70
  %v204 = vunpack.c.l.b16 %v71
  %v205 = vunpack.c.l.b16 %v72
  %v206 = vunpack.c.l.b16 %v73
  %v207 = vunpack.c.l.b16 %v74
  %v208 = vunpack.c.l.b16 %v75
  %v209 = vunpack.c.l.b16 %v76
  %v210 = vunpack.c.l.b16 %v77
  %v211 = vunpack.c.l.b16 %v78
  %v212 = vunpack.c.l.b16 %v79
  %v213 = vunpack.c.l.b16 %v80
  %v214 = vunpack.c.l.b16 %v81
  %v215 = vpack.c.b16 %v152, %v151
  %v216 = vpack.c.b16 %v154, %v153
  %v217 = vpack.c.b16 %v156, %v155
  %v218 = vpack.c.b16 %v158, %v157
  %v219 = vpack.c.b16 %v160, %v159
  %v220 = vpack.c.b16 %v162, %v161
  %v221 = vpack.c.b16 %v164, %v163
  %v222 = vpack.c.b16 %v166, %v165
  %v223 = vpack.c.b16 %v168, %v167
  %v224 = vpack.c.b16 %v170, %v169
  %v225 = vpack.c.b16 %v172, %v171
  %v226 = vpack.c.b16 %v174, %v173
  %v227 = vpack.c.b16 %v176, %v175
  %v228 = vpack.c.b16 %v178, %v177
  %v229 = vpack.c.b16 %v180, %v179
  %v230 = vpack.c.b16 %v182, %v181
  %v231 = vpack.c.b16 %v184, %v183
  %v232 = vpack.c.b16 %v186, %v185
  %v233 = vpack.c.b16 %v188, %v187
  %v234 = vpack.c.b16 %v190, %v189
  %v235 = vpack.c.b16 %v192, %v191
  %v236 = vpack.c.b16 %v194, %v193
  %v237 = vpack.c.b16 %v196, %v195
  %v238 = vpack.c.b16 %v198, %v197
  %v239 = vpack.c.b16 %v200, %v199
  %v240 = vpack.c.b16 %v202, %v201
  %v241 = vpack.c.b16 %v204, %v203
  %v242 = vpack.c.b16 %v206, %v205
  %v243 = vpack.c.b16 %v208, %v207
  %v244 = vpack.c.b16 %v210, %v209
  %v245 = vpack.c.b16 %v212, %v211
  %v246 = vpack.c.b16 %v214, %v213
  %v252 = vunpack.c.l.b16 %v82
  %v253 = vunpack.c.l.b16 %v83
  %v254 = vunpack.c.l.b16 %v84
  %v255 = vunpack.c.l.b16 %v85
  %v256 = vunpack.c.l.b16 %v86
  %v257 = vpack.c.b16 %v253, %v252
  %v258 = vpack.c.b16 %v255, %v254
  %v259 = vpack.c.b16 %v256, %v256
  %vm262 = vcmask 293888
  %v264 = vsel %vm262, %v215, 0
  %v267 = vsel %vm262, %v216, 0
  %v270 = vsel %vm262, %v217, 0
  %v273 = vsel %vm262, %v218, 0
  %v276 = vsel %vm262, %v219, 0
  %v279 = vsel %vm262, %v220, 0
  %v282 = vsel %vm262, %v221, 0
  %v285 = vsel %vm262, %v222, 0
  %v288 = vsel %vm262, %v223, 0
  %v291 = vsel %vm262, %v224, 0
  %v294 = vsel %vm262, %v225, 0
  %v297 = vsel %vm262, %v226, 0
  %v300 = vsel %vm262, %v227, 0
  %v303 = vsel %vm262, %v228, 0
  %v306 = vsel %vm262, %v229, 0
  %v309 = vsel %vm262, %v230, 0
  %v312 = vsel %vm262, %v231, 0
  %v315 = vsel %vm262, %v232, 0
  %v318 = vsel %vm262, %v233, 0
  %v321 = vsel %vm262, %v234, 0
  %v324 = vsel %vm262, %v235, 0
  %v327 = vsel %vm262, %v236, 0
  %v330 = vsel %vm262, %v237, 0
  %v333 = vsel %vm262, %v238, 0
  %v336 = vsel %vm262, %v239, 0
  %v339 = vsel %vm262, %v240, 0
  %v342 = vsel %vm262, %v241, 0
  %v345 = vsel %vm262, %v242, 0
  %v348 = vsel %vm262, %v243, 0
  %v351 = vsel %vm262, %v244, 0
  %v354 = vsel %vm262, %v245, 0
  %v357 = vsel %vm262, %v246, 0
  %vm359 = vcmask 1041408
  %v361 = vsel %vm359, %v259, 0
  %363 = vmatprep.subr.bf16.mxu0 0
  %364 = vmatpush1.bf16.msra.mxu0 %v257
  %365 = vmatprep.subr.bf16.mxu0 0
  %366 = vmatpush1.bf16.msra.mxu0 %v258
  %367 = vmatprep.subr.bf16.mxu0 0
  %368 = vmatpush1.bf16.msra.mxu0 %v361
  %369 = vmatprep.subr.bf16.mxu0 0
  %370 = vmatpush1.bf16.msra.mxu0 0
  %371 = vmatprep.subr.bf16.mxu0 0
  %372 = vmatpush1.bf16.msra.mxu0 0
  %373 = vmatprep.subr.bf16.mxu0 0
  %374 = vmatpush1.bf16.msra.mxu0 0
  %375 = vmatprep.subr.bf16.mxu0 0
  %376 = vmatpush1.bf16.msra.mxu0 0
  %377 = vmatprep.subr.bf16.mxu0 0
  %378 = vmatpush1.bf16.msra.mxu0 0
  %379 = vmatprep.subr.bf16.mxu0 0
  %380 = vmatpush1.bf16.msra.mxu0 0
  %381 = vmatprep.subr.bf16.mxu0 0
  %382 = vmatpush1.bf16.msra.mxu0 0
  %383 = vmatprep.subr.bf16.mxu0 0
  %384 = vmatpush1.bf16.msra.mxu0 0
  %385 = vmatprep.subr.bf16.mxu0 0
  %386 = vmatpush1.bf16.msra.mxu0 0
  %387 = vmatprep.subr.bf16.mxu0 0
  %388 = vmatpush1.bf16.msra.mxu0 0
  %389 = vmatprep.subr.bf16.mxu0 0
  %390 = vmatpush1.bf16.msra.mxu0 0
  %391 = vmatprep.subr.bf16.mxu0 0
  %392 = vmatpush1.bf16.msra.mxu0 0
  %393 = vmatprep.subr.bf16.mxu0 0
  %394 = vmatpush1.bf16.msra.mxu0 0
  %395 = vmatprep.mubr.bf16.mxu0 0
  %396 = vmatmul.mubr.bf16.gmra.mrb[0].mxu0 %v264
  %v397 = vpop.f32.mrb[0].mxu0
  %v398 = vadd.f32 0.0, %v397
  %v399 = vpop.f32.mrb[0].mxu0
  %v400 = vpop.f32.mrb[0].mxu0
  %v401 = vadd.f32 0.0, %v400
  %v402 = vpop.f32.mrb[0].mxu0
  %403 = vmatprep.mubr.bf16.mxu0 0
  %404 = vmatmul.mubr.bf16.gmra.mrb[0].mxu0 %v267
  %v405 = vpop.f32.mrb[0].mxu0
  %v406 = vadd.f32 0.0, %v405
  %v407 = vpop.f32.mrb[0].mxu0
  %v408 = vpop.f32.mrb[0].mxu0
  %v409 = vadd.f32 0.0, %v408
  %v410 = vpop.f32.mrb[0].mxu0
  %411 = vmatprep.mubr.bf16.mxu0 0
  %412 = vmatmul.mubr.bf16.gmra.mrb[0].mxu0 %v270
  %v413 = vpop.f32.mrb[0].mxu0
  %v414 = vadd.f32 0.0, %v413
  %v415 = vpop.f32.mrb[0].mxu0
  %v416 = vpop.f32.mrb[0].mxu0
  %v417 = vadd.f32 0.0, %v416
  %v418 = vpop.f32.mrb[0].mxu0
  %419 = vmatprep.mubr.bf16.mxu0 0
  %420 = vmatmul.mubr.bf16.gmra.mrb[0].mxu0 %v273
  %v421 = vpop.f32.mrb[0].mxu0
  %v422 = vadd.f32 0.0, %v421
  %v423 = vpop.f32.mrb[0].mxu0
  %v424 = vpop.f32.mrb[0].mxu0
  %v425 = vadd.f32 0.0, %v424
  %v426 = vpop.f32.mrb[0].mxu0
  %427 = vmatprep.mubr.bf16.mxu0 0
  %428 = vmatmul.mubr.bf16.gmra.mrb[0].mxu0 %v276
  %v429 = vpop.f32.mrb[0].mxu0
  %v430 = vadd.f32 0.0, %v429
  %v431 = vpop.f32.mrb[0].mxu0
  %v432 = vpop.f32.mrb[0].mxu0
  %v433 = vadd.f32 0.0, %v432
  %v434 = vpop.f32.mrb[0].mxu0
  %435 = vmatprep.mubr.bf16.mxu0 0
  %436 = vmatmul.mubr.bf16.gmra.mrb[0].mxu0 %v279
  %v437 = vpop.f32.mrb[0].mxu0
  %v438 = vadd.f32 0.0, %v437
  %v439 = vpop.f32.mrb[0].mxu0
  %v440 = vpop.f32.mrb[0].mxu0
  %v441 = vadd.f32 0.0, %v440
  %v442 = vpop.f32.mrb[0].mxu0
  %443 = vmatprep.mubr.bf16.mxu0 0
  %444 = vmatmul.mubr.bf16.gmra.mrb[0].mxu0 %v282
  %v445 = vpop.f32.mrb[0].mxu0
  %v446 = vadd.f32 0.0, %v445
  %v447 = vpop.f32.mrb[0].mxu0
  %v448 = vpop.f32.mrb[0].mxu0
  %v449 = vadd.f32 0.0, %v448
  %v450 = vpop.f32.mrb[0].mxu0
  %451 = vmatprep.mubr.bf16.mxu0 0
  %452 = vmatmul.mubr.bf16.gmra.mrb[0].mxu0 %v285
  %v453 = vpop.f32.mrb[0].mxu0
  %v454 = vadd.f32 0.0, %v453
  %v455 = vpop.f32.mrb[0].mxu0
  %v456 = vpop.f32.mrb[0].mxu0
  %v457 = vadd.f32 0.0, %v456
  %v458 = vpop.f32.mrb[0].mxu0
  %459 = vmatprep.mubr.bf16.mxu0 0
  %460 = vmatmul.mubr.bf16.gmra.mrb[0].mxu0 %v288
  %v461 = vpop.f32.mrb[0].mxu0
  %v462 = vadd.f32 0.0, %v461
  %v463 = vpop.f32.mrb[0].mxu0
  %v464 = vpop.f32.mrb[0].mxu0
  %v465 = vadd.f32 0.0, %v464
  %v466 = vpop.f32.mrb[0].mxu0
  %467 = vmatprep.mubr.bf16.mxu0 0
  %468 = vmatmul.mubr.bf16.gmra.mrb[0].mxu0 %v291
  %v469 = vpop.f32.mrb[0].mxu0
  %v470 = vadd.f32 0.0, %v469
  %v471 = vpop.f32.mrb[0].mxu0
  %v472 = vpop.f32.mrb[0].mxu0
  %v473 = vadd.f32 0.0, %v472
  %v474 = vpop.f32.mrb[0].mxu0
  %475 = vmatprep.mubr.bf16.mxu0 0
  %476 = vmatmul.mubr.bf16.gmra.mrb[0].mxu0 %v294
  %v477 = vpop.f32.mrb[0].mxu0
  %v478 = vadd.f32 0.0, %v477
  %v479 = vpop.f32.mrb[0].mxu0
  %v480 = vpop.f32.mrb[0].mxu0
  %v481 = vadd.f32 0.0, %v480
  %v482 = vpop.f32.mrb[0].mxu0
  %483 = vmatprep.mubr.bf16.mxu0 0
  %484 = vmatmul.mubr.bf16.gmra.mrb[0].mxu0 %v297
  %v485 = vpop.f32.mrb[0].mxu0
  %v486 = vadd.f32 0.0, %v485
  %v487 = vpop.f32.mrb[0].mxu0
  %v488 = vpop.f32.mrb[0].mxu0
  %v489 = vadd.f32 0.0, %v488
  %v490 = vpop.f32.mrb[0].mxu0
  %491 = vmatprep.mubr.bf16.mxu0 0
  %492 = vmatmul.mubr.bf16.gmra.mrb[0].mxu0 %v300
  %v493 = vpop.f32.mrb[0].mxu0
  %v494 = vadd.f32 0.0, %v493
  %v495 = vpop.f32.mrb[0].mxu0
  %v496 = vpop.f32.mrb[0].mxu0
  %v497 = vadd.f32 0.0, %v496
  %v498 = vpop.f32.mrb[0].mxu0
  %499 = vmatprep.mubr.bf16.mxu0 0
  %500 = vmatmul.mubr.bf16.gmra.mrb[0].mxu0 %v303
  %v501 = vpop.f32.mrb[0].mxu0
  %v502 = vadd.f32 0.0, %v501
  %v503 = vpop.f32.mrb[0].mxu0
  %v504 = vpop.f32.mrb[0].mxu0
  %v505 = vadd.f32 0.0, %v504
  %v506 = vpop.f32.mrb[0].mxu0
  %507 = vmatprep.mubr.bf16.mxu0 0
  %508 = vmatmul.mubr.bf16.gmra.mrb[0].mxu0 %v306
  %v509 = vpop.f32.mrb[0].mxu0
  %v510 = vadd.f32 0.0, %v509
  %v511 = vpop.f32.mrb[0].mxu0
  %v512 = vpop.f32.mrb[0].mxu0
  %v513 = vadd.f32 0.0, %v512
  %v514 = vpop.f32.mrb[0].mxu0
  %515 = vmatprep.mubr.bf16.mxu0 0
  %516 = vmatmul.mubr.bf16.gmra.mrb[0].mxu0 %v309
  %v517 = vpop.f32.mrb[0].mxu0
  %v518 = vadd.f32 0.0, %v517
  %v519 = vpop.f32.mrb[0].mxu0
  %v520 = vpop.f32.mrb[0].mxu0
  %v521 = vadd.f32 0.0, %v520
  %v522 = vpop.f32.mrb[0].mxu0
  %523 = vmatprep.mubr.bf16.mxu0 0
  %524 = vmatmul.mubr.bf16.gmra.mrb[0].mxu0 %v312
  %v525 = vpop.f32.mrb[0].mxu0
  %v526 = vadd.f32 0.0, %v525
  %v527 = vpop.f32.mrb[0].mxu0
  %v528 = vpop.f32.mrb[0].mxu0
  %v529 = vadd.f32 0.0, %v528
  %v530 = vpop.f32.mrb[0].mxu0
  %531 = vmatprep.mubr.bf16.mxu0 0
  %532 = vmatmul.mubr.bf16.gmra.mrb[0].mxu0 %v315
  %v533 = vpop.f32.mrb[0].mxu0
  %v534 = vadd.f32 0.0, %v533
  %v535 = vpop.f32.mrb[0].mxu0
  %v536 = vpop.f32.mrb[0].mxu0
  %v537 = vadd.f32 0.0, %v536
  %v538 = vpop.f32.mrb[0].mxu0
  %539 = vmatprep.mubr.bf16.mxu0 0
  %540 = vmatmul.mubr.bf16.gmra.mrb[0].mxu0 %v318
  %v541 = vpop.f32.mrb[0].mxu0
  %v542 = vadd.f32 0.0, %v541
  %v543 = vpop.f32.mrb[0].mxu0
  %v544 = vpop.f32.mrb[0].mxu0
  %v545 = vadd.f32 0.0, %v544
  %v546 = vpop.f32.mrb[0].mxu0
  %547 = vmatprep.mubr.bf16.mxu0 0
  %548 = vmatmul.mubr.bf16.gmra.mrb[0].mxu0 %v321
  %v549 = vpop.f32.mrb[0].mxu0
  %v550 = vadd.f32 0.0, %v549
  %v551 = vpop.f32.mrb[0].mxu0
  %v552 = vpop.f32.mrb[0].mxu0
  %v553 = vadd.f32 0.0, %v552
  %v554 = vpop.f32.mrb[0].mxu0
  %555 = vmatprep.mubr.bf16.mxu0 0
  %556 = vmatmul.mubr.bf16.gmra.mrb[0].mxu0 %v324
  %v557 = vpop.f32.mrb[0].mxu0
  %v558 = vadd.f32 0.0, %v557
  %v559 = vpop.f32.mrb[0].mxu0
  %v560 = vpop.f32.mrb[0].mxu0
  %v561 = vadd.f32 0.0, %v560
  %v562 = vpop.f32.mrb[0].mxu0
  %563 = vmatprep.mubr.bf16.mxu0 0
  %564 = vmatmul.mubr.bf16.gmra.mrb[0].mxu0 %v327
  %v565 = vpop.f32.mrb[0].mxu0
  %v566 = vadd.f32 0.0, %v565
  %v567 = vpop.f32.mrb[0].mxu0
  %v568 = vpop.f32.mrb[0].mxu0
  %v569 = vadd.f32 0.0, %v568
  %v570 = vpop.f32.mrb[0].mxu0
  %571 = vmatprep.mubr.bf16.mxu0 0
  %572 = vmatmul.mubr.bf16.gmra.mrb[0].mxu0 %v330
  %v573 = vpop.f32.mrb[0].mxu0
  %v574 = vadd.f32 0.0, %v573
  %v575 = vpop.f32.mrb[0].mxu0
  %v576 = vpop.f32.mrb[0].mxu0
  %v577 = vadd.f32 0.0, %v576
  %v578 = vpop.f32.mrb[0].mxu0
  %579 = vmatprep.mubr.bf16.mxu0 0
  %580 = vmatmul.mubr.bf16.gmra.mrb[0].mxu0 %v333
  %v581 = vpop.f32.mrb[0].mxu0
  %v582 = vadd.f32 0.0, %v581
  %v583 = vpop.f32.mrb[0].mxu0
  %v584 = vpop.f32.mrb[0].mxu0
  %v585 = vadd.f32 0.0, %v584
  %v586 = vpop.f32.mrb[0].mxu0
  %587 = vmatprep.mubr.bf16.mxu0 0
  %588 = vmatmul.mubr.bf16.gmra.mrb[0].mxu0 %v336
  %v589 = vpop.f32.mrb[0].mxu0
  %v590 = vadd.f32 0.0, %v589
  %v591 = vpop.f32.mrb[0].mxu0
  %v592 = vpop.f32.mrb[0].mxu0
  %v593 = vadd.f32 0.0, %v592
  %v594 = vpop.f32.mrb[0].mxu0
  %595 = vmatprep.mubr.bf16.mxu0 0
  %596 = vmatmul.mubr.bf16.gmra.mrb[0].mxu0 %v339
  %v597 = vpop.f32.mrb[0].mxu0
  %v598 = vadd.f32 0.0, %v597
  %v599 = vpop.f32.mrb[0].mxu0
  %v600 = vpop.f32.mrb[0].mxu0
  %v601 = vadd.f32 0.0, %v600
  %v602 = vpop.f32.mrb[0].mxu0
  %603 = vmatprep.mubr.bf16.mxu0 0
  %604 = vmatmul.mubr.bf16.gmra.mrb[0].mxu0 %v342
  %v605 = vpop.f32.mrb[0].mxu0
  %v606 = vadd.f32 0.0, %v605
  %v607 = vpop.f32.mrb[0].mxu0
  %v608 = vpop.f32.mrb[0].mxu0
  %v609 = vadd.f32 0.0, %v608
  %v610 = vpop.f32.mrb[0].mxu0
  %611 = vmatprep.mubr.bf16.mxu0 0
  %612 = vmatmul.mubr.bf16.gmra.mrb[0].mxu0 %v345
  %v613 = vpop.f32.mrb[0].mxu0
  %v614 = vadd.f32 0.0, %v613
  %v615 = vpop.f32.mrb[0].mxu0
  %v616 = vpop.f32.mrb[0].mxu0
  %v617 = vadd.f32 0.0, %v616
  %v618 = vpop.f32.mrb[0].mxu0
  %619 = vmatprep.mubr.bf16.mxu0 0
  %620 = vmatmul.mubr.bf16.gmra.mrb[0].mxu0 %v348
  %v621 = vpop.f32.mrb[0].mxu0
  %v622 = vadd.f32 0.0, %v621
  %v623 = vpop.f32.mrb[0].mxu0
  %v624 = vpop.f32.mrb[0].mxu0
  %v625 = vadd.f32 0.0, %v624
  %v626 = vpop.f32.mrb[0].mxu0
  %627 = vmatprep.mubr.bf16.mxu0 0
  %628 = vmatmul.mubr.bf16.gmra.mrb[0].mxu0 %v351
  %v629 = vpop.f32.mrb[0].mxu0
  %v630 = vadd.f32 0.0, %v629
  %v631 = vpop.f32.mrb[0].mxu0
  %v632 = vpop.f32.mrb[0].mxu0
  %v633 = vadd.f32 0.0, %v632
  %v634 = vpop.f32.mrb[0].mxu0
  %635 = vmatprep.mubr.bf16.mxu0 0
  %636 = vmatmul.mubr.bf16.gmra.mrb[0].mxu0 %v354
  %v637 = vpop.f32.mrb[0].mxu0
  %v638 = vadd.f32 0.0, %v637
  %v639 = vpop.f32.mrb[0].mxu0
  %v640 = vpop.f32.mrb[0].mxu0
  %v641 = vadd.f32 0.0, %v640
  %v642 = vpop.f32.mrb[0].mxu0
  %643 = vmatprep.mubr.bf16.mxu0 0
  %644 = vmatmul.mubr.bf16.gmra.mrb[0].mxu0 %v357
  %v645 = vpop.f32.mrb[0].mxu0
  %v646 = vadd.f32 0.0, %v645
  %v647 = vpop.f32.mrb[0].mxu0
  %v648 = vpop.f32.mrb[0].mxu0
  %v649 = vadd.f32 0.0, %v648
  %v650 = vpop.f32.mrb[0].mxu0
  %651 = vdwg.mxu0
  %v652 = vld [vmem:[%s2] sm:$0x1]
  %v654 = vlaneseq
  %v655 = vshrl.u32 %v654, 7
  %v656 = vsub.s32 0, %v655
  %v657 = vrot.slane %v652, %v656
  %v659 = vmul.f32 %v398, %v657
  %v660 = vmul.f32 %v401, %v657
  %v661 = vmul.f32 %v406, %v657
  %v662 = vmul.f32 %v409, %v657
  %v663 = vmul.f32 %v414, %v657
  %v664 = vmul.f32 %v417, %v657
  %v665 = vmul.f32 %v422, %v657
  %v666 = vmul.f32 %v425, %v657
  %v667 = vmul.f32 %v430, %v657
  %v668 = vmul.f32 %v433, %v657
  %v669 = vmul.f32 %v438, %v657
  %v670 = vmul.f32 %v441, %v657
  %v671 = vmul.f32 %v446, %v657
  %v672 = vmul.f32 %v449, %v657
  %v673 = vmul.f32 %v454, %v657
  %v674 = vmul.f32 %v457, %v657
  %v675 = vmul.f32 %v462, %v657
  %v676 = vmul.f32 %v465, %v657
  %v677 = vmul.f32 %v470, %v657
  %v678 = vmul.f32 %v473, %v657
  %v679 = vmul.f32 %v478, %v657
  %v680 = vmul.f32 %v481, %v657
  %v681 = vmul.f32 %v486, %v657
  %v682 = vmul.f32 %v489, %v657
  %v683 = vmul.f32 %v494, %v657
  %v684 = vmul.f32 %v497, %v657
  %v685 = vmul.f32 %v502, %v657
  %v686 = vmul.f32 %v505, %v657
  %v687 = vmul.f32 %v510, %v657
  %v688 = vmul.f32 %v513, %v657
  %v689 = vmul.f32 %v518, %v657
  %v690 = vmul.f32 %v521, %v657
  %v691 = vmul.f32 %v526, %v657
  %v692 = vmul.f32 %v529, %v657
  %v693 = vmul.f32 %v534, %v657
  %v694 = vmul.f32 %v537, %v657
  %v695 = vmul.f32 %v542, %v657
  %v696 = vmul.f32 %v545, %v657
  %v697 = vmul.f32 %v550, %v657
  %v698 = vmul.f32 %v553, %v657
  %v699 = vmul.f32 %v558, %v657
  %v700 = vmul.f32 %v561, %v657
  %v701 = vmul.f32 %v566, %v657
  %v702 = vmul.f32 %v569, %v657
  %v703 = vmul.f32 %v574, %v657
  %v704 = vmul.f32 %v577, %v657
  %v705 = vmul.f32 %v582, %v657
  %v706 = vmul.f32 %v585, %v657
  %v707 = vmul.f32 %v590, %v657
  %v708 = vmul.f32 %v593, %v657
  %v709 = vmul.f32 %v598, %v657
  %v710 = vmul.f32 %v601, %v657
  %v711 = vmul.f32 %v606, %v657
  %v712 = vmul.f32 %v609, %v657
  %v713 = vmul.f32 %v614, %v657
  %v714 = vmul.f32 %v617, %v657
  %v715 = vmul.f32 %v622, %v657
  %v716 = vmul.f32 %v625, %v657
  %v717 = vmul.f32 %v630, %v657
  %v718 = vmul.f32 %v633, %v657
  %v719 = vmul.f32 %v638, %v657
  %v720 = vmul.f32 %v641, %v657
  %v721 = vmul.f32 %v646, %v657
  %v722 = vmul.f32 %v649, %v657
  %v723 = vld [vmem:[%s3] sm:$0x1]
  %v725 = vlaneseq
  %v726 = vshrl.u32 %v725, 7
  %v727 = vsub.s32 0, %v726
  %v728 = vrot.slane %v723, %v727
  %v730 = vadd.f32 %v659, %v728
  %v731 = vadd.f32 %v660, %v728
  %v732 = vadd.f32 %v661, %v728
  %v733 = vadd.f32 %v662, %v728
  %v734 = vadd.f32 %v663, %v728
  %v735 = vadd.f32 %v664, %v728
  %v736 = vadd.f32 %v665, %v728
  %v737 = vadd.f32 %v666, %v728
  %v738 = vadd.f32 %v667, %v728
  %v739 = vadd.f32 %v668, %v728
  %v740 = vadd.f32 %v669, %v728
  %v741 = vadd.f32 %v670, %v728
  %v742 = vadd.f32 %v671, %v728
  %v743 = vadd.f32 %v672, %v728
  %v744 = vadd.f32 %v673, %v728
  %v745 = vadd.f32 %v674, %v728
  %v746 = vadd.f32 %v675, %v728
  %v747 = vadd.f32 %v676, %v728
  %v748 = vadd.f32 %v677, %v728
  %v749 = vadd.f32 %v678, %v728
  %v750 = vadd.f32 %v679, %v728
  %v751 = vadd.f32 %v680, %v728
  %v752 = vadd.f32 %v681, %v728
  %v753 = vadd.f32 %v682, %v728
  %v754 = vadd.f32 %v683, %v728
  %v755 = vadd.f32 %v684, %v728
  %v756 = vadd.f32 %v685, %v728
  %v757 = vadd.f32 %v686, %v728
  %v758 = vadd.f32 %v687, %v728
  %v759 = vadd.f32 %v688, %v728
  %v760 = vadd.f32 %v689, %v728
  %v761 = vadd.f32 %v690, %v728
  %v762 = vadd.f32 %v691, %v728
  %v763 = vadd.f32 %v692, %v728
  %v764 = vadd.f32 %v693, %v728
  %v765 = vadd.f32 %v694, %v728
  %v766 = vadd.f32 %v695, %v728
  %v767 = vadd.f32 %v696, %v728
  %v768 = vadd.f32 %v697, %v728
  %v769 = vadd.f32 %v698, %v728
  %v770 = vadd.f32 %v699, %v728
  %v771 = vadd.f32 %v700, %v728
  %v772 = vadd.f32 %v701, %v728
  %v773 = vadd.f32 %v702, %v728
  %v774 = vadd.f32 %v703, %v728
  %v775 = vadd.f32 %v704, %v728
  %v776 = vadd.f32 %v705, %v728
  %v777 = vadd.f32 %v706, %v728
  %v778 = vadd.f32 %v707, %v728
  %v779 = vadd.f32 %v708, %v728
  %v780 = vadd.f32 %v709, %v728
  %v781 = vadd.f32 %v710, %v728
  %v782 = vadd.f32 %v711, %v728
  %v783 = vadd.f32 %v712, %v728
  %v784 = vadd.f32 %v713, %v728
  %v785 = vadd.f32 %v714, %v728
  %v786 = vadd.f32 %v715, %v728
  %v787 = vadd.f32 %v716, %v728
  %v788 = vadd.f32 %v717, %v728
  %v789 = vadd.f32 %v718, %v728
  %v790 = vadd.f32 %v719, %v728
  %v791 = vadd.f32 %v720, %v728
  %v792 = vadd.f32 %v721, %v728
  %v793 = vadd.f32 %v722, %v728
  %v794 = vmax.f32 %v730, 0.0
  %v795 = vmax.f32 %v731, 0.0
  %v796 = vmax.f32 %v732, 0.0
  %v797 = vmax.f32 %v733, 0.0
  %v798 = vmax.f32 %v734, 0.0
  %v799 = vmax.f32 %v735, 0.0
  %v800 = vmax.f32 %v736, 0.0
  %v801 = vmax.f32 %v737, 0.0
  %v802 = vmax.f32 %v738, 0.0
  %v803 = vmax.f32 %v739, 0.0
  %v804 = vmax.f32 %v740, 0.0
  %v805 = vmax.f32 %v741, 0.0
  %v806 = vmax.f32 %v742, 0.0
  %v807 = vmax.f32 %v743, 0.0
  %v808 = vmax.f32 %v744, 0.0
  %v809 = vmax.f32 %v745, 0.0
  %v810 = vmax.f32 %v746, 0.0
  %v811 = vmax.f32 %v747, 0.0
  %v812 = vmax.f32 %v748, 0.0
  %v813 = vmax.f32 %v749, 0.0
  %v814 = vmax.f32 %v750, 0.0
  %v815 = vmax.f32 %v751, 0.0
  %v816 = vmax.f32 %v752, 0.0
  %v817 = vmax.f32 %v753, 0.0
  %v818 = vmax.f32 %v754, 0.0
  %v819 = vmax.f32 %v755, 0.0
  %v820 = vmax.f32 %v756, 0.0
  %v821 = vmax.f32 %v757, 0.0
  %v822 = vmax.f32 %v758, 0.0
  %v823 = vmax.f32 %v759, 0.0
  %v824 = vmax.f32 %v760, 0.0
  %v825 = vmax.f32 %v761, 0.0
  %v826 = vmax.f32 %v762, 0.0
  %v827 = vmax.f32 %v763, 0.0
  %v828 = vmax.f32 %v764, 0.0
  %v829 = vmax.f32 %v765, 0.0
  %v830 = vmax.f32 %v766, 0.0
  %v831 = vmax.f32 %v767, 0.0
  %v832 = vmax.f32 %v768, 0.0
  %v833 = vmax.f32 %v769, 0.0
  %v834 = vmax.f32 %v770, 0.0
  %v835 = vmax.f32 %v771, 0.0
  %v836 = vmax.f32 %v772, 0.0
  %v837 = vmax.f32 %v773, 0.0
  %v838 = vmax.f32 %v774, 0.0
  %v839 = vmax.f32 %v775, 0.0
  %v840 = vmax.f32 %v776, 0.0
  %v841 = vmax.f32 %v777, 0.0
  %v842 = vmax.f32 %v778, 0.0
  %v843 = vmax.f32 %v779, 0.0
  %v844 = vmax.f32 %v780, 0.0
  %v845 = vmax.f32 %v781, 0.0
  %v846 = vmax.f32 %v782, 0.0
  %v847 = vmax.f32 %v783, 0.0
  %v848 = vmax.f32 %v784, 0.0
  %v849 = vmax.f32 %v785, 0.0
  %v850 = vmax.f32 %v786, 0.0
  %v851 = vmax.f32 %v787, 0.0
  %v852 = vmax.f32 %v788, 0.0
  %v853 = vmax.f32 %v789, 0.0
  %v854 = vmax.f32 %v790, 0.0
  %v855 = vmax.f32 %v791, 0.0
  %v856 = vmax.f32 %v792, 0.0
  %v857 = vmax.f32 %v793, 0.0
  %v858 = vpack.c.bf16 %v795, %v794
  %v859 = vpack.c.bf16 %v797, %v796
  %v860 = vpack.c.bf16 %v799, %v798
  %v861 = vpack.c.bf16 %v801, %v800
  %v862 = vpack.c.bf16 %v803, %v802
  %v863 = vpack.c.bf16 %v805, %v804
  %v864 = vpack.c.bf16 %v807, %v806
  %v865 = vpack.c.bf16 %v809, %v808
  %v866 = vpack.c.bf16 %v811, %v810
  %v867 = vpack.c.bf16 %v813, %v812
  %v868 = vpack.c.bf16 %v815, %v814
  %v869 = vpack.c.bf16 %v817, %v816
  %v870 = vpack.c.bf16 %v819, %v818
  %v871 = vpack.c.bf16 %v821, %v820
  %v872 = vpack.c.bf16 %v823, %v822
  %v873 = vpack.c.bf16 %v825, %v824
  %v874 = vpack.c.bf16 %v827, %v826
  %v875 = vpack.c.bf16 %v829, %v828
  %v876 = vpack.c.bf16 %v831, %v830
  %v877 = vpack.c.bf16 %v833, %v832
  %v878 = vpack.c.bf16 %v835, %v834
  %v879 = vpack.c.bf16 %v837, %v836
  %v880 = vpack.c.bf16 %v839, %v838
  %v881 = vpack.c.bf16 %v841, %v840
  %v882 = vpack.c.bf16 %v843, %v842
  %v883 = vpack.c.bf16 %v845, %v844
  %v884 = vpack.c.bf16 %v847, %v846
  %v885 = vpack.c.bf16 %v849, %v848
  %v886 = vpack.c.bf16 %v851, %v850
  %v887 = vpack.c.bf16 %v853, %v852
  %v888 = vpack.c.bf16 %v855, %v854
  %v889 = vpack.c.bf16 %v857, %v856
  %v922 = vunpack.c.l.b16 %v858
  %v923 = vunpack.c.h.b16 %v858
  %v924 = vunpack.c.l.b16 %v859
  %v925 = vunpack.c.h.b16 %v859
  %v926 = vunpack.c.l.b16 %v860
  %v927 = vunpack.c.h.b16 %v860
  %v928 = vunpack.c.l.b16 %v861
  %v929 = vunpack.c.h.b16 %v861
  %v930 = vunpack.c.l.b16 %v862
  %v931 = vunpack.c.h.b16 %v862
  %v932 = vunpack.c.l.b16 %v863
  %v933 = vunpack.c.h.b16 %v863
  %v934 = vunpack.c.l.b16 %v864
  %v935 = vunpack.c.h.b16 %v864
  %v936 = vunpack.c.l.b16 %v865
  %v937 = vunpack.c.h.b16 %v865
  %v938 = vunpack.c.l.b16 %v866
  %v939 = vunpack.c.h.b16 %v866
  %v940 = vunpack.c.l.b16 %v867
  %v941 = vunpack.c.h.b16 %v867
  %v942 = vunpack.c.l.b16 %v868
  %v943 = vunpack.c.h.b16 %v868
  %v944 = vunpack.c.l.b16 %v869
  %v945 = vunpack.c.h.b16 %v869
  %v946 = vunpack.c.l.b16 %v870
  %v947 = vunpack.c.h.b16 %v870
  %v948 = vunpack.c.l.b16 %v871
  %v949 = vunpack.c.h.b16 %v871
  %v950 = vunpack.c.l.b16 %v872
  %v951 = vunpack.c.h.b16 %v872
  %v952 = vunpack.c.l.b16 %v873
  %v953 = vunpack.c.h.b16 %v873
  %v954 = vunpack.c.l.b16 %v874
  %v955 = vunpack.c.h.b16 %v874
  %v956 = vunpack.c.l.b16 %v875
  %v957 = vunpack.c.h.b16 %v875
  %v958 = vunpack.c.l.b16 %v876
  %v959 = vunpack.c.h.b16 %v876
  %v960 = vunpack.c.l.b16 %v877
  %v961 = vunpack.c.h.b16 %v877
  %v962 = vunpack.c.l.b16 %v878
  %v963 = vunpack.c.h.b16 %v878
  %v964 = vunpack.c.l.b16 %v879
  %v965 = vunpack.c.h.b16 %v879
  %v966 = vunpack.c.l.b16 %v880
  %v967 = vunpack.c.h.b16 %v880
  %v968 = vunpack.c.l.b16 %v881
  %v969 = vunpack.c.h.b16 %v881
  %v970 = vunpack.c.l.b16 %v882
  %v971 = vunpack.c.h.b16 %v882
  %v972 = vunpack.c.l.b16 %v883
  %v973 = vunpack.c.h.b16 %v883
  %v974 = vunpack.c.l.b16 %v884
  %v975 = vunpack.c.h.b16 %v884
  %v976 = vunpack.c.l.b16 %v885
  %v977 = vunpack.c.h.b16 %v885
  %v978 = vunpack.c.l.b16 %v886
  %v979 = vunpack.c.h.b16 %v886
  %v980 = vunpack.c.l.b16 %v887
  %v981 = vunpack.c.h.b16 %v887
  %v982 = vunpack.c.l.b16 %v888
  %v983 = vunpack.c.h.b16 %v888
  %v984 = vunpack.c.l.b16 %v889
  %v985 = vunpack.c.h.b16 %v889
  %v986 = vpack.c.b16 %v922, %v922
  %v987 = vpack.c.b16 %v923, %v923
  %v988 = vpack.c.b16 %v924, %v924
  %v989 = vpack.c.b16 %v925, %v925
  %v990 = vpack.c.b16 %v926, %v926
  %v991 = vpack.c.b16 %v927, %v927
  %v992 = vpack.c.b16 %v928, %v928
  %v993 = vpack.c.b16 %v929, %v929
  %v994 = vpack.c.b16 %v930, %v930
  %v995 = vpack.c.b16 %v931, %v931
  %v996 = vpack.c.b16 %v932, %v932
  %v997 = vpack.c.b16 %v933, %v933
  %v998 = vpack.c.b16 %v934, %v934
  %v999 = vpack.c.b16 %v935, %v935
  %v1000 = vpack.c.b16 %v936, %v936
  %v1001 = vpack.c.b16 %v937, %v937
  %v1002 = vpack.c.b16 %v938, %v938
  %v1003 = vpack.c.b16 %v939, %v939
  %v1004 = vpack.c.b16 %v940, %v940
  %v1005 = vpack.c.b16 %v941, %v941
  %v1006 = vpack.c.b16 %v942, %v942
  %v1007 = vpack.c.b16 %v943, %v943
  %v1008 = vpack.c.b16 %v944, %v944
  %v1009 = vpack.c.b16 %v945, %v945
  %v1010 = vpack.c.b16 %v946, %v946
  %v1011 = vpack.c.b16 %v947, %v947
  %v1012 = vpack.c.b16 %v948, %v948
  %v1013 = vpack.c.b16 %v949, %v949
  %v1014 = vpack.c.b16 %v950, %v950
  %v1015 = vpack.c.b16 %v951, %v951
  %v1016 = vpack.c.b16 %v952, %v952
  %v1017 = vpack.c.b16 %v953, %v953
  %v1018 = vpack.c.b16 %v954, %v954
  %v1019 = vpack.c.b16 %v955, %v955
  %v1020 = vpack.c.b16 %v956, %v956
  %v1021 = vpack.c.b16 %v957, %v957
  %v1022 = vpack.c.b16 %v958, %v958
  %v1023 = vpack.c.b16 %v959, %v959
  %v1024 = vpack.c.b16 %v960, %v960
  %v1025 = vpack.c.b16 %v961, %v961
  %v1026 = vpack.c.b16 %v962, %v962
  %v1027 = vpack.c.b16 %v963, %v963
  %v1028 = vpack.c.b16 %v964, %v964
  %v1029 = vpack.c.b16 %v965, %v965
  %v1030 = vpack.c.b16 %v966, %v966
  %v1031 = vpack.c.b16 %v967, %v967
  %v1032 = vpack.c.b16 %v968, %v968
  %v1033 = vpack.c.b16 %v969, %v969
  %v1034 = vpack.c.b16 %v970, %v970
  %v1035 = vpack.c.b16 %v971, %v971
  %v1036 = vpack.c.b16 %v972, %v972
  %v1037 = vpack.c.b16 %v973, %v973
  %v1038 = vpack.c.b16 %v974, %v974
  %v1039 = vpack.c.b16 %v975, %v975
  %v1040 = vpack.c.b16 %v976, %v976
  %v1041 = vpack.c.b16 %v977, %v977
  %v1042 = vpack.c.b16 %v978, %v978
  %v1043 = vpack.c.b16 %v979, %v979
  %v1044 = vpack.c.b16 %v980, %v980
  %v1045 = vpack.c.b16 %v981, %v981
  %v1046 = vpack.c.b16 %v982, %v982
  %v1047 = vpack.c.b16 %v983, %v983
  %v1048 = vpack.c.b16 %v984, %v984
  %v1049 = vpack.c.b16 %v985, %v985
  %1114 = vst [vmem:[%s4] sm:$0xf] %v986
  %1115 = vst [vmem:[%s4 + $0x4] sm:$0xf] %v987
  %1116 = vst [vmem:[%s4 + $0x8] sm:$0xf] %v988
  %1117 = vst [vmem:[%s4 + $0xc] sm:$0xf] %v989
  %1118 = vst [vmem:[%s4 + $0x10] sm:$0xf] %v990
  %1119 = vst [vmem:[%s4 + $0x14] sm:$0xf] %v991
  %1120 = vst [vmem:[%s4 + $0x18] sm:$0xf] %v992
  %1121 = vst [vmem:[%s4 + $0x1c] sm:$0xf] %v993
  %1122 = vst [vmem:[%s4 + $0x20] sm:$0xf] %v994
  %1123 = vst [vmem:[%s4 + $0x24] sm:$0xf] %v995
  %1124 = vst [vmem:[%s4 + $0x28] sm:$0xf] %v996
  %1125 = vst [vmem:[%s4 + $0x2c] sm:$0xf] %v997
  %1126 = vst [vmem:[%s4 + $0x30] sm:$0xf] %v998
  %1127 = vst [vmem:[%s4 + $0x34] sm:$0xf] %v999
  %1128 = vst [vmem:[%s4 + $0x38] sm:$0xf] %v1000
  %1129 = vst [vmem:[%s4 + $0x3c] sm:$0xf] %v1001
  %1130 = vst [vmem:[%s4 + $0x40] sm:$0xf] %v1002
  %1131 = vst [vmem:[%s4 + $0x44] sm:$0xf] %v1003
  %1132 = vst [vmem:[%s4 + $0x48] sm:$0xf] %v1004
  %1133 = vst [vmem:[%s4 + $0x4c] sm:$0xf] %v1005
  %1134 = vst [vmem:[%s4 + $0x50] sm:$0xf] %v1006
  %1135 = vst [vmem:[%s4 + $0x54] sm:$0xf] %v1007
  %1136 = vst [vmem:[%s4 + $0x58] sm:$0xf] %v1008
  %1137 = vst [vmem:[%s4 + $0x5c] sm:$0xf] %v1009
  %1138 = vst [vmem:[%s4 + $0x60] sm:$0xf] %v1010
  %1139 = vst [vmem:[%s4 + $0x64] sm:$0xf] %v1011
  %1140 = vst [vmem:[%s4 + $0x68] sm:$0xf] %v1012
  %1141 = vst [vmem:[%s4 + $0x6c] sm:$0xf] %v1013
  %1142 = vst [vmem:[%s4 + $0x70] sm:$0xf] %v1014
  %1143 = vst [vmem:[%s4 + $0x74] sm:$0xf] %v1015
  %1144 = vst [vmem:[%s4 + $0x78] sm:$0xf] %v1016
  %1145 = vst [vmem:[%s4 + $0x7c] sm:$0xf] %v1017
  %1146 = vst [vmem:[%s4 + $0x80] sm:$0xf] %v1018
  %1147 = vst [vmem:[%s4 + $0x84] sm:$0xf] %v1019
  %1148 = vst [vmem:[%s4 + $0x88] sm:$0xf] %v1020
  %1149 = vst [vmem:[%s4 + $0x8c] sm:$0xf] %v1021
  %1150 = vst [vmem:[%s4 + $0x90] sm:$0xf] %v1022
  %1151 = vst [vmem:[%s4 + $0x94] sm:$0xf] %v1023
  %1152 = vst [vmem:[%s4 + $0x98] sm:$0xf] %v1024
  %1153 = vst [vmem:[%s4 + $0x9c] sm:$0xf] %v1025
  %1154 = vst [vmem:[%s4 + $0xa0] sm:$0xf] %v1026
  %1155 = vst [vmem:[%s4 + $0xa4] sm:$0xf] %v1027
  %1156 = vst [vmem:[%s4 + $0xa8] sm:$0xf] %v1028
  %1157 = vst [vmem:[%s4 + $0xac] sm:$0xf] %v1029
  %1158 = vst [vmem:[%s4 + $0xb0] sm:$0xf] %v1030
  %1159 = vst [vmem:[%s4 + $0xb4] sm:$0xf] %v1031
  %1160 = vst [vmem:[%s4 + $0xb8] sm:$0xf] %v1032
  %1161 = vst [vmem:[%s4 + $0xbc] sm:$0xf] %v1033
  %1162 = vst [vmem:[%s4 + $0xc0] sm:$0xf] %v1034
  %1163 = vst [vmem:[%s4 + $0xc4] sm:$0xf] %v1035
  %1164 = vst [vmem:[%s4 + $0xc8] sm:$0xf] %v1036
  %1165 = vst [vmem:[%s4 + $0xcc] sm:$0xf] %v1037
  %1166 = vst [vmem:[%s4 + $0xd0] sm:$0xf] %v1038
  %1167 = vst [vmem:[%s4 + $0xd4] sm:$0xf] %v1039
  %1168 = vst [vmem:[%s4 + $0xd8] sm:$0xf] %v1040
  %1169 = vst [vmem:[%s4 + $0xdc] sm:$0xf] %v1041
  %1170 = vst [vmem:[%s4 + $0xe0] sm:$0xf] %v1042
  %1171 = vst [vmem:[%s4 + $0xe4] sm:$0xf] %v1043
  %1172 = vst [vmem:[%s4 + $0xe8] sm:$0xf] %v1044
  %1173 = vst [vmem:[%s4 + $0xec] sm:$0xf] %v1045
  %1174 = vst [vmem:[%s4 + $0xf0] sm:$0xf] %v1046
  %1175 = vst [vmem:[%s4 + $0xf4] sm:$0xf] %v1047
  %1176 = vst [vmem:[%s4 + $0xf8] sm:$0xf] %v1048
  %1177 = vst [vmem:[%s4 + $0xfc] sm:$0xf] %v1049
  // Predicated region
  $region18: #{vggnet_forward.18} parent=0 // pred_check
    _
  $region19: #{vggnet_forward.18} parent=0 // pred_check_branch
    %1179 = sbr.rel (0) target = $region21
  $region20: #{vggnet_forward.18} parent=0 // pred_region
    _
  $region21: #{vggnet_forward.18} parent=0 // pred_fallthru
    _
  // Predicated region
  $region22: #{vggnet_forward.18} parent=0 // pred_check
    _
  $region23: #{vggnet_forward.18} parent=0 // pred_check_branch
    %1181 = sbr.rel (0) target = $region25
  $region24: #{vggnet_forward.18} parent=0 // pred_region
    _
  $region25: #{vggnet_forward.18} parent=0 // pred_fallthru
    _

// kernel: vggnet_forward.19
$region0: #{vggnet_forward.19}
  #allocation0 [shape = 'u32[]', space=smem, size = 0x4, offset = 0x4, fixed_abs, tag = 'smem constant byte address 0x4 - core index']
  #allocation1 [shape = 'u32[144,128]{1,0:T(1,128)}', space=vmem, size = 0x12000, scoped, tag = 'internal scratch']
  %s0 = inlined_call_operand.vmem [shape: bf16[4,128,72], index: 0, kind: input, shape index: {}]
  %s1 = inlined_call_operand.vmem [shape: bf16[72,128], index: 1, kind: input, shape index: {}]
  %s2 = inlined_call_operand.vmem [shape: f32[1,128], index: 2, kind: input, shape index: {}]
  %s3 = inlined_call_operand.vmem [shape: f32[1,128], index: 3, kind: input, shape index: {}]
  %s4 = inlined_call_operand.vmem [shape: bf16[128,128], index: 4, kind: output, shape index: {}]
  %s5 = sld [smem:[#allocation0]]
  $region26: #{vggnet_forward.19} parent=0
    _
  %s7 = ssub.s32 1, %s5
  %s8 = scalar_select 0, %s7, %s5
  // Predicated region
  $region2: #{vggnet_forward.19} parent=0 // pred_check
    _
  $region3: #{vggnet_forward.19} parent=0 // pred_check_branch
    %10 = sbr.rel (0) target = $region5
  $region4: #{vggnet_forward.19} parent=0 // pred_region
    _
  $region5: #{vggnet_forward.19} parent=0 // pred_fallthru
    _
  // Predicated region
  $region6: #{vggnet_forward.19} parent=0 // pred_check
    _
  $region7: #{vggnet_forward.19} parent=0 // pred_check_branch
    %12 = sbr.rel (0) target = $region9
  $region8: #{vggnet_forward.19} parent=0 // pred_region
    _
  $region9: #{vggnet_forward.19} parent=0 // pred_fallthru
    _
  // Predicated region
  $region10: #{vggnet_forward.19} parent=0 // pred_check
    _
  $region11: #{vggnet_forward.19} parent=0 // pred_check_branch
    %14 = sbr.rel (0) target = $region13
  $region12: #{vggnet_forward.19} parent=0 // pred_region
    _
  $region13: #{vggnet_forward.19} parent=0 // pred_fallthru
    _
  // Predicated region
  $region14: #{vggnet_forward.19} parent=0 // pred_check
    _
  $region15: #{vggnet_forward.19} parent=0 // pred_check_branch
    %16 = sbr.rel (0) target = $region17
  $region16: #{vggnet_forward.19} parent=0 // pred_region
    _
  $region17: #{vggnet_forward.19} parent=0 // pred_fallthru
    _
  %v18 = vld [vmem:[%s1] sm:$0xf]
  %v19 = vld [vmem:[%s1 + $0x4] sm:$0xf]
  %v20 = vld [vmem:[%s1 + $0x8] sm:$0xf]
  %v21 = vld [vmem:[%s1 + $0xc] sm:$0xf]
  %v22 = vld [vmem:[%s1 + $0x10] sm:$0xf]
  %v23 = vld [vmem:[%s1 + $0x14] sm:$0xf]
  %v24 = vld [vmem:[%s1 + $0x18] sm:$0xf]
  %v25 = vld [vmem:[%s1 + $0x1c] sm:$0xf]
  %v26 = vld [vmem:[%s1 + $0x20] sm:$0xf]
  %v27 = vld [vmem:[%s2] sm:$0x1]
  %v28 = vld [vmem:[%s3] sm:$0x1]
  %v29 = vld [vmem:[%s0] sm:$0xf]
  %v30 = vld [vmem:[%s0 + $0x4] sm:$0xf]
  %v31 = vld [vmem:[%s0 + $0x8] sm:$0xf]
  %v32 = vld [vmem:[%s0 + $0xc] sm:$0xf]
  %v33 = vld [vmem:[%s0 + $0x10] sm:$0xf]
  %v34 = vld [vmem:[%s0 + $0x14] sm:$0xf]
  %v35 = vld [vmem:[%s0 + $0x18] sm:$0xf]
  %v36 = vld [vmem:[%s0 + $0x1c] sm:$0xf]
  %v37 = vld [vmem:[%s0 + $0x20] sm:$0xf]
  %v38 = vld [vmem:[%s0 + $0x24] sm:$0xf]
  %v39 = vld [vmem:[%s0 + $0x28] sm:$0xf]
  %v40 = vld [vmem:[%s0 + $0x2c] sm:$0xf]
  %v41 = vld [vmem:[%s0 + $0x30] sm:$0xf]
  %v42 = vld [vmem:[%s0 + $0x34] sm:$0xf]
  %v43 = vld [vmem:[%s0 + $0x38] sm:$0xf]
  %v44 = vld [vmem:[%s0 + $0x3c] sm:$0xf]
  %v61 = vunpack.c.l.b16 %v29
  %v62 = vunpack.c.l.b16 %v30
  %v63 = vunpack.c.l.b16 %v31
  %v64 = vunpack.c.l.b16 %v32
  %v65 = vunpack.c.l.b16 %v33
  %v66 = vunpack.c.l.b16 %v34
  %v67 = vunpack.c.l.b16 %v35
  %v68 = vunpack.c.l.b16 %v36
  %v69 = vunpack.c.l.b16 %v37
  %v70 = vunpack.c.l.b16 %v38
  %v71 = vunpack.c.l.b16 %v39
  %v72 = vunpack.c.l.b16 %v40
  %v73 = vunpack.c.l.b16 %v41
  %v74 = vunpack.c.l.b16 %v42
  %v75 = vunpack.c.l.b16 %v43
  %v76 = vunpack.c.l.b16 %v44
  %v77 = vpack.c.b16 %v62, %v61
  %v78 = vpack.c.b16 %v64, %v63
  %v79 = vpack.c.b16 %v66, %v65
  %v80 = vpack.c.b16 %v68, %v67
  %v81 = vpack.c.b16 %v70, %v69
  %v82 = vpack.c.b16 %v72, %v71
  %v83 = vpack.c.b16 %v74, %v73
  %v84 = vpack.c.b16 %v76, %v75
  %v94 = vunpack.c.l.b16 %v18
  %v95 = vunpack.c.l.b16 %v19
  %v96 = vunpack.c.l.b16 %v20
  %v97 = vunpack.c.l.b16 %v21
  %v98 = vunpack.c.l.b16 %v22
  %v99 = vunpack.c.l.b16 %v23
  %v100 = vunpack.c.l.b16 %v24
  %v101 = vunpack.c.l.b16 %v25
  %v102 = vunpack.c.l.b16 %v26
  %v103 = vpack.c.b16 %v95, %v94
  %v104 = vpack.c.b16 %v97, %v96
  %v105 = vpack.c.b16 %v99, %v98
  %v106 = vpack.c.b16 %v101, %v100
  %v107 = vpack.c.b16 %v102, %v102
  %vm112 = vcmask 588800
  %v114 = vsel %vm112, %v77, 0
  %v117 = vsel %vm112, %v78, 0
  %v120 = vsel %vm112, %v79, 0
  %v123 = vsel %vm112, %v80, 0
  %v126 = vsel %vm112, %v81, 0
  %v129 = vsel %vm112, %v82, 0
  %v132 = vsel %vm112, %v83, 0
  %v135 = vsel %vm112, %v84, 0
  %vm137 = vcmask 1043456
  %v139 = vsel %vm137, %v107, 0
  %141 = vmatprep.subr.bf16.mxu0 0
  %142 = vmatpush1.bf16.msra.mxu0 %v103
  %143 = vmatprep.subr.bf16.mxu0 0
  %144 = vmatpush1.bf16.msra.mxu0 %v104
  %145 = vmatprep.subr.bf16.mxu0 0
  %146 = vmatpush1.bf16.msra.mxu0 %v105
  %147 = vmatprep.subr.bf16.mxu0 0
  %148 = vmatpush1.bf16.msra.mxu0 %v106
  %149 = vmatprep.subr.bf16.mxu0 0
  %150 = vmatpush1.bf16.msra.mxu0 %v139
  %151 = vmatprep.subr.bf16.mxu0 0
  %152 = vmatpush1.bf16.msra.mxu0 0
  %153 = vmatprep.subr.bf16.mxu0 0
  %154 = vmatpush1.bf16.msra.mxu0 0
  %155 = vmatprep.subr.bf16.mxu0 0
  %156 = vmatpush1.bf16.msra.mxu0 0
  %157 = vmatprep.subr.bf16.mxu0 0
  %158 = vmatpush1.bf16.msra.mxu0 0
  %159 = vmatprep.subr.bf16.mxu0 0
  %160 = vmatpush1.bf16.msra.mxu0 0
  %161 = vmatprep.subr.bf16.mxu0 0
  %162 = vmatpush1.bf16.msra.mxu0 0
  %163 = vmatprep.subr.bf16.mxu0 0
  %164 = vmatpush1.bf16.msra.mxu0 0
  %165 = vmatprep.subr.bf16.mxu0 0
  %166 = vmatpush1.bf16.msra.mxu0 0
  %167 = vmatprep.subr.bf16.mxu0 0
  %168 = vmatpush1.bf16.msra.mxu0 0
  %169 = vmatprep.subr.bf16.mxu0 0
  %170 = vmatpush1.bf16.msra.mxu0 0
  %171 = vmatprep.subr.bf16.mxu0 0
  %172 = vmatpush1.bf16.msra.mxu0 0
  %173 = vmatprep.mubr.bf16.mxu0 0
  %174 = vmatmul.mubr.bf16.gmra.mrb[0].mxu0 %v114
  %v175 = vpop.f32.mrb[0].mxu0
  %v176 = vadd.f32 0.0, %v175
  %v177 = vpop.f32.mrb[0].mxu0
  %v178 = vpop.f32.mrb[0].mxu0
  %v179 = vadd.f32 0.0, %v178
  %v180 = vpop.f32.mrb[0].mxu0
  %181 = vmatprep.mubr.bf16.mxu0 0
  %182 = vmatmul.mubr.bf16.gmra.mrb[0].mxu0 %v117
  %v183 = vpop.f32.mrb[0].mxu0
  %v184 = vadd.f32 0.0, %v183
  %v185 = vpop.f32.mrb[0].mxu0
  %v186 = vpop.f32.mrb[0].mxu0
  %v187 = vadd.f32 0.0, %v186
  %v188 = vpop.f32.mrb[0].mxu0
  %189 = vmatprep.mubr.bf16.mxu0 0
  %190 = vmatmul.mubr.bf16.gmra.mrb[0].mxu0 %v120
  %v191 = vpop.f32.mrb[0].mxu0
  %v192 = vadd.f32 0.0, %v191
  %v193 = vpop.f32.mrb[0].mxu0
  %v194 = vpop.f32.mrb[0].mxu0
  %v195 = vadd.f32 0.0, %v194
  %v196 = vpop.f32.mrb[0].mxu0
  %197 = vmatprep.mubr.bf16.mxu0 0
  %198 = vmatmul.mubr.bf16.gmra.mrb[0].mxu0 %v123
  %v199 = vpop.f32.mrb[0].mxu0
  %v200 = vadd.f32 0.0, %v199
  %v201 = vpop.f32.mrb[0].mxu0
  %v202 = vpop.f32.mrb[0].mxu0
  %v203 = vadd.f32 0.0, %v202
  %v204 = vpop.f32.mrb[0].mxu0
  %205 = vmatprep.mubr.bf16.mxu0 0
  %206 = vmatmul.mubr.bf16.gmra.mrb[0].mxu0 %v126
  %v207 = vpop.f32.mrb[0].mxu0
  %v208 = vadd.f32 0.0, %v207
  %v209 = vpop.f32.mrb[0].mxu0
  %v210 = vpop.f32.mrb[0].mxu0
  %v211 = vadd.f32 0.0, %v210
  %v212 = vpop.f32.mrb[0].mxu0
  %213 = vmatprep.mubr.bf16.mxu0 0
  %214 = vmatmul.mubr.bf16.gmra.mrb[0].mxu0 %v129
  %v215 = vpop.f32.mrb[0].mxu0
  %v216 = vadd.f32 0.0, %v215
  %v217 = vpop.f32.mrb[0].mxu0
  %v218 = vpop.f32.mrb[0].mxu0
  %v219 = vadd.f32 0.0, %v218
  %v220 = vpop.f32.mrb[0].mxu0
  %221 = vmatprep.mubr.bf16.mxu0 0
  %222 = vmatmul.mubr.bf16.gmra.mrb[0].mxu0 %v132
  %v223 = vpop.f32.mrb[0].mxu0
  %v224 = vadd.f32 0.0, %v223
  %v225 = vpop.f32.mrb[0].mxu0
  %v226 = vpop.f32.mrb[0].mxu0
  %v227 = vadd.f32 0.0, %v226
  %v228 = vpop.f32.mrb[0].mxu0
  %229 = vmatprep.mubr.bf16.mxu0 0
  %230 = vmatmul.mubr.bf16.gmra.mrb[0].mxu0 %v135
  %v231 = vpop.f32.mrb[0].mxu0
  %v232 = vadd.f32 0.0, %v231
  %v233 = vpop.f32.mrb[0].mxu0
  %v234 = vpop.f32.mrb[0].mxu0
  %v235 = vadd.f32 0.0, %v234
  %v236 = vpop.f32.mrb[0].mxu0
  %237 = vdwg.mxu0
  %v239 = vlaneseq
  %v240 = vshrl.u32 %v239, 7
  %v241 = vsub.s32 0, %v240
  %v242 = vrot.slane %v27, %v241
  %v244 = vmul.f32 %v176, %v242
  %v245 = vmul.f32 %v179, %v242
  %v246 = vmul.f32 %v184, %v242
  %v247 = vmul.f32 %v187, %v242
  %v248 = vmul.f32 %v192, %v242
  %v249 = vmul.f32 %v195, %v242
  %v250 = vmul.f32 %v200, %v242
  %v251 = vmul.f32 %v203, %v242
  %v252 = vmul.f32 %v208, %v242
  %v253 = vmul.f32 %v211, %v242
  %v254 = vmul.f32 %v216, %v242
  %v255 = vmul.f32 %v219, %v242
  %v256 = vmul.f32 %v224, %v242
  %v257 = vmul.f32 %v227, %v242
  %v258 = vmul.f32 %v232, %v242
  %v259 = vmul.f32 %v235, %v242
  %v261 = vlaneseq
  %v262 = vshrl.u32 %v261, 7
  %v263 = vsub.s32 0, %v262
  %v264 = vrot.slane %v28, %v263
  %v266 = vadd.f32 %v244, %v264
  %v267 = vadd.f32 %v245, %v264
  %v268 = vadd.f32 %v246, %v264
  %v269 = vadd.f32 %v247, %v264
  %v270 = vadd.f32 %v248, %v264
  %v271 = vadd.f32 %v249, %v264
  %v272 = vadd.f32 %v250, %v264
  %v273 = vadd.f32 %v251, %v264
  %v274 = vadd.f32 %v252, %v264
  %v275 = vadd.f32 %v253, %v264
  %v276 = vadd.f32 %v254, %v264
  %v277 = vadd.f32 %v255, %v264
  %v278 = vadd.f32 %v256, %v264
  %v279 = vadd.f32 %v257, %v264
  %v280 = vadd.f32 %v258, %v264
  %v281 = vadd.f32 %v259, %v264
  %v282 = vmax.f32 %v266, 0.0
  %v283 = vmax.f32 %v267, 0.0
  %v284 = vmax.f32 %v268, 0.0
  %v285 = vmax.f32 %v269, 0.0
  %v286 = vmax.f32 %v270, 0.0
  %v287 = vmax.f32 %v271, 0.0
  %v288 = vmax.f32 %v272, 0.0
  %v289 = vmax.f32 %v273, 0.0
  %v290 = vmax.f32 %v274, 0.0
  %v291 = vmax.f32 %v275, 0.0
  %v292 = vmax.f32 %v276, 0.0
  %v293 = vmax.f32 %v277, 0.0
  %v294 = vmax.f32 %v278, 0.0
  %v295 = vmax.f32 %v279, 0.0
  %v296 = vmax.f32 %v280, 0.0
  %v297 = vmax.f32 %v281, 0.0
  %s298 = scalar_lea.vmem %s0, 64
  %v299 = vld [vmem:[%s298] sm:$0xf]
  %v300 = vld [vmem:[%s298 + $0x4] sm:$0xf]
  %v301 = vld [vmem:[%s298 + $0x8] sm:$0xf]
  %v302 = vld [vmem:[%s298 + $0xc] sm:$0xf]
  %v303 = vld [vmem:[%s298 + $0x10] sm:$0xf]
  %v304 = vld [vmem:[%s298 + $0x14] sm:$0xf]
  %v305 = vld [vmem:[%s298 + $0x18] sm:$0xf]
  %v306 = vld [vmem:[%s298 + $0x1c] sm:$0xf]
  %v307 = vld [vmem:[%s298 + $0x20] sm:$0xf]
  %v308 = vld [vmem:[%s298 + $0x24] sm:$0xf]
  %v309 = vld [vmem:[%s298 + $0x28] sm:$0xf]
  %v310 = vld [vmem:[%s298 + $0x2c] sm:$0xf]
  %v311 = vld [vmem:[%s298 + $0x30] sm:$0xf]
  %v312 = vld [vmem:[%s298 + $0x34] sm:$0xf]
  %v313 = vld [vmem:[%s298 + $0x38] sm:$0xf]
  %v314 = vld [vmem:[%s298 + $0x3c] sm:$0xf]
  %v331 = vunpack.c.l.b16 %v299
  %v332 = vunpack.c.l.b16 %v300
  %v333 = vunpack.c.l.b16 %v301
  %v334 = vunpack.c.l.b16 %v302
  %v335 = vunpack.c.l.b16 %v303
  %v336 = vunpack.c.l.b16 %v304
  %v337 = vunpack.c.l.b16 %v305
  %v338 = vunpack.c.l.b16 %v306
  %v339 = vunpack.c.l.b16 %v307
  %v340 = vunpack.c.l.b16 %v308
  %v341 = vunpack.c.l.b16 %v309
  %v342 = vunpack.c.l.b16 %v310
  %v343 = vunpack.c.l.b16 %v311
  %v344 = vunpack.c.l.b16 %v312
  %v345 = vunpack.c.l.b16 %v313
  %v346 = vunpack.c.l.b16 %v314
  %v347 = vpack.c.b16 %v332, %v331
  %v348 = vpack.c.b16 %v334, %v333
  %v349 = vpack.c.b16 %v336, %v335
  %v350 = vpack.c.b16 %v338, %v337
  %v351 = vpack.c.b16 %v340, %v339
  %v352 = vpack.c.b16 %v342, %v341
  %v353 = vpack.c.b16 %v344, %v343
  %v354 = vpack.c.b16 %v346, %v345
  %v356 = vsel %vm112, %v347, 0
  %v359 = vsel %vm112, %v348, 0
  %v362 = vsel %vm112, %v349, 0
  %v365 = vsel %vm112, %v350, 0
  %v368 = vsel %vm112, %v351, 0
  %v371 = vsel %vm112, %v352, 0
  %v374 = vsel %vm112, %v353, 0
  %v377 = vsel %vm112, %v354, 0
  %379 = vmatprep.subr.bf16.mxu0 0
  %380 = vmatpush1.bf16.msra.mxu0 %v103
  %381 = vmatprep.subr.bf16.mxu0 0
  %382 = vmatpush1.bf16.msra.mxu0 %v104
  %383 = vmatprep.subr.bf16.mxu0 0
  %384 = vmatpush1.bf16.msra.mxu0 %v105
  %385 = vmatprep.subr.bf16.mxu0 0
  %386 = vmatpush1.bf16.msra.mxu0 %v106
  %387 = vmatprep.subr.bf16.mxu0 0
  %388 = vmatpush1.bf16.msra.mxu0 %v139
  %389 = vmatprep.subr.bf16.mxu0 0
  %390 = vmatpush1.bf16.msra.mxu0 0
  %391 = vmatprep.subr.bf16.mxu0 0
  %392 = vmatpush1.bf16.msra.mxu0 0
  %393 = vmatprep.subr.bf16.mxu0 0
  %394 = vmatpush1.bf16.msra.mxu0 0
  %395 = vmatprep.subr.bf16.mxu0 0
  %396 = vmatpush1.bf16.msra.mxu0 0
  %397 = vmatprep.subr.bf16.mxu0 0
  %398 = vmatpush1.bf16.msra.mxu0 0
  %399 = vmatprep.subr.bf16.mxu0 0
  %400 = vmatpush1.bf16.msra.mxu0 0
  %401 = vmatprep.subr.bf16.mxu0 0
  %402 = vmatpush1.bf16.msra.mxu0 0
  %403 = vmatprep.subr.bf16.mxu0 0
  %404 = vmatpush1.bf16.msra.mxu0 0
  %405 = vmatprep.subr.bf16.mxu0 0
  %406 = vmatpush1.bf16.msra.mxu0 0
  %407 = vmatprep.subr.bf16.mxu0 0
  %408 = vmatpush1.bf16.msra.mxu0 0
  %409 = vmatprep.subr.bf16.mxu0 0
  %410 = vmatpush1.bf16.msra.mxu0 0
  %411 = vmatprep.mubr.bf16.mxu0 0
  %412 = vmatmul.mubr.bf16.gmra.mrb[0].mxu0 %v356
  %v413 = vpop.f32.mrb[0].mxu0
  %v414 = vadd.f32 0.0, %v413
  %v415 = vpop.f32.mrb[0].mxu0
  %v416 = vpop.f32.mrb[0].mxu0
  %v417 = vadd.f32 0.0, %v416
  %v418 = vpop.f32.mrb[0].mxu0
  %419 = vmatprep.mubr.bf16.mxu0 0
  %420 = vmatmul.mubr.bf16.gmra.mrb[0].mxu0 %v359
  %v421 = vpop.f32.mrb[0].mxu0
  %v422 = vadd.f32 0.0, %v421
  %v423 = vpop.f32.mrb[0].mxu0
  %v424 = vpop.f32.mrb[0].mxu0
  %v425 = vadd.f32 0.0, %v424
  %v426 = vpop.f32.mrb[0].mxu0
  %427 = vmatprep.mubr.bf16.mxu0 0
  %428 = vmatmul.mubr.bf16.gmra.mrb[0].mxu0 %v362
  %v429 = vpop.f32.mrb[0].mxu0
  %v430 = vadd.f32 0.0, %v429
  %v431 = vpop.f32.mrb[0].mxu0
  %v432 = vpop.f32.mrb[0].mxu0
  %v433 = vadd.f32 0.0, %v432
  %v434 = vpop.f32.mrb[0].mxu0
  %435 = vmatprep.mubr.bf16.mxu0 0
  %436 = vmatmul.mubr.bf16.gmra.mrb[0].mxu0 %v365
  %v437 = vpop.f32.mrb[0].mxu0
  %v438 = vadd.f32 0.0, %v437
  %v439 = vpop.f32.mrb[0].mxu0
  %v440 = vpop.f32.mrb[0].mxu0
  %v441 = vadd.f32 0.0, %v440
  %v442 = vpop.f32.mrb[0].mxu0
  %443 = vmatprep.mubr.bf16.mxu0 0
  %444 = vmatmul.mubr.bf16.gmra.mrb[0].mxu0 %v368
  %v445 = vpop.f32.mrb[0].mxu0
  %v446 = vadd.f32 0.0, %v445
  %v447 = vpop.f32.mrb[0].mxu0
  %v448 = vpop.f32.mrb[0].mxu0
  %v449 = vadd.f32 0.0, %v448
  %v450 = vpop.f32.mrb[0].mxu0
  %451 = vmatprep.mubr.bf16.mxu0 0
  %452 = vmatmul.mubr.bf16.gmra.mrb[0].mxu0 %v371
  %v453 = vpop.f32.mrb[0].mxu0
  %v454 = vadd.f32 0.0, %v453
  %v455 = vpop.f32.mrb[0].mxu0
  %v456 = vpop.f32.mrb[0].mxu0
  %v457 = vadd.f32 0.0, %v456
  %v458 = vpop.f32.mrb[0].mxu0
  %459 = vmatprep.mubr.bf16.mxu0 0
  %460 = vmatmul.mubr.bf16.gmra.mrb[0].mxu0 %v374
  %v461 = vpop.f32.mrb[0].mxu0
  %v462 = vadd.f32 0.0, %v461
  %v463 = vpop.f32.mrb[0].mxu0
  %v464 = vpop.f32.mrb[0].mxu0
  %v465 = vadd.f32 0.0, %v464
  %v466 = vpop.f32.mrb[0].mxu0
  %467 = vmatprep.mubr.bf16.mxu0 0
  %468 = vmatmul.mubr.bf16.gmra.mrb[0].mxu0 %v377
  %v469 = vpop.f32.mrb[0].mxu0
  %v470 = vadd.f32 0.0, %v469
  %v471 = vpop.f32.mrb[0].mxu0
  %v472 = vpop.f32.mrb[0].mxu0
  %v473 = vadd.f32 0.0, %v472
  %v474 = vpop.f32.mrb[0].mxu0
  %475 = vdwg.mxu0
  %v476 = vmul.f32 %v414, %v242
  %v477 = vmul.f32 %v417, %v242
  %v478 = vmul.f32 %v422, %v242
  %v479 = vmul.f32 %v425, %v242
  %v480 = vmul.f32 %v430, %v242
  %v481 = vmul.f32 %v433, %v242
  %v482 = vmul.f32 %v438, %v242
  %v483 = vmul.f32 %v441, %v242
  %v484 = vmul.f32 %v446, %v242
  %v485 = vmul.f32 %v449, %v242
  %v486 = vmul.f32 %v454, %v242
  %v487 = vmul.f32 %v457, %v242
  %v488 = vmul.f32 %v462, %v242
  %v489 = vmul.f32 %v465, %v242
  %v490 = vmul.f32 %v470, %v242
  %v491 = vmul.f32 %v473, %v242
  %v492 = vadd.f32 %v476, %v264
  %v493 = vadd.f32 %v477, %v264
  %v494 = vadd.f32 %v478, %v264
  %v495 = vadd.f32 %v479, %v264
  %v496 = vadd.f32 %v480, %v264
  %v497 = vadd.f32 %v481, %v264
  %v498 = vadd.f32 %v482, %v264
  %v499 = vadd.f32 %v483, %v264
  %v500 = vadd.f32 %v484, %v264
  %v501 = vadd.f32 %v485, %v264
  %v502 = vadd.f32 %v486, %v264
  %v503 = vadd.f32 %v487, %v264
  %v504 = vadd.f32 %v488, %v264
  %v505 = vadd.f32 %v489, %v264
  %v506 = vadd.f32 %v490, %v264
  %v507 = vadd.f32 %v491, %v264
  %v508 = vmax.f32 %v492, 0.0
  %v509 = vmax.f32 %v493, 0.0
  %v510 = vmax.f32 %v494, 0.0
  %v511 = vmax.f32 %v495, 0.0
  %v512 = vmax.f32 %v496, 0.0
  %v513 = vmax.f32 %v497, 0.0
  %v514 = vmax.f32 %v498, 0.0
  %v515 = vmax.f32 %v499, 0.0
  %v516 = vmax.f32 %v500, 0.0
  %v517 = vmax.f32 %v501, 0.0
  %v518 = vmax.f32 %v502, 0.0
  %v519 = vmax.f32 %v503, 0.0
  %v520 = vmax.f32 %v504, 0.0
  %v521 = vmax.f32 %v505, 0.0
  %v522 = vmax.f32 %v506, 0.0
  %v523 = vmax.f32 %v507, 0.0
  %v524 = vmax.f32 %v282, %v508
  %v525 = vmax.f32 %v283, %v509
  %v526 = vmax.f32 %v284, %v510
  %v527 = vmax.f32 %v285, %v511
  %v528 = vmax.f32 %v286, %v512
  %v529 = vmax.f32 %v287, %v513
  %v530 = vmax.f32 %v288, %v514
  %v531 = vmax.f32 %v289, %v515
  %v532 = vmax.f32 %v290, %v516
  %v533 = vmax.f32 %v291, %v517
  %v534 = vmax.f32 %v292, %v518
  %v535 = vmax.f32 %v293, %v519
  %v536 = vmax.f32 %v294, %v520
  %v537 = vmax.f32 %v295, %v521
  %v538 = vmax.f32 %v296, %v522
  %v539 = vmax.f32 %v297, %v523
  %s540 = scalar_lea.vmem %s0, 128
  %v541 = vld [vmem:[%s540] sm:$0xf]
  %v542 = vld [vmem:[%s540 + $0x4] sm:$0xf]
  %v543 = vld [vmem:[%s540 + $0x8] sm:$0xf]
  %v544 = vld [vmem:[%s540 + $0xc] sm:$0xf]
  %v545 = vld [vmem:[%s540 + $0x10] sm:$0xf]
  %v546 = vld [vmem:[%s540 + $0x14] sm:$0xf]
  %v547 = vld [vmem:[%s540 + $0x18] sm:$0xf]
  %v548 = vld [vmem:[%s540 + $0x1c] sm:$0xf]
  %v549 = vld [vmem:[%s540 + $0x20] sm:$0xf]
  %v550 = vld [vmem:[%s540 + $0x24] sm:$0xf]
  %v551 = vld [vmem:[%s540 + $0x28] sm:$0xf]
  %v552 = vld [vmem:[%s540 + $0x2c] sm:$0xf]
  %v553 = vld [vmem:[%s540 + $0x30] sm:$0xf]
  %v554 = vld [vmem:[%s540 + $0x34] sm:$0xf]
  %v555 = vld [vmem:[%s540 + $0x38] sm:$0xf]
  %v556 = vld [vmem:[%s540 + $0x3c] sm:$0xf]
  %v573 = vunpack.c.l.b16 %v541
  %v574 = vunpack.c.l.b16 %v542
  %v575 = vunpack.c.l.b16 %v543
  %v576 = vunpack.c.l.b16 %v544
  %v577 = vunpack.c.l.b16 %v545
  %v578 = vunpack.c.l.b16 %v546
  %v579 = vunpack.c.l.b16 %v547
  %v580 = vunpack.c.l.b16 %v548
  %v581 = vunpack.c.l.b16 %v549
  %v582 = vunpack.c.l.b16 %v550
  %v583 = vunpack.c.l.b16 %v551
  %v584 = vunpack.c.l.b16 %v552
  %v585 = vunpack.c.l.b16 %v553
  %v586 = vunpack.c.l.b16 %v554
  %v587 = vunpack.c.l.b16 %v555
  %v588 = vunpack.c.l.b16 %v556
  %v589 = vpack.c.b16 %v574, %v573
  %v590 = vpack.c.b16 %v576, %v575
  %v591 = vpack.c.b16 %v578, %v577
  %v592 = vpack.c.b16 %v580, %v579
  %v593 = vpack.c.b16 %v582, %v581
  %v594 = vpack.c.b16 %v584, %v583
  %v595 = vpack.c.b16 %v586, %v585
  %v596 = vpack.c.b16 %v588, %v587
  %v598 = vsel %vm112, %v589, 0
  %v601 = vsel %vm112, %v590, 0
  %v604 = vsel %vm112, %v591, 0
  %v607 = vsel %vm112, %v592, 0
  %v610 = vsel %vm112, %v593, 0
  %v613 = vsel %vm112, %v594, 0
  %v616 = vsel %vm112, %v595, 0
  %v619 = vsel %vm112, %v596, 0
  %621 = vmatprep.subr.bf16.mxu0 0
  %622 = vmatpush1.bf16.msra.mxu0 %v103
  %623 = vmatprep.subr.bf16.mxu0 0
  %624 = vmatpush1.bf16.msra.mxu0 %v104
  %625 = vmatprep.subr.bf16.mxu0 0
  %626 = vmatpush1.bf16.msra.mxu0 %v105
  %627 = vmatprep.subr.bf16.mxu0 0
  %628 = vmatpush1.bf16.msra.mxu0 %v106
  %629 = vmatprep.subr.bf16.mxu0 0
  %630 = vmatpush1.bf16.msra.mxu0 %v139
  %631 = vmatprep.subr.bf16.mxu0 0
  %632 = vmatpush1.bf16.msra.mxu0 0
  %633 = vmatprep.subr.bf16.mxu0 0
  %634 = vmatpush1.bf16.msra.mxu0 0
  %635 = vmatprep.subr.bf16.mxu0 0
  %636 = vmatpush1.bf16.msra.mxu0 0
  %637 = vmatprep.subr.bf16.mxu0 0
  %638 = vmatpush1.bf16.msra.mxu0 0
  %639 = vmatprep.subr.bf16.mxu0 0
  %640 = vmatpush1.bf16.msra.mxu0 0
  %641 = vmatprep.subr.bf16.mxu0 0
  %642 = vmatpush1.bf16.msra.mxu0 0
  %643 = vmatprep.subr.bf16.mxu0 0
  %644 = vmatpush1.bf16.msra.mxu0 0
  %645 = vmatprep.subr.bf16.mxu0 0
  %646 = vmatpush1.bf16.msra.mxu0 0
  %647 = vmatprep.subr.bf16.mxu0 0
  %648 = vmatpush1.bf16.msra.mxu0 0
  %649 = vmatprep.subr.bf16.mxu0 0
  %650 = vmatpush1.bf16.msra.mxu0 0
  %651 = vmatprep.subr.bf16.mxu0 0
  %652 = vmatpush1.bf16.msra.mxu0 0
  %653 = vmatprep.mubr.bf16.mxu0 0
  %654 = vmatmul.mubr.bf16.gmra.mrb[0].mxu0 %v598
  %v655 = vpop.f32.mrb[0].mxu0
  %v656 = vadd.f32 0.0, %v655
  %v657 = vpop.f32.mrb[0].mxu0
  %v658 = vpop.f32.mrb[0].mxu0
  %v659 = vadd.f32 0.0, %v658
  %v660 = vpop.f32.mrb[0].mxu0
  %661 = vmatprep.mubr.bf16.mxu0 0
  %662 = vmatmul.mubr.bf16.gmra.mrb[0].mxu0 %v601
  %v663 = vpop.f32.mrb[0].mxu0
  %v664 = vadd.f32 0.0, %v663
  %v665 = vpop.f32.mrb[0].mxu0
  %v666 = vpop.f32.mrb[0].mxu0
  %v667 = vadd.f32 0.0, %v666
  %v668 = vpop.f32.mrb[0].mxu0
  %669 = vmatprep.mubr.bf16.mxu0 0
  %670 = vmatmul.mubr.bf16.gmra.mrb[0].mxu0 %v604
  %v671 = vpop.f32.mrb[0].mxu0
  %v672 = vadd.f32 0.0, %v671
  %v673 = vpop.f32.mrb[0].mxu0
  %v674 = vpop.f32.mrb[0].mxu0
  %v675 = vadd.f32 0.0, %v674
  %v676 = vpop.f32.mrb[0].mxu0
  %677 = vmatprep.mubr.bf16.mxu0 0
  %678 = vmatmul.mubr.bf16.gmra.mrb[0].mxu0 %v607
  %v679 = vpop.f32.mrb[0].mxu0
  %v680 = vadd.f32 0.0, %v679
  %v681 = vpop.f32.mrb[0].mxu0
  %v682 = vpop.f32.mrb[0].mxu0
  %v683 = vadd.f32 0.0, %v682
  %v684 = vpop.f32.mrb[0].mxu0
  %685 = vmatprep.mubr.bf16.mxu0 0
  %686 = vmatmul.mubr.bf16.gmra.mrb[0].mxu0 %v610
  %v687 = vpop.f32.mrb[0].mxu0
  %v688 = vadd.f32 0.0, %v687
  %v689 = vpop.f32.mrb[0].mxu0
  %v690 = vpop.f32.mrb[0].mxu0
  %v691 = vadd.f32 0.0, %v690
  %v692 = vpop.f32.mrb[0].mxu0
  %693 = vmatprep.mubr.bf16.mxu0 0
  %694 = vmatmul.mubr.bf16.gmra.mrb[0].mxu0 %v613
  %v695 = vpop.f32.mrb[0].mxu0
  %v696 = vadd.f32 0.0, %v695
  %v697 = vpop.f32.mrb[0].mxu0
  %v698 = vpop.f32.mrb[0].mxu0
  %v699 = vadd.f32 0.0, %v698
  %v700 = vpop.f32.mrb[0].mxu0
  %701 = vmatprep.mubr.bf16.mxu0 0
  %702 = vmatmul.mubr.bf16.gmra.mrb[0].mxu0 %v616
  %v703 = vpop.f32.mrb[0].mxu0
  %v704 = vadd.f32 0.0, %v703
  %v705 = vpop.f32.mrb[0].mxu0
  %v706 = vpop.f32.mrb[0].mxu0
  %v707 = vadd.f32 0.0, %v706
  %v708 = vpop.f32.mrb[0].mxu0
  %709 = vmatprep.mubr.bf16.mxu0 0
  %710 = vmatmul.mubr.bf16.gmra.mrb[0].mxu0 %v619
  %v711 = vpop.f32.mrb[0].mxu0
  %v712 = vadd.f32 0.0, %v711
  %v713 = vpop.f32.mrb[0].mxu0
  %v714 = vpop.f32.mrb[0].mxu0
  %v715 = vadd.f32 0.0, %v714
  %v716 = vpop.f32.mrb[0].mxu0
  %717 = vdwg.mxu0
  %v718 = vmul.f32 %v656, %v242
  %v719 = vmul.f32 %v659, %v242
  %v720 = vmul.f32 %v664, %v242
  %v721 = vmul.f32 %v667, %v242
  %v722 = vmul.f32 %v672, %v242
  %v723 = vmul.f32 %v675, %v242
  %v724 = vmul.f32 %v680, %v242
  %v725 = vmul.f32 %v683, %v242
  %v726 = vmul.f32 %v688, %v242
  %v727 = vmul.f32 %v691, %v242
  %v728 = vmul.f32 %v696, %v242
  %v729 = vmul.f32 %v699, %v242
  %v730 = vmul.f32 %v704, %v242
  %v731 = vmul.f32 %v707, %v242
  %v732 = vmul.f32 %v712, %v242
  %v733 = vmul.f32 %v715, %v242
  %v734 = vadd.f32 %v718, %v264
  %v735 = vadd.f32 %v719, %v264
  %v736 = vadd.f32 %v720, %v264
  %v737 = vadd.f32 %v721, %v264
  %v738 = vadd.f32 %v722, %v264
  %v739 = vadd.f32 %v723, %v264
  %v740 = vadd.f32 %v724, %v264
  %v741 = vadd.f32 %v725, %v264
  %v742 = vadd.f32 %v726, %v264
  %v743 = vadd.f32 %v727, %v264
  %v744 = vadd.f32 %v728, %v264
  %v745 = vadd.f32 %v729, %v264
  %v746 = vadd.f32 %v730, %v264
  %v747 = vadd.f32 %v731, %v264
  %v748 = vadd.f32 %v732, %v264
  %v749 = vadd.f32 %v733, %v264
  %v750 = vmax.f32 %v734, 0.0
  %v751 = vmax.f32 %v735, 0.0
  %v752 = vmax.f32 %v736, 0.0
  %v753 = vmax.f32 %v737, 0.0
  %v754 = vmax.f32 %v738, 0.0
  %v755 = vmax.f32 %v739, 0.0
  %v756 = vmax.f32 %v740, 0.0
  %v757 = vmax.f32 %v741, 0.0
  %v758 = vmax.f32 %v742, 0.0
  %v759 = vmax.f32 %v743, 0.0
  %v760 = vmax.f32 %v744, 0.0
  %v761 = vmax.f32 %v745, 0.0
  %v762 = vmax.f32 %v746, 0.0
  %v763 = vmax.f32 %v747, 0.0
  %v764 = vmax.f32 %v748, 0.0
  %v765 = vmax.f32 %v749, 0.0
  %v766 = vmax.f32 %v524, %v750
  %v767 = vmax.f32 %v525, %v751
  %v768 = vmax.f32 %v526, %v752
  %v769 = vmax.f32 %v527, %v753
  %v770 = vmax.f32 %v528, %v754
  %v771 = vmax.f32 %v529, %v755
  %v772 = vmax.f32 %v530, %v756
  %v773 = vmax.f32 %v531, %v757
  %v774 = vmax.f32 %v532, %v758
  %v775 = vmax.f32 %v533, %v759
  %v776 = vmax.f32 %v534, %v760
  %v777 = vmax.f32 %v535, %v761
  %v778 = vmax.f32 %v536, %v762
  %v779 = vmax.f32 %v537, %v763
  %v780 = vmax.f32 %v538, %v764
  %v781 = vmax.f32 %v539, %v765
  %s782 = scalar_lea.vmem %s0, 192
  %v783 = vld [vmem:[%s782] sm:$0xf]
  %v784 = vld [vmem:[%s782 + $0x4] sm:$0xf]
  %v785 = vld [vmem:[%s782 + $0x8] sm:$0xf]
  %v786 = vld [vmem:[%s782 + $0xc] sm:$0xf]
  %v787 = vld [vmem:[%s782 + $0x10] sm:$0xf]
  %v788 = vld [vmem:[%s782 + $0x14] sm:$0xf]
  %v789 = vld [vmem:[%s782 + $0x18] sm:$0xf]
  %v790 = vld [vmem:[%s782 + $0x1c] sm:$0xf]
  %v791 = vld [vmem:[%s782 + $0x20] sm:$0xf]
  %v792 = vld [vmem:[%s782 + $0x24] sm:$0xf]
  %v793 = vld [vmem:[%s782 + $0x28] sm:$0xf]
  %v794 = vld [vmem:[%s782 + $0x2c] sm:$0xf]
  %v795 = vld [vmem:[%s782 + $0x30] sm:$0xf]
  %v796 = vld [vmem:[%s782 + $0x34] sm:$0xf]
  %v797 = vld [vmem:[%s782 + $0x38] sm:$0xf]
  %v798 = vld [vmem:[%s782 + $0x3c] sm:$0xf]
  %v815 = vunpack.c.l.b16 %v783
  %v816 = vunpack.c.l.b16 %v784
  %v817 = vunpack.c.l.b16 %v785
  %v818 = vunpack.c.l.b16 %v786
  %v819 = vunpack.c.l.b16 %v787
  %v820 = vunpack.c.l.b16 %v788
  %v821 = vunpack.c.l.b16 %v789
  %v822 = vunpack.c.l.b16 %v790
  %v823 = vunpack.c.l.b16 %v791
  %v824 = vunpack.c.l.b16 %v792
  %v825 = vunpack.c.l.b16 %v793
  %v826 = vunpack.c.l.b16 %v794
  %v827 = vunpack.c.l.b16 %v795
  %v828 = vunpack.c.l.b16 %v796
  %v829 = vunpack.c.l.b16 %v797
  %v830 = vunpack.c.l.b16 %v798
  %v831 = vpack.c.b16 %v816, %v815
  %v832 = vpack.c.b16 %v818, %v817
  %v833 = vpack.c.b16 %v820, %v819
  %v834 = vpack.c.b16 %v822, %v821
  %v835 = vpack.c.b16 %v824, %v823
  %v836 = vpack.c.b16 %v826, %v825
  %v837 = vpack.c.b16 %v828, %v827
  %v838 = vpack.c.b16 %v830, %v829
  %v840 = vsel %vm112, %v831, 0
  %v843 = vsel %vm112, %v832, 0
  %v846 = vsel %vm112, %v833, 0
  %v849 = vsel %vm112, %v834, 0
  %v852 = vsel %vm112, %v835, 0
  %v855 = vsel %vm112, %v836, 0
  %v858 = vsel %vm112, %v837, 0
  %v861 = vsel %vm112, %v838, 0
  %863 = vmatprep.subr.bf16.mxu0 0
  %864 = vmatpush1.bf16.msra.mxu0 %v103
  %865 = vmatprep.subr.bf16.mxu0 0
  %866 = vmatpush1.bf16.msra.mxu0 %v104
  %867 = vmatprep.subr.bf16.mxu0 0
  %868 = vmatpush1.bf16.msra.mxu0 %v105
  %869 = vmatprep.subr.bf16.mxu0 0
  %870 = vmatpush1.bf16.msra.mxu0 %v106
  %871 = vmatprep.subr.bf16.mxu0 0
  %872 = vmatpush1.bf16.msra.mxu0 %v139
  %873 = vmatprep.subr.bf16.mxu0 0
  %874 = vmatpush1.bf16.msra.mxu0 0
  %875 = vmatprep.subr.bf16.mxu0 0
  %876 = vmatpush1.bf16.msra.mxu0 0
  %877 = vmatprep.subr.bf16.mxu0 0
  %878 = vmatpush1.bf16.msra.mxu0 0
  %879 = vmatprep.subr.bf16.mxu0 0
  %880 = vmatpush1.bf16.msra.mxu0 0
  %881 = vmatprep.subr.bf16.mxu0 0
  %882 = vmatpush1.bf16.msra.mxu0 0
  %883 = vmatprep.subr.bf16.mxu0 0
  %884 = vmatpush1.bf16.msra.mxu0 0
  %885 = vmatprep.subr.bf16.mxu0 0
  %886 = vmatpush1.bf16.msra.mxu0 0
  %887 = vmatprep.subr.bf16.mxu0 0
  %888 = vmatpush1.bf16.msra.mxu0 0
  %889 = vmatprep.subr.bf16.mxu0 0
  %890 = vmatpush1.bf16.msra.mxu0 0
  %891 = vmatprep.subr.bf16.mxu0 0
  %892 = vmatpush1.bf16.msra.mxu0 0
  %893 = vmatprep.subr.bf16.mxu0 0
  %894 = vmatpush1.bf16.msra.mxu0 0
  %895 = vmatprep.mubr.bf16.mxu0 0
  %896 = vmatmul.mubr.bf16.gmra.mrb[0].mxu0 %v840
  %v897 = vpop.f32.mrb[0].mxu0
  %v898 = vadd.f32 0.0, %v897
  %v899 = vpop.f32.mrb[0].mxu0
  %v900 = vpop.f32.mrb[0].mxu0
  %v901 = vadd.f32 0.0, %v900
  %v902 = vpop.f32.mrb[0].mxu0
  %903 = vmatprep.mubr.bf16.mxu0 0
  %904 = vmatmul.mubr.bf16.gmra.mrb[0].mxu0 %v843
  %v905 = vpop.f32.mrb[0].mxu0
  %v906 = vadd.f32 0.0, %v905
  %v907 = vpop.f32.mrb[0].mxu0
  %v908 = vpop.f32.mrb[0].mxu0
  %v909 = vadd.f32 0.0, %v908
  %v910 = vpop.f32.mrb[0].mxu0
  %911 = vmatprep.mubr.bf16.mxu0 0
  %912 = vmatmul.mubr.bf16.gmra.mrb[0].mxu0 %v846
  %v913 = vpop.f32.mrb[0].mxu0
  %v914 = vadd.f32 0.0, %v913
  %v915 = vpop.f32.mrb[0].mxu0
  %v916 = vpop.f32.mrb[0].mxu0
  %v917 = vadd.f32 0.0, %v916
  %v918 = vpop.f32.mrb[0].mxu0
  %919 = vmatprep.mubr.bf16.mxu0 0
  %920 = vmatmul.mubr.bf16.gmra.mrb[0].mxu0 %v849
  %v921 = vpop.f32.mrb[0].mxu0
  %v922 = vadd.f32 0.0, %v921
  %v923 = vpop.f32.mrb[0].mxu0
  %v924 = vpop.f32.mrb[0].mxu0
  %v925 = vadd.f32 0.0, %v924
  %v926 = vpop.f32.mrb[0].mxu0
  %927 = vmatprep.mubr.bf16.mxu0 0
  %928 = vmatmul.mubr.bf16.gmra.mrb[0].mxu0 %v852
  %v929 = vpop.f32.mrb[0].mxu0
  %v930 = vadd.f32 0.0, %v929
  %v931 = vpop.f32.mrb[0].mxu0
  %v932 = vpop.f32.mrb[0].mxu0
  %v933 = vadd.f32 0.0, %v932
  %v934 = vpop.f32.mrb[0].mxu0
  %935 = vmatprep.mubr.bf16.mxu0 0
  %936 = vmatmul.mubr.bf16.gmra.mrb[0].mxu0 %v855
  %v937 = vpop.f32.mrb[0].mxu0
  %v938 = vadd.f32 0.0, %v937
  %v939 = vpop.f32.mrb[0].mxu0
  %v940 = vpop.f32.mrb[0].mxu0
  %v941 = vadd.f32 0.0, %v940
  %v942 = vpop.f32.mrb[0].mxu0
  %943 = vmatprep.mubr.bf16.mxu0 0
  %944 = vmatmul.mubr.bf16.gmra.mrb[0].mxu0 %v858
  %v945 = vpop.f32.mrb[0].mxu0
  %v946 = vadd.f32 0.0, %v945
  %v947 = vpop.f32.mrb[0].mxu0
  %v948 = vpop.f32.mrb[0].mxu0
  %v949 = vadd.f32 0.0, %v948
  %v950 = vpop.f32.mrb[0].mxu0
  %951 = vmatprep.mubr.bf16.mxu0 0
  %952 = vmatmul.mubr.bf16.gmra.mrb[0].mxu0 %v861
  %v953 = vpop.f32.mrb[0].mxu0
  %v954 = vadd.f32 0.0, %v953
  %v955 = vpop.f32.mrb[0].mxu0
  %v956 = vpop.f32.mrb[0].mxu0
  %v957 = vadd.f32 0.0, %v956
  %v958 = vpop.f32.mrb[0].mxu0
  %959 = vdwg.mxu0
  %v960 = vmul.f32 %v898, %v242
  %v961 = vmul.f32 %v901, %v242
  %v962 = vmul.f32 %v906, %v242
  %v963 = vmul.f32 %v909, %v242
  %v964 = vmul.f32 %v914, %v242
  %v965 = vmul.f32 %v917, %v242
  %v966 = vmul.f32 %v922, %v242
  %v967 = vmul.f32 %v925, %v242
  %v968 = vmul.f32 %v930, %v242
  %v969 = vmul.f32 %v933, %v242
  %v970 = vmul.f32 %v938, %v242
  %v971 = vmul.f32 %v941, %v242
  %v972 = vmul.f32 %v946, %v242
  %v973 = vmul.f32 %v949, %v242
  %v974 = vmul.f32 %v954, %v242
  %v975 = vmul.f32 %v957, %v242
  %v976 = vadd.f32 %v960, %v264
  %v977 = vadd.f32 %v961, %v264
  %v978 = vadd.f32 %v962, %v264
  %v979 = vadd.f32 %v963, %v264
  %v980 = vadd.f32 %v964, %v264
  %v981 = vadd.f32 %v965, %v264
  %v982 = vadd.f32 %v966, %v264
  %v983 = vadd.f32 %v967, %v264
  %v984 = vadd.f32 %v968, %v264
  %v985 = vadd.f32 %v969, %v264
  %v986 = vadd.f32 %v970, %v264
  %v987 = vadd.f32 %v971, %v264
  %v988 = vadd.f32 %v972, %v264
  %v989 = vadd.f32 %v973, %v264
  %v990 = vadd.f32 %v974, %v264
  %v991 = vadd.f32 %v975, %v264
  %v992 = vmax.f32 %v976, 0.0
  %v993 = vmax.f32 %v977, 0.0
  %v994 = vmax.f32 %v978, 0.0
  %v995 = vmax.f32 %v979, 0.0
  %v996 = vmax.f32 %v980, 0.0
  %v997 = vmax.f32 %v981, 0.0
  %v998 = vmax.f32 %v982, 0.0
  %v999 = vmax.f32 %v983, 0.0
  %v1000 = vmax.f32 %v984, 0.0
  %v1001 = vmax.f32 %v985, 0.0
  %v1002 = vmax.f32 %v986, 0.0
  %v1003 = vmax.f32 %v987, 0.0
  %v1004 = vmax.f32 %v988, 0.0
  %v1005 = vmax.f32 %v989, 0.0
  %v1006 = vmax.f32 %v990, 0.0
  %v1007 = vmax.f32 %v991, 0.0
  %v1008 = vmax.f32 %v766, %v992
  %v1009 = vmax.f32 %v767, %v993
  %v1010 = vmax.f32 %v768, %v994
  %v1011 = vmax.f32 %v769, %v995
  %v1012 = vmax.f32 %v770, %v996
  %v1013 = vmax.f32 %v771, %v997
  %v1014 = vmax.f32 %v772, %v998
  %v1015 = vmax.f32 %v773, %v999
  %v1016 = vmax.f32 %v774, %v1000
  %v1017 = vmax.f32 %v775, %v1001
  %v1018 = vmax.f32 %v776, %v1002
  %v1019 = vmax.f32 %v777, %v1003
  %v1020 = vmax.f32 %v778, %v1004
  %v1021 = vmax.f32 %v779, %v1005
  %v1022 = vmax.f32 %v780, %v1006
  %v1023 = vmax.f32 %v781, %v1007
  %v1024 = vpack.c.bf16 %v1009, %v1008
  %v1025 = vpack.c.bf16 %v1011, %v1010
  %v1026 = vpack.c.bf16 %v1013, %v1012
  %v1027 = vpack.c.bf16 %v1015, %v1014
  %v1028 = vpack.c.bf16 %v1017, %v1016
  %v1029 = vpack.c.bf16 %v1019, %v1018
  %v1030 = vpack.c.bf16 %v1021, %v1020
  %v1031 = vpack.c.bf16 %v1023, %v1022
  %v1040 = vunpack.c.l.b16 %v1024
  %v1041 = vunpack.c.h.b16 %v1024
  %v1042 = vunpack.c.l.b16 %v1025
  %v1043 = vunpack.c.h.b16 %v1025
  %v1044 = vunpack.c.l.b16 %v1026
  %v1045 = vunpack.c.h.b16 %v1026
  %v1046 = vunpack.c.l.b16 %v1027
  %v1047 = vunpack.c.h.b16 %v1027
  %v1048 = vunpack.c.l.b16 %v1028
  %v1049 = vunpack.c.h.b16 %v1028
  %v1050 = vunpack.c.l.b16 %v1029
  %v1051 = vunpack.c.h.b16 %v1029
  %v1052 = vunpack.c.l.b16 %v1030
  %v1053 = vunpack.c.h.b16 %v1030
  %v1054 = vunpack.c.l.b16 %v1031
  %v1055 = vunpack.c.h.b16 %v1031
  %v1056 = vpack.c.b16 %v1040, %v1040
  %v1057 = vpack.c.b16 %v1041, %v1041
  %v1058 = vpack.c.b16 %v1042, %v1042
  %v1059 = vpack.c.b16 %v1043, %v1043
  %v1060 = vpack.c.b16 %v1044, %v1044
  %v1061 = vpack.c.b16 %v1045, %v1045
  %v1062 = vpack.c.b16 %v1046, %v1046
  %v1063 = vpack.c.b16 %v1047, %v1047
  %v1064 = vpack.c.b16 %v1048, %v1048
  %v1065 = vpack.c.b16 %v1049, %v1049
  %v1066 = vpack.c.b16 %v1050, %v1050
  %v1067 = vpack.c.b16 %v1051, %v1051
  %v1068 = vpack.c.b16 %v1052, %v1052
  %v1069 = vpack.c.b16 %v1053, %v1053
  %v1070 = vpack.c.b16 %v1054, %v1054
  %v1071 = vpack.c.b16 %v1055, %v1055
  %1088 = vst [vmem:[%s4] sm:$0xf] %v1056
  %1089 = vst [vmem:[%s4 + $0x4] sm:$0xf] %v1057
  %1090 = vst [vmem:[%s4 + $0x8] sm:$0xf] %v1058
  %1091 = vst [vmem:[%s4 + $0xc] sm:$0xf] %v1059
  %1092 = vst [vmem:[%s4 + $0x10] sm:$0xf] %v1060
  %1093 = vst [vmem:[%s4 + $0x14] sm:$0xf] %v1061
  %1094 = vst [vmem:[%s4 + $0x18] sm:$0xf] %v1062
  %1095 = vst [vmem:[%s4 + $0x1c] sm:$0xf] %v1063
  %1096 = vst [vmem:[%s4 + $0x20] sm:$0xf] %v1064
  %1097 = vst [vmem:[%s4 + $0x24] sm:$0xf] %v1065
  %1098 = vst [vmem:[%s4 + $0x28] sm:$0xf] %v1066
  %1099 = vst [vmem:[%s4 + $0x2c] sm:$0xf] %v1067
  %1100 = vst [vmem:[%s4 + $0x30] sm:$0xf] %v1068
  %1101 = vst [vmem:[%s4 + $0x34] sm:$0xf] %v1069
  %1102 = vst [vmem:[%s4 + $0x38] sm:$0xf] %v1070
  %1103 = vst [vmem:[%s4 + $0x3c] sm:$0xf] %v1071
  // Predicated region
  $region18: #{vggnet_forward.19} parent=0 // pred_check
    _
  $region19: #{vggnet_forward.19} parent=0 // pred_check_branch
    %1105 = sbr.rel (0) target = $region21
  $region20: #{vggnet_forward.19} parent=0 // pred_region
    _
  $region21: #{vggnet_forward.19} parent=0 // pred_fallthru
    _
  // Predicated region
  $region22: #{vggnet_forward.19} parent=0 // pred_check
    _
  $region23: #{vggnet_forward.19} parent=0 // pred_check_branch
    %1107 = sbr.rel (0) target = $region25
  $region24: #{vggnet_forward.19} parent=0 // pred_region
    _
  $region25: #{vggnet_forward.19} parent=0 // pred_fallthru
    _

// kernel: vggnet_forward.20
$region0: #{vggnet_forward.20}
  #allocation0 [shape = 'u32[]', space=smem, size = 0x4, offset = 0x4, fixed_abs, tag = 'smem constant byte address 0x4 - core index']
  #allocation1 [shape = 'u32[144,128]{1,0:T(1,128)}', space=vmem, size = 0x12000, scoped, tag = 'internal scratch']
  %s0 = inlined_call_operand.vmem [shape: bf16[128,72], index: 0, kind: input, shape index: {}]
  %s1 = inlined_call_operand.vmem [shape: bf16[72,128], index: 1, kind: input, shape index: {}]
  %s2 = inlined_call_operand.vmem [shape: f32[1,128], index: 2, kind: input, shape index: {}]
  %s3 = inlined_call_operand.vmem [shape: f32[1,128], index: 3, kind: input, shape index: {}]
  %s4 = inlined_call_operand.vmem [shape: bf16[128,128], index: 4, kind: output, shape index: {}]
  %s5 = sld [smem:[#allocation0]]
  $region26: #{vggnet_forward.20} parent=0
    _
  %s7 = ssub.s32 1, %s5
  %s8 = scalar_select 0, %s7, %s5
  // Predicated region
  $region2: #{vggnet_forward.20} parent=0 // pred_check
    _
  $region3: #{vggnet_forward.20} parent=0 // pred_check_branch
    %10 = sbr.rel (0) target = $region5
  $region4: #{vggnet_forward.20} parent=0 // pred_region
    _
  $region5: #{vggnet_forward.20} parent=0 // pred_fallthru
    _
  // Predicated region
  $region6: #{vggnet_forward.20} parent=0 // pred_check
    _
  $region7: #{vggnet_forward.20} parent=0 // pred_check_branch
    %12 = sbr.rel (0) target = $region9
  $region8: #{vggnet_forward.20} parent=0 // pred_region
    _
  $region9: #{vggnet_forward.20} parent=0 // pred_fallthru
    _
  // Predicated region
  $region10: #{vggnet_forward.20} parent=0 // pred_check
    _
  $region11: #{vggnet_forward.20} parent=0 // pred_check_branch
    %14 = sbr.rel (0) target = $region13
  $region12: #{vggnet_forward.20} parent=0 // pred_region
    _
  $region13: #{vggnet_forward.20} parent=0 // pred_fallthru
    _
  // Predicated region
  $region14: #{vggnet_forward.20} parent=0 // pred_check
    _
  $region15: #{vggnet_forward.20} parent=0 // pred_check_branch
    %16 = sbr.rel (0) target = $region17
  $region16: #{vggnet_forward.20} parent=0 // pred_region
    _
  $region17: #{vggnet_forward.20} parent=0 // pred_fallthru
    _
  %v18 = vld [vmem:[%s0] sm:$0xf]
  %v19 = vld [vmem:[%s0 + $0x4] sm:$0xf]
  %v20 = vld [vmem:[%s0 + $0x8] sm:$0xf]
  %v21 = vld [vmem:[%s0 + $0xc] sm:$0xf]
  %v22 = vld [vmem:[%s0 + $0x10] sm:$0xf]
  %v23 = vld [vmem:[%s0 + $0x14] sm:$0xf]
  %v24 = vld [vmem:[%s0 + $0x18] sm:$0xf]
  %v25 = vld [vmem:[%s0 + $0x1c] sm:$0xf]
  %v26 = vld [vmem:[%s0 + $0x20] sm:$0xf]
  %v27 = vld [vmem:[%s0 + $0x24] sm:$0xf]
  %v28 = vld [vmem:[%s0 + $0x28] sm:$0xf]
  %v29 = vld [vmem:[%s0 + $0x2c] sm:$0xf]
  %v30 = vld [vmem:[%s0 + $0x30] sm:$0xf]
  %v31 = vld [vmem:[%s0 + $0x34] sm:$0xf]
  %v32 = vld [vmem:[%s0 + $0x38] sm:$0xf]
  %v33 = vld [vmem:[%s0 + $0x3c] sm:$0xf]
  %v34 = vld [vmem:[%s1] sm:$0xf]
  %v35 = vld [vmem:[%s1 + $0x4] sm:$0xf]
  %v36 = vld [vmem:[%s1 + $0x8] sm:$0xf]
  %v37 = vld [vmem:[%s1 + $0xc] sm:$0xf]
  %v38 = vld [vmem:[%s1 + $0x10] sm:$0xf]
  %v39 = vld [vmem:[%s1 + $0x14] sm:$0xf]
  %v40 = vld [vmem:[%s1 + $0x18] sm:$0xf]
  %v41 = vld [vmem:[%s1 + $0x1c] sm:$0xf]
  %v42 = vld [vmem:[%s1 + $0x20] sm:$0xf]
  %v59 = vunpack.c.l.b16 %v18
  %v60 = vunpack.c.l.b16 %v19
  %v61 = vunpack.c.l.b16 %v20
  %v62 = vunpack.c.l.b16 %v21
  %v63 = vunpack.c.l.b16 %v22
  %v64 = vunpack.c.l.b16 %v23
  %v65 = vunpack.c.l.b16 %v24
  %v66 = vunpack.c.l.b16 %v25
  %v67 = vunpack.c.l.b16 %v26
  %v68 = vunpack.c.l.b16 %v27
  %v69 = vunpack.c.l.b16 %v28
  %v70 = vunpack.c.l.b16 %v29
  %v71 = vunpack.c.l.b16 %v30
  %v72 = vunpack.c.l.b16 %v31
  %v73 = vunpack.c.l.b16 %v32
  %v74 = vunpack.c.l.b16 %v33
  %v75 = vpack.c.b16 %v60, %v59
  %v76 = vpack.c.b16 %v62, %v61
  %v77 = vpack.c.b16 %v64, %v63
  %v78 = vpack.c.b16 %v66, %v65
  %v79 = vpack.c.b16 %v68, %v67
  %v80 = vpack.c.b16 %v70, %v69
  %v81 = vpack.c.b16 %v72, %v71
  %v82 = vpack.c.b16 %v74, %v73
  %v92 = vunpack.c.l.b16 %v34
  %v93 = vunpack.c.l.b16 %v35
  %v94 = vunpack.c.l.b16 %v36
  %v95 = vunpack.c.l.b16 %v37
  %v96 = vunpack.c.l.b16 %v38
  %v97 = vunpack.c.l.b16 %v39
  %v98 = vunpack.c.l.b16 %v40
  %v99 = vunpack.c.l.b16 %v41
  %v100 = vunpack.c.l.b16 %v42
  %v101 = vpack.c.b16 %v93, %v92
  %v102 = vpack.c.b16 %v95, %v94
  %v103 = vpack.c.b16 %v97, %v96
  %v104 = vpack.c.b16 %v99, %v98
  %v105 = vpack.c.b16 %v100, %v100
  %vm110 = vcmask 588800
  %v112 = vsel %vm110, %v75, 0
  %v115 = vsel %vm110, %v76, 0
  %v118 = vsel %vm110, %v77, 0
  %v121 = vsel %vm110, %v78, 0
  %v124 = vsel %vm110, %v79, 0
  %v127 = vsel %vm110, %v80, 0
  %v130 = vsel %vm110, %v81, 0
  %v133 = vsel %vm110, %v82, 0
  %vm135 = vcmask 1043456
  %v137 = vsel %vm135, %v105, 0
  %139 = vmatprep.subr.bf16.mxu0 0
  %140 = vmatpush1.bf16.msra.mxu0 %v101
  %141 = vmatprep.subr.bf16.mxu0 0
  %142 = vmatpush1.bf16.msra.mxu0 %v102
  %143 = vmatprep.subr.bf16.mxu0 0
  %144 = vmatpush1.bf16.msra.mxu0 %v103
  %145 = vmatprep.subr.bf16.mxu0 0
  %146 = vmatpush1.bf16.msra.mxu0 %v104
  %147 = vmatprep.subr.bf16.mxu0 0
  %148 = vmatpush1.bf16.msra.mxu0 %v137
  %149 = vmatprep.subr.bf16.mxu0 0
  %150 = vmatpush1.bf16.msra.mxu0 0
  %151 = vmatprep.subr.bf16.mxu0 0
  %152 = vmatpush1.bf16.msra.mxu0 0
  %153 = vmatprep.subr.bf16.mxu0 0
  %154 = vmatpush1.bf16.msra.mxu0 0
  %155 = vmatprep.subr.bf16.mxu0 0
  %156 = vmatpush1.bf16.msra.mxu0 0
  %157 = vmatprep.subr.bf16.mxu0 0
  %158 = vmatpush1.bf16.msra.mxu0 0
  %159 = vmatprep.subr.bf16.mxu0 0
  %160 = vmatpush1.bf16.msra.mxu0 0
  %161 = vmatprep.subr.bf16.mxu0 0
  %162 = vmatpush1.bf16.msra.mxu0 0
  %163 = vmatprep.subr.bf16.mxu0 0
  %164 = vmatpush1.bf16.msra.mxu0 0
  %165 = vmatprep.subr.bf16.mxu0 0
  %166 = vmatpush1.bf16.msra.mxu0 0
  %167 = vmatprep.subr.bf16.mxu0 0
  %168 = vmatpush1.bf16.msra.mxu0 0
  %169 = vmatprep.subr.bf16.mxu0 0
  %170 = vmatpush1.bf16.msra.mxu0 0
  %171 = vmatprep.mubr.bf16.mxu0 0
  %172 = vmatmul.mubr.bf16.gmra.mrb[0].mxu0 %v112
  %v173 = vpop.f32.mrb[0].mxu0
  %v174 = vadd.f32 0.0, %v173
  %v175 = vpop.f32.mrb[0].mxu0
  %v176 = vpop.f32.mrb[0].mxu0
  %v177 = vadd.f32 0.0, %v176
  %v178 = vpop.f32.mrb[0].mxu0
  %179 = vmatprep.mubr.bf16.mxu0 0
  %180 = vmatmul.mubr.bf16.gmra.mrb[0].mxu0 %v115
  %v181 = vpop.f32.mrb[0].mxu0
  %v182 = vadd.f32 0.0, %v181
  %v183 = vpop.f32.mrb[0].mxu0
  %v184 = vpop.f32.mrb[0].mxu0
  %v185 = vadd.f32 0.0, %v184
  %v186 = vpop.f32.mrb[0].mxu0
  %187 = vmatprep.mubr.bf16.mxu0 0
  %188 = vmatmul.mubr.bf16.gmra.mrb[0].mxu0 %v118
  %v189 = vpop.f32.mrb[0].mxu0
  %v190 = vadd.f32 0.0, %v189
  %v191 = vpop.f32.mrb[0].mxu0
  %v192 = vpop.f32.mrb[0].mxu0
  %v193 = vadd.f32 0.0, %v192
  %v194 = vpop.f32.mrb[0].mxu0
  %195 = vmatprep.mubr.bf16.mxu0 0
  %196 = vmatmul.mubr.bf16.gmra.mrb[0].mxu0 %v121
  %v197 = vpop.f32.mrb[0].mxu0
  %v198 = vadd.f32 0.0, %v197
  %v199 = vpop.f32.mrb[0].mxu0
  %v200 = vpop.f32.mrb[0].mxu0
  %v201 = vadd.f32 0.0, %v200
  %v202 = vpop.f32.mrb[0].mxu0
  %203 = vmatprep.mubr.bf16.mxu0 0
  %204 = vmatmul.mubr.bf16.gmra.mrb[0].mxu0 %v124
  %v205 = vpop.f32.mrb[0].mxu0
  %v206 = vadd.f32 0.0, %v205
  %v207 = vpop.f32.mrb[0].mxu0
  %v208 = vpop.f32.mrb[0].mxu0
  %v209 = vadd.f32 0.0, %v208
  %v210 = vpop.f32.mrb[0].mxu0
  %211 = vmatprep.mubr.bf16.mxu0 0
  %212 = vmatmul.mubr.bf16.gmra.mrb[0].mxu0 %v127
  %v213 = vpop.f32.mrb[0].mxu0
  %v214 = vadd.f32 0.0, %v213
  %v215 = vpop.f32.mrb[0].mxu0
  %v216 = vpop.f32.mrb[0].mxu0
  %v217 = vadd.f32 0.0, %v216
  %v218 = vpop.f32.mrb[0].mxu0
  %219 = vmatprep.mubr.bf16.mxu0 0
  %220 = vmatmul.mubr.bf16.gmra.mrb[0].mxu0 %v130
  %v221 = vpop.f32.mrb[0].mxu0
  %v222 = vadd.f32 0.0, %v221
  %v223 = vpop.f32.mrb[0].mxu0
  %v224 = vpop.f32.mrb[0].mxu0
  %v225 = vadd.f32 0.0, %v224
  %v226 = vpop.f32.mrb[0].mxu0
  %227 = vmatprep.mubr.bf16.mxu0 0
  %228 = vmatmul.mubr.bf16.gmra.mrb[0].mxu0 %v133
  %v229 = vpop.f32.mrb[0].mxu0
  %v230 = vadd.f32 0.0, %v229
  %v231 = vpop.f32.mrb[0].mxu0
  %v232 = vpop.f32.mrb[0].mxu0
  %v233 = vadd.f32 0.0, %v232
  %v234 = vpop.f32.mrb[0].mxu0
  %235 = vdwg.mxu0
  %v236 = vld [vmem:[%s2] sm:$0x1]
  %v238 = vlaneseq
  %v239 = vshrl.u32 %v238, 7
  %v240 = vsub.s32 0, %v239
  %v241 = vrot.slane %v236, %v240
  %v243 = vmul.f32 %v174, %v241
  %v244 = vmul.f32 %v177, %v241
  %v245 = vmul.f32 %v182, %v241
  %v246 = vmul.f32 %v185, %v241
  %v247 = vmul.f32 %v190, %v241
  %v248 = vmul.f32 %v193, %v241
  %v249 = vmul.f32 %v198, %v241
  %v250 = vmul.f32 %v201, %v241
  %v251 = vmul.f32 %v206, %v241
  %v252 = vmul.f32 %v209, %v241
  %v253 = vmul.f32 %v214, %v241
  %v254 = vmul.f32 %v217, %v241
  %v255 = vmul.f32 %v222, %v241
  %v256 = vmul.f32 %v225, %v241
  %v257 = vmul.f32 %v230, %v241
  %v258 = vmul.f32 %v233, %v241
  %v259 = vld [vmem:[%s3] sm:$0x1]
  %v261 = vlaneseq
  %v262 = vshrl.u32 %v261, 7
  %v263 = vsub.s32 0, %v262
  %v264 = vrot.slane %v259, %v263
  %v266 = vadd.f32 %v243, %v264
  %v267 = vadd.f32 %v244, %v264
  %v268 = vadd.f32 %v245, %v264
  %v269 = vadd.f32 %v246, %v264
  %v270 = vadd.f32 %v247, %v264
  %v271 = vadd.f32 %v248, %v264
  %v272 = vadd.f32 %v249, %v264
  %v273 = vadd.f32 %v250, %v264
  %v274 = vadd.f32 %v251, %v264
  %v275 = vadd.f32 %v252, %v264
  %v276 = vadd.f32 %v253, %v264
  %v277 = vadd.f32 %v254, %v264
  %v278 = vadd.f32 %v255, %v264
  %v279 = vadd.f32 %v256, %v264
  %v280 = vadd.f32 %v257, %v264
  %v281 = vadd.f32 %v258, %v264
  %v282 = vmax.f32 %v266, 0.0
  %v283 = vmax.f32 %v267, 0.0
  %v284 = vmax.f32 %v268, 0.0
  %v285 = vmax.f32 %v269, 0.0
  %v286 = vmax.f32 %v270, 0.0
  %v287 = vmax.f32 %v271, 0.0
  %v288 = vmax.f32 %v272, 0.0
  %v289 = vmax.f32 %v273, 0.0
  %v290 = vmax.f32 %v274, 0.0
  %v291 = vmax.f32 %v275, 0.0
  %v292 = vmax.f32 %v276, 0.0
  %v293 = vmax.f32 %v277, 0.0
  %v294 = vmax.f32 %v278, 0.0
  %v295 = vmax.f32 %v279, 0.0
  %v296 = vmax.f32 %v280, 0.0
  %v297 = vmax.f32 %v281, 0.0
  %v298 = vpack.c.bf16 %v283, %v282
  %v299 = vpack.c.bf16 %v285, %v284
  %v300 = vpack.c.bf16 %v287, %v286
  %v301 = vpack.c.bf16 %v289, %v288
  %v302 = vpack.c.bf16 %v291, %v290
  %v303 = vpack.c.bf16 %v293, %v292
  %v304 = vpack.c.bf16 %v295, %v294
  %v305 = vpack.c.bf16 %v297, %v296
  %v314 = vunpack.c.l.b16 %v298
  %v315 = vunpack.c.h.b16 %v298
  %v316 = vunpack.c.l.b16 %v299
  %v317 = vunpack.c.h.b16 %v299
  %v318 = vunpack.c.l.b16 %v300
  %v319 = vunpack.c.h.b16 %v300
  %v320 = vunpack.c.l.b16 %v301
  %v321 = vunpack.c.h.b16 %v301
  %v322 = vunpack.c.l.b16 %v302
  %v323 = vunpack.c.h.b16 %v302
  %v324 = vunpack.c.l.b16 %v303
  %v325 = vunpack.c.h.b16 %v303
  %v326 = vunpack.c.l.b16 %v304
  %v327 = vunpack.c.h.b16 %v304
  %v328 = vunpack.c.l.b16 %v305
  %v329 = vunpack.c.h.b16 %v305
  %v330 = vpack.c.b16 %v314, %v314
  %v331 = vpack.c.b16 %v315, %v315
  %v332 = vpack.c.b16 %v316, %v316
  %v333 = vpack.c.b16 %v317, %v317
  %v334 = vpack.c.b16 %v318, %v318
  %v335 = vpack.c.b16 %v319, %v319
  %v336 = vpack.c.b16 %v320, %v320
  %v337 = vpack.c.b16 %v321, %v321
  %v338 = vpack.c.b16 %v322, %v322
  %v339 = vpack.c.b16 %v323, %v323
  %v340 = vpack.c.b16 %v324, %v324
  %v341 = vpack.c.b16 %v325, %v325
  %v342 = vpack.c.b16 %v326, %v326
  %v343 = vpack.c.b16 %v327, %v327
  %v344 = vpack.c.b16 %v328, %v328
  %v345 = vpack.c.b16 %v329, %v329
  %362 = vst [vmem:[%s4] sm:$0xf] %v330
  %363 = vst [vmem:[%s4 + $0x4] sm:$0xf] %v331
  %364 = vst [vmem:[%s4 + $0x8] sm:$0xf] %v332
  %365 = vst [vmem:[%s4 + $0xc] sm:$0xf] %v333
  %366 = vst [vmem:[%s4 + $0x10] sm:$0xf] %v334
  %367 = vst [vmem:[%s4 + $0x14] sm:$0xf] %v335
  %368 = vst [vmem:[%s4 + $0x18] sm:$0xf] %v336
  %369 = vst [vmem:[%s4 + $0x1c] sm:$0xf] %v337
  %370 = vst [vmem:[%s4 + $0x20] sm:$0xf] %v338
  %371 = vst [vmem:[%s4 + $0x24] sm:$0xf] %v339
  %372 = vst [vmem:[%s4 + $0x28] sm:$0xf] %v340
  %373 = vst [vmem:[%s4 + $0x2c] sm:$0xf] %v341
  %374 = vst [vmem:[%s4 + $0x30] sm:$0xf] %v342
  %375 = vst [vmem:[%s4 + $0x34] sm:$0xf] %v343
  %376 = vst [vmem:[%s4 + $0x38] sm:$0xf] %v344
  %377 = vst [vmem:[%s4 + $0x3c] sm:$0xf] %v345
  // Predicated region
  $region18: #{vggnet_forward.20} parent=0 // pred_check
    _
  $region19: #{vggnet_forward.20} parent=0 // pred_check_branch
    %379 = sbr.rel (0) target = $region21
  $region20: #{vggnet_forward.20} parent=0 // pred_region
    _
  $region21: #{vggnet_forward.20} parent=0 // pred_fallthru
    _
  // Predicated region
  $region22: #{vggnet_forward.20} parent=0 // pred_check
    _
  $region23: #{vggnet_forward.20} parent=0 // pred_check_branch
    %381 = sbr.rel (0) target = $region25
  $region24: #{vggnet_forward.20} parent=0 // pred_region
    _
  $region25: #{vggnet_forward.20} parent=0 // pred_fallthru
    _

// kernel: vggnet_forward.21
$region0: #{vggnet_forward.21}
  #allocation0 [shape = 'u32[]', space=smem, size = 0x4, offset = 0x4, fixed_abs, tag = 'smem constant byte address 0x4 - core index']
  #allocation1 [shape = 'u32[144,128]{1,0:T(1,128)}', space=vmem, size = 0x12000, scoped, tag = 'internal scratch']
  %s0 = inlined_call_operand.vmem [shape: bf16[128,144], index: 0, kind: input, shape index: {}]
  %s1 = inlined_call_operand.vmem [shape: bf16[144,128], index: 1, kind: input, shape index: {}]
  %s2 = inlined_call_operand.vmem [shape: f32[1,128], index: 2, kind: input, shape index: {}]
  %s3 = inlined_call_operand.vmem [shape: f32[1,128], index: 3, kind: input, shape index: {}]
  %s4 = inlined_call_operand.vmem [shape: bf16[128,128], index: 4, kind: output, shape index: {}]
  %s5 = sld [smem:[#allocation0]]
  $region26: #{vggnet_forward.21} parent=0
    _
  %s7 = ssub.s32 1, %s5
  %s8 = scalar_select 0, %s7, %s5
  // Predicated region
  $region2: #{vggnet_forward.21} parent=0 // pred_check
    _
  $region3: #{vggnet_forward.21} parent=0 // pred_check_branch
    %10 = sbr.rel (0) target = $region5
  $region4: #{vggnet_forward.21} parent=0 // pred_region
    _
  $region5: #{vggnet_forward.21} parent=0 // pred_fallthru
    _
  // Predicated region
  $region6: #{vggnet_forward.21} parent=0 // pred_check
    _
  $region7: #{vggnet_forward.21} parent=0 // pred_check_branch
    %12 = sbr.rel (0) target = $region9
  $region8: #{vggnet_forward.21} parent=0 // pred_region
    _
  $region9: #{vggnet_forward.21} parent=0 // pred_fallthru
    _
  // Predicated region
  $region10: #{vggnet_forward.21} parent=0 // pred_check
    _
  $region11: #{vggnet_forward.21} parent=0 // pred_check_branch
    %14 = sbr.rel (0) target = $region13
  $region12: #{vggnet_forward.21} parent=0 // pred_region
    _
  $region13: #{vggnet_forward.21} parent=0 // pred_fallthru
    _
  // Predicated region
  $region14: #{vggnet_forward.21} parent=0 // pred_check
    _
  $region15: #{vggnet_forward.21} parent=0 // pred_check_branch
    %16 = sbr.rel (0) target = $region17
  $region16: #{vggnet_forward.21} parent=0 // pred_region
    _
  $region17: #{vggnet_forward.21} parent=0 // pred_fallthru
    _
  %v18 = vld [vmem:[%s0] sm:$0xff]
  %v19 = vld [vmem:[%s0 + $0x8] sm:$0xff]
  %v20 = vld [vmem:[%s0 + $0x10] sm:$0xff]
  %v21 = vld [vmem:[%s0 + $0x18] sm:$0xff]
  %v22 = vld [vmem:[%s0 + $0x20] sm:$0xff]
  %v23 = vld [vmem:[%s0 + $0x28] sm:$0xff]
  %v24 = vld [vmem:[%s0 + $0x30] sm:$0xff]
  %v25 = vld [vmem:[%s0 + $0x38] sm:$0xff]
  %v26 = vld [vmem:[%s0 + $0x40] sm:$0xff]
  %v27 = vld [vmem:[%s0 + $0x48] sm:$0xff]
  %v28 = vld [vmem:[%s0 + $0x50] sm:$0xff]
  %v29 = vld [vmem:[%s0 + $0x58] sm:$0xff]
  %v30 = vld [vmem:[%s0 + $0x60] sm:$0xff]
  %v31 = vld [vmem:[%s0 + $0x68] sm:$0xff]
  %v32 = vld [vmem:[%s0 + $0x70] sm:$0xff]
  %v33 = vld [vmem:[%s0 + $0x78] sm:$0xff]
  %v34 = vld [vmem:[%s1] sm:$0xf]
  %v35 = vld [vmem:[%s1 + $0x4] sm:$0xf]
  %v36 = vld [vmem:[%s1 + $0x8] sm:$0xf]
  %v37 = vld [vmem:[%s1 + $0xc] sm:$0xf]
  %v38 = vld [vmem:[%s1 + $0x10] sm:$0xf]
  %v39 = vld [vmem:[%s1 + $0x14] sm:$0xf]
  %v40 = vld [vmem:[%s1 + $0x18] sm:$0xf]
  %v41 = vld [vmem:[%s1 + $0x1c] sm:$0xf]
  %v42 = vld [vmem:[%s1 + $0x20] sm:$0xf]
  %v43 = vld [vmem:[%s1 + $0x24] sm:$0xf]
  %v44 = vld [vmem:[%s1 + $0x28] sm:$0xf]
  %v45 = vld [vmem:[%s1 + $0x2c] sm:$0xf]
  %v46 = vld [vmem:[%s1 + $0x30] sm:$0xf]
  %v47 = vld [vmem:[%s1 + $0x34] sm:$0xf]
  %v48 = vld [vmem:[%s1 + $0x38] sm:$0xf]
  %v49 = vld [vmem:[%s1 + $0x3c] sm:$0xf]
  %v50 = vld [vmem:[%s1 + $0x40] sm:$0xf]
  %v51 = vld [vmem:[%s1 + $0x44] sm:$0xf]
  %v68 = vunpack.c.l.b16 %v18
  %v69 = vunpack.c.h.b16 %v18
  %v70 = vunpack.c.l.b16 %v19
  %v71 = vunpack.c.h.b16 %v19
  %v72 = vunpack.c.l.b16 %v20
  %v73 = vunpack.c.h.b16 %v20
  %v74 = vunpack.c.l.b16 %v21
  %v75 = vunpack.c.h.b16 %v21
  %v76 = vunpack.c.l.b16 %v22
  %v77 = vunpack.c.h.b16 %v22
  %v78 = vunpack.c.l.b16 %v23
  %v79 = vunpack.c.h.b16 %v23
  %v80 = vunpack.c.l.b16 %v24
  %v81 = vunpack.c.h.b16 %v24
  %v82 = vunpack.c.l.b16 %v25
  %v83 = vunpack.c.h.b16 %v25
  %v84 = vunpack.c.l.b16 %v26
  %v85 = vunpack.c.h.b16 %v26
  %v86 = vunpack.c.l.b16 %v27
  %v87 = vunpack.c.h.b16 %v27
  %v88 = vunpack.c.l.b16 %v28
  %v89 = vunpack.c.h.b16 %v28
  %v90 = vunpack.c.l.b16 %v29
  %v91 = vunpack.c.h.b16 %v29
  %v92 = vunpack.c.l.b16 %v30
  %v93 = vunpack.c.h.b16 %v30
  %v94 = vunpack.c.l.b16 %v31
  %v95 = vunpack.c.h.b16 %v31
  %v96 = vunpack.c.l.b16 %v32
  %v97 = vunpack.c.h.b16 %v32
  %v98 = vunpack.c.l.b16 %v33
  %v99 = vunpack.c.h.b16 %v33
  %v100 = vpack.c.b16 %v70, %v68
  %v101 = vpack.c.b16 %v71, %v69
  %v102 = vpack.c.b16 %v74, %v72
  %v103 = vpack.c.b16 %v75, %v73
  %v104 = vpack.c.b16 %v78, %v76
  %v105 = vpack.c.b16 %v79, %v77
  %v106 = vpack.c.b16 %v82, %v80
  %v107 = vpack.c.b16 %v83, %v81
  %v108 = vpack.c.b16 %v86, %v84
  %v109 = vpack.c.b16 %v87, %v85
  %v110 = vpack.c.b16 %v90, %v88
  %v111 = vpack.c.b16 %v91, %v89
  %v112 = vpack.c.b16 %v94, %v92
  %v113 = vpack.c.b16 %v95, %v93
  %v114 = vpack.c.b16 %v98, %v96
  %v115 = vpack.c.b16 %v99, %v97
  %v142 = vunpack.c.l.b16 %v34
  %v143 = vunpack.c.l.b16 %v35
  %v144 = vunpack.c.l.b16 %v36
  %v145 = vunpack.c.l.b16 %v37
  %v146 = vunpack.c.l.b16 %v38
  %v147 = vunpack.c.l.b16 %v39
  %v148 = vunpack.c.l.b16 %v40
  %v149 = vunpack.c.l.b16 %v41
  %v150 = vunpack.c.l.b16 %v42
  %v151 = vunpack.c.l.b16 %v43
  %v152 = vunpack.c.l.b16 %v44
  %v153 = vunpack.c.l.b16 %v45
  %v154 = vunpack.c.l.b16 %v46
  %v155 = vunpack.c.l.b16 %v47
  %v156 = vunpack.c.l.b16 %v48
  %v157 = vunpack.c.l.b16 %v49
  %v158 = vunpack.c.l.b16 %v50
  %v159 = vunpack.c.l.b16 %v51
  %v160 = vpack.c.b16 %v143, %v142
  %v161 = vpack.c.b16 %v145, %v144
  %v162 = vpack.c.b16 %v147, %v146
  %v163 = vpack.c.b16 %v149, %v148
  %v164 = vpack.c.b16 %v151, %v150
  %v165 = vpack.c.b16 %v153, %v152
  %v166 = vpack.c.b16 %v155, %v154
  %v167 = vpack.c.b16 %v157, %v156
  %v168 = vpack.c.b16 %v159, %v158
  %vm178 = vcmask 130048
  %v180 = vsel %vm178, %v101, 0
  %v183 = vsel %vm178, %v103, 0
  %v186 = vsel %vm178, %v105, 0
  %v189 = vsel %vm178, %v107, 0
  %v192 = vsel %vm178, %v109, 0
  %v195 = vsel %vm178, %v111, 0
  %v198 = vsel %vm178, %v113, 0
  %v201 = vsel %vm178, %v115, 0
  %203 = vmatprep.subr.bf16.mxu0 0
  %204 = vmatpush1.bf16.msra.mxu0 %v160
  %205 = vmatprep.subr.bf16.mxu0 0
  %206 = vmatpush1.bf16.msra.mxu0 %v161
  %207 = vmatprep.subr.bf16.mxu0 0
  %208 = vmatpush1.bf16.msra.mxu0 %v162
  %209 = vmatprep.subr.bf16.mxu0 0
  %210 = vmatpush1.bf16.msra.mxu0 %v163
  %211 = vmatprep.subr.bf16.mxu0 0
  %212 = vmatpush1.bf16.msra.mxu0 %v164
  %213 = vmatprep.subr.bf16.mxu0 0
  %214 = vmatpush1.bf16.msra.mxu0 %v165
  %215 = vmatprep.subr.bf16.mxu0 0
  %216 = vmatpush1.bf16.msra.mxu0 %v166
  %217 = vmatprep.subr.bf16.mxu0 0
  %218 = vmatpush1.bf16.msra.mxu0 %v167
  %219 = vmatprep.subr.bf16.mxu0 0
  %220 = vmatpush1.bf16.msra.mxu0 %v168
  %221 = vmatprep.subr.bf16.mxu0 0
  %222 = vmatpush1.bf16.msra.mxu0 0
  %223 = vmatprep.subr.bf16.mxu0 0
  %224 = vmatpush1.bf16.msra.mxu0 0
  %225 = vmatprep.subr.bf16.mxu0 0
  %226 = vmatpush1.bf16.msra.mxu0 0
  %227 = vmatprep.subr.bf16.mxu0 0
  %228 = vmatpush1.bf16.msra.mxu0 0
  %229 = vmatprep.subr.bf16.mxu0 0
  %230 = vmatpush1.bf16.msra.mxu0 0
  %231 = vmatprep.subr.bf16.mxu0 0
  %232 = vmatpush1.bf16.msra.mxu0 0
  %233 = vmatprep.subr.bf16.mxu0 0
  %234 = vmatpush1.bf16.msra.mxu0 0
  %235 = vmatprep.mubr.bf16.mxu0 %v180
  %236 = vmatmul.mubr.bf16.gmra.mrb[0].mxu0 %v100
  %v237 = vpop.f32.mrb[0].mxu0
  %v238 = vadd.f32 0.0, %v237
  %v239 = vpop.f32.mrb[0].mxu0
  %v240 = vpop.f32.mrb[0].mxu0
  %v241 = vadd.f32 0.0, %v240
  %v242 = vpop.f32.mrb[0].mxu0
  %243 = vmatprep.mubr.bf16.mxu0 %v183
  %244 = vmatmul.mubr.bf16.gmra.mrb[0].mxu0 %v102
  %v245 = vpop.f32.mrb[0].mxu0
  %v246 = vadd.f32 0.0, %v245
  %v247 = vpop.f32.mrb[0].mxu0
  %v248 = vpop.f32.mrb[0].mxu0
  %v249 = vadd.f32 0.0, %v248
  %v250 = vpop.f32.mrb[0].mxu0
  %251 = vmatprep.mubr.bf16.mxu0 %v186
  %252 = vmatmul.mubr.bf16.gmra.mrb[0].mxu0 %v104
  %v253 = vpop.f32.mrb[0].mxu0
  %v254 = vadd.f32 0.0, %v253
  %v255 = vpop.f32.mrb[0].mxu0
  %v256 = vpop.f32.mrb[0].mxu0
  %v257 = vadd.f32 0.0, %v256
  %v258 = vpop.f32.mrb[0].mxu0
  %259 = vmatprep.mubr.bf16.mxu0 %v189
  %260 = vmatmul.mubr.bf16.gmra.mrb[0].mxu0 %v106
  %v261 = vpop.f32.mrb[0].mxu0
  %v262 = vadd.f32 0.0, %v261
  %v263 = vpop.f32.mrb[0].mxu0
  %v264 = vpop.f32.mrb[0].mxu0
  %v265 = vadd.f32 0.0, %v264
  %v266 = vpop.f32.mrb[0].mxu0
  %267 = vmatprep.mubr.bf16.mxu0 %v192
  %268 = vmatmul.mubr.bf16.gmra.mrb[0].mxu0 %v108
  %v269 = vpop.f32.mrb[0].mxu0
  %v270 = vadd.f32 0.0, %v269
  %v271 = vpop.f32.mrb[0].mxu0
  %v272 = vpop.f32.mrb[0].mxu0
  %v273 = vadd.f32 0.0, %v272
  %v274 = vpop.f32.mrb[0].mxu0
  %275 = vmatprep.mubr.bf16.mxu0 %v195
  %276 = vmatmul.mubr.bf16.gmra.mrb[0].mxu0 %v110
  %v277 = vpop.f32.mrb[0].mxu0
  %v278 = vadd.f32 0.0, %v277
  %v279 = vpop.f32.mrb[0].mxu0
  %v280 = vpop.f32.mrb[0].mxu0
  %v281 = vadd.f32 0.0, %v280
  %v282 = vpop.f32.mrb[0].mxu0
  %283 = vmatprep.mubr.bf16.mxu0 %v198
  %284 = vmatmul.mubr.bf16.gmra.mrb[0].mxu0 %v112
  %v285 = vpop.f32.mrb[0].mxu0
  %v286 = vadd.f32 0.0, %v285
  %v287 = vpop.f32.mrb[0].mxu0
  %v288 = vpop.f32.mrb[0].mxu0
  %v289 = vadd.f32 0.0, %v288
  %v290 = vpop.f32.mrb[0].mxu0
  %291 = vmatprep.mubr.bf16.mxu0 %v201
  %292 = vmatmul.mubr.bf16.gmra.mrb[0].mxu0 %v114
  %v293 = vpop.f32.mrb[0].mxu0
  %v294 = vadd.f32 0.0, %v293
  %v295 = vpop.f32.mrb[0].mxu0
  %v296 = vpop.f32.mrb[0].mxu0
  %v297 = vadd.f32 0.0, %v296
  %v298 = vpop.f32.mrb[0].mxu0
  %299 = vdwg.mxu0
  %v300 = vld [vmem:[%s2] sm:$0x1]
  %v302 = vlaneseq
  %v303 = vshrl.u32 %v302, 7
  %v304 = vsub.s32 0, %v303
  %v305 = vrot.slane %v300, %v304
  %v307 = vmul.f32 %v238, %v305
  %v308 = vmul.f32 %v241, %v305
  %v309 = vmul.f32 %v246, %v305
  %v310 = vmul.f32 %v249, %v305
  %v311 = vmul.f32 %v254, %v305
  %v312 = vmul.f32 %v257, %v305
  %v313 = vmul.f32 %v262, %v305
  %v314 = vmul.f32 %v265, %v305
  %v315 = vmul.f32 %v270, %v305
  %v316 = vmul.f32 %v273, %v305
  %v317 = vmul.f32 %v278, %v305
  %v318 = vmul.f32 %v281, %v305
  %v319 = vmul.f32 %v286, %v305
  %v320 = vmul.f32 %v289, %v305
  %v321 = vmul.f32 %v294, %v305
  %v322 = vmul.f32 %v297, %v305
  %v323 = vld [vmem:[%s3] sm:$0x1]
  %v325 = vlaneseq
  %v326 = vshrl.u32 %v325, 7
  %v327 = vsub.s32 0, %v326
  %v328 = vrot.slane %v323, %v327
  %v330 = vadd.f32 %v307, %v328
  %v331 = vadd.f32 %v308, %v328
  %v332 = vadd.f32 %v309, %v328
  %v333 = vadd.f32 %v310, %v328
  %v334 = vadd.f32 %v311, %v328
  %v335 = vadd.f32 %v312, %v328
  %v336 = vadd.f32 %v313, %v328
  %v337 = vadd.f32 %v314, %v328
  %v338 = vadd.f32 %v315, %v328
  %v339 = vadd.f32 %v316, %v328
  %v340 = vadd.f32 %v317, %v328
  %v341 = vadd.f32 %v318, %v328
  %v342 = vadd.f32 %v319, %v328
  %v343 = vadd.f32 %v320, %v328
  %v344 = vadd.f32 %v321, %v328
  %v345 = vadd.f32 %v322, %v328
  %v346 = vmax.f32 %v330, 0.0
  %v347 = vmax.f32 %v331, 0.0
  %v348 = vmax.f32 %v332, 0.0
  %v349 = vmax.f32 %v333, 0.0
  %v350 = vmax.f32 %v334, 0.0
  %v351 = vmax.f32 %v335, 0.0
  %v352 = vmax.f32 %v336, 0.0
  %v353 = vmax.f32 %v337, 0.0
  %v354 = vmax.f32 %v338, 0.0
  %v355 = vmax.f32 %v339, 0.0
  %v356 = vmax.f32 %v340, 0.0
  %v357 = vmax.f32 %v341, 0.0
  %v358 = vmax.f32 %v342, 0.0
  %v359 = vmax.f32 %v343, 0.0
  %v360 = vmax.f32 %v344, 0.0
  %v361 = vmax.f32 %v345, 0.0
  %v362 = vpack.c.bf16 %v347, %v346
  %v363 = vpack.c.bf16 %v349, %v348
  %v364 = vpack.c.bf16 %v351, %v350
  %v365 = vpack.c.bf16 %v353, %v352
  %v366 = vpack.c.bf16 %v355, %v354
  %v367 = vpack.c.bf16 %v357, %v356
  %v368 = vpack.c.bf16 %v359, %v358
  %v369 = vpack.c.bf16 %v361, %v360
  %v378 = vunpack.c.l.b16 %v362
  %v379 = vunpack.c.h.b16 %v362
  %v380 = vunpack.c.l.b16 %v363
  %v381 = vunpack.c.h.b16 %v363
  %v382 = vunpack.c.l.b16 %v364
  %v383 = vunpack.c.h.b16 %v364
  %v384 = vunpack.c.l.b16 %v365
  %v385 = vunpack.c.h.b16 %v365
  %v386 = vunpack.c.l.b16 %v366
  %v387 = vunpack.c.h.b16 %v366
  %v388 = vunpack.c.l.b16 %v367
  %v389 = vunpack.c.h.b16 %v367
  %v390 = vunpack.c.l.b16 %v368
  %v391 = vunpack.c.h.b16 %v368
  %v392 = vunpack.c.l.b16 %v369
  %v393 = vunpack.c.h.b16 %v369
  %v394 = vpack.c.b16 %v378, %v378
  %v395 = vpack.c.b16 %v379, %v379
  %v396 = vpack.c.b16 %v380, %v380
  %v397 = vpack.c.b16 %v381, %v381
  %v398 = vpack.c.b16 %v382, %v382
  %v399 = vpack.c.b16 %v383, %v383
  %v400 = vpack.c.b16 %v384, %v384
  %v401 = vpack.c.b16 %v385, %v385
  %v402 = vpack.c.b16 %v386, %v386
  %v403 = vpack.c.b16 %v387, %v387
  %v404 = vpack.c.b16 %v388, %v388
  %v405 = vpack.c.b16 %v389, %v389
  %v406 = vpack.c.b16 %v390, %v390
  %v407 = vpack.c.b16 %v391, %v391
  %v408 = vpack.c.b16 %v392, %v392
  %v409 = vpack.c.b16 %v393, %v393
  %426 = vst [vmem:[%s4] sm:$0xf] %v394
  %427 = vst [vmem:[%s4 + $0x4] sm:$0xf] %v395
  %428 = vst [vmem:[%s4 + $0x8] sm:$0xf] %v396
  %429 = vst [vmem:[%s4 + $0xc] sm:$0xf] %v397
  %430 = vst [vmem:[%s4 + $0x10] sm:$0xf] %v398
  %431 = vst [vmem:[%s4 + $0x14] sm:$0xf] %v399
  %432 = vst [vmem:[%s4 + $0x18] sm:$0xf] %v400
  %433 = vst [vmem:[%s4 + $0x1c] sm:$0xf] %v401
  %434 = vst [vmem:[%s4 + $0x20] sm:$0xf] %v402
  %435 = vst [vmem:[%s4 + $0x24] sm:$0xf] %v403
  %436 = vst [vmem:[%s4 + $0x28] sm:$0xf] %v404
  %437 = vst [vmem:[%s4 + $0x2c] sm:$0xf] %v405
  %438 = vst [vmem:[%s4 + $0x30] sm:$0xf] %v406
  %439 = vst [vmem:[%s4 + $0x34] sm:$0xf] %v407
  %440 = vst [vmem:[%s4 + $0x38] sm:$0xf] %v408
  %441 = vst [vmem:[%s4 + $0x3c] sm:$0xf] %v409
  // Predicated region
  $region18: #{vggnet_forward.21} parent=0 // pred_check
    _
  $region19: #{vggnet_forward.21} parent=0 // pred_check_branch
    %443 = sbr.rel (0) target = $region21
  $region20: #{vggnet_forward.21} parent=0 // pred_region
    _
  $region21: #{vggnet_forward.21} parent=0 // pred_fallthru
    _
  // Predicated region
  $region22: #{vggnet_forward.21} parent=0 // pred_check
    _
  $region23: #{vggnet_forward.21} parent=0 // pred_check_branch
    %445 = sbr.rel (0) target = $region25
  $region24: #{vggnet_forward.21} parent=0 // pred_region
    _
  $region25: #{vggnet_forward.21} parent=0 // pred_fallthru
    _

// kernel: vggnet_forward.23
$region0: #{vggnet_forward.23}
  #allocation0 [shape = 'u32[]', space=smem, size = 0x4, offset = 0x4, fixed_abs, tag = 'smem constant byte address 0x4 - core index']
  #allocation1 [shape = 'u32[144,128]{1,0:T(1,128)}', space=vmem, size = 0x12000, scoped, tag = 'internal scratch']
  %s0 = inlined_call_operand.vmem [shape: bf16[4,32,144], index: 0, kind: input, shape index: {}]
  %s1 = inlined_call_operand.vmem [shape: bf16[144,128], index: 1, kind: input, shape index: {}]
  %s2 = inlined_call_operand.vmem [shape: f32[1,128], index: 2, kind: input, shape index: {}]
  %s3 = inlined_call_operand.vmem [shape: f32[1,128], index: 3, kind: input, shape index: {}]
  %s4 = inlined_call_operand.vmem [shape: bf16[32,128], index: 4, kind: output, shape index: {}]
  %s5 = sld [smem:[#allocation0]]
  $region26: #{vggnet_forward.23} parent=0
    _
  %s7 = ssub.s32 1, %s5
  %s8 = scalar_select 0, %s7, %s5
  // Predicated region
  $region2: #{vggnet_forward.23} parent=0 // pred_check
    _
  $region3: #{vggnet_forward.23} parent=0 // pred_check_branch
    %10 = sbr.rel (0) target = $region5
  $region4: #{vggnet_forward.23} parent=0 // pred_region
    _
  $region5: #{vggnet_forward.23} parent=0 // pred_fallthru
    _
  // Predicated region
  $region6: #{vggnet_forward.23} parent=0 // pred_check
    _
  $region7: #{vggnet_forward.23} parent=0 // pred_check_branch
    %12 = sbr.rel (0) target = $region9
  $region8: #{vggnet_forward.23} parent=0 // pred_region
    _
  $region9: #{vggnet_forward.23} parent=0 // pred_fallthru
    _
  // Predicated region
  $region10: #{vggnet_forward.23} parent=0 // pred_check
    _
  $region11: #{vggnet_forward.23} parent=0 // pred_check_branch
    %14 = sbr.rel (0) target = $region13
  $region12: #{vggnet_forward.23} parent=0 // pred_region
    _
  $region13: #{vggnet_forward.23} parent=0 // pred_fallthru
    _
  // Predicated region
  $region14: #{vggnet_forward.23} parent=0 // pred_check
    _
  $region15: #{vggnet_forward.23} parent=0 // pred_check_branch
    %16 = sbr.rel (0) target = $region17
  $region16: #{vggnet_forward.23} parent=0 // pred_region
    _
  $region17: #{vggnet_forward.23} parent=0 // pred_fallthru
    _
  %v18 = vld [vmem:[%s1] sm:$0xf]
  %v19 = vld [vmem:[%s1 + $0x4] sm:$0xf]
  %v20 = vld [vmem:[%s1 + $0x8] sm:$0xf]
  %v21 = vld [vmem:[%s1 + $0xc] sm:$0xf]
  %v22 = vld [vmem:[%s1 + $0x10] sm:$0xf]
  %v23 = vld [vmem:[%s1 + $0x14] sm:$0xf]
  %v24 = vld [vmem:[%s1 + $0x18] sm:$0xf]
  %v25 = vld [vmem:[%s1 + $0x1c] sm:$0xf]
  %v26 = vld [vmem:[%s1 + $0x20] sm:$0xf]
  %v27 = vld [vmem:[%s1 + $0x24] sm:$0xf]
  %v28 = vld [vmem:[%s1 + $0x28] sm:$0xf]
  %v29 = vld [vmem:[%s1 + $0x2c] sm:$0xf]
  %v30 = vld [vmem:[%s1 + $0x30] sm:$0xf]
  %v31 = vld [vmem:[%s1 + $0x34] sm:$0xf]
  %v32 = vld [vmem:[%s1 + $0x38] sm:$0xf]
  %v33 = vld [vmem:[%s1 + $0x3c] sm:$0xf]
  %v34 = vld [vmem:[%s1 + $0x40] sm:$0xf]
  %v35 = vld [vmem:[%s1 + $0x44] sm:$0xf]
  %v36 = vld [vmem:[%s2] sm:$0x1]
  %v37 = vld [vmem:[%s3] sm:$0x1]
  %v38 = vld [vmem:[%s0] sm:$0xff]
  %v39 = vld [vmem:[%s0 + $0x8] sm:$0xff]
  %v40 = vld [vmem:[%s0 + $0x10] sm:$0xff]
  %v41 = vld [vmem:[%s0 + $0x18] sm:$0xff]
  %v46 = vunpack.c.l.b16 %v38
  %v47 = vunpack.c.h.b16 %v38
  %v48 = vunpack.c.l.b16 %v39
  %v49 = vunpack.c.h.b16 %v39
  %v50 = vunpack.c.l.b16 %v40
  %v51 = vunpack.c.h.b16 %v40
  %v52 = vunpack.c.l.b16 %v41
  %v53 = vunpack.c.h.b16 %v41
  %v54 = vpack.c.b16 %v48, %v46
  %v55 = vpack.c.b16 %v49, %v47
  %v56 = vpack.c.b16 %v52, %v50
  %v57 = vpack.c.b16 %v53, %v51
  %v78 = vunpack.c.l.b16 %v18
  %v79 = vunpack.c.l.b16 %v19
  %v80 = vunpack.c.l.b16 %v20
  %v81 = vunpack.c.l.b16 %v21
  %v82 = vunpack.c.l.b16 %v22
  %v83 = vunpack.c.l.b16 %v23
  %v84 = vunpack.c.l.b16 %v24
  %v85 = vunpack.c.l.b16 %v25
  %v86 = vunpack.c.l.b16 %v26
  %v87 = vunpack.c.l.b16 %v27
  %v88 = vunpack.c.l.b16 %v28
  %v89 = vunpack.c.l.b16 %v29
  %v90 = vunpack.c.l.b16 %v30
  %v91 = vunpack.c.l.b16 %v31
  %v92 = vunpack.c.l.b16 %v32
  %v93 = vunpack.c.l.b16 %v33
  %v94 = vunpack.c.l.b16 %v34
  %v95 = vunpack.c.l.b16 %v35
  %v96 = vpack.c.b16 %v79, %v78
  %v97 = vpack.c.b16 %v81, %v80
  %v98 = vpack.c.b16 %v83, %v82
  %v99 = vpack.c.b16 %v85, %v84
  %v100 = vpack.c.b16 %v87, %v86
  %v101 = vpack.c.b16 %v89, %v88
  %v102 = vpack.c.b16 %v91, %v90
  %v103 = vpack.c.b16 %v93, %v92
  %v104 = vpack.c.b16 %v95, %v94
  %vm114 = vcmask 130048
  %v116 = vsel %vm114, %v55, 0
  %v119 = vsel %vm114, %v57, 0
  %121 = vmatprep.subr.bf16.mxu0 0
  %122 = vmatpush1.bf16.msra.mxu0 %v96
  %123 = vmatprep.subr.bf16.mxu0 0
  %124 = vmatpush1.bf16.msra.mxu0 %v97
  %125 = vmatprep.subr.bf16.mxu0 0
  %126 = vmatpush1.bf16.msra.mxu0 %v98
  %127 = vmatprep.subr.bf16.mxu0 0
  %128 = vmatpush1.bf16.msra.mxu0 %v99
  %129 = vmatprep.subr.bf16.mxu0 0
  %130 = vmatpush1.bf16.msra.mxu0 %v100
  %131 = vmatprep.subr.bf16.mxu0 0
  %132 = vmatpush1.bf16.msra.mxu0 %v101
  %133 = vmatprep.subr.bf16.mxu0 0
  %134 = vmatpush1.bf16.msra.mxu0 %v102
  %135 = vmatprep.subr.bf16.mxu0 0
  %136 = vmatpush1.bf16.msra.mxu0 %v103
  %137 = vmatprep.subr.bf16.mxu0 0
  %138 = vmatpush1.bf16.msra.mxu0 %v104
  %139 = vmatprep.subr.bf16.mxu0 0
  %140 = vmatpush1.bf16.msra.mxu0 0
  %141 = vmatprep.subr.bf16.mxu0 0
  %142 = vmatpush1.bf16.msra.mxu0 0
  %143 = vmatprep.subr.bf16.mxu0 0
  %144 = vmatpush1.bf16.msra.mxu0 0
  %145 = vmatprep.subr.bf16.mxu0 0
  %146 = vmatpush1.bf16.msra.mxu0 0
  %147 = vmatprep.subr.bf16.mxu0 0
  %148 = vmatpush1.bf16.msra.mxu0 0
  %149 = vmatprep.subr.bf16.mxu0 0
  %150 = vmatpush1.bf16.msra.mxu0 0
  %151 = vmatprep.subr.bf16.mxu0 0
  %152 = vmatpush1.bf16.msra.mxu0 0
  %153 = vmatprep.mubr.bf16.mxu0 %v116
  %154 = vmatmul.mubr.bf16.gmra.mrb[0].mxu0 %v54
  %v155 = vpop.f32.mrb[0].mxu0
  %v156 = vadd.f32 0.0, %v155
  %v157 = vpop.f32.mrb[0].mxu0
  %v158 = vpop.f32.mrb[0].mxu0
  %v159 = vadd.f32 0.0, %v158
  %v160 = vpop.f32.mrb[0].mxu0
  %161 = vmatprep.mubr.bf16.mxu0 %v119
  %162 = vmatmul.mubr.bf16.gmra.mrb[0].mxu0 %v56
  %v163 = vpop.f32.mrb[0].mxu0
  %v164 = vadd.f32 0.0, %v163
  %v165 = vpop.f32.mrb[0].mxu0
  %v166 = vpop.f32.mrb[0].mxu0
  %v167 = vadd.f32 0.0, %v166
  %v168 = vpop.f32.mrb[0].mxu0
  %169 = vdwg.mxu0
  %v171 = vlaneseq
  %v172 = vshrl.u32 %v171, 7
  %v173 = vsub.s32 0, %v172
  %v174 = vrot.slane %v36, %v173
  %v176 = vmul.f32 %v156, %v174
  %v177 = vmul.f32 %v159, %v174
  %v178 = vmul.f32 %v164, %v174
  %v179 = vmul.f32 %v167, %v174
  %v181 = vlaneseq
  %v182 = vshrl.u32 %v181, 7
  %v183 = vsub.s32 0, %v182
  %v184 = vrot.slane %v37, %v183
  %v186 = vadd.f32 %v176, %v184
  %v187 = vadd.f32 %v177, %v184
  %v188 = vadd.f32 %v178, %v184
  %v189 = vadd.f32 %v179, %v184
  %v190 = vmax.f32 %v186, 0.0
  %v191 = vmax.f32 %v187, 0.0
  %v192 = vmax.f32 %v188, 0.0
  %v193 = vmax.f32 %v189, 0.0
  %s194 = scalar_lea.vmem %s0, 32
  %v195 = vld [vmem:[%s194] sm:$0xff]
  %v196 = vld [vmem:[%s194 + $0x8] sm:$0xff]
  %v197 = vld [vmem:[%s194 + $0x10] sm:$0xff]
  %v198 = vld [vmem:[%s194 + $0x18] sm:$0xff]
  %v203 = vunpack.c.l.b16 %v195
  %v204 = vunpack.c.h.b16 %v195
  %v205 = vunpack.c.l.b16 %v196
  %v206 = vunpack.c.h.b16 %v196
  %v207 = vunpack.c.l.b16 %v197
  %v208 = vunpack.c.h.b16 %v197
  %v209 = vunpack.c.l.b16 %v198
  %v210 = vunpack.c.h.b16 %v198
  %v211 = vpack.c.b16 %v205, %v203
  %v212 = vpack.c.b16 %v206, %v204
  %v213 = vpack.c.b16 %v209, %v207
  %v214 = vpack.c.b16 %v210, %v208
  %v218 = vsel %vm114, %v212, 0
  %v221 = vsel %vm114, %v214, 0
  %223 = vmatprep.subr.bf16.mxu0 0
  %224 = vmatpush1.bf16.msra.mxu0 %v96
  %225 = vmatprep.subr.bf16.mxu0 0
  %226 = vmatpush1.bf16.msra.mxu0 %v97
  %227 = vmatprep.subr.bf16.mxu0 0
  %228 = vmatpush1.bf16.msra.mxu0 %v98
  %229 = vmatprep.subr.bf16.mxu0 0
  %230 = vmatpush1.bf16.msra.mxu0 %v99
  %231 = vmatprep.subr.bf16.mxu0 0
  %232 = vmatpush1.bf16.msra.mxu0 %v100
  %233 = vmatprep.subr.bf16.mxu0 0
  %234 = vmatpush1.bf16.msra.mxu0 %v101
  %235 = vmatprep.subr.bf16.mxu0 0
  %236 = vmatpush1.bf16.msra.mxu0 %v102
  %237 = vmatprep.subr.bf16.mxu0 0
  %238 = vmatpush1.bf16.msra.mxu0 %v103
  %239 = vmatprep.subr.bf16.mxu0 0
  %240 = vmatpush1.bf16.msra.mxu0 %v104
  %241 = vmatprep.subr.bf16.mxu0 0
  %242 = vmatpush1.bf16.msra.mxu0 0
  %243 = vmatprep.subr.bf16.mxu0 0
  %244 = vmatpush1.bf16.msra.mxu0 0
  %245 = vmatprep.subr.bf16.mxu0 0
  %246 = vmatpush1.bf16.msra.mxu0 0
  %247 = vmatprep.subr.bf16.mxu0 0
  %248 = vmatpush1.bf16.msra.mxu0 0
  %249 = vmatprep.subr.bf16.mxu0 0
  %250 = vmatpush1.bf16.msra.mxu0 0
  %251 = vmatprep.subr.bf16.mxu0 0
  %252 = vmatpush1.bf16.msra.mxu0 0
  %253 = vmatprep.subr.bf16.mxu0 0
  %254 = vmatpush1.bf16.msra.mxu0 0
  %255 = vmatprep.mubr.bf16.mxu0 %v218
  %256 = vmatmul.mubr.bf16.gmra.mrb[0].mxu0 %v211
  %v257 = vpop.f32.mrb[0].mxu0
  %v258 = vadd.f32 0.0, %v257
  %v259 = vpop.f32.mrb[0].mxu0
  %v260 = vpop.f32.mrb[0].mxu0
  %v261 = vadd.f32 0.0, %v260
  %v262 = vpop.f32.mrb[0].mxu0
  %263 = vmatprep.mubr.bf16.mxu0 %v221
  %264 = vmatmul.mubr.bf16.gmra.mrb[0].mxu0 %v213
  %v265 = vpop.f32.mrb[0].mxu0
  %v266 = vadd.f32 0.0, %v265
  %v267 = vpop.f32.mrb[0].mxu0
  %v268 = vpop.f32.mrb[0].mxu0
  %v269 = vadd.f32 0.0, %v268
  %v270 = vpop.f32.mrb[0].mxu0
  %271 = vdwg.mxu0
  %v272 = vmul.f32 %v258, %v174
  %v273 = vmul.f32 %v261, %v174
  %v274 = vmul.f32 %v266, %v174
  %v275 = vmul.f32 %v269, %v174
  %v276 = vadd.f32 %v272, %v184
  %v277 = vadd.f32 %v273, %v184
  %v278 = vadd.f32 %v274, %v184
  %v279 = vadd.f32 %v275, %v184
  %v280 = vmax.f32 %v276, 0.0
  %v281 = vmax.f32 %v277, 0.0
  %v282 = vmax.f32 %v278, 0.0
  %v283 = vmax.f32 %v279, 0.0
  %v284 = vmax.f32 %v190, %v280
  %v285 = vmax.f32 %v191, %v281
  %v286 = vmax.f32 %v192, %v282
  %v287 = vmax.f32 %v193, %v283
  %s288 = scalar_lea.vmem %s0, 64
  %v289 = vld [vmem:[%s288] sm:$0xff]
  %v290 = vld [vmem:[%s288 + $0x8] sm:$0xff]
  %v291 = vld [vmem:[%s288 + $0x10] sm:$0xff]
  %v292 = vld [vmem:[%s288 + $0x18] sm:$0xff]
  %v297 = vunpack.c.l.b16 %v289
  %v298 = vunpack.c.h.b16 %v289
  %v299 = vunpack.c.l.b16 %v290
  %v300 = vunpack.c.h.b16 %v290
  %v301 = vunpack.c.l.b16 %v291
  %v302 = vunpack.c.h.b16 %v291
  %v303 = vunpack.c.l.b16 %v292
  %v304 = vunpack.c.h.b16 %v292
  %v305 = vpack.c.b16 %v299, %v297
  %v306 = vpack.c.b16 %v300, %v298
  %v307 = vpack.c.b16 %v303, %v301
  %v308 = vpack.c.b16 %v304, %v302
  %v312 = vsel %vm114, %v306, 0
  %v315 = vsel %vm114, %v308, 0
  %317 = vmatprep.subr.bf16.mxu0 0
  %318 = vmatpush1.bf16.msra.mxu0 %v96
  %319 = vmatprep.subr.bf16.mxu0 0
  %320 = vmatpush1.bf16.msra.mxu0 %v97
  %321 = vmatprep.subr.bf16.mxu0 0
  %322 = vmatpush1.bf16.msra.mxu0 %v98
  %323 = vmatprep.subr.bf16.mxu0 0
  %324 = vmatpush1.bf16.msra.mxu0 %v99
  %325 = vmatprep.subr.bf16.mxu0 0
  %326 = vmatpush1.bf16.msra.mxu0 %v100
  %327 = vmatprep.subr.bf16.mxu0 0
  %328 = vmatpush1.bf16.msra.mxu0 %v101
  %329 = vmatprep.subr.bf16.mxu0 0
  %330 = vmatpush1.bf16.msra.mxu0 %v102
  %331 = vmatprep.subr.bf16.mxu0 0
  %332 = vmatpush1.bf16.msra.mxu0 %v103
  %333 = vmatprep.subr.bf16.mxu0 0
  %334 = vmatpush1.bf16.msra.mxu0 %v104
  %335 = vmatprep.subr.bf16.mxu0 0
  %336 = vmatpush1.bf16.msra.mxu0 0
  %337 = vmatprep.subr.bf16.mxu0 0
  %338 = vmatpush1.bf16.msra.mxu0 0
  %339 = vmatprep.subr.bf16.mxu0 0
  %340 = vmatpush1.bf16.msra.mxu0 0
  %341 = vmatprep.subr.bf16.mxu0 0
  %342 = vmatpush1.bf16.msra.mxu0 0
  %343 = vmatprep.subr.bf16.mxu0 0
  %344 = vmatpush1.bf16.msra.mxu0 0
  %345 = vmatprep.subr.bf16.mxu0 0
  %346 = vmatpush1.bf16.msra.mxu0 0
  %347 = vmatprep.subr.bf16.mxu0 0
  %348 = vmatpush1.bf16.msra.mxu0 0
  %349 = vmatprep.mubr.bf16.mxu0 %v312
  %350 = vmatmul.mubr.bf16.gmra.mrb[0].mxu0 %v305
  %v351 = vpop.f32.mrb[0].mxu0
  %v352 = vadd.f32 0.0, %v351
  %v353 = vpop.f32.mrb[0].mxu0
  %v354 = vpop.f32.mrb[0].mxu0
  %v355 = vadd.f32 0.0, %v354
  %v356 = vpop.f32.mrb[0].mxu0
  %357 = vmatprep.mubr.bf16.mxu0 %v315
  %358 = vmatmul.mubr.bf16.gmra.mrb[0].mxu0 %v307
  %v359 = vpop.f32.mrb[0].mxu0
  %v360 = vadd.f32 0.0, %v359
  %v361 = vpop.f32.mrb[0].mxu0
  %v362 = vpop.f32.mrb[0].mxu0
  %v363 = vadd.f32 0.0, %v362
  %v364 = vpop.f32.mrb[0].mxu0
  %365 = vdwg.mxu0
  %v366 = vmul.f32 %v352, %v174
  %v367 = vmul.f32 %v355, %v174
  %v368 = vmul.f32 %v360, %v174
  %v369 = vmul.f32 %v363, %v174
  %v370 = vadd.f32 %v366, %v184
  %v371 = vadd.f32 %v367, %v184
  %v372 = vadd.f32 %v368, %v184
  %v373 = vadd.f32 %v369, %v184
  %v374 = vmax.f32 %v370, 0.0
  %v375 = vmax.f32 %v371, 0.0
  %v376 = vmax.f32 %v372, 0.0
  %v377 = vmax.f32 %v373, 0.0
  %v378 = vmax.f32 %v284, %v374
  %v379 = vmax.f32 %v285, %v375
  %v380 = vmax.f32 %v286, %v376
  %v381 = vmax.f32 %v287, %v377
  %s382 = scalar_lea.vmem %s0, 96
  %v383 = vld [vmem:[%s382] sm:$0xff]
  %v384 = vld [vmem:[%s382 + $0x8] sm:$0xff]
  %v385 = vld [vmem:[%s382 + $0x10] sm:$0xff]
  %v386 = vld [vmem:[%s382 + $0x18] sm:$0xff]
  %v391 = vunpack.c.l.b16 %v383
  %v392 = vunpack.c.h.b16 %v383
  %v393 = vunpack.c.l.b16 %v384
  %v394 = vunpack.c.h.b16 %v384
  %v395 = vunpack.c.l.b16 %v385
  %v396 = vunpack.c.h.b16 %v385
  %v397 = vunpack.c.l.b16 %v386
  %v398 = vunpack.c.h.b16 %v386
  %v399 = vpack.c.b16 %v393, %v391
  %v400 = vpack.c.b16 %v394, %v392
  %v401 = vpack.c.b16 %v397, %v395
  %v402 = vpack.c.b16 %v398, %v396
  %v406 = vsel %vm114, %v400, 0
  %v409 = vsel %vm114, %v402, 0
  %411 = vmatprep.subr.bf16.mxu0 0
  %412 = vmatpush1.bf16.msra.mxu0 %v96
  %413 = vmatprep.subr.bf16.mxu0 0
  %414 = vmatpush1.bf16.msra.mxu0 %v97
  %415 = vmatprep.subr.bf16.mxu0 0
  %416 = vmatpush1.bf16.msra.mxu0 %v98
  %417 = vmatprep.subr.bf16.mxu0 0
  %418 = vmatpush1.bf16.msra.mxu0 %v99
  %419 = vmatprep.subr.bf16.mxu0 0
  %420 = vmatpush1.bf16.msra.mxu0 %v100
  %421 = vmatprep.subr.bf16.mxu0 0
  %422 = vmatpush1.bf16.msra.mxu0 %v101
  %423 = vmatprep.subr.bf16.mxu0 0
  %424 = vmatpush1.bf16.msra.mxu0 %v102
  %425 = vmatprep.subr.bf16.mxu0 0
  %426 = vmatpush1.bf16.msra.mxu0 %v103
  %427 = vmatprep.subr.bf16.mxu0 0
  %428 = vmatpush1.bf16.msra.mxu0 %v104
  %429 = vmatprep.subr.bf16.mxu0 0
  %430 = vmatpush1.bf16.msra.mxu0 0
  %431 = vmatprep.subr.bf16.mxu0 0
  %432 = vmatpush1.bf16.msra.mxu0 0
  %433 = vmatprep.subr.bf16.mxu0 0
  %434 = vmatpush1.bf16.msra.mxu0 0
  %435 = vmatprep.subr.bf16.mxu0 0
  %436 = vmatpush1.bf16.msra.mxu0 0
  %437 = vmatprep.subr.bf16.mxu0 0
  %438 = vmatpush1.bf16.msra.mxu0 0
  %439 = vmatprep.subr.bf16.mxu0 0
  %440 = vmatpush1.bf16.msra.mxu0 0
  %441 = vmatprep.subr.bf16.mxu0 0
  %442 = vmatpush1.bf16.msra.mxu0 0
  %443 = vmatprep.mubr.bf16.mxu0 %v406
  %444 = vmatmul.mubr.bf16.gmra.mrb[0].mxu0 %v399
  %v445 = vpop.f32.mrb[0].mxu0
  %v446 = vadd.f32 0.0, %v445
  %v447 = vpop.f32.mrb[0].mxu0
  %v448 = vpop.f32.mrb[0].mxu0
  %v449 = vadd.f32 0.0, %v448
  %v450 = vpop.f32.mrb[0].mxu0
  %451 = vmatprep.mubr.bf16.mxu0 %v409
  %452 = vmatmul.mubr.bf16.gmra.mrb[0].mxu0 %v401
  %v453 = vpop.f32.mrb[0].mxu0
  %v454 = vadd.f32 0.0, %v453
  %v455 = vpop.f32.mrb[0].mxu0
  %v456 = vpop.f32.mrb[0].mxu0
  %v457 = vadd.f32 0.0, %v456
  %v458 = vpop.f32.mrb[0].mxu0
  %459 = vdwg.mxu0
  %v460 = vmul.f32 %v446, %v174
  %v461 = vmul.f32 %v449, %v174
  %v462 = vmul.f32 %v454, %v174
  %v463 = vmul.f32 %v457, %v174
  %v464 = vadd.f32 %v460, %v184
  %v465 = vadd.f32 %v461, %v184
  %v466 = vadd.f32 %v462, %v184
  %v467 = vadd.f32 %v463, %v184
  %v468 = vmax.f32 %v464, 0.0
  %v469 = vmax.f32 %v465, 0.0
  %v470 = vmax.f32 %v466, 0.0
  %v471 = vmax.f32 %v467, 0.0
  %v472 = vmax.f32 %v378, %v468
  %v473 = vmax.f32 %v379, %v469
  %v474 = vmax.f32 %v380, %v470
  %v475 = vmax.f32 %v381, %v471
  %v476 = vpack.c.bf16 %v473, %v472
  %v477 = vpack.c.bf16 %v475, %v474
  %v480 = vunpack.c.l.b16 %v476
  %v481 = vunpack.c.h.b16 %v476
  %v482 = vunpack.c.l.b16 %v477
  %v483 = vunpack.c.h.b16 %v477
  %v484 = vpack.c.b16 %v480, %v480
  %v485 = vpack.c.b16 %v481, %v481
  %v486 = vpack.c.b16 %v482, %v482
  %v487 = vpack.c.b16 %v483, %v483
  %492 = vst [vmem:[%s4] sm:$0xf] %v484
  %493 = vst [vmem:[%s4 + $0x4] sm:$0xf] %v485
  %494 = vst [vmem:[%s4 + $0x8] sm:$0xf] %v486
  %495 = vst [vmem:[%s4 + $0xc] sm:$0xf] %v487
  // Predicated region
  $region18: #{vggnet_forward.23} parent=0 // pred_check
    _
  $region19: #{vggnet_forward.23} parent=0 // pred_check_branch
    %497 = sbr.rel (0) target = $region21
  $region20: #{vggnet_forward.23} parent=0 // pred_region
    _
  $region21: #{vggnet_forward.23} parent=0 // pred_fallthru
    _
  // Predicated region
  $region22: #{vggnet_forward.23} parent=0 // pred_check
    _
  $region23: #{vggnet_forward.23} parent=0 // pred_check_branch
    %499 = sbr.rel (0) target = $region25
  $region24: #{vggnet_forward.23} parent=0 // pred_region
    _
  $region25: #{vggnet_forward.23} parent=0 // pred_fallthru
    _

// kernel: vggnet_forward.24
$region0: #{vggnet_forward.24}
  #allocation0 [shape = 'u32[]', space=smem, size = 0x4, offset = 0x4, fixed_abs, tag = 'smem constant byte address 0x4 - core index']
  #allocation1 [shape = 'u32[144,128]{1,0:T(1,128)}', space=vmem, size = 0x12000, scoped, tag = 'internal scratch']
  %s0 = inlined_call_operand.vmem [shape: bf16[32,144], index: 0, kind: input, shape index: {}]
  %s1 = inlined_call_operand.vmem [shape: bf16[144,128], index: 1, kind: input, shape index: {}]
  %s2 = inlined_call_operand.vmem [shape: f32[1,128], index: 2, kind: input, shape index: {}]
  %s3 = inlined_call_operand.vmem [shape: f32[1,128], index: 3, kind: input, shape index: {}]
  %s4 = inlined_call_operand.vmem [shape: bf16[32,128], index: 4, kind: output, shape index: {}]
  %s5 = sld [smem:[#allocation0]]
  $region26: #{vggnet_forward.24} parent=0
    _
  %s7 = ssub.s32 1, %s5
  %s8 = scalar_select 0, %s7, %s5
  // Predicated region
  $region2: #{vggnet_forward.24} parent=0 // pred_check
    _
  $region3: #{vggnet_forward.24} parent=0 // pred_check_branch
    %10 = sbr.rel (0) target = $region5
  $region4: #{vggnet_forward.24} parent=0 // pred_region
    _
  $region5: #{vggnet_forward.24} parent=0 // pred_fallthru
    _
  // Predicated region
  $region6: #{vggnet_forward.24} parent=0 // pred_check
    _
  $region7: #{vggnet_forward.24} parent=0 // pred_check_branch
    %12 = sbr.rel (0) target = $region9
  $region8: #{vggnet_forward.24} parent=0 // pred_region
    _
  $region9: #{vggnet_forward.24} parent=0 // pred_fallthru
    _
  // Predicated region
  $region10: #{vggnet_forward.24} parent=0 // pred_check
    _
  $region11: #{vggnet_forward.24} parent=0 // pred_check_branch
    %14 = sbr.rel (0) target = $region13
  $region12: #{vggnet_forward.24} parent=0 // pred_region
    _
  $region13: #{vggnet_forward.24} parent=0 // pred_fallthru
    _
  // Predicated region
  $region14: #{vggnet_forward.24} parent=0 // pred_check
    _
  $region15: #{vggnet_forward.24} parent=0 // pred_check_branch
    %16 = sbr.rel (0) target = $region17
  $region16: #{vggnet_forward.24} parent=0 // pred_region
    _
  $region17: #{vggnet_forward.24} parent=0 // pred_fallthru
    _
  %v18 = vld [vmem:[%s0] sm:$0xff]
  %v19 = vld [vmem:[%s0 + $0x8] sm:$0xff]
  %v20 = vld [vmem:[%s0 + $0x10] sm:$0xff]
  %v21 = vld [vmem:[%s0 + $0x18] sm:$0xff]
  %v22 = vld [vmem:[%s1] sm:$0xf]
  %v23 = vld [vmem:[%s1 + $0x4] sm:$0xf]
  %v24 = vld [vmem:[%s1 + $0x8] sm:$0xf]
  %v25 = vld [vmem:[%s1 + $0xc] sm:$0xf]
  %v26 = vld [vmem:[%s1 + $0x10] sm:$0xf]
  %v27 = vld [vmem:[%s1 + $0x14] sm:$0xf]
  %v28 = vld [vmem:[%s1 + $0x18] sm:$0xf]
  %v29 = vld [vmem:[%s1 + $0x1c] sm:$0xf]
  %v30 = vld [vmem:[%s1 + $0x20] sm:$0xf]
  %v31 = vld [vmem:[%s1 + $0x24] sm:$0xf]
  %v32 = vld [vmem:[%s1 + $0x28] sm:$0xf]
  %v33 = vld [vmem:[%s1 + $0x2c] sm:$0xf]
  %v34 = vld [vmem:[%s1 + $0x30] sm:$0xf]
  %v35 = vld [vmem:[%s1 + $0x34] sm:$0xf]
  %v36 = vld [vmem:[%s1 + $0x38] sm:$0xf]
  %v37 = vld [vmem:[%s1 + $0x3c] sm:$0xf]
  %v38 = vld [vmem:[%s1 + $0x40] sm:$0xf]
  %v39 = vld [vmem:[%s1 + $0x44] sm:$0xf]
  %v44 = vunpack.c.l.b16 %v18
  %v45 = vunpack.c.h.b16 %v18
  %v46 = vunpack.c.l.b16 %v19
  %v47 = vunpack.c.h.b16 %v19
  %v48 = vunpack.c.l.b16 %v20
  %v49 = vunpack.c.h.b16 %v20
  %v50 = vunpack.c.l.b16 %v21
  %v51 = vunpack.c.h.b16 %v21
  %v52 = vpack.c.b16 %v46, %v44
  %v53 = vpack.c.b16 %v47, %v45
  %v54 = vpack.c.b16 %v50, %v48
  %v55 = vpack.c.b16 %v51, %v49
  %v76 = vunpack.c.l.b16 %v22
  %v77 = vunpack.c.l.b16 %v23
  %v78 = vunpack.c.l.b16 %v24
  %v79 = vunpack.c.l.b16 %v25
  %v80 = vunpack.c.l.b16 %v26
  %v81 = vunpack.c.l.b16 %v27
  %v82 = vunpack.c.l.b16 %v28
  %v83 = vunpack.c.l.b16 %v29
  %v84 = vunpack.c.l.b16 %v30
  %v85 = vunpack.c.l.b16 %v31
  %v86 = vunpack.c.l.b16 %v32
  %v87 = vunpack.c.l.b16 %v33
  %v88 = vunpack.c.l.b16 %v34
  %v89 = vunpack.c.l.b16 %v35
  %v90 = vunpack.c.l.b16 %v36
  %v91 = vunpack.c.l.b16 %v37
  %v92 = vunpack.c.l.b16 %v38
  %v93 = vunpack.c.l.b16 %v39
  %v94 = vpack.c.b16 %v77, %v76
  %v95 = vpack.c.b16 %v79, %v78
  %v96 = vpack.c.b16 %v81, %v80
  %v97 = vpack.c.b16 %v83, %v82
  %v98 = vpack.c.b16 %v85, %v84
  %v99 = vpack.c.b16 %v87, %v86
  %v100 = vpack.c.b16 %v89, %v88
  %v101 = vpack.c.b16 %v91, %v90
  %v102 = vpack.c.b16 %v93, %v92
  %vm112 = vcmask 130048
  %v114 = vsel %vm112, %v53, 0
  %v117 = vsel %vm112, %v55, 0
  %119 = vmatprep.subr.bf16.mxu0 0
  %120 = vmatpush1.bf16.msra.mxu0 %v94
  %121 = vmatprep.subr.bf16.mxu0 0
  %122 = vmatpush1.bf16.msra.mxu0 %v95
  %123 = vmatprep.subr.bf16.mxu0 0
  %124 = vmatpush1.bf16.msra.mxu0 %v96
  %125 = vmatprep.subr.bf16.mxu0 0
  %126 = vmatpush1.bf16.msra.mxu0 %v97
  %127 = vmatprep.subr.bf16.mxu0 0
  %128 = vmatpush1.bf16.msra.mxu0 %v98
  %129 = vmatprep.subr.bf16.mxu0 0
  %130 = vmatpush1.bf16.msra.mxu0 %v99
  %131 = vmatprep.subr.bf16.mxu0 0
  %132 = vmatpush1.bf16.msra.mxu0 %v100
  %133 = vmatprep.subr.bf16.mxu0 0
  %134 = vmatpush1.bf16.msra.mxu0 %v101
  %135 = vmatprep.subr.bf16.mxu0 0
  %136 = vmatpush1.bf16.msra.mxu0 %v102
  %137 = vmatprep.subr.bf16.mxu0 0
  %138 = vmatpush1.bf16.msra.mxu0 0
  %139 = vmatprep.subr.bf16.mxu0 0
  %140 = vmatpush1.bf16.msra.mxu0 0
  %141 = vmatprep.subr.bf16.mxu0 0
  %142 = vmatpush1.bf16.msra.mxu0 0
  %143 = vmatprep.subr.bf16.mxu0 0
  %144 = vmatpush1.bf16.msra.mxu0 0
  %145 = vmatprep.subr.bf16.mxu0 0
  %146 = vmatpush1.bf16.msra.mxu0 0
  %147 = vmatprep.subr.bf16.mxu0 0
  %148 = vmatpush1.bf16.msra.mxu0 0
  %149 = vmatprep.subr.bf16.mxu0 0
  %150 = vmatpush1.bf16.msra.mxu0 0
  %151 = vmatprep.mubr.bf16.mxu0 %v114
  %152 = vmatmul.mubr.bf16.gmra.mrb[0].mxu0 %v52
  %v153 = vpop.f32.mrb[0].mxu0
  %v154 = vadd.f32 0.0, %v153
  %v155 = vpop.f32.mrb[0].mxu0
  %v156 = vpop.f32.mrb[0].mxu0
  %v157 = vadd.f32 0.0, %v156
  %v158 = vpop.f32.mrb[0].mxu0
  %159 = vmatprep.mubr.bf16.mxu0 %v117
  %160 = vmatmul.mubr.bf16.gmra.mrb[0].mxu0 %v54
  %v161 = vpop.f32.mrb[0].mxu0
  %v162 = vadd.f32 0.0, %v161
  %v163 = vpop.f32.mrb[0].mxu0
  %v164 = vpop.f32.mrb[0].mxu0
  %v165 = vadd.f32 0.0, %v164
  %v166 = vpop.f32.mrb[0].mxu0
  %167 = vdwg.mxu0
  %v168 = vld [vmem:[%s2] sm:$0x1]
  %v170 = vlaneseq
  %v171 = vshrl.u32 %v170, 7
  %v172 = vsub.s32 0, %v171
  %v173 = vrot.slane %v168, %v172
  %v175 = vmul.f32 %v154, %v173
  %v176 = vmul.f32 %v157, %v173
  %v177 = vmul.f32 %v162, %v173
  %v178 = vmul.f32 %v165, %v173
  %v179 = vld [vmem:[%s3] sm:$0x1]
  %v181 = vlaneseq
  %v182 = vshrl.u32 %v181, 7
  %v183 = vsub.s32 0, %v182
  %v184 = vrot.slane %v179, %v183
  %v186 = vadd.f32 %v175, %v184
  %v187 = vadd.f32 %v176, %v184
  %v188 = vadd.f32 %v177, %v184
  %v189 = vadd.f32 %v178, %v184
  %v190 = vmax.f32 %v186, 0.0
  %v191 = vmax.f32 %v187, 0.0
  %v192 = vmax.f32 %v188, 0.0
  %v193 = vmax.f32 %v189, 0.0
  %v194 = vpack.c.bf16 %v191, %v190
  %v195 = vpack.c.bf16 %v193, %v192
  %v198 = vunpack.c.l.b16 %v194
  %v199 = vunpack.c.h.b16 %v194
  %v200 = vunpack.c.l.b16 %v195
  %v201 = vunpack.c.h.b16 %v195
  %v202 = vpack.c.b16 %v198, %v198
  %v203 = vpack.c.b16 %v199, %v199
  %v204 = vpack.c.b16 %v200, %v200
  %v205 = vpack.c.b16 %v201, %v201
  %210 = vst [vmem:[%s4] sm:$0xf] %v202
  %211 = vst [vmem:[%s4 + $0x4] sm:$0xf] %v203
  %212 = vst [vmem:[%s4 + $0x8] sm:$0xf] %v204
  %213 = vst [vmem:[%s4 + $0xc] sm:$0xf] %v205
  // Predicated region
  $region18: #{vggnet_forward.24} parent=0 // pred_check
    _
  $region19: #{vggnet_forward.24} parent=0 // pred_check_branch
    %215 = sbr.rel (0) target = $region21
  $region20: #{vggnet_forward.24} parent=0 // pred_region
    _
  $region21: #{vggnet_forward.24} parent=0 // pred_fallthru
    _
  // Predicated region
  $region22: #{vggnet_forward.24} parent=0 // pred_check
    _
  $region23: #{vggnet_forward.24} parent=0 // pred_check_branch
    %217 = sbr.rel (0) target = $region25
  $region24: #{vggnet_forward.24} parent=0 // pred_region
    _
  $region25: #{vggnet_forward.24} parent=0 // pred_fallthru
    _

// kernel: vggnet_forward.25
$region0: #{vggnet_forward.25}
  #allocation0 [shape = 'u32[]', space=smem, size = 0x4, offset = 0x4, fixed_abs, tag = 'smem constant byte address 0x4 - core index']
  #allocation1 [shape = 'u32[144,128]{1,0:T(1,128)}', space=vmem, size = 0x12000, scoped, tag = 'internal scratch']
  %s0 = inlined_call_operand.vmem [shape: bf16[32,288], index: 0, kind: input, shape index: {}]
  %s1 = inlined_call_operand.vmem [shape: bf16[288,128], index: 1, kind: input, shape index: {}]
  %s2 = inlined_call_operand.vmem [shape: f32[1,128], index: 2, kind: input, shape index: {}]
  %s3 = inlined_call_operand.vmem [shape: f32[1,128], index: 3, kind: input, shape index: {}]
  %s4 = inlined_call_operand.vmem [shape: bf16[32,128], index: 4, kind: output, shape index: {}]
  %s5 = sld [smem:[#allocation0]]
  $region26: #{vggnet_forward.25} parent=0
    _
  %s7 = ssub.s32 1, %s5
  %s8 = scalar_select 0, %s7, %s5
  // Predicated region
  $region2: #{vggnet_forward.25} parent=0 // pred_check
    _
  $region3: #{vggnet_forward.25} parent=0 // pred_check_branch
    %10 = sbr.rel (0) target = $region5
  $region4: #{vggnet_forward.25} parent=0 // pred_region
    _
  $region5: #{vggnet_forward.25} parent=0 // pred_fallthru
    _
  // Predicated region
  $region6: #{vggnet_forward.25} parent=0 // pred_check
    _
  $region7: #{vggnet_forward.25} parent=0 // pred_check_branch
    %12 = sbr.rel (0) target = $region9
  $region8: #{vggnet_forward.25} parent=0 // pred_region
    _
  $region9: #{vggnet_forward.25} parent=0 // pred_fallthru
    _
  // Predicated region
  $region10: #{vggnet_forward.25} parent=0 // pred_check
    _
  $region11: #{vggnet_forward.25} parent=0 // pred_check_branch
    %14 = sbr.rel (0) target = $region13
  $region12: #{vggnet_forward.25} parent=0 // pred_region
    _
  $region13: #{vggnet_forward.25} parent=0 // pred_fallthru
    _
  // Predicated region
  $region14: #{vggnet_forward.25} parent=0 // pred_check
    _
  $region15: #{vggnet_forward.25} parent=0 // pred_check_branch
    %16 = sbr.rel (0) target = $region17
  $region16: #{vggnet_forward.25} parent=0 // pred_region
    _
  $region17: #{vggnet_forward.25} parent=0 // pred_fallthru
    _
  %v18 = vld [vmem:[%s0] sm:$0xff]
  %v19 = vld [vmem:[%s0 + $0x8] sm:$0xf]
  %v20 = vld [vmem:[%s0 + $0xc] sm:$0xff]
  %v21 = vld [vmem:[%s0 + $0x14] sm:$0xf]
  %v22 = vld [vmem:[%s0 + $0x18] sm:$0xff]
  %v23 = vld [vmem:[%s0 + $0x20] sm:$0xf]
  %v24 = vld [vmem:[%s0 + $0x24] sm:$0xff]
  %v25 = vld [vmem:[%s0 + $0x2c] sm:$0xf]
  %v26 = vld [vmem:[%s1] sm:$0xf]
  %v27 = vld [vmem:[%s1 + $0x4] sm:$0xf]
  %v28 = vld [vmem:[%s1 + $0x8] sm:$0xf]
  %v29 = vld [vmem:[%s1 + $0xc] sm:$0xf]
  %v30 = vld [vmem:[%s1 + $0x10] sm:$0xf]
  %v31 = vld [vmem:[%s1 + $0x14] sm:$0xf]
  %v32 = vld [vmem:[%s1 + $0x18] sm:$0xf]
  %v33 = vld [vmem:[%s1 + $0x1c] sm:$0xf]
  %v34 = vld [vmem:[%s1 + $0x20] sm:$0xf]
  %v35 = vld [vmem:[%s1 + $0x24] sm:$0xf]
  %v36 = vld [vmem:[%s1 + $0x28] sm:$0xf]
  %v37 = vld [vmem:[%s1 + $0x2c] sm:$0xf]
  %v38 = vld [vmem:[%s1 + $0x30] sm:$0xf]
  %v39 = vld [vmem:[%s1 + $0x34] sm:$0xf]
  %v40 = vld [vmem:[%s1 + $0x38] sm:$0xf]
  %v41 = vld [vmem:[%s1 + $0x3c] sm:$0xf]
  %v42 = vld [vmem:[%s1 + $0x40] sm:$0xf]
  %v43 = vld [vmem:[%s1 + $0x44] sm:$0xf]
  %v44 = vld [vmem:[%s1 + $0x48] sm:$0xf]
  %v45 = vld [vmem:[%s1 + $0x4c] sm:$0xf]
  %v46 = vld [vmem:[%s1 + $0x50] sm:$0xf]
  %v47 = vld [vmem:[%s1 + $0x54] sm:$0xf]
  %v48 = vld [vmem:[%s1 + $0x58] sm:$0xf]
  %v49 = vld [vmem:[%s1 + $0x5c] sm:$0xf]
  %v50 = vld [vmem:[%s1 + $0x60] sm:$0xf]
  %v51 = vld [vmem:[%s1 + $0x64] sm:$0xf]
  %v52 = vld [vmem:[%s1 + $0x68] sm:$0xf]
  %v53 = vld [vmem:[%s1 + $0x6c] sm:$0xf]
  %v54 = vld [vmem:[%s1 + $0x70] sm:$0xf]
  %v55 = vld [vmem:[%s1 + $0x74] sm:$0xf]
  %v56 = vld [vmem:[%s1 + $0x78] sm:$0xf]
  %v57 = vld [vmem:[%s1 + $0x7c] sm:$0xf]
  %v58 = vld [vmem:[%s1 + $0x80] sm:$0xf]
  %v59 = vld [vmem:[%s1 + $0x84] sm:$0xf]
  %v60 = vld [vmem:[%s1 + $0x88] sm:$0xf]
  %v61 = vld [vmem:[%s1 + $0x8c] sm:$0xf]
  %v70 = vunpack.c.l.b16 %v18
  %v71 = vunpack.c.h.b16 %v18
  %v72 = vunpack.c.l.b16 %v19
  %v73 = vunpack.c.l.b16 %v20
  %v74 = vunpack.c.h.b16 %v20
  %v75 = vunpack.c.l.b16 %v21
  %v76 = vunpack.c.l.b16 %v22
  %v77 = vunpack.c.h.b16 %v22
  %v78 = vunpack.c.l.b16 %v23
  %v79 = vunpack.c.l.b16 %v24
  %v80 = vunpack.c.h.b16 %v24
  %v81 = vunpack.c.l.b16 %v25
  %v82 = vpack.c.b16 %v73, %v70
  %v83 = vpack.c.b16 %v74, %v71
  %v84 = vpack.c.b16 %v75, %v72
  %v85 = vpack.c.b16 %v79, %v76
  %v86 = vpack.c.b16 %v80, %v77
  %v87 = vpack.c.b16 %v81, %v78
  %v128 = vunpack.c.l.b16 %v26
  %v129 = vunpack.c.l.b16 %v27
  %v130 = vunpack.c.l.b16 %v28
  %v131 = vunpack.c.l.b16 %v29
  %v132 = vunpack.c.l.b16 %v30
  %v133 = vunpack.c.l.b16 %v31
  %v134 = vunpack.c.l.b16 %v32
  %v135 = vunpack.c.l.b16 %v33
  %v136 = vunpack.c.l.b16 %v34
  %v137 = vunpack.c.l.b16 %v35
  %v138 = vunpack.c.l.b16 %v36
  %v139 = vunpack.c.l.b16 %v37
  %v140 = vunpack.c.l.b16 %v38
  %v141 = vunpack.c.l.b16 %v39
  %v142 = vunpack.c.l.b16 %v40
  %v143 = vunpack.c.l.b16 %v41
  %v144 = vunpack.c.l.b16 %v42
  %v145 = vunpack.c.l.b16 %v43
  %v146 = vunpack.c.l.b16 %v44
  %v147 = vunpack.c.l.b16 %v45
  %v148 = vunpack.c.l.b16 %v46
  %v149 = vunpack.c.l.b16 %v47
  %v150 = vunpack.c.l.b16 %v48
  %v151 = vunpack.c.l.b16 %v49
  %v152 = vunpack.c.l.b16 %v50
  %v153 = vunpack.c.l.b16 %v51
  %v154 = vunpack.c.l.b16 %v52
  %v155 = vunpack.c.l.b16 %v53
  %v156 = vunpack.c.l.b16 %v54
  %v157 = vunpack.c.l.b16 %v55
  %v158 = vunpack.c.l.b16 %v56
  %v159 = vunpack.c.l.b16 %v57
  %v160 = vunpack.c.l.b16 %v58
  %v161 = vunpack.c.l.b16 %v59
  %v162 = vunpack.c.l.b16 %v60
  %v163 = vunpack.c.l.b16 %v61
  %v164 = vpack.c.b16 %v129, %v128
  %v165 = vpack.c.b16 %v131, %v130
  %v166 = vpack.c.b16 %v133, %v132
  %v167 = vpack.c.b16 %v135, %v134
  %v168 = vpack.c.b16 %v137, %v136
  %v169 = vpack.c.b16 %v139, %v138
  %v170 = vpack.c.b16 %v141, %v140
  %v171 = vpack.c.b16 %v143, %v142
  %v172 = vpack.c.b16 %v145, %v144
  %v173 = vpack.c.b16 %v147, %v146
  %v174 = vpack.c.b16 %v149, %v148
  %v175 = vpack.c.b16 %v151, %v150
  %v176 = vpack.c.b16 %v153, %v152
  %v177 = vpack.c.b16 %v155, %v154
  %v178 = vpack.c.b16 %v157, %v156
  %v179 = vpack.c.b16 %v159, %v158
  %v180 = vpack.c.b16 %v161, %v160
  %v181 = vpack.c.b16 %v163, %v162
  %vm200 = vcmask 261120
  %v202 = vsel %vm200, %v84, 0
  %v205 = vsel %vm200, %v87, 0
  %207 = vmatprep.subr.bf16.mxu0 0
  %208 = vmatpush1.bf16.msra.mxu0 %v164
  %209 = vmatprep.subr.bf16.mxu0 0
  %210 = vmatpush1.bf16.msra.mxu0 %v165
  %211 = vmatprep.subr.bf16.mxu0 0
  %212 = vmatpush1.bf16.msra.mxu0 %v166
  %213 = vmatprep.subr.bf16.mxu0 0
  %214 = vmatpush1.bf16.msra.mxu0 %v167
  %215 = vmatprep.subr.bf16.mxu0 0
  %216 = vmatpush1.bf16.msra.mxu0 %v168
  %217 = vmatprep.subr.bf16.mxu0 0
  %218 = vmatpush1.bf16.msra.mxu0 %v169
  %219 = vmatprep.subr.bf16.mxu0 0
  %220 = vmatpush1.bf16.msra.mxu0 %v170
  %221 = vmatprep.subr.bf16.mxu0 0
  %222 = vmatpush1.bf16.msra.mxu0 %v171
  %223 = vmatprep.subr.bf16.mxu0 0
  %224 = vmatpush1.bf16.msra.mxu0 %v172
  %225 = vmatprep.subr.bf16.mxu0 0
  %226 = vmatpush1.bf16.msra.mxu0 %v173
  %227 = vmatprep.subr.bf16.mxu0 0
  %228 = vmatpush1.bf16.msra.mxu0 %v174
  %229 = vmatprep.subr.bf16.mxu0 0
  %230 = vmatpush1.bf16.msra.mxu0 %v175
  %231 = vmatprep.subr.bf16.mxu0 0
  %232 = vmatpush1.bf16.msra.mxu0 %v176
  %233 = vmatprep.subr.bf16.mxu0 0
  %234 = vmatpush1.bf16.msra.mxu0 %v177
  %235 = vmatprep.subr.bf16.mxu0 0
  %236 = vmatpush1.bf16.msra.mxu0 %v178
  %237 = vmatprep.subr.bf16.mxu0 0
  %238 = vmatpush1.bf16.msra.mxu0 %v179
  %239 = vmatprep.mubr.bf16.mxu0 %v83
  %240 = vmatmul.mubr.bf16.gmra.mrb[0].mxu0 %v82
  %v241 = vpop.f32.mrb[0].mxu0
  %v242 = vadd.f32 0.0, %v241
  %v243 = vpop.f32.mrb[0].mxu0
  %v244 = vpop.f32.mrb[0].mxu0
  %v245 = vadd.f32 0.0, %v244
  %v246 = vpop.f32.mrb[0].mxu0
  %247 = vmatprep.mubr.bf16.mxu0 %v86
  %248 = vmatmul.mubr.bf16.gmra.mrb[0].mxu0 %v85
  %v249 = vpop.f32.mrb[0].mxu0
  %v250 = vadd.f32 0.0, %v249
  %v251 = vpop.f32.mrb[0].mxu0
  %v252 = vpop.f32.mrb[0].mxu0
  %v253 = vadd.f32 0.0, %v252
  %v254 = vpop.f32.mrb[0].mxu0
  %255 = vdwg.mxu0
  %256 = vmatprep.subr.bf16.mxu0 0
  %257 = vmatpush1.bf16.msra.mxu0 %v180
  %258 = vmatprep.subr.bf16.mxu0 0
  %259 = vmatpush1.bf16.msra.mxu0 %v181
  %260 = vmatprep.subr.bf16.mxu0 0
  %261 = vmatpush1.bf16.msra.mxu0 0
  %262 = vmatprep.subr.bf16.mxu0 0
  %263 = vmatpush1.bf16.msra.mxu0 0
  %264 = vmatprep.subr.bf16.mxu0 0
  %265 = vmatpush1.bf16.msra.mxu0 0
  %266 = vmatprep.subr.bf16.mxu0 0
  %267 = vmatpush1.bf16.msra.mxu0 0
  %268 = vmatprep.subr.bf16.mxu0 0
  %269 = vmatpush1.bf16.msra.mxu0 0
  %270 = vmatprep.subr.bf16.mxu0 0
  %271 = vmatpush1.bf16.msra.mxu0 0
  %272 = vmatprep.subr.bf16.mxu0 0
  %273 = vmatpush1.bf16.msra.mxu0 0
  %274 = vmatprep.subr.bf16.mxu0 0
  %275 = vmatpush1.bf16.msra.mxu0 0
  %276 = vmatprep.subr.bf16.mxu0 0
  %277 = vmatpush1.bf16.msra.mxu0 0
  %278 = vmatprep.subr.bf16.mxu0 0
  %279 = vmatpush1.bf16.msra.mxu0 0
  %280 = vmatprep.subr.bf16.mxu0 0
  %281 = vmatpush1.bf16.msra.mxu0 0
  %282 = vmatprep.subr.bf16.mxu0 0
  %283 = vmatpush1.bf16.msra.mxu0 0
  %284 = vmatprep.subr.bf16.mxu0 0
  %285 = vmatpush1.bf16.msra.mxu0 0
  %286 = vmatprep.subr.bf16.mxu0 0
  %287 = vmatpush1.bf16.msra.mxu0 0
  %288 = vmatprep.mubr.bf16.mxu0 0
  %289 = vmatmul.mubr.bf16.gmra.mrb[0].mxu0 %v202
  %v290 = vpop.f32.mrb[0].mxu0
  %v291 = vadd.f32 %v242, %v290
  %v292 = vpop.f32.mrb[0].mxu0
  %v293 = vpop.f32.mrb[0].mxu0
  %v294 = vadd.f32 %v245, %v293
  %v295 = vpop.f32.mrb[0].mxu0
  %296 = vmatprep.mubr.bf16.mxu0 0
  %297 = vmatmul.mubr.bf16.gmra.mrb[0].mxu0 %v205
  %v298 = vpop.f32.mrb[0].mxu0
  %v299 = vadd.f32 %v250, %v298
  %v300 = vpop.f32.mrb[0].mxu0
  %v301 = vpop.f32.mrb[0].mxu0
  %v302 = vadd.f32 %v253, %v301
  %v303 = vpop.f32.mrb[0].mxu0
  %304 = vdwg.mxu0
  %v305 = vld [vmem:[%s2] sm:$0x1]
  %v307 = vlaneseq
  %v308 = vshrl.u32 %v307, 7
  %v309 = vsub.s32 0, %v308
  %v310 = vrot.slane %v305, %v309
  %v312 = vmul.f32 %v291, %v310
  %v313 = vmul.f32 %v294, %v310
  %v314 = vmul.f32 %v299, %v310
  %v315 = vmul.f32 %v302, %v310
  %v316 = vld [vmem:[%s3] sm:$0x1]
  %v318 = vlaneseq
  %v319 = vshrl.u32 %v318, 7
  %v320 = vsub.s32 0, %v319
  %v321 = vrot.slane %v316, %v320
  %v323 = vadd.f32 %v312, %v321
  %v324 = vadd.f32 %v313, %v321
  %v325 = vadd.f32 %v314, %v321
  %v326 = vadd.f32 %v315, %v321
  %v327 = vmax.f32 %v323, 0.0
  %v328 = vmax.f32 %v324, 0.0
  %v329 = vmax.f32 %v325, 0.0
  %v330 = vmax.f32 %v326, 0.0
  %v331 = vpack.c.bf16 %v328, %v327
  %v332 = vpack.c.bf16 %v330, %v329
  %v335 = vunpack.c.l.b16 %v331
  %v336 = vunpack.c.h.b16 %v331
  %v337 = vunpack.c.l.b16 %v332
  %v338 = vunpack.c.h.b16 %v332
  %v339 = vpack.c.b16 %v335, %v335
  %v340 = vpack.c.b16 %v336, %v336
  %v341 = vpack.c.b16 %v337, %v337
  %v342 = vpack.c.b16 %v338, %v338
  %347 = vst [vmem:[%s4] sm:$0xf] %v339
  %348 = vst [vmem:[%s4 + $0x4] sm:$0xf] %v340
  %349 = vst [vmem:[%s4 + $0x8] sm:$0xf] %v341
  %350 = vst [vmem:[%s4 + $0xc] sm:$0xf] %v342
  // Predicated region
  $region18: #{vggnet_forward.25} parent=0 // pred_check
    _
  $region19: #{vggnet_forward.25} parent=0 // pred_check_branch
    %352 = sbr.rel (0) target = $region21
  $region20: #{vggnet_forward.25} parent=0 // pred_region
    _
  $region21: #{vggnet_forward.25} parent=0 // pred_fallthru
    _
  // Predicated region
  $region22: #{vggnet_forward.25} parent=0 // pred_check
    _
  $region23: #{vggnet_forward.25} parent=0 // pred_check_branch
    %354 = sbr.rel (0) target = $region25
  $region24: #{vggnet_forward.25} parent=0 // pred_region
    _
  $region25: #{vggnet_forward.25} parent=0 // pred_fallthru
    _

// kernel: vggnet_forward.27
$region0: #{vggnet_forward.27}
  #allocation0 [shape = 'u32[]', space=smem, size = 0x4, offset = 0x4, fixed_abs, tag = 'smem constant byte address 0x4 - core index']
  #allocation1 [shape = 'u32[144,128]{1,0:T(1,128)}', space=vmem, size = 0x12000, scoped, tag = 'internal scratch']
  %s0 = inlined_call_operand.vmem [shape: bf16[4,8,288], index: 0, kind: input, shape index: {}]
  %s1 = inlined_call_operand.vmem [shape: bf16[288,128], index: 1, kind: input, shape index: {}]
  %s2 = inlined_call_operand.vmem [shape: f32[1,128], index: 2, kind: input, shape index: {}]
  %s3 = inlined_call_operand.vmem [shape: f32[1,128], index: 3, kind: input, shape index: {}]
  %s4 = inlined_call_operand.vmem [shape: bf16[8,128], index: 4, kind: output, shape index: {}]
  %s5 = sld [smem:[#allocation0]]
  $region26: #{vggnet_forward.27} parent=0
    _
  %s7 = ssub.s32 1, %s5
  %s8 = scalar_select 0, %s7, %s5
  // Predicated region
  $region2: #{vggnet_forward.27} parent=0 // pred_check
    _
  $region3: #{vggnet_forward.27} parent=0 // pred_check_branch
    %10 = sbr.rel (0) target = $region5
  $region4: #{vggnet_forward.27} parent=0 // pred_region
    _
  $region5: #{vggnet_forward.27} parent=0 // pred_fallthru
    _
  // Predicated region
  $region6: #{vggnet_forward.27} parent=0 // pred_check
    _
  $region7: #{vggnet_forward.27} parent=0 // pred_check_branch
    %12 = sbr.rel (0) target = $region9
  $region8: #{vggnet_forward.27} parent=0 // pred_region
    _
  $region9: #{vggnet_forward.27} parent=0 // pred_fallthru
    _
  // Predicated region
  $region10: #{vggnet_forward.27} parent=0 // pred_check
    _
  $region11: #{vggnet_forward.27} parent=0 // pred_check_branch
    %14 = sbr.rel (0) target = $region13
  $region12: #{vggnet_forward.27} parent=0 // pred_region
    _
  $region13: #{vggnet_forward.27} parent=0 // pred_fallthru
    _
  // Predicated region
  $region14: #{vggnet_forward.27} parent=0 // pred_check
    _
  $region15: #{vggnet_forward.27} parent=0 // pred_check_branch
    %16 = sbr.rel (0) target = $region17
  $region16: #{vggnet_forward.27} parent=0 // pred_region
    _
  $region17: #{vggnet_forward.27} parent=0 // pred_fallthru
    _
  %v18 = vld [vmem:[%s1] sm:$0xf]
  %v19 = vld [vmem:[%s1 + $0x4] sm:$0xf]
  %v20 = vld [vmem:[%s1 + $0x8] sm:$0xf]
  %v21 = vld [vmem:[%s1 + $0xc] sm:$0xf]
  %v22 = vld [vmem:[%s1 + $0x10] sm:$0xf]
  %v23 = vld [vmem:[%s1 + $0x14] sm:$0xf]
  %v24 = vld [vmem:[%s1 + $0x18] sm:$0xf]
  %v25 = vld [vmem:[%s1 + $0x1c] sm:$0xf]
  %v26 = vld [vmem:[%s1 + $0x20] sm:$0xf]
  %v27 = vld [vmem:[%s1 + $0x24] sm:$0xf]
  %v28 = vld [vmem:[%s1 + $0x28] sm:$0xf]
  %v29 = vld [vmem:[%s1 + $0x2c] sm:$0xf]
  %v30 = vld [vmem:[%s1 + $0x30] sm:$0xf]
  %v31 = vld [vmem:[%s1 + $0x34] sm:$0xf]
  %v32 = vld [vmem:[%s1 + $0x38] sm:$0xf]
  %v33 = vld [vmem:[%s1 + $0x3c] sm:$0xf]
  %v34 = vld [vmem:[%s1 + $0x40] sm:$0xf]
  %v35 = vld [vmem:[%s1 + $0x44] sm:$0xf]
  %v36 = vld [vmem:[%s1 + $0x48] sm:$0xf]
  %v37 = vld [vmem:[%s1 + $0x4c] sm:$0xf]
  %v38 = vld [vmem:[%s1 + $0x50] sm:$0xf]
  %v39 = vld [vmem:[%s1 + $0x54] sm:$0xf]
  %v40 = vld [vmem:[%s1 + $0x58] sm:$0xf]
  %v41 = vld [vmem:[%s1 + $0x5c] sm:$0xf]
  %v42 = vld [vmem:[%s1 + $0x60] sm:$0xf]
  %v43 = vld [vmem:[%s1 + $0x64] sm:$0xf]
  %v44 = vld [vmem:[%s1 + $0x68] sm:$0xf]
  %v45 = vld [vmem:[%s1 + $0x6c] sm:$0xf]
  %v46 = vld [vmem:[%s1 + $0x70] sm:$0xf]
  %v47 = vld [vmem:[%s1 + $0x74] sm:$0xf]
  %v48 = vld [vmem:[%s1 + $0x78] sm:$0xf]
  %v49 = vld [vmem:[%s1 + $0x7c] sm:$0xf]
  %v50 = vld [vmem:[%s1 + $0x80] sm:$0xf]
  %v51 = vld [vmem:[%s1 + $0x84] sm:$0xf]
  %v52 = vld [vmem:[%s1 + $0x88] sm:$0xf]
  %v53 = vld [vmem:[%s1 + $0x8c] sm:$0xf]
  %v54 = vld [vmem:[%s2] sm:$0x1]
  %v55 = vld [vmem:[%s3] sm:$0x1]
  %v56 = vld [vmem:[%s0] sm:$0xff]
  %v57 = vld [vmem:[%s0 + $0x8] sm:$0xf]
  %v60 = vunpack.c.l.b16 %v56
  %v61 = vunpack.c.h.b16 %v56
  %v62 = vunpack.c.l.b16 %v57
  %v63 = vpack.c.b16 %v60, %v60
  %v64 = vpack.c.b16 %v61, %v61
  %v65 = vpack.c.b16 %v62, %v62
  %v104 = vunpack.c.l.b16 %v18
  %v105 = vunpack.c.l.b16 %v19
  %v106 = vunpack.c.l.b16 %v20
  %v107 = vunpack.c.l.b16 %v21
  %v108 = vunpack.c.l.b16 %v22
  %v109 = vunpack.c.l.b16 %v23
  %v110 = vunpack.c.l.b16 %v24
  %v111 = vunpack.c.l.b16 %v25
  %v112 = vunpack.c.l.b16 %v26
  %v113 = vunpack.c.l.b16 %v27
  %v114 = vunpack.c.l.b16 %v28
  %v115 = vunpack.c.l.b16 %v29
  %v116 = vunpack.c.l.b16 %v30
  %v117 = vunpack.c.l.b16 %v31
  %v118 = vunpack.c.l.b16 %v32
  %v119 = vunpack.c.l.b16 %v33
  %v120 = vunpack.c.l.b16 %v34
  %v121 = vunpack.c.l.b16 %v35
  %v122 = vunpack.c.l.b16 %v36
  %v123 = vunpack.c.l.b16 %v37
  %v124 = vunpack.c.l.b16 %v38
  %v125 = vunpack.c.l.b16 %v39
  %v126 = vunpack.c.l.b16 %v40
  %v127 = vunpack.c.l.b16 %v41
  %v128 = vunpack.c.l.b16 %v42
  %v129 = vunpack.c.l.b16 %v43
  %v130 = vunpack.c.l.b16 %v44
  %v131 = vunpack.c.l.b16 %v45
  %v132 = vunpack.c.l.b16 %v46
  %v133 = vunpack.c.l.b16 %v47
  %v134 = vunpack.c.l.b16 %v48
  %v135 = vunpack.c.l.b16 %v49
  %v136 = vunpack.c.l.b16 %v50
  %v137 = vunpack.c.l.b16 %v51
  %v138 = vunpack.c.l.b16 %v52
  %v139 = vunpack.c.l.b16 %v53
  %v140 = vpack.c.b16 %v105, %v104
  %v141 = vpack.c.b16 %v107, %v106
  %v142 = vpack.c.b16 %v109, %v108
  %v143 = vpack.c.b16 %v111, %v110
  %v144 = vpack.c.b16 %v113, %v112
  %v145 = vpack.c.b16 %v115, %v114
  %v146 = vpack.c.b16 %v117, %v116
  %v147 = vpack.c.b16 %v119, %v118
  %v148 = vpack.c.b16 %v121, %v120
  %v149 = vpack.c.b16 %v123, %v122
  %v150 = vpack.c.b16 %v125, %v124
  %v151 = vpack.c.b16 %v127, %v126
  %v152 = vpack.c.b16 %v129, %v128
  %v153 = vpack.c.b16 %v131, %v130
  %v154 = vpack.c.b16 %v133, %v132
  %v155 = vpack.c.b16 %v135, %v134
  %v156 = vpack.c.b16 %v137, %v136
  %v157 = vpack.c.b16 %v139, %v138
  %vm176 = vcmask 261120
  %v178 = vsel %vm176, %v65, 0
  %180 = vmatprep.subr.bf16.mxu0 0
  %181 = vmatpush1.bf16.msra.mxu0 %v140
  %182 = vmatprep.subr.bf16.mxu0 0
  %183 = vmatpush1.bf16.msra.mxu0 %v141
  %184 = vmatprep.subr.bf16.mxu0 0
  %185 = vmatpush1.bf16.msra.mxu0 %v142
  %186 = vmatprep.subr.bf16.mxu0 0
  %187 = vmatpush1.bf16.msra.mxu0 %v143
  %188 = vmatprep.subr.bf16.mxu0 0
  %189 = vmatpush1.bf16.msra.mxu0 %v144
  %190 = vmatprep.subr.bf16.mxu0 0
  %191 = vmatpush1.bf16.msra.mxu0 %v145
  %192 = vmatprep.subr.bf16.mxu0 0
  %193 = vmatpush1.bf16.msra.mxu0 %v146
  %194 = vmatprep.subr.bf16.mxu0 0
  %195 = vmatpush1.bf16.msra.mxu0 %v147
  %196 = vmatprep.subr.bf16.mxu0 0
  %197 = vmatpush1.bf16.msra.mxu0 %v148
  %198 = vmatprep.subr.bf16.mxu0 0
  %199 = vmatpush1.bf16.msra.mxu0 %v149
  %200 = vmatprep.subr.bf16.mxu0 0
  %201 = vmatpush1.bf16.msra.mxu0 %v150
  %202 = vmatprep.subr.bf16.mxu0 0
  %203 = vmatpush1.bf16.msra.mxu0 %v151
  %204 = vmatprep.subr.bf16.mxu0 0
  %205 = vmatpush1.bf16.msra.mxu0 %v152
  %206 = vmatprep.subr.bf16.mxu0 0
  %207 = vmatpush1.bf16.msra.mxu0 %v153
  %208 = vmatprep.subr.bf16.mxu0 0
  %209 = vmatpush1.bf16.msra.mxu0 %v154
  %210 = vmatprep.subr.bf16.mxu0 0
  %211 = vmatpush1.bf16.msra.mxu0 %v155
  %212 = vmatprep.mubr.bf16.mxu0 %v64
  %213 = vmatmul.mubr.bf16.gmra.mrb[0].mxu0 %v63
  %v214 = vpop.f32.mrb[0].mxu0
  %v215 = vadd.f32 0.0, %v214
  %v216 = vpop.f32.mrb[0].mxu0
  %v217 = vpop.f32.mrb[0].mxu0
  %v218 = vpop.f32.mrb[0].mxu0
  %219 = vdwg.mxu0
  %220 = vmatprep.subr.bf16.mxu0 0
  %221 = vmatpush1.bf16.msra.mxu0 %v156
  %222 = vmatprep.subr.bf16.mxu0 0
  %223 = vmatpush1.bf16.msra.mxu0 %v157
  %224 = vmatprep.subr.bf16.mxu0 0
  %225 = vmatpush1.bf16.msra.mxu0 0
  %226 = vmatprep.subr.bf16.mxu0 0
  %227 = vmatpush1.bf16.msra.mxu0 0
  %228 = vmatprep.subr.bf16.mxu0 0
  %229 = vmatpush1.bf16.msra.mxu0 0
  %230 = vmatprep.subr.bf16.mxu0 0
  %231 = vmatpush1.bf16.msra.mxu0 0
  %232 = vmatprep.subr.bf16.mxu0 0
  %233 = vmatpush1.bf16.msra.mxu0 0
  %234 = vmatprep.subr.bf16.mxu0 0
  %235 = vmatpush1.bf16.msra.mxu0 0
  %236 = vmatprep.subr.bf16.mxu0 0
  %237 = vmatpush1.bf16.msra.mxu0 0
  %238 = vmatprep.subr.bf16.mxu0 0
  %239 = vmatpush1.bf16.msra.mxu0 0
  %240 = vmatprep.subr.bf16.mxu0 0
  %241 = vmatpush1.bf16.msra.mxu0 0
  %242 = vmatprep.subr.bf16.mxu0 0
  %243 = vmatpush1.bf16.msra.mxu0 0
  %244 = vmatprep.subr.bf16.mxu0 0
  %245 = vmatpush1.bf16.msra.mxu0 0
  %246 = vmatprep.subr.bf16.mxu0 0
  %247 = vmatpush1.bf16.msra.mxu0 0
  %248 = vmatprep.subr.bf16.mxu0 0
  %249 = vmatpush1.bf16.msra.mxu0 0
  %250 = vmatprep.subr.bf16.mxu0 0
  %251 = vmatpush1.bf16.msra.mxu0 0
  %252 = vmatprep.mubr.bf16.mxu0 0
  %253 = vmatmul.mubr.bf16.gmra.mrb[0].mxu0 %v178
  %v254 = vpop.f32.mrb[0].mxu0
  %v255 = vadd.f32 %v215, %v254
  %v256 = vpop.f32.mrb[0].mxu0
  %v257 = vpop.f32.mrb[0].mxu0
  %v258 = vpop.f32.mrb[0].mxu0
  %259 = vdwg.mxu0
  %v261 = vlaneseq
  %v262 = vshrl.u32 %v261, 7
  %v263 = vsub.s32 0, %v262
  %v264 = vrot.slane %v54, %v263
  %v266 = vmul.f32 %v255, %v264
  %v268 = vlaneseq
  %v269 = vshrl.u32 %v268, 7
  %v270 = vsub.s32 0, %v269
  %v271 = vrot.slane %v55, %v270
  %v273 = vadd.f32 %v266, %v271
  %v274 = vmax.f32 %v273, 0.0
  %s275 = scalar_lea.vmem %s0, 12
  %v276 = vld [vmem:[%s275] sm:$0xff]
  %v277 = vld [vmem:[%s275 + $0x8] sm:$0xf]
  %v280 = vunpack.c.l.b16 %v276
  %v281 = vunpack.c.h.b16 %v276
  %v282 = vunpack.c.l.b16 %v277
  %v283 = vpack.c.b16 %v280, %v280
  %v284 = vpack.c.b16 %v281, %v281
  %v285 = vpack.c.b16 %v282, %v282
  %v289 = vsel %vm176, %v285, 0
  %291 = vmatprep.subr.bf16.mxu0 0
  %292 = vmatpush1.bf16.msra.mxu0 %v140
  %293 = vmatprep.subr.bf16.mxu0 0
  %294 = vmatpush1.bf16.msra.mxu0 %v141
  %295 = vmatprep.subr.bf16.mxu0 0
  %296 = vmatpush1.bf16.msra.mxu0 %v142
  %297 = vmatprep.subr.bf16.mxu0 0
  %298 = vmatpush1.bf16.msra.mxu0 %v143
  %299 = vmatprep.subr.bf16.mxu0 0
  %300 = vmatpush1.bf16.msra.mxu0 %v144
  %301 = vmatprep.subr.bf16.mxu0 0
  %302 = vmatpush1.bf16.msra.mxu0 %v145
  %303 = vmatprep.subr.bf16.mxu0 0
  %304 = vmatpush1.bf16.msra.mxu0 %v146
  %305 = vmatprep.subr.bf16.mxu0 0
  %306 = vmatpush1.bf16.msra.mxu0 %v147
  %307 = vmatprep.subr.bf16.mxu0 0
  %308 = vmatpush1.bf16.msra.mxu0 %v148
  %309 = vmatprep.subr.bf16.mxu0 0
  %310 = vmatpush1.bf16.msra.mxu0 %v149
  %311 = vmatprep.subr.bf16.mxu0 0
  %312 = vmatpush1.bf16.msra.mxu0 %v150
  %313 = vmatprep.subr.bf16.mxu0 0
  %314 = vmatpush1.bf16.msra.mxu0 %v151
  %315 = vmatprep.subr.bf16.mxu0 0
  %316 = vmatpush1.bf16.msra.mxu0 %v152
  %317 = vmatprep.subr.bf16.mxu0 0
  %318 = vmatpush1.bf16.msra.mxu0 %v153
  %319 = vmatprep.subr.bf16.mxu0 0
  %320 = vmatpush1.bf16.msra.mxu0 %v154
  %321 = vmatprep.subr.bf16.mxu0 0
  %322 = vmatpush1.bf16.msra.mxu0 %v155
  %323 = vmatprep.mubr.bf16.mxu0 %v284
  %324 = vmatmul.mubr.bf16.gmra.mrb[0].mxu0 %v283
  %v325 = vpop.f32.mrb[0].mxu0
  %v326 = vadd.f32 0.0, %v325
  %v327 = vpop.f32.mrb[0].mxu0
  %v328 = vpop.f32.mrb[0].mxu0
  %v329 = vpop.f32.mrb[0].mxu0
  %330 = vdwg.mxu0
  %331 = vmatprep.subr.bf16.mxu0 0
  %332 = vmatpush1.bf16.msra.mxu0 %v156
  %333 = vmatprep.subr.bf16.mxu0 0
  %334 = vmatpush1.bf16.msra.mxu0 %v157
  %335 = vmatprep.subr.bf16.mxu0 0
  %336 = vmatpush1.bf16.msra.mxu0 0
  %337 = vmatprep.subr.bf16.mxu0 0
  %338 = vmatpush1.bf16.msra.mxu0 0
  %339 = vmatprep.subr.bf16.mxu0 0
  %340 = vmatpush1.bf16.msra.mxu0 0
  %341 = vmatprep.subr.bf16.mxu0 0
  %342 = vmatpush1.bf16.msra.mxu0 0
  %343 = vmatprep.subr.bf16.mxu0 0
  %344 = vmatpush1.bf16.msra.mxu0 0
  %345 = vmatprep.subr.bf16.mxu0 0
  %346 = vmatpush1.bf16.msra.mxu0 0
  %347 = vmatprep.subr.bf16.mxu0 0
  %348 = vmatpush1.bf16.msra.mxu0 0
  %349 = vmatprep.subr.bf16.mxu0 0
  %350 = vmatpush1.bf16.msra.mxu0 0
  %351 = vmatprep.subr.bf16.mxu0 0
  %352 = vmatpush1.bf16.msra.mxu0 0
  %353 = vmatprep.subr.bf16.mxu0 0
  %354 = vmatpush1.bf16.msra.mxu0 0
  %355 = vmatprep.subr.bf16.mxu0 0
  %356 = vmatpush1.bf16.msra.mxu0 0
  %357 = vmatprep.subr.bf16.mxu0 0
  %358 = vmatpush1.bf16.msra.mxu0 0
  %359 = vmatprep.subr.bf16.mxu0 0
  %360 = vmatpush1.bf16.msra.mxu0 0
  %361 = vmatprep.subr.bf16.mxu0 0
  %362 = vmatpush1.bf16.msra.mxu0 0
  %363 = vmatprep.mubr.bf16.mxu0 0
  %364 = vmatmul.mubr.bf16.gmra.mrb[0].mxu0 %v289
  %v365 = vpop.f32.mrb[0].mxu0
  %v366 = vadd.f32 %v326, %v365
  %v367 = vpop.f32.mrb[0].mxu0
  %v368 = vpop.f32.mrb[0].mxu0
  %v369 = vpop.f32.mrb[0].mxu0
  %370 = vdwg.mxu0
  %v371 = vmul.f32 %v366, %v264
  %v372 = vadd.f32 %v371, %v271
  %v373 = vmax.f32 %v372, 0.0
  %v374 = vmax.f32 %v274, %v373
  %s375 = scalar_lea.vmem %s0, 24
  %v376 = vld [vmem:[%s375] sm:$0xff]
  %v377 = vld [vmem:[%s375 + $0x8] sm:$0xf]
  %v380 = vunpack.c.l.b16 %v376
  %v381 = vunpack.c.h.b16 %v376
  %v382 = vunpack.c.l.b16 %v377
  %v383 = vpack.c.b16 %v380, %v380
  %v384 = vpack.c.b16 %v381, %v381
  %v385 = vpack.c.b16 %v382, %v382
  %v389 = vsel %vm176, %v385, 0
  %391 = vmatprep.subr.bf16.mxu0 0
  %392 = vmatpush1.bf16.msra.mxu0 %v140
  %393 = vmatprep.subr.bf16.mxu0 0
  %394 = vmatpush1.bf16.msra.mxu0 %v141
  %395 = vmatprep.subr.bf16.mxu0 0
  %396 = vmatpush1.bf16.msra.mxu0 %v142
  %397 = vmatprep.subr.bf16.mxu0 0
  %398 = vmatpush1.bf16.msra.mxu0 %v143
  %399 = vmatprep.subr.bf16.mxu0 0
  %400 = vmatpush1.bf16.msra.mxu0 %v144
  %401 = vmatprep.subr.bf16.mxu0 0
  %402 = vmatpush1.bf16.msra.mxu0 %v145
  %403 = vmatprep.subr.bf16.mxu0 0
  %404 = vmatpush1.bf16.msra.mxu0 %v146
  %405 = vmatprep.subr.bf16.mxu0 0
  %406 = vmatpush1.bf16.msra.mxu0 %v147
  %407 = vmatprep.subr.bf16.mxu0 0
  %408 = vmatpush1.bf16.msra.mxu0 %v148
  %409 = vmatprep.subr.bf16.mxu0 0
  %410 = vmatpush1.bf16.msra.mxu0 %v149
  %411 = vmatprep.subr.bf16.mxu0 0
  %412 = vmatpush1.bf16.msra.mxu0 %v150
  %413 = vmatprep.subr.bf16.mxu0 0
  %414 = vmatpush1.bf16.msra.mxu0 %v151
  %415 = vmatprep.subr.bf16.mxu0 0
  %416 = vmatpush1.bf16.msra.mxu0 %v152
  %417 = vmatprep.subr.bf16.mxu0 0
  %418 = vmatpush1.bf16.msra.mxu0 %v153
  %419 = vmatprep.subr.bf16.mxu0 0
  %420 = vmatpush1.bf16.msra.mxu0 %v154
  %421 = vmatprep.subr.bf16.mxu0 0
  %422 = vmatpush1.bf16.msra.mxu0 %v155
  %423 = vmatprep.mubr.bf16.mxu0 %v384
  %424 = vmatmul.mubr.bf16.gmra.mrb[0].mxu0 %v383
  %v425 = vpop.f32.mrb[0].mxu0
  %v426 = vadd.f32 0.0, %v425
  %v427 = vpop.f32.mrb[0].mxu0
  %v428 = vpop.f32.mrb[0].mxu0
  %v429 = vpop.f32.mrb[0].mxu0
  %430 = vdwg.mxu0
  %431 = vmatprep.subr.bf16.mxu0 0
  %432 = vmatpush1.bf16.msra.mxu0 %v156
  %433 = vmatprep.subr.bf16.mxu0 0
  %434 = vmatpush1.bf16.msra.mxu0 %v157
  %435 = vmatprep.subr.bf16.mxu0 0
  %436 = vmatpush1.bf16.msra.mxu0 0
  %437 = vmatprep.subr.bf16.mxu0 0
  %438 = vmatpush1.bf16.msra.mxu0 0
  %439 = vmatprep.subr.bf16.mxu0 0
  %440 = vmatpush1.bf16.msra.mxu0 0
  %441 = vmatprep.subr.bf16.mxu0 0
  %442 = vmatpush1.bf16.msra.mxu0 0
  %443 = vmatprep.subr.bf16.mxu0 0
  %444 = vmatpush1.bf16.msra.mxu0 0
  %445 = vmatprep.subr.bf16.mxu0 0
  %446 = vmatpush1.bf16.msra.mxu0 0
  %447 = vmatprep.subr.bf16.mxu0 0
  %448 = vmatpush1.bf16.msra.mxu0 0
  %449 = vmatprep.subr.bf16.mxu0 0
  %450 = vmatpush1.bf16.msra.mxu0 0
  %451 = vmatprep.subr.bf16.mxu0 0
  %452 = vmatpush1.bf16.msra.mxu0 0
  %453 = vmatprep.subr.bf16.mxu0 0
  %454 = vmatpush1.bf16.msra.mxu0 0
  %455 = vmatprep.subr.bf16.mxu0 0
  %456 = vmatpush1.bf16.msra.mxu0 0
  %457 = vmatprep.subr.bf16.mxu0 0
  %458 = vmatpush1.bf16.msra.mxu0 0
  %459 = vmatprep.subr.bf16.mxu0 0
  %460 = vmatpush1.bf16.msra.mxu0 0
  %461 = vmatprep.subr.bf16.mxu0 0
  %462 = vmatpush1.bf16.msra.mxu0 0
  %463 = vmatprep.mubr.bf16.mxu0 0
  %464 = vmatmul.mubr.bf16.gmra.mrb[0].mxu0 %v389
  %v465 = vpop.f32.mrb[0].mxu0
  %v466 = vadd.f32 %v426, %v465
  %v467 = vpop.f32.mrb[0].mxu0
  %v468 = vpop.f32.mrb[0].mxu0
  %v469 = vpop.f32.mrb[0].mxu0
  %470 = vdwg.mxu0
  %v471 = vmul.f32 %v466, %v264
  %v472 = vadd.f32 %v471, %v271
  %v473 = vmax.f32 %v472, 0.0
  %v474 = vmax.f32 %v374, %v473
  %s475 = scalar_lea.vmem %s0, 36
  %v476 = vld [vmem:[%s475] sm:$0xff]
  %v477 = vld [vmem:[%s475 + $0x8] sm:$0xf]
  %v480 = vunpack.c.l.b16 %v476
  %v481 = vunpack.c.h.b16 %v476
  %v482 = vunpack.c.l.b16 %v477
  %v483 = vpack.c.b16 %v480, %v480
  %v484 = vpack.c.b16 %v481, %v481
  %v485 = vpack.c.b16 %v482, %v482
  %v489 = vsel %vm176, %v485, 0
  %491 = vmatprep.subr.bf16.mxu0 0
  %492 = vmatpush1.bf16.msra.mxu0 %v140
  %493 = vmatprep.subr.bf16.mxu0 0
  %494 = vmatpush1.bf16.msra.mxu0 %v141
  %495 = vmatprep.subr.bf16.mxu0 0
  %496 = vmatpush1.bf16.msra.mxu0 %v142
  %497 = vmatprep.subr.bf16.mxu0 0
  %498 = vmatpush1.bf16.msra.mxu0 %v143
  %499 = vmatprep.subr.bf16.mxu0 0
  %500 = vmatpush1.bf16.msra.mxu0 %v144
  %501 = vmatprep.subr.bf16.mxu0 0
  %502 = vmatpush1.bf16.msra.mxu0 %v145
  %503 = vmatprep.subr.bf16.mxu0 0
  %504 = vmatpush1.bf16.msra.mxu0 %v146
  %505 = vmatprep.subr.bf16.mxu0 0
  %506 = vmatpush1.bf16.msra.mxu0 %v147
  %507 = vmatprep.subr.bf16.mxu0 0
  %508 = vmatpush1.bf16.msra.mxu0 %v148
  %509 = vmatprep.subr.bf16.mxu0 0
  %510 = vmatpush1.bf16.msra.mxu0 %v149
  %511 = vmatprep.subr.bf16.mxu0 0
  %512 = vmatpush1.bf16.msra.mxu0 %v150
  %513 = vmatprep.subr.bf16.mxu0 0
  %514 = vmatpush1.bf16.msra.mxu0 %v151
  %515 = vmatprep.subr.bf16.mxu0 0
  %516 = vmatpush1.bf16.msra.mxu0 %v152
  %517 = vmatprep.subr.bf16.mxu0 0
  %518 = vmatpush1.bf16.msra.mxu0 %v153
  %519 = vmatprep.subr.bf16.mxu0 0
  %520 = vmatpush1.bf16.msra.mxu0 %v154
  %521 = vmatprep.subr.bf16.mxu0 0
  %522 = vmatpush1.bf16.msra.mxu0 %v155
  %523 = vmatprep.mubr.bf16.mxu0 %v484
  %524 = vmatmul.mubr.bf16.gmra.mrb[0].mxu0 %v483
  %v525 = vpop.f32.mrb[0].mxu0
  %v526 = vadd.f32 0.0, %v525
  %v527 = vpop.f32.mrb[0].mxu0
  %v528 = vpop.f32.mrb[0].mxu0
  %v529 = vpop.f32.mrb[0].mxu0
  %530 = vdwg.mxu0
  %531 = vmatprep.subr.bf16.mxu0 0
  %532 = vmatpush1.bf16.msra.mxu0 %v156
  %533 = vmatprep.subr.bf16.mxu0 0
  %534 = vmatpush1.bf16.msra.mxu0 %v157
  %535 = vmatprep.subr.bf16.mxu0 0
  %536 = vmatpush1.bf16.msra.mxu0 0
  %537 = vmatprep.subr.bf16.mxu0 0
  %538 = vmatpush1.bf16.msra.mxu0 0
  %539 = vmatprep.subr.bf16.mxu0 0
  %540 = vmatpush1.bf16.msra.mxu0 0
  %541 = vmatprep.subr.bf16.mxu0 0
  %542 = vmatpush1.bf16.msra.mxu0 0
  %543 = vmatprep.subr.bf16.mxu0 0
  %544 = vmatpush1.bf16.msra.mxu0 0
  %545 = vmatprep.subr.bf16.mxu0 0
  %546 = vmatpush1.bf16.msra.mxu0 0
  %547 = vmatprep.subr.bf16.mxu0 0
  %548 = vmatpush1.bf16.msra.mxu0 0
  %549 = vmatprep.subr.bf16.mxu0 0
  %550 = vmatpush1.bf16.msra.mxu0 0
  %551 = vmatprep.subr.bf16.mxu0 0
  %552 = vmatpush1.bf16.msra.mxu0 0
  %553 = vmatprep.subr.bf16.mxu0 0
  %554 = vmatpush1.bf16.msra.mxu0 0
  %555 = vmatprep.subr.bf16.mxu0 0
  %556 = vmatpush1.bf16.msra.mxu0 0
  %557 = vmatprep.subr.bf16.mxu0 0
  %558 = vmatpush1.bf16.msra.mxu0 0
  %559 = vmatprep.subr.bf16.mxu0 0
  %560 = vmatpush1.bf16.msra.mxu0 0
  %561 = vmatprep.subr.bf16.mxu0 0
  %562 = vmatpush1.bf16.msra.mxu0 0
  %563 = vmatprep.mubr.bf16.mxu0 0
  %564 = vmatmul.mubr.bf16.gmra.mrb[0].mxu0 %v489
  %v565 = vpop.f32.mrb[0].mxu0
  %v566 = vadd.f32 %v526, %v565
  %v567 = vpop.f32.mrb[0].mxu0
  %v568 = vpop.f32.mrb[0].mxu0
  %v569 = vpop.f32.mrb[0].mxu0
  %570 = vdwg.mxu0
  %v571 = vmul.f32 %v566, %v264
  %v572 = vadd.f32 %v571, %v271
  %v573 = vmax.f32 %v572, 0.0
  %v574 = vmax.f32 %v474, %v573
  %v575 = vpack.c.bf16 %v574, %v574
  %576 = vst [vmem:[%s4] sm:$0xf] %v575
  // Predicated region
  $region18: #{vggnet_forward.27} parent=0 // pred_check
    _
  $region19: #{vggnet_forward.27} parent=0 // pred_check_branch
    %578 = sbr.rel (0) target = $region21
  $region20: #{vggnet_forward.27} parent=0 // pred_region
    _
  $region21: #{vggnet_forward.27} parent=0 // pred_fallthru
    _
  // Predicated region
  $region22: #{vggnet_forward.27} parent=0 // pred_check
    _
  $region23: #{vggnet_forward.27} parent=0 // pred_check_branch
    %580 = sbr.rel (0) target = $region25
  $region24: #{vggnet_forward.27} parent=0 // pred_region
    _
  $region25: #{vggnet_forward.27} parent=0 // pred_fallthru
    _

// kernel: vggnet_forward.28
$region0: #{vggnet_forward.28}
  #allocation0 [shape = 'u32[]', space=smem, size = 0x4, offset = 0x4, fixed_abs, tag = 'smem constant byte address 0x4 - core index']
  #allocation1 [shape = 'u32[144,128]{1,0:T(1,128)}', space=vmem, size = 0x12000, scoped, tag = 'internal scratch']
  %s0 = inlined_call_operand.vmem [shape: bf16[8,288], index: 0, kind: input, shape index: {}]
  %s1 = inlined_call_operand.vmem [shape: bf16[288,128], index: 1, kind: input, shape index: {}]
  %s2 = inlined_call_operand.vmem [shape: f32[1,128], index: 2, kind: input, shape index: {}]
  %s3 = inlined_call_operand.vmem [shape: f32[1,128], index: 3, kind: input, shape index: {}]
  %s4 = inlined_call_operand.vmem [shape: bf16[8,128], index: 4, kind: output, shape index: {}]
  %s5 = sld [smem:[#allocation0]]
  $region26: #{vggnet_forward.28} parent=0
    _
  %s7 = ssub.s32 1, %s5
  %s8 = scalar_select 0, %s7, %s5
  // Predicated region
  $region2: #{vggnet_forward.28} parent=0 // pred_check
    _
  $region3: #{vggnet_forward.28} parent=0 // pred_check_branch
    %10 = sbr.rel (0) target = $region5
  $region4: #{vggnet_forward.28} parent=0 // pred_region
    _
  $region5: #{vggnet_forward.28} parent=0 // pred_fallthru
    _
  // Predicated region
  $region6: #{vggnet_forward.28} parent=0 // pred_check
    _
  $region7: #{vggnet_forward.28} parent=0 // pred_check_branch
    %12 = sbr.rel (0) target = $region9
  $region8: #{vggnet_forward.28} parent=0 // pred_region
    _
  $region9: #{vggnet_forward.28} parent=0 // pred_fallthru
    _
  // Predicated region
  $region10: #{vggnet_forward.28} parent=0 // pred_check
    _
  $region11: #{vggnet_forward.28} parent=0 // pred_check_branch
    %14 = sbr.rel (0) target = $region13
  $region12: #{vggnet_forward.28} parent=0 // pred_region
    _
  $region13: #{vggnet_forward.28} parent=0 // pred_fallthru
    _
  // Predicated region
  $region14: #{vggnet_forward.28} parent=0 // pred_check
    _
  $region15: #{vggnet_forward.28} parent=0 // pred_check_branch
    %16 = sbr.rel (0) target = $region17
  $region16: #{vggnet_forward.28} parent=0 // pred_region
    _
  $region17: #{vggnet_forward.28} parent=0 // pred_fallthru
    _
  %v18 = vld [vmem:[%s0] sm:$0xff]
  %v19 = vld [vmem:[%s0 + $0x8] sm:$0xf]
  %v20 = vld [vmem:[%s1] sm:$0xf]
  %v21 = vld [vmem:[%s1 + $0x4] sm:$0xf]
  %v22 = vld [vmem:[%s1 + $0x8] sm:$0xf]
  %v23 = vld [vmem:[%s1 + $0xc] sm:$0xf]
  %v24 = vld [vmem:[%s1 + $0x10] sm:$0xf]
  %v25 = vld [vmem:[%s1 + $0x14] sm:$0xf]
  %v26 = vld [vmem:[%s1 + $0x18] sm:$0xf]
  %v27 = vld [vmem:[%s1 + $0x1c] sm:$0xf]
  %v28 = vld [vmem:[%s1 + $0x20] sm:$0xf]
  %v29 = vld [vmem:[%s1 + $0x24] sm:$0xf]
  %v30 = vld [vmem:[%s1 + $0x28] sm:$0xf]
  %v31 = vld [vmem:[%s1 + $0x2c] sm:$0xf]
  %v32 = vld [vmem:[%s1 + $0x30] sm:$0xf]
  %v33 = vld [vmem:[%s1 + $0x34] sm:$0xf]
  %v34 = vld [vmem:[%s1 + $0x38] sm:$0xf]
  %v35 = vld [vmem:[%s1 + $0x3c] sm:$0xf]
  %v36 = vld [vmem:[%s1 + $0x40] sm:$0xf]
  %v37 = vld [vmem:[%s1 + $0x44] sm:$0xf]
  %v38 = vld [vmem:[%s1 + $0x48] sm:$0xf]
  %v39 = vld [vmem:[%s1 + $0x4c] sm:$0xf]
  %v40 = vld [vmem:[%s1 + $0x50] sm:$0xf]
  %v41 = vld [vmem:[%s1 + $0x54] sm:$0xf]
  %v42 = vld [vmem:[%s1 + $0x58] sm:$0xf]
  %v43 = vld [vmem:[%s1 + $0x5c] sm:$0xf]
  %v44 = vld [vmem:[%s1 + $0x60] sm:$0xf]
  %v45 = vld [vmem:[%s1 + $0x64] sm:$0xf]
  %v46 = vld [vmem:[%s1 + $0x68] sm:$0xf]
  %v47 = vld [vmem:[%s1 + $0x6c] sm:$0xf]
  %v48 = vld [vmem:[%s1 + $0x70] sm:$0xf]
  %v49 = vld [vmem:[%s1 + $0x74] sm:$0xf]
  %v50 = vld [vmem:[%s1 + $0x78] sm:$0xf]
  %v51 = vld [vmem:[%s1 + $0x7c] sm:$0xf]
  %v52 = vld [vmem:[%s1 + $0x80] sm:$0xf]
  %v53 = vld [vmem:[%s1 + $0x84] sm:$0xf]
  %v54 = vld [vmem:[%s1 + $0x88] sm:$0xf]
  %v55 = vld [vmem:[%s1 + $0x8c] sm:$0xf]
  %v58 = vunpack.c.l.b16 %v18
  %v59 = vunpack.c.h.b16 %v18
  %v60 = vunpack.c.l.b16 %v19
  %v61 = vpack.c.b16 %v58, %v58
  %v62 = vpack.c.b16 %v59, %v59
  %v63 = vpack.c.b16 %v60, %v60
  %v102 = vunpack.c.l.b16 %v20
  %v103 = vunpack.c.l.b16 %v21
  %v104 = vunpack.c.l.b16 %v22
  %v105 = vunpack.c.l.b16 %v23
  %v106 = vunpack.c.l.b16 %v24
  %v107 = vunpack.c.l.b16 %v25
  %v108 = vunpack.c.l.b16 %v26
  %v109 = vunpack.c.l.b16 %v27
  %v110 = vunpack.c.l.b16 %v28
  %v111 = vunpack.c.l.b16 %v29
  %v112 = vunpack.c.l.b16 %v30
  %v113 = vunpack.c.l.b16 %v31
  %v114 = vunpack.c.l.b16 %v32
  %v115 = vunpack.c.l.b16 %v33
  %v116 = vunpack.c.l.b16 %v34
  %v117 = vunpack.c.l.b16 %v35
  %v118 = vunpack.c.l.b16 %v36
  %v119 = vunpack.c.l.b16 %v37
  %v120 = vunpack.c.l.b16 %v38
  %v121 = vunpack.c.l.b16 %v39
  %v122 = vunpack.c.l.b16 %v40
  %v123 = vunpack.c.l.b16 %v41
  %v124 = vunpack.c.l.b16 %v42
  %v125 = vunpack.c.l.b16 %v43
  %v126 = vunpack.c.l.b16 %v44
  %v127 = vunpack.c.l.b16 %v45
  %v128 = vunpack.c.l.b16 %v46
  %v129 = vunpack.c.l.b16 %v47
  %v130 = vunpack.c.l.b16 %v48
  %v131 = vunpack.c.l.b16 %v49
  %v132 = vunpack.c.l.b16 %v50
  %v133 = vunpack.c.l.b16 %v51
  %v134 = vunpack.c.l.b16 %v52
  %v135 = vunpack.c.l.b16 %v53
  %v136 = vunpack.c.l.b16 %v54
  %v137 = vunpack.c.l.b16 %v55
  %v138 = vpack.c.b16 %v103, %v102
  %v139 = vpack.c.b16 %v105, %v104
  %v140 = vpack.c.b16 %v107, %v106
  %v141 = vpack.c.b16 %v109, %v108
  %v142 = vpack.c.b16 %v111, %v110
  %v143 = vpack.c.b16 %v113, %v112
  %v144 = vpack.c.b16 %v115, %v114
  %v145 = vpack.c.b16 %v117, %v116
  %v146 = vpack.c.b16 %v119, %v118
  %v147 = vpack.c.b16 %v121, %v120
  %v148 = vpack.c.b16 %v123, %v122
  %v149 = vpack.c.b16 %v125, %v124
  %v150 = vpack.c.b16 %v127, %v126
  %v151 = vpack.c.b16 %v129, %v128
  %v152 = vpack.c.b16 %v131, %v130
  %v153 = vpack.c.b16 %v133, %v132
  %v154 = vpack.c.b16 %v135, %v134
  %v155 = vpack.c.b16 %v137, %v136
  %vm174 = vcmask 261120
  %v176 = vsel %vm174, %v63, 0
  %178 = vmatprep.subr.bf16.mxu0 0
  %179 = vmatpush1.bf16.msra.mxu0 %v138
  %180 = vmatprep.subr.bf16.mxu0 0
  %181 = vmatpush1.bf16.msra.mxu0 %v139
  %182 = vmatprep.subr.bf16.mxu0 0
  %183 = vmatpush1.bf16.msra.mxu0 %v140
  %184 = vmatprep.subr.bf16.mxu0 0
  %185 = vmatpush1.bf16.msra.mxu0 %v141
  %186 = vmatprep.subr.bf16.mxu0 0
  %187 = vmatpush1.bf16.msra.mxu0 %v142
  %188 = vmatprep.subr.bf16.mxu0 0
  %189 = vmatpush1.bf16.msra.mxu0 %v143
  %190 = vmatprep.subr.bf16.mxu0 0
  %191 = vmatpush1.bf16.msra.mxu0 %v144
  %192 = vmatprep.subr.bf16.mxu0 0
  %193 = vmatpush1.bf16.msra.mxu0 %v145
  %194 = vmatprep.subr.bf16.mxu0 0
  %195 = vmatpush1.bf16.msra.mxu0 %v146
  %196 = vmatprep.subr.bf16.mxu0 0
  %197 = vmatpush1.bf16.msra.mxu0 %v147
  %198 = vmatprep.subr.bf16.mxu0 0
  %199 = vmatpush1.bf16.msra.mxu0 %v148
  %200 = vmatprep.subr.bf16.mxu0 0
  %201 = vmatpush1.bf16.msra.mxu0 %v149
  %202 = vmatprep.subr.bf16.mxu0 0
  %203 = vmatpush1.bf16.msra.mxu0 %v150
  %204 = vmatprep.subr.bf16.mxu0 0
  %205 = vmatpush1.bf16.msra.mxu0 %v151
  %206 = vmatprep.subr.bf16.mxu0 0
  %207 = vmatpush1.bf16.msra.mxu0 %v152
  %208 = vmatprep.subr.bf16.mxu0 0
  %209 = vmatpush1.bf16.msra.mxu0 %v153
  %210 = vmatprep.mubr.bf16.mxu0 %v62
  %211 = vmatmul.mubr.bf16.gmra.mrb[0].mxu0 %v61
  %v212 = vpop.f32.mrb[0].mxu0
  %v213 = vadd.f32 0.0, %v212
  %v214 = vpop.f32.mrb[0].mxu0
  %v215 = vpop.f32.mrb[0].mxu0
  %v216 = vpop.f32.mrb[0].mxu0
  %217 = vdwg.mxu0
  %218 = vmatprep.subr.bf16.mxu0 0
  %219 = vmatpush1.bf16.msra.mxu0 %v154
  %220 = vmatprep.subr.bf16.mxu0 0
  %221 = vmatpush1.bf16.msra.mxu0 %v155
  %222 = vmatprep.subr.bf16.mxu0 0
  %223 = vmatpush1.bf16.msra.mxu0 0
  %224 = vmatprep.subr.bf16.mxu0 0
  %225 = vmatpush1.bf16.msra.mxu0 0
  %226 = vmatprep.subr.bf16.mxu0 0
  %227 = vmatpush1.bf16.msra.mxu0 0
  %228 = vmatprep.subr.bf16.mxu0 0
  %229 = vmatpush1.bf16.msra.mxu0 0
  %230 = vmatprep.subr.bf16.mxu0 0
  %231 = vmatpush1.bf16.msra.mxu0 0
  %232 = vmatprep.subr.bf16.mxu0 0
  %233 = vmatpush1.bf16.msra.mxu0 0
  %234 = vmatprep.subr.bf16.mxu0 0
  %235 = vmatpush1.bf16.msra.mxu0 0
  %236 = vmatprep.subr.bf16.mxu0 0
  %237 = vmatpush1.bf16.msra.mxu0 0
  %238 = vmatprep.subr.bf16.mxu0 0
  %239 = vmatpush1.bf16.msra.mxu0 0
  %240 = vmatprep.subr.bf16.mxu0 0
  %241 = vmatpush1.bf16.msra.mxu0 0
  %242 = vmatprep.subr.bf16.mxu0 0
  %243 = vmatpush1.bf16.msra.mxu0 0
  %244 = vmatprep.subr.bf16.mxu0 0
  %245 = vmatpush1.bf16.msra.mxu0 0
  %246 = vmatprep.subr.bf16.mxu0 0
  %247 = vmatpush1.bf16.msra.mxu0 0
  %248 = vmatprep.subr.bf16.mxu0 0
  %249 = vmatpush1.bf16.msra.mxu0 0
  %250 = vmatprep.mubr.bf16.mxu0 0
  %251 = vmatmul.mubr.bf16.gmra.mrb[0].mxu0 %v176
  %v252 = vpop.f32.mrb[0].mxu0
  %v253 = vadd.f32 %v213, %v252
  %v254 = vpop.f32.mrb[0].mxu0
  %v255 = vpop.f32.mrb[0].mxu0
  %v256 = vpop.f32.mrb[0].mxu0
  %257 = vdwg.mxu0
  %v258 = vld [vmem:[%s2] sm:$0x1]
  %v260 = vlaneseq
  %v261 = vshrl.u32 %v260, 7
  %v262 = vsub.s32 0, %v261
  %v263 = vrot.slane %v258, %v262
  %v265 = vmul.f32 %v253, %v263
  %v266 = vld [vmem:[%s3] sm:$0x1]
  %v268 = vlaneseq
  %v269 = vshrl.u32 %v268, 7
  %v270 = vsub.s32 0, %v269
  %v271 = vrot.slane %v266, %v270
  %v273 = vadd.f32 %v265, %v271
  %v274 = vmax.f32 %v273, 0.0
  %v275 = vpack.c.bf16 %v274, %v274
  %276 = vst [vmem:[%s4] sm:$0xf] %v275
  // Predicated region
  $region18: #{vggnet_forward.28} parent=0 // pred_check
    _
  $region19: #{vggnet_forward.28} parent=0 // pred_check_branch
    %278 = sbr.rel (0) target = $region21
  $region20: #{vggnet_forward.28} parent=0 // pred_region
    _
  $region21: #{vggnet_forward.28} parent=0 // pred_fallthru
    _
  // Predicated region
  $region22: #{vggnet_forward.28} parent=0 // pred_check
    _
  $region23: #{vggnet_forward.28} parent=0 // pred_check_branch
    %280 = sbr.rel (0) target = $region25
  $region24: #{vggnet_forward.28} parent=0 // pred_region
    _
  $region25: #{vggnet_forward.28} parent=0 // pred_fallthru
    _

// kernel: vggnet_forward.31
$region0: #{vggnet_forward.31}
  #allocation0 [shape = 'u32[]', space=smem, size = 0x4, offset = 0x4, fixed_abs, tag = 'smem constant byte address 0x4 - core index']
  #allocation1 [shape = 'u32[144,128]{1,0:T(1,128)}', space=vmem, size = 0x12000, scoped, tag = 'internal scratch']
  %s0 = inlined_call_operand.vmem [shape: bf16[4,2,288], index: 0, kind: input, shape index: {}]
  %s1 = inlined_call_operand.vmem [shape: bf16[288,128], index: 1, kind: input, shape index: {}]
  %s2 = inlined_call_operand.vmem [shape: f32[1,128], index: 2, kind: input, shape index: {}]
  %s3 = inlined_call_operand.vmem [shape: f32[1,128], index: 3, kind: input, shape index: {}]
  %s4 = inlined_call_operand.vmem [shape: f32[128,128], index: 4, kind: input, shape index: {}]
  %s5 = inlined_call_operand.vmem [shape: f32[1,128], index: 5, kind: input, shape index: {}]
  %s6 = inlined_call_operand.vmem [shape: f32[128,128], index: 6, kind: input, shape index: {}]
  %s7 = inlined_call_operand.vmem [shape: f32[1,128], index: 7, kind: input, shape index: {}]
  %s8 = inlined_call_operand.hbm [shape: f32[2,128], index: 8, kind: output, shape index: {}]
  %s9 = sld [smem:[#allocation0]]
  $region42: #{vggnet_forward.31} parent=0
    _
  %s11 = ssub.s32 1, %s9
  %s12 = scalar_select 0, %s11, %s9
  $region1: #{vggnet_forward.31} parent=0
    #allocation2 [shape = 'u8[1024]{0}', space=vmem, size = 0x400, scoped, tag = 'output window, operand 0, single buffered']
    #allocation3 [shape = 's32[1]{0}', space=sflag, size = 0x4, scoped, tag = 'scoped memory for vggnet_forward.31']
    %13 = vsyncpa [#allocation3], 0
    // Predicated region
    $region2: #{vggnet_forward.31} parent=1 // pred_check
      _
    $region3: #{vggnet_forward.31} parent=1 // pred_check_branch
      %15 = sbr.rel (0) target = $region5
    $region4: #{vggnet_forward.31} parent=1 // pred_region
      _
    $region5: #{vggnet_forward.31} parent=1 // pred_fallthru
      _
    // Predicated region
    $region6: #{vggnet_forward.31} parent=1 // pred_check
      _
    $region7: #{vggnet_forward.31} parent=1 // pred_check_branch
      %17 = sbr.rel (0) target = $region9
    $region8: #{vggnet_forward.31} parent=1 // pred_region
      _
    $region9: #{vggnet_forward.31} parent=1 // pred_fallthru
      _
    // Predicated region
    $region10: #{vggnet_forward.31} parent=1 // pred_check
      _
    $region11: #{vggnet_forward.31} parent=1 // pred_check_branch
      %19 = sbr.rel (0) target = $region13
    $region12: #{vggnet_forward.31} parent=1 // pred_region
      _
    $region13: #{vggnet_forward.31} parent=1 // pred_fallthru
      _
    // Predicated region
    $region14: #{vggnet_forward.31} parent=1 // pred_check
      _
    $region15: #{vggnet_forward.31} parent=1 // pred_check_branch
      %21 = sbr.rel (0) target = $region17
    $region16: #{vggnet_forward.31} parent=1 // pred_region
      _
    $region17: #{vggnet_forward.31} parent=1 // pred_fallthru
      _
    // Predicated region
    $region18: #{vggnet_forward.31} parent=1 // pred_check
      _
    $region19: #{vggnet_forward.31} parent=1 // pred_check_branch
      %23 = sbr.rel (0) target = $region21
    $region20: #{vggnet_forward.31} parent=1 // pred_region
      _
    $region21: #{vggnet_forward.31} parent=1 // pred_fallthru
      _
    // Predicated region
    $region22: #{vggnet_forward.31} parent=1 // pred_check
      _
    $region23: #{vggnet_forward.31} parent=1 // pred_check_branch
      %25 = sbr.rel (0) target = $region25
    $region24: #{vggnet_forward.31} parent=1 // pred_region
      _
    $region25: #{vggnet_forward.31} parent=1 // pred_fallthru
      _
    // Predicated region
    $region26: #{vggnet_forward.31} parent=1 // pred_check
      _
    $region27: #{vggnet_forward.31} parent=1 // pred_check_branch
      %27 = sbr.rel (0) target = $region29
    $region28: #{vggnet_forward.31} parent=1 // pred_region
      _
    $region29: #{vggnet_forward.31} parent=1 // pred_fallthru
      _
    // Predicated region
    $region30: #{vggnet_forward.31} parent=1 // pred_check
      _
    $region31: #{vggnet_forward.31} parent=1 // pred_check_branch
      %29 = sbr.rel (0) target = $region33
    $region32: #{vggnet_forward.31} parent=1 // pred_region
      _
    $region33: #{vggnet_forward.31} parent=1 // pred_fallthru
      _
    %v31 = vld [vmem:[%s1] sm:$0xf]
    %v32 = vld [vmem:[%s1 + $0x4] sm:$0xf]
    %v33 = vld [vmem:[%s1 + $0x8] sm:$0xf]
    %v34 = vld [vmem:[%s1 + $0xc] sm:$0xf]
    %v35 = vld [vmem:[%s1 + $0x10] sm:$0xf]
    %v36 = vld [vmem:[%s1 + $0x14] sm:$0xf]
    %v37 = vld [vmem:[%s1 + $0x18] sm:$0xf]
    %v38 = vld [vmem:[%s1 + $0x1c] sm:$0xf]
    %v39 = vld [vmem:[%s1 + $0x20] sm:$0xf]
    %v40 = vld [vmem:[%s1 + $0x24] sm:$0xf]
    %v41 = vld [vmem:[%s1 + $0x28] sm:$0xf]
    %v42 = vld [vmem:[%s1 + $0x2c] sm:$0xf]
    %v43 = vld [vmem:[%s1 + $0x30] sm:$0xf]
    %v44 = vld [vmem:[%s1 + $0x34] sm:$0xf]
    %v45 = vld [vmem:[%s1 + $0x38] sm:$0xf]
    %v46 = vld [vmem:[%s1 + $0x3c] sm:$0xf]
    %v47 = vld [vmem:[%s1 + $0x40] sm:$0xf]
    %v48 = vld [vmem:[%s1 + $0x44] sm:$0xf]
    %v49 = vld [vmem:[%s1 + $0x48] sm:$0xf]
    %v50 = vld [vmem:[%s1 + $0x4c] sm:$0xf]
    %v51 = vld [vmem:[%s1 + $0x50] sm:$0xf]
    %v52 = vld [vmem:[%s1 + $0x54] sm:$0xf]
    %v53 = vld [vmem:[%s1 + $0x58] sm:$0xf]
    %v54 = vld [vmem:[%s1 + $0x5c] sm:$0xf]
    %v55 = vld [vmem:[%s1 + $0x60] sm:$0xf]
    %v56 = vld [vmem:[%s1 + $0x64] sm:$0xf]
    %v57 = vld [vmem:[%s1 + $0x68] sm:$0xf]
    %v58 = vld [vmem:[%s1 + $0x6c] sm:$0xf]
    %v59 = vld [vmem:[%s1 + $0x70] sm:$0xf]
    %v60 = vld [vmem:[%s1 + $0x74] sm:$0xf]
    %v61 = vld [vmem:[%s1 + $0x78] sm:$0xf]
    %v62 = vld [vmem:[%s1 + $0x7c] sm:$0xf]
    %v63 = vld [vmem:[%s1 + $0x80] sm:$0xf]
    %v64 = vld [vmem:[%s1 + $0x84] sm:$0xf]
    %v65 = vld [vmem:[%s1 + $0x88] sm:$0xf]
    %v66 = vld [vmem:[%s1 + $0x8c] sm:$0xf]
    %v67 = vld [vmem:[%s2] sm:$0x1]
    %v68 = vld [vmem:[%s3] sm:$0x1]
    %v69 = vld [vmem:[%s0] sm:$0x7]
    %v72 = vunpack.c.l.s4 1966171168
    %v73 = vunpack.c.0.s8 %v72
    %v74 = vlaneseq
    %v75 = vshrl.u32 %v74, 7
    %v76 = vsub.s32 %v73, %v75
    %v77 = vrot.slane %v69, %v76
    %v78 = vcombine.high %v77, %v77
    %v80 = vunpack.c.l.s4 1966171168
    %v81 = vunpack.c.0.s8 %v80
    %v82 = vlaneseq
    %v83 = vshrl.u32 %v82, 7
    %v84 = vsub.s32 %v81, %v83
    %v85 = vrot.slane %v77, %v84
    %v87 = vunpack.c.l.s4 1966171168
    %v88 = vunpack.c.0.s8 %v87
    %v89 = vlaneseq
    %v90 = vshrl.u32 %v89, 7
    %v91 = vsub.s32 %v88, %v90
    %v92 = vrot.slane %v78, %v91
    %v93 = vcombine.high %v85, %v85
    %v132 = vunpack.c.l.b16 %v31
    %v133 = vunpack.c.l.b16 %v32
    %v134 = vunpack.c.l.b16 %v33
    %v135 = vunpack.c.l.b16 %v34
    %v136 = vunpack.c.l.b16 %v35
    %v137 = vunpack.c.l.b16 %v36
    %v138 = vunpack.c.l.b16 %v37
    %v139 = vunpack.c.l.b16 %v38
    %v140 = vunpack.c.l.b16 %v39
    %v141 = vunpack.c.l.b16 %v40
    %v142 = vunpack.c.l.b16 %v41
    %v143 = vunpack.c.l.b16 %v42
    %v144 = vunpack.c.l.b16 %v43
    %v145 = vunpack.c.l.b16 %v44
    %v146 = vunpack.c.l.b16 %v45
    %v147 = vunpack.c.l.b16 %v46
    %v148 = vunpack.c.l.b16 %v47
    %v149 = vunpack.c.l.b16 %v48
    %v150 = vunpack.c.l.b16 %v49
    %v151 = vunpack.c.l.b16 %v50
    %v152 = vunpack.c.l.b16 %v51
    %v153 = vunpack.c.l.b16 %v52
    %v154 = vunpack.c.l.b16 %v53
    %v155 = vunpack.c.l.b16 %v54
    %v156 = vunpack.c.l.b16 %v55
    %v157 = vunpack.c.l.b16 %v56
    %v158 = vunpack.c.l.b16 %v57
    %v159 = vunpack.c.l.b16 %v58
    %v160 = vunpack.c.l.b16 %v59
    %v161 = vunpack.c.l.b16 %v60
    %v162 = vunpack.c.l.b16 %v61
    %v163 = vunpack.c.l.b16 %v62
    %v164 = vunpack.c.l.b16 %v63
    %v165 = vunpack.c.l.b16 %v64
    %v166 = vunpack.c.l.b16 %v65
    %v167 = vunpack.c.l.b16 %v66
    %v168 = vpack.c.b16 %v133, %v132
    %v169 = vpack.c.b16 %v135, %v134
    %v170 = vpack.c.b16 %v137, %v136
    %v171 = vpack.c.b16 %v139, %v138
    %v172 = vpack.c.b16 %v141, %v140
    %v173 = vpack.c.b16 %v143, %v142
    %v174 = vpack.c.b16 %v145, %v144
    %v175 = vpack.c.b16 %v147, %v146
    %v176 = vpack.c.b16 %v149, %v148
    %v177 = vpack.c.b16 %v151, %v150
    %v178 = vpack.c.b16 %v153, %v152
    %v179 = vpack.c.b16 %v155, %v154
    %v180 = vpack.c.b16 %v157, %v156
    %v181 = vpack.c.b16 %v159, %v158
    %v182 = vpack.c.b16 %v161, %v160
    %v183 = vpack.c.b16 %v163, %v162
    %v184 = vpack.c.b16 %v165, %v164
    %v185 = vpack.c.b16 %v167, %v166
    %vm204 = vcmask 261120
    %v206 = vsel %vm204, %v93, 0
    %208 = vmatprep.subr.bf16.mxu0 0
    %209 = vmatpush1.bf16.msra.mxu0 %v168
    %210 = vmatprep.subr.bf16.mxu0 0
    %211 = vmatpush1.bf16.msra.mxu0 %v169
    %212 = vmatprep.subr.bf16.mxu0 0
    %213 = vmatpush1.bf16.msra.mxu0 %v170
    %214 = vmatprep.subr.bf16.mxu0 0
    %215 = vmatpush1.bf16.msra.mxu0 %v171
    %216 = vmatprep.subr.bf16.mxu0 0
    %217 = vmatpush1.bf16.msra.mxu0 %v172
    %218 = vmatprep.subr.bf16.mxu0 0
    %219 = vmatpush1.bf16.msra.mxu0 %v173
    %220 = vmatprep.subr.bf16.mxu0 0
    %221 = vmatpush1.bf16.msra.mxu0 %v174
    %222 = vmatprep.subr.bf16.mxu0 0
    %223 = vmatpush1.bf16.msra.mxu0 %v175
    %224 = vmatprep.subr.bf16.mxu0 0
    %225 = vmatpush1.bf16.msra.mxu0 %v176
    %226 = vmatprep.subr.bf16.mxu0 0
    %227 = vmatpush1.bf16.msra.mxu0 %v177
    %228 = vmatprep.subr.bf16.mxu0 0
    %229 = vmatpush1.bf16.msra.mxu0 %v178
    %230 = vmatprep.subr.bf16.mxu0 0
    %231 = vmatpush1.bf16.msra.mxu0 %v179
    %232 = vmatprep.subr.bf16.mxu0 0
    %233 = vmatpush1.bf16.msra.mxu0 %v180
    %234 = vmatprep.subr.bf16.mxu0 0
    %235 = vmatpush1.bf16.msra.mxu0 %v181
    %236 = vmatprep.subr.bf16.mxu0 0
    %237 = vmatpush1.bf16.msra.mxu0 %v182
    %238 = vmatprep.subr.bf16.mxu0 0
    %239 = vmatpush1.bf16.msra.mxu0 %v183
    %240 = vmatprep.mubr.bf16.mxu0 %v92
    %241 = vmatmul.mubr.bf16.gmra.mrb[0].mxu0 %v85
    %v242 = vpop.f32.mrb[0].mxu0
    %v243 = vadd.f32 0.0, %v242
    %v244 = vpop.f32.mrb[0].mxu0
    %v245 = vpop.f32.mrb[0].mxu0
    %v246 = vpop.f32.mrb[0].mxu0
    %247 = vdwg.mxu0
    %248 = vmatprep.subr.bf16.mxu0 0
    %249 = vmatpush1.bf16.msra.mxu0 %v184
    %250 = vmatprep.subr.bf16.mxu0 0
    %251 = vmatpush1.bf16.msra.mxu0 %v185
    %252 = vmatprep.subr.bf16.mxu0 0
    %253 = vmatpush1.bf16.msra.mxu0 0
    %254 = vmatprep.subr.bf16.mxu0 0
    %255 = vmatpush1.bf16.msra.mxu0 0
    %256 = vmatprep.subr.bf16.mxu0 0
    %257 = vmatpush1.bf16.msra.mxu0 0
    %258 = vmatprep.subr.bf16.mxu0 0
    %259 = vmatpush1.bf16.msra.mxu0 0
    %260 = vmatprep.subr.bf16.mxu0 0
    %261 = vmatpush1.bf16.msra.mxu0 0
    %262 = vmatprep.subr.bf16.mxu0 0
    %263 = vmatpush1.bf16.msra.mxu0 0
    %264 = vmatprep.subr.bf16.mxu0 0
    %265 = vmatpush1.bf16.msra.mxu0 0
    %266 = vmatprep.subr.bf16.mxu0 0
    %267 = vmatpush1.bf16.msra.mxu0 0
    %268 = vmatprep.subr.bf16.mxu0 0
    %269 = vmatpush1.bf16.msra.mxu0 0
    %270 = vmatprep.subr.bf16.mxu0 0
    %271 = vmatpush1.bf16.msra.mxu0 0
    %272 = vmatprep.subr.bf16.mxu0 0
    %273 = vmatpush1.bf16.msra.mxu0 0
    %274 = vmatprep.subr.bf16.mxu0 0
    %275 = vmatpush1.bf16.msra.mxu0 0
    %276 = vmatprep.subr.bf16.mxu0 0
    %277 = vmatpush1.bf16.msra.mxu0 0
    %278 = vmatprep.subr.bf16.mxu0 0
    %279 = vmatpush1.bf16.msra.mxu0 0
    %280 = vmatprep.mubr.bf16.mxu0 0
    %281 = vmatmul.mubr.bf16.gmra.mrb[0].mxu0 %v206
    %v282 = vpop.f32.mrb[0].mxu0
    %v283 = vadd.f32 %v243, %v282
    %v284 = vpop.f32.mrb[0].mxu0
    %v285 = vpop.f32.mrb[0].mxu0
    %v286 = vpop.f32.mrb[0].mxu0
    %287 = vdwg.mxu0
    %v289 = vlaneseq
    %v290 = vshrl.u32 %v289, 7
    %v291 = vsub.s32 0, %v290
    %v292 = vrot.slane %v67, %v291
    %v294 = vmul.f32 %v283, %v292
    %v296 = vlaneseq
    %v297 = vshrl.u32 %v296, 7
    %v298 = vsub.s32 0, %v297
    %v299 = vrot.slane %v68, %v298
    %v301 = vadd.f32 %v294, %v299
    %v302 = vmax.f32 %v301, 0.0
    %s303 = scalar_lea.vmem %s0, 3
    %v304 = vld [vmem:[%s303] sm:$0x7]
    %v307 = vunpack.c.l.s4 1966171168
    %v308 = vunpack.c.0.s8 %v307
    %v309 = vlaneseq
    %v310 = vshrl.u32 %v309, 7
    %v311 = vsub.s32 %v308, %v310
    %v312 = vrot.slane %v304, %v311
    %v313 = vcombine.high %v312, %v312
    %v315 = vunpack.c.l.s4 1966171168
    %v316 = vunpack.c.0.s8 %v315
    %v317 = vlaneseq
    %v318 = vshrl.u32 %v317, 7
    %v319 = vsub.s32 %v316, %v318
    %v320 = vrot.slane %v312, %v319
    %v322 = vunpack.c.l.s4 1966171168
    %v323 = vunpack.c.0.s8 %v322
    %v324 = vlaneseq
    %v325 = vshrl.u32 %v324, 7
    %v326 = vsub.s32 %v323, %v325
    %v327 = vrot.slane %v313, %v326
    %v328 = vcombine.high %v320, %v320
    %v332 = vsel %vm204, %v328, 0
    %334 = vmatprep.subr.bf16.mxu0 0
    %335 = vmatpush1.bf16.msra.mxu0 %v168
    %336 = vmatprep.subr.bf16.mxu0 0
    %337 = vmatpush1.bf16.msra.mxu0 %v169
    %338 = vmatprep.subr.bf16.mxu0 0
    %339 = vmatpush1.bf16.msra.mxu0 %v170
    %340 = vmatprep.subr.bf16.mxu0 0
    %341 = vmatpush1.bf16.msra.mxu0 %v171
    %342 = vmatprep.subr.bf16.mxu0 0
    %343 = vmatpush1.bf16.msra.mxu0 %v172
    %344 = vmatprep.subr.bf16.mxu0 0
    %345 = vmatpush1.bf16.msra.mxu0 %v173
    %346 = vmatprep.subr.bf16.mxu0 0
    %347 = vmatpush1.bf16.msra.mxu0 %v174
    %348 = vmatprep.subr.bf16.mxu0 0
    %349 = vmatpush1.bf16.msra.mxu0 %v175
    %350 = vmatprep.subr.bf16.mxu0 0
    %351 = vmatpush1.bf16.msra.mxu0 %v176
    %352 = vmatprep.subr.bf16.mxu0 0
    %353 = vmatpush1.bf16.msra.mxu0 %v177
    %354 = vmatprep.subr.bf16.mxu0 0
    %355 = vmatpush1.bf16.msra.mxu0 %v178
    %356 = vmatprep.subr.bf16.mxu0 0
    %357 = vmatpush1.bf16.msra.mxu0 %v179
    %358 = vmatprep.subr.bf16.mxu0 0
    %359 = vmatpush1.bf16.msra.mxu0 %v180
    %360 = vmatprep.subr.bf16.mxu0 0
    %361 = vmatpush1.bf16.msra.mxu0 %v181
    %362 = vmatprep.subr.bf16.mxu0 0
    %363 = vmatpush1.bf16.msra.mxu0 %v182
    %364 = vmatprep.subr.bf16.mxu0 0
    %365 = vmatpush1.bf16.msra.mxu0 %v183
    %366 = vmatprep.mubr.bf16.mxu0 %v327
    %367 = vmatmul.mubr.bf16.gmra.mrb[0].mxu0 %v320
    %v368 = vpop.f32.mrb[0].mxu0
    %v369 = vadd.f32 0.0, %v368
    %v370 = vpop.f32.mrb[0].mxu0
    %v371 = vpop.f32.mrb[0].mxu0
    %v372 = vpop.f32.mrb[0].mxu0
    %373 = vdwg.mxu0
    %374 = vmatprep.subr.bf16.mxu0 0
    %375 = vmatpush1.bf16.msra.mxu0 %v184
    %376 = vmatprep.subr.bf16.mxu0 0
    %377 = vmatpush1.bf16.msra.mxu0 %v185
    %378 = vmatprep.subr.bf16.mxu0 0
    %379 = vmatpush1.bf16.msra.mxu0 0
    %380 = vmatprep.subr.bf16.mxu0 0
    %381 = vmatpush1.bf16.msra.mxu0 0
    %382 = vmatprep.subr.bf16.mxu0 0
    %383 = vmatpush1.bf16.msra.mxu0 0
    %384 = vmatprep.subr.bf16.mxu0 0
    %385 = vmatpush1.bf16.msra.mxu0 0
    %386 = vmatprep.subr.bf16.mxu0 0
    %387 = vmatpush1.bf16.msra.mxu0 0
    %388 = vmatprep.subr.bf16.mxu0 0
    %389 = vmatpush1.bf16.msra.mxu0 0
    %390 = vmatprep.subr.bf16.mxu0 0
    %391 = vmatpush1.bf16.msra.mxu0 0
    %392 = vmatprep.subr.bf16.mxu0 0
    %393 = vmatpush1.bf16.msra.mxu0 0
    %394 = vmatprep.subr.bf16.mxu0 0
    %395 = vmatpush1.bf16.msra.mxu0 0
    %396 = vmatprep.subr.bf16.mxu0 0
    %397 = vmatpush1.bf16.msra.mxu0 0
    %398 = vmatprep.subr.bf16.mxu0 0
    %399 = vmatpush1.bf16.msra.mxu0 0
    %400 = vmatprep.subr.bf16.mxu0 0
    %401 = vmatpush1.bf16.msra.mxu0 0
    %402 = vmatprep.subr.bf16.mxu0 0
    %403 = vmatpush1.bf16.msra.mxu0 0
    %404 = vmatprep.subr.bf16.mxu0 0
    %405 = vmatpush1.bf16.msra.mxu0 0
    %406 = vmatprep.mubr.bf16.mxu0 0
    %407 = vmatmul.mubr.bf16.gmra.mrb[0].mxu0 %v332
    %v408 = vpop.f32.mrb[0].mxu0
    %v409 = vadd.f32 %v369, %v408
    %v410 = vpop.f32.mrb[0].mxu0
    %v411 = vpop.f32.mrb[0].mxu0
    %v412 = vpop.f32.mrb[0].mxu0
    %413 = vdwg.mxu0
    %v414 = vmul.f32 %v409, %v292
    %v415 = vadd.f32 %v414, %v299
    %v416 = vmax.f32 %v415, 0.0
    %v417 = vmax.f32 %v302, %v416
    %s418 = scalar_lea.vmem %s0, 6
    %v419 = vld [vmem:[%s418] sm:$0x7]
    %v422 = vunpack.c.l.s4 1966171168
    %v423 = vunpack.c.0.s8 %v422
    %v424 = vlaneseq
    %v425 = vshrl.u32 %v424, 7
    %v426 = vsub.s32 %v423, %v425
    %v427 = vrot.slane %v419, %v426
    %v428 = vcombine.high %v427, %v427
    %v430 = vunpack.c.l.s4 1966171168
    %v431 = vunpack.c.0.s8 %v430
    %v432 = vlaneseq
    %v433 = vshrl.u32 %v432, 7
    %v434 = vsub.s32 %v431, %v433
    %v435 = vrot.slane %v427, %v434
    %v437 = vunpack.c.l.s4 1966171168
    %v438 = vunpack.c.0.s8 %v437
    %v439 = vlaneseq
    %v440 = vshrl.u32 %v439, 7
    %v441 = vsub.s32 %v438, %v440
    %v442 = vrot.slane %v428, %v441
    %v443 = vcombine.high %v435, %v435
    %v447 = vsel %vm204, %v443, 0
    %449 = vmatprep.subr.bf16.mxu0 0
    %450 = vmatpush1.bf16.msra.mxu0 %v168
    %451 = vmatprep.subr.bf16.mxu0 0
    %452 = vmatpush1.bf16.msra.mxu0 %v169
    %453 = vmatprep.subr.bf16.mxu0 0
    %454 = vmatpush1.bf16.msra.mxu0 %v170
    %455 = vmatprep.subr.bf16.mxu0 0
    %456 = vmatpush1.bf16.msra.mxu0 %v171
    %457 = vmatprep.subr.bf16.mxu0 0
    %458 = vmatpush1.bf16.msra.mxu0 %v172
    %459 = vmatprep.subr.bf16.mxu0 0
    %460 = vmatpush1.bf16.msra.mxu0 %v173
    %461 = vmatprep.subr.bf16.mxu0 0
    %462 = vmatpush1.bf16.msra.mxu0 %v174
    %463 = vmatprep.subr.bf16.mxu0 0
    %464 = vmatpush1.bf16.msra.mxu0 %v175
    %465 = vmatprep.subr.bf16.mxu0 0
    %466 = vmatpush1.bf16.msra.mxu0 %v176
    %467 = vmatprep.subr.bf16.mxu0 0
    %468 = vmatpush1.bf16.msra.mxu0 %v177
    %469 = vmatprep.subr.bf16.mxu0 0
    %470 = vmatpush1.bf16.msra.mxu0 %v178
    %471 = vmatprep.subr.bf16.mxu0 0
    %472 = vmatpush1.bf16.msra.mxu0 %v179
    %473 = vmatprep.subr.bf16.mxu0 0
    %474 = vmatpush1.bf16.msra.mxu0 %v180
    %475 = vmatprep.subr.bf16.mxu0 0
    %476 = vmatpush1.bf16.msra.mxu0 %v181
    %477 = vmatprep.subr.bf16.mxu0 0
    %478 = vmatpush1.bf16.msra.mxu0 %v182
    %479 = vmatprep.subr.bf16.mxu0 0
    %480 = vmatpush1.bf16.msra.mxu0 %v183
    %481 = vmatprep.mubr.bf16.mxu0 %v442
    %482 = vmatmul.mubr.bf16.gmra.mrb[0].mxu0 %v435
    %v483 = vpop.f32.mrb[0].mxu0
    %v484 = vadd.f32 0.0, %v483
    %v485 = vpop.f32.mrb[0].mxu0
    %v486 = vpop.f32.mrb[0].mxu0
    %v487 = vpop.f32.mrb[0].mxu0
    %488 = vdwg.mxu0
    %489 = vmatprep.subr.bf16.mxu0 0
    %490 = vmatpush1.bf16.msra.mxu0 %v184
    %491 = vmatprep.subr.bf16.mxu0 0
    %492 = vmatpush1.bf16.msra.mxu0 %v185
    %493 = vmatprep.subr.bf16.mxu0 0
    %494 = vmatpush1.bf16.msra.mxu0 0
    %495 = vmatprep.subr.bf16.mxu0 0
    %496 = vmatpush1.bf16.msra.mxu0 0
    %497 = vmatprep.subr.bf16.mxu0 0
    %498 = vmatpush1.bf16.msra.mxu0 0
    %499 = vmatprep.subr.bf16.mxu0 0
    %500 = vmatpush1.bf16.msra.mxu0 0
    %501 = vmatprep.subr.bf16.mxu0 0
    %502 = vmatpush1.bf16.msra.mxu0 0
    %503 = vmatprep.subr.bf16.mxu0 0
    %504 = vmatpush1.bf16.msra.mxu0 0
    %505 = vmatprep.subr.bf16.mxu0 0
    %506 = vmatpush1.bf16.msra.mxu0 0
    %507 = vmatprep.subr.bf16.mxu0 0
    %508 = vmatpush1.bf16.msra.mxu0 0
    %509 = vmatprep.subr.bf16.mxu0 0
    %510 = vmatpush1.bf16.msra.mxu0 0
    %511 = vmatprep.subr.bf16.mxu0 0
    %512 = vmatpush1.bf16.msra.mxu0 0
    %513 = vmatprep.subr.bf16.mxu0 0
    %514 = vmatpush1.bf16.msra.mxu0 0
    %515 = vmatprep.subr.bf16.mxu0 0
    %516 = vmatpush1.bf16.msra.mxu0 0
    %517 = vmatprep.subr.bf16.mxu0 0
    %518 = vmatpush1.bf16.msra.mxu0 0
    %519 = vmatprep.subr.bf16.mxu0 0
    %520 = vmatpush1.bf16.msra.mxu0 0
    %521 = vmatprep.mubr.bf16.mxu0 0
    %522 = vmatmul.mubr.bf16.gmra.mrb[0].mxu0 %v447
    %v523 = vpop.f32.mrb[0].mxu0
    %v524 = vadd.f32 %v484, %v523
    %v525 = vpop.f32.mrb[0].mxu0
    %v526 = vpop.f32.mrb[0].mxu0
    %v527 = vpop.f32.mrb[0].mxu0
    %528 = vdwg.mxu0
    %v529 = vmul.f32 %v524, %v292
    %v530 = vadd.f32 %v529, %v299
    %v531 = vmax.f32 %v530, 0.0
    %v532 = vmax.f32 %v417, %v531
    %s533 = scalar_lea.vmem %s0, 9
    %v534 = vld [vmem:[%s533] sm:$0x7]
    %v537 = vunpack.c.l.s4 1966171168
    %v538 = vunpack.c.0.s8 %v537
    %v539 = vlaneseq
    %v540 = vshrl.u32 %v539, 7
    %v541 = vsub.s32 %v538, %v540
    %v542 = vrot.slane %v534, %v541
    %v543 = vcombine.high %v542, %v542
    %v545 = vunpack.c.l.s4 1966171168
    %v546 = vunpack.c.0.s8 %v545
    %v547 = vlaneseq
    %v548 = vshrl.u32 %v547, 7
    %v549 = vsub.s32 %v546, %v548
    %v550 = vrot.slane %v542, %v549
    %v552 = vunpack.c.l.s4 1966171168
    %v553 = vunpack.c.0.s8 %v552
    %v554 = vlaneseq
    %v555 = vshrl.u32 %v554, 7
    %v556 = vsub.s32 %v553, %v555
    %v557 = vrot.slane %v543, %v556
    %v558 = vcombine.high %v550, %v550
    %v562 = vsel %vm204, %v558, 0
    %564 = vmatprep.subr.bf16.mxu0 0
    %565 = vmatpush1.bf16.msra.mxu0 %v168
    %566 = vmatprep.subr.bf16.mxu0 0
    %567 = vmatpush1.bf16.msra.mxu0 %v169
    %568 = vmatprep.subr.bf16.mxu0 0
    %569 = vmatpush1.bf16.msra.mxu0 %v170
    %570 = vmatprep.subr.bf16.mxu0 0
    %571 = vmatpush1.bf16.msra.mxu0 %v171
    %572 = vmatprep.subr.bf16.mxu0 0
    %573 = vmatpush1.bf16.msra.mxu0 %v172
    %574 = vmatprep.subr.bf16.mxu0 0
    %575 = vmatpush1.bf16.msra.mxu0 %v173
    %576 = vmatprep.subr.bf16.mxu0 0
    %577 = vmatpush1.bf16.msra.mxu0 %v174
    %578 = vmatprep.subr.bf16.mxu0 0
    %579 = vmatpush1.bf16.msra.mxu0 %v175
    %580 = vmatprep.subr.bf16.mxu0 0
    %581 = vmatpush1.bf16.msra.mxu0 %v176
    %582 = vmatprep.subr.bf16.mxu0 0
    %583 = vmatpush1.bf16.msra.mxu0 %v177
    %584 = vmatprep.subr.bf16.mxu0 0
    %585 = vmatpush1.bf16.msra.mxu0 %v178
    %586 = vmatprep.subr.bf16.mxu0 0
    %587 = vmatpush1.bf16.msra.mxu0 %v179
    %588 = vmatprep.subr.bf16.mxu0 0
    %589 = vmatpush1.bf16.msra.mxu0 %v180
    %590 = vmatprep.subr.bf16.mxu0 0
    %591 = vmatpush1.bf16.msra.mxu0 %v181
    %592 = vmatprep.subr.bf16.mxu0 0
    %593 = vmatpush1.bf16.msra.mxu0 %v182
    %594 = vmatprep.subr.bf16.mxu0 0
    %595 = vmatpush1.bf16.msra.mxu0 %v183
    %596 = vmatprep.mubr.bf16.mxu0 %v557
    %597 = vmatmul.mubr.bf16.gmra.mrb[0].mxu0 %v550
    %v598 = vpop.f32.mrb[0].mxu0
    %v599 = vadd.f32 0.0, %v598
    %v600 = vpop.f32.mrb[0].mxu0
    %v601 = vpop.f32.mrb[0].mxu0
    %v602 = vpop.f32.mrb[0].mxu0
    %603 = vdwg.mxu0
    %604 = vmatprep.subr.bf16.mxu0 0
    %605 = vmatpush1.bf16.msra.mxu0 %v184
    %606 = vmatprep.subr.bf16.mxu0 0
    %607 = vmatpush1.bf16.msra.mxu0 %v185
    %608 = vmatprep.subr.bf16.mxu0 0
    %609 = vmatpush1.bf16.msra.mxu0 0
    %610 = vmatprep.subr.bf16.mxu0 0
    %611 = vmatpush1.bf16.msra.mxu0 0
    %612 = vmatprep.subr.bf16.mxu0 0
    %613 = vmatpush1.bf16.msra.mxu0 0
    %614 = vmatprep.subr.bf16.mxu0 0
    %615 = vmatpush1.bf16.msra.mxu0 0
    %616 = vmatprep.subr.bf16.mxu0 0
    %617 = vmatpush1.bf16.msra.mxu0 0
    %618 = vmatprep.subr.bf16.mxu0 0
    %619 = vmatpush1.bf16.msra.mxu0 0
    %620 = vmatprep.subr.bf16.mxu0 0
    %621 = vmatpush1.bf16.msra.mxu0 0
    %622 = vmatprep.subr.bf16.mxu0 0
    %623 = vmatpush1.bf16.msra.mxu0 0
    %624 = vmatprep.subr.bf16.mxu0 0
    %625 = vmatpush1.bf16.msra.mxu0 0
    %626 = vmatprep.subr.bf16.mxu0 0
    %627 = vmatpush1.bf16.msra.mxu0 0
    %628 = vmatprep.subr.bf16.mxu0 0
    %629 = vmatpush1.bf16.msra.mxu0 0
    %630 = vmatprep.subr.bf16.mxu0 0
    %631 = vmatpush1.bf16.msra.mxu0 0
    %632 = vmatprep.subr.bf16.mxu0 0
    %633 = vmatpush1.bf16.msra.mxu0 0
    %634 = vmatprep.subr.bf16.mxu0 0
    %635 = vmatpush1.bf16.msra.mxu0 0
    %636 = vmatprep.mubr.bf16.mxu0 0
    %637 = vmatmul.mubr.bf16.gmra.mrb[0].mxu0 %v562
    %v638 = vpop.f32.mrb[0].mxu0
    %v639 = vadd.f32 %v599, %v638
    %v640 = vpop.f32.mrb[0].mxu0
    %v641 = vpop.f32.mrb[0].mxu0
    %v642 = vpop.f32.mrb[0].mxu0
    %643 = vdwg.mxu0
    %v644 = vmul.f32 %v639, %v292
    %v645 = vadd.f32 %v644, %v299
    %v646 = vmax.f32 %v645, 0.0
    %v647 = vmax.f32 %v532, %v646
    %v648 = vld [vmem:[%s4] sm:$0xff]
    %v649 = vld [vmem:[%s4 + $0x8] sm:$0xff]
    %v650 = vld [vmem:[%s4 + $0x10] sm:$0xff]
    %v651 = vld [vmem:[%s4 + $0x18] sm:$0xff]
    %v652 = vld [vmem:[%s4 + $0x20] sm:$0xff]
    %v653 = vld [vmem:[%s4 + $0x28] sm:$0xff]
    %v654 = vld [vmem:[%s4 + $0x30] sm:$0xff]
    %v655 = vld [vmem:[%s4 + $0x38] sm:$0xff]
    %v656 = vld [vmem:[%s4 + $0x40] sm:$0xff]
    %v657 = vld [vmem:[%s4 + $0x48] sm:$0xff]
    %v658 = vld [vmem:[%s4 + $0x50] sm:$0xff]
    %v659 = vld [vmem:[%s4 + $0x58] sm:$0xff]
    %v660 = vld [vmem:[%s4 + $0x60] sm:$0xff]
    %v661 = vld [vmem:[%s4 + $0x68] sm:$0xff]
    %v662 = vld [vmem:[%s4 + $0x70] sm:$0xff]
    %v663 = vld [vmem:[%s4 + $0x78] sm:$0xff]
    %v664 = vld [vmem:[%s5] sm:$0x1]
    %v666 = vlaneseq
    %v667 = vshrl.u32 %v666, 7
    %v668 = vsub.s32 0, %v667
    %v669 = vrot.slane %v664, %v668
    %671 = vmatprep.subr.mxu0 0.0
    %672 = vmatpush1.msra.mxu0 %v648
    %673 = vmatprep.subr.mxu0 0.0
    %674 = vmatpush1.msra.mxu0 %v649
    %675 = vmatprep.subr.mxu0 0.0
    %676 = vmatpush1.msra.mxu0 %v650
    %677 = vmatprep.subr.mxu0 0.0
    %678 = vmatpush1.msra.mxu0 %v651
    %679 = vmatprep.subr.mxu0 0.0
    %680 = vmatpush1.msra.mxu0 %v652
    %681 = vmatprep.subr.mxu0 0.0
    %682 = vmatpush1.msra.mxu0 %v653
    %683 = vmatprep.subr.mxu0 0.0
    %684 = vmatpush1.msra.mxu0 %v654
    %685 = vmatprep.subr.mxu0 0.0
    %686 = vmatpush1.msra.mxu0 %v655
    %687 = vmatprep.subr.mxu0 0.0
    %688 = vmatpush1.msra.mxu0 %v656
    %689 = vmatprep.subr.mxu0 0.0
    %690 = vmatpush1.msra.mxu0 %v657
    %691 = vmatprep.subr.mxu0 0.0
    %692 = vmatpush1.msra.mxu0 %v658
    %693 = vmatprep.subr.mxu0 0.0
    %694 = vmatpush1.msra.mxu0 %v659
    %695 = vmatprep.subr.mxu0 0.0
    %696 = vmatpush1.msra.mxu0 %v660
    %697 = vmatprep.subr.mxu0 0.0
    %698 = vmatpush1.msra.mxu0 %v661
    %699 = vmatprep.subr.mxu0 0.0
    %700 = vmatpush1.msra.mxu0 %v662
    %701 = vmatprep.subr.mxu0 0.0
    %702 = vmatpush1.msra.mxu0 %v663
    %703 = vmatprep.subr.mxu0 0.0
    %704 = vmatpush1.msra.mxu0 0.0
    %705 = vmatprep.subr.mxu0 0.0
    %706 = vmatpush1.msra.mxu0 0.0
    %707 = vmatprep.subr.mxu0 0.0
    %708 = vmatpush1.msra.mxu0 0.0
    %709 = vmatprep.subr.mxu0 0.0
    %710 = vmatpush1.msra.mxu0 0.0
    %711 = vmatprep.subr.mxu0 0.0
    %712 = vmatpush1.msra.mxu0 0.0
    %713 = vmatprep.subr.mxu0 0.0
    %714 = vmatpush1.msra.mxu0 0.0
    %715 = vmatprep.subr.mxu0 0.0
    %716 = vmatpush1.msra.mxu0 0.0
    %717 = vmatprep.subr.mxu0 0.0
    %718 = vmatpush1.msra.mxu0 0.0
    %719 = vmatprep.subr.mxu0 0.0
    %720 = vmatpush1.msra.mxu0 0.0
    %721 = vmatprep.subr.mxu0 0.0
    %722 = vmatpush1.msra.mxu0 0.0
    %723 = vmatprep.subr.mxu0 0.0
    %724 = vmatpush1.msra.mxu0 0.0
    %725 = vmatprep.subr.mxu0 0.0
    %726 = vmatpush1.msra.mxu0 0.0
    %727 = vmatprep.subr.mxu0 0.0
    %728 = vmatpush1.msra.mxu0 0.0
    %729 = vmatprep.subr.mxu0 0.0
    %730 = vmatpush1.msra.mxu0 0.0
    %731 = vmatprep.subr.mxu0 0.0
    %732 = vmatpush1.msra.mxu0 0.0
    %733 = vmatprep.subr.mxu0 0.0
    %734 = vmatpush1.msra.mxu0 0.0
    %735 = vmatprep.mubr.f32.mxu0 0.0
    %736 = vmatmul.mubr.f32.gmra.mrb[0].mxu0 %v647
    %v737 = vpop.f32.mrb[0].mxu0
    %v738 = vadd.f32 %v669, %v737
    %v739 = vpop.f32.mrb[0].mxu0
    %740 = vdwg.mxu0
    %v741 = vmax.f32 %v738, 0.0
    %v742 = vld [vmem:[%s6] sm:$0xff]
    %v743 = vld [vmem:[%s6 + $0x8] sm:$0xff]
    %v744 = vld [vmem:[%s6 + $0x10] sm:$0xff]
    %v745 = vld [vmem:[%s6 + $0x18] sm:$0xff]
    %v746 = vld [vmem:[%s6 + $0x20] sm:$0xff]
    %v747 = vld [vmem:[%s6 + $0x28] sm:$0xff]
    %v748 = vld [vmem:[%s6 + $0x30] sm:$0xff]
    %v749 = vld [vmem:[%s6 + $0x38] sm:$0xff]
    %v750 = vld [vmem:[%s6 + $0x40] sm:$0xff]
    %v751 = vld [vmem:[%s6 + $0x48] sm:$0xff]
    %v752 = vld [vmem:[%s6 + $0x50] sm:$0xff]
    %v753 = vld [vmem:[%s6 + $0x58] sm:$0xff]
    %v754 = vld [vmem:[%s6 + $0x60] sm:$0xff]
    %v755 = vld [vmem:[%s6 + $0x68] sm:$0xff]
    %v756 = vld [vmem:[%s6 + $0x70] sm:$0xff]
    %v757 = vld [vmem:[%s6 + $0x78] sm:$0xff]
    %v758 = vld [vmem:[%s7] sm:$0x1]
    %v760 = vlaneseq
    %v761 = vshrl.u32 %v760, 7
    %v762 = vsub.s32 0, %v761
    %v763 = vrot.slane %v758, %v762
    %765 = vmatprep.subr.mxu0 0.0
    %766 = vmatpush1.msra.mxu0 %v742
    %767 = vmatprep.subr.mxu0 0.0
    %768 = vmatpush1.msra.mxu0 %v743
    %769 = vmatprep.subr.mxu0 0.0
    %770 = vmatpush1.msra.mxu0 %v744
    %771 = vmatprep.subr.mxu0 0.0
    %772 = vmatpush1.msra.mxu0 %v745
    %773 = vmatprep.subr.mxu0 0.0
    %774 = vmatpush1.msra.mxu0 %v746
    %775 = vmatprep.subr.mxu0 0.0
    %776 = vmatpush1.msra.mxu0 %v747
    %777 = vmatprep.subr.mxu0 0.0
    %778 = vmatpush1.msra.mxu0 %v748
    %779 = vmatprep.subr.mxu0 0.0
    %780 = vmatpush1.msra.mxu0 %v749
    %781 = vmatprep.subr.mxu0 0.0
    %782 = vmatpush1.msra.mxu0 %v750
    %783 = vmatprep.subr.mxu0 0.0
    %784 = vmatpush1.msra.mxu0 %v751
    %785 = vmatprep.subr.mxu0 0.0
    %786 = vmatpush1.msra.mxu0 %v752
    %787 = vmatprep.subr.mxu0 0.0
    %788 = vmatpush1.msra.mxu0 %v753
    %789 = vmatprep.subr.mxu0 0.0
    %790 = vmatpush1.msra.mxu0 %v754
    %791 = vmatprep.subr.mxu0 0.0
    %792 = vmatpush1.msra.mxu0 %v755
    %793 = vmatprep.subr.mxu0 0.0
    %794 = vmatpush1.msra.mxu0 %v756
    %795 = vmatprep.subr.mxu0 0.0
    %796 = vmatpush1.msra.mxu0 %v757
    %797 = vmatprep.subr.mxu0 0.0
    %798 = vmatpush1.msra.mxu0 0.0
    %799 = vmatprep.subr.mxu0 0.0
    %800 = vmatpush1.msra.mxu0 0.0
    %801 = vmatprep.subr.mxu0 0.0
    %802 = vmatpush1.msra.mxu0 0.0
    %803 = vmatprep.subr.mxu0 0.0
    %804 = vmatpush1.msra.mxu0 0.0
    %805 = vmatprep.subr.mxu0 0.0
    %806 = vmatpush1.msra.mxu0 0.0
    %807 = vmatprep.subr.mxu0 0.0
    %808 = vmatpush1.msra.mxu0 0.0
    %809 = vmatprep.subr.mxu0 0.0
    %810 = vmatpush1.msra.mxu0 0.0
    %811 = vmatprep.subr.mxu0 0.0
    %812 = vmatpush1.msra.mxu0 0.0
    %813 = vmatprep.subr.mxu0 0.0
    %814 = vmatpush1.msra.mxu0 0.0
    %815 = vmatprep.subr.mxu0 0.0
    %816 = vmatpush1.msra.mxu0 0.0
    %817 = vmatprep.subr.mxu0 0.0
    %818 = vmatpush1.msra.mxu0 0.0
    %819 = vmatprep.subr.mxu0 0.0
    %820 = vmatpush1.msra.mxu0 0.0
    %821 = vmatprep.subr.mxu0 0.0
    %822 = vmatpush1.msra.mxu0 0.0
    %823 = vmatprep.subr.mxu0 0.0
    %824 = vmatpush1.msra.mxu0 0.0
    %825 = vmatprep.subr.mxu0 0.0
    %826 = vmatpush1.msra.mxu0 0.0
    %827 = vmatprep.subr.mxu0 0.0
    %828 = vmatpush1.msra.mxu0 0.0
    %829 = vmatprep.mubr.f32.mxu0 0.0
    %830 = vmatmul.mubr.f32.gmra.mrb[0].mxu0 %v741
    %v831 = vpop.f32.mrb[0].mxu0
    %v832 = vadd.f32 %v763, %v831
    %v833 = vpop.f32.mrb[0].mxu0
    %834 = vdwg.mxu0
    %v835 = vmax.f32 %v832, 0.0
    %836 = vst [vmem:[#allocation2] sm:$0x3] %v835
    // Predicated region
    $region34: #{vggnet_forward.31} parent=1 // pred_check
      _
    $region35: #{vggnet_forward.31} parent=1 // pred_check_branch
      %838 = sbr.rel (0) target = $region37
    $region36: #{vggnet_forward.31} parent=1 // pred_region
      %s840 = ssub.s32 32, 32
      %841 = vsyncadd [#allocation3], %s840
      %s843 = sshll.u32 [#allocation2], 4
      %s844 = int_to_ptr.vmem [resolvable:$true] %s843
      %846 = dma.vmem_to_hbm [thread:$0]  %s844, 32, %s8, [#allocation3]
    $region37: #{vggnet_forward.31} parent=1 // pred_fallthru
      _
    // Predicated region
    $region38: #{vggnet_forward.31} parent=1 // pred_check
      _
    $region39: #{vggnet_forward.31} parent=1 // pred_check_branch
      %848 = sbr.rel (0) target = $region41
    $region40: #{vggnet_forward.31} parent=1 // pred_region
      %849 = dma.done [#allocation3], 32
    $region41: #{vggnet_forward.31} parent=1 // pred_fallthru
      _
    %850 = vsyncpa [#allocation3], 1

</llo_original>
